<compile_context>
chip_gen: v5e
topology: v5e:2x2
jax: 0.10.0
libtpu: 0.0.40
codegen_flags: <defaults>
</compile_context>

<pallas_src>
import jax
import jax.numpy as jnp
from jax.experimental import pallas as pl
from jax.experimental.pallas import tpu as pltpu

B = 2                 # batch
H = W = 28            # input spatial (30 * ((28-2)//2)^2 = 5070 features)
C_OUT = 30
KH = KW = 3
HP = WP = 13          # pooled spatial size
SP = HP * WP          # 169
POOL_PAD = 256        # each pooling-offset slab padded to 2 lane-tiles
PATCH_LANES = 4 * POOL_PAD
F1 = C_OUT * SP       # 5070
H1 = 150
NCLASS = 10
K1 = 400              # KWinner k after conv/pool
K2 = 50               # KWinner k after first linear
BISECT_ITERS = 13     # threshold binary-search iterations (was 26)


def _kth_largest_threshold(v, k, axis, iters=BISECT_ITERS):
    """Threshold t ~= k-th largest value of v (count(v >= t) == k) via a
    counting binary search on the value range (no sort / top_k).  Ties / gaps
    below (max-min)/2**iters keep all tied elements, the usual caveat of a
    `x >= kth_value` KWinner formulation.  Counting stays in f32 so counts up
    to 5070 are exact."""
    lo = jnp.min(v, axis=axis, keepdims=True)
    hi = jnp.max(v, axis=axis, keepdims=True)

    def body(_, carry):
        lo, hi = carry
        mid = (lo + hi) * 0.5
        cnt = jnp.sum((v >= mid).astype(jnp.float32), axis=axis, keepdims=True)
        take = cnt >= float(k)
        return jnp.where(take, mid, lo), jnp.where(take, hi, mid)

    lo, hi = jax.lax.fori_loop(0, iters, body, (lo, hi))
    return lo


def sparse_cnn_kernel(p_ref, cw_ref, cb_ref, w1_hbm, b1_ref, w2_ref, b2_ref,
                      o_ref, w1_vmem, w1_sem):
    """Fully fused SparseCNN forward for the whole (B=2) batch.

    p_ref : (B, 9, 1024) f32  im2col patches; lane o*256 + (13*i+j) of tap
            t=3*dy+dx holds x[2*i+py+dy, 2*j+px+dx] with o=2*py+px
            (lanes 169..255 of each 256-lane slab are zero padding).
    cw_ref: (30, 9) f32 conv weight, cb_ref: (30, 1) f32 conv bias.
    w1_hbm: (30, 169, 150) bf16 fc1 weight, left in HBM (manual DMA).
    b1_ref: (1, 150) f32, w2_ref: (150, 10) f32, b2_ref: (1, 10) f32.
    o_ref : (B, 10) f32 logits.
    w1_vmem: (30, 169, 150) bf16 VMEM scratch, w1_sem: DMA semaphore.
    """
    # Kick off the fc1 weight stream immediately; it overlaps the whole
    # conv / max-pool / KWinner(400) section below.
    w1_copy = pltpu.make_async_copy(w1_hbm, w1_vmem, w1_sem)
    w1_copy.start()

    w = cw_ref[...]                       # (30, 9)
    bias = cb_ref[...]                    # (30, 1)

    masked = []                           # per-sample (30,169) f32, KWinner-masked
    for b in range(B):
        # One MXU dot covers all four pooling offsets (lane-aligned 256 slabs).
        y = jnp.dot(w, p_ref[b], preferred_element_type=jnp.float32)  # (30,1024)
        slabs = [y[:, o * POOL_PAD:(o + 1) * POOL_PAD] for o in range(4)]
        pooled = jnp.maximum(jnp.maximum(slabs[0], slabs[1]),
                             jnp.maximum(slabs[2], slabs[3]))          # (30,256)
        # Drop zero-padded lanes, add bias (max-pool commutes with +bias).
        pooled = pooled[:, :SP] + bias                                 # (30,169)
        thr = _kth_largest_threshold(pooled, K1, axis=None)            # (1,1)
        masked.append(jnp.where(pooled >= thr, pooled, jnp.zeros_like(pooled)))

    # fc1: contraction over 5070 = 30 channels x 169 spatial.  Per channel,
    # one (B,169)@(169,150) dot shared across the batch, so the 760K fc1
    # weights are pushed through the MXU exactly once.
    w1_copy.wait()
    acc = jnp.zeros((B, H1), jnp.float32)
    for c in range(C_OUT):
        lhs = jnp.concatenate([masked[b][c:c + 1, :] for b in range(B)],
                              axis=0).astype(jnp.bfloat16)             # (B,169)
        acc = acc + jnp.dot(lhs, w1_vmem[c],
                            preferred_element_type=jnp.float32)        # (B,150)
    h = acc + b1_ref[...]                                              # (B,150)

    thr2 = _kth_largest_threshold(h, K2, axis=-1)                      # (B,1)
    hm = jnp.where(h >= thr2, h, jnp.zeros_like(h))
    o_ref[...] = (jnp.dot(hm, w2_ref[...], preferred_element_type=jnp.float32)
                  + b2_ref[...])


def sparse_cnn_fused(patches, conv_w, conv_b, w1_r, b1, w2, b2):
    return pl.pallas_call(
        sparse_cnn_kernel,
        out_shape=jax.ShapeDtypeStruct((B, NCLASS), jnp.float32),
        grid=(1,),
        in_specs=[
            pl.BlockSpec((B, KH * KW, PATCH_LANES), lambda i: (0, 0, 0)),
            pl.BlockSpec((C_OUT, KH * KW), lambda i: (0, 0)),
            pl.BlockSpec((C_OUT, 1), lambda i: (0, 0)),
            pl.BlockSpec(memory_space=pl.ANY),          # fc1_w stays in HBM
            pl.BlockSpec((1, H1), lambda i: (0, 0)),
            pl.BlockSpec((H1, NCLASS), lambda i: (0, 0)),
            pl.BlockSpec((1, NCLASS), lambda i: (0, 0)),
        ],
        out_specs=pl.BlockSpec((B, NCLASS), lambda i: (0, 0)),
        scratch_shapes=[
            pltpu.VMEM((C_OUT, SP, H1), jnp.bfloat16),  # ~2.7 MB padded: fine on
            pltpu.SemaphoreType.DMA,                    # v5e/v6e/v7x scoped VMEM
        ],
        compiler_params=pltpu.CompilerParams(
            dimension_semantics=("arbitrary",)),
    )(patches, conv_w, conv_b, w1_r, b1, w2, b2)


def _im2col_pool_patches(x2):
    """(B, 28, 28) -> (B, 9, 1024) conv patches, one 256-lane-aligned slab per
    2x2 pooling offset (lanes 169..255 of each slab are zero).

    Pure layout plumbing on a 6 KB image (36 static strided slices + pad +
    concat, XLA fuses it) so the conv kernel runs a single lane-dense MXU
    matmul per sample."""
    n = x2.shape[0]
    slabs = []
    for py in range(2):
        for px in range(2):
            taps = []
            for dy in range(KH):
                for dx in range(KW):
                    sl = x2[:, py + dy:py + dy + 2 * HP:2,
                            px + dx:px + dx + 2 * WP:2]        # (B, 13, 13)
                    taps.append(sl.reshape(n, SP))
            slab = jnp.stack(taps, axis=1)                     # (B, 9, 169)
            slab = jnp.pad(slab, ((0, 0), (0, 0), (0, POOL_PAD - SP)))
            slabs.append(slab)                                 # (B, 9, 256)
    return jnp.concatenate(slabs, axis=2)                      # (B, 9, 1024)


def sparse_cnn_forward(x, params):
    # x: (B, 1, 28, 28) NCHW, as in the PyTorch module.
    x2 = x[:, 0, :, :]
    patches = _im2col_pool_patches(x2)
    return sparse_cnn_fused(patches, params["conv_w"], params["conv_b"],
                            params["fc1_w"], params["fc1_b"],
                            params["fc2_w"], params["fc2_b"])


def init_params(key):
    # SparseConv2D / SparseLinear modeled as dense weights with a fixed 50%
    # binary mask; KWinner as plain top-k masking of activations.
    ks = jax.random.split(key, 8)
    conv_w = jax.random.normal(ks[0], (C_OUT, KH * KW), jnp.float32) * 0.1
    conv_w = conv_w * jax.random.bernoulli(ks[1], 0.5, conv_w.shape).astype(jnp.float32)
    conv_b = jax.random.normal(ks[2], (C_OUT, 1), jnp.float32) * 0.1
    fc1_w = jax.random.normal(ks[3], (F1, H1), jnp.float32) * 0.02
    fc1_w = fc1_w * jax.random.bernoulli(ks[4], 0.5, fc1_w.shape).astype(jnp.float32)
    # bf16 weights halve the dominant HBM stream; stored as (30, 169, 150),
    # a free row-major reshape of the (5070, 150) matrix in PyTorch NCHW
    # flatten order (index = c*169 + 13*i + j).
    fc1_w = fc1_w.astype(jnp.bfloat16).reshape(C_OUT, SP, H1)
    fc1_b = jax.random.normal(ks[5], (1, H1), jnp.float32) * 0.02
    fc2_w = jax.random.normal(ks[6], (H1, NCLASS), jnp.float32) * 0.05
    fc2_b = jax.random.normal(ks[7], (1, NCLASS), jnp.float32) * 0.05
    return dict(conv_w=conv_w, conv_b=conv_b,
                fc1_w=fc1_w, fc1_b=fc1_b,
                fc2_w=fc2_w, fc2_b=fc2_b)


if __name__ == "__main__":
    key = jax.random.PRNGKey(0)
    pkey, xkey = jax.random.split(key)
    params = init_params(pkey)
    x = jax.random.normal(xkey, (B, 1, H, W), jnp.float32)
    out = jax.jit(lambda xx: sparse_cnn_forward(xx, params))(x)
    jax.block_until_ready(out)
    assert out.shape == (B, NCLASS) and out.dtype == jnp.float32
    print("KERNEL_OK")
</pallas_src>

<mosaic_0001>
module attributes {stable_mosaic.version = 11 : i64} {
  func.func @sparse_cnn_kernel(%arg0: i32, %arg1: memref<2x9x1024xf32, #tpu.memory_space<vmem>>, %arg2: memref<30x9xf32, #tpu.memory_space<vmem>>, %arg3: memref<30x1xf32, #tpu.memory_space<vmem>>, %arg4: memref<30x169x150xbf16, #tpu.memory_space<any>>, %arg5: memref<1x150xf32, #tpu.memory_space<vmem>>, %arg6: memref<150x10xf32, #tpu.memory_space<vmem>>, %arg7: memref<1x10xf32, #tpu.memory_space<vmem>>, %arg8: memref<2x10xf32, #tpu.memory_space<vmem>>, %arg9: memref<30x169x150xbf16, #tpu.memory_space<vmem>>, %arg10: memref<!tpu.dma_semaphore, #tpu.memory_space<semaphore_mem>>) attributes {dimension_semantics = [#tpu.dimension_semantics<arbitrary>], iteration_bounds = array<i64: 1>, scalar_prefetch = 0 : i64, scratch_operands = 2 : i64, tpu.core_type = #tpu.core_type<tc>, window_params = [{pipeline_mode = #tpu.pipeline_mode<synchronous>, transform_indices = @transform_0, window_bounds = array<i64: 2, 9, 1024>}, {pipeline_mode = #tpu.pipeline_mode<synchronous>, transform_indices = @transform_1, window_bounds = array<i64: 30, 9>}, {pipeline_mode = #tpu.pipeline_mode<synchronous>, transform_indices = @transform_2, window_bounds = array<i64: 30, 1>}, {}, {pipeline_mode = #tpu.pipeline_mode<synchronous>, transform_indices = @transform_4, window_bounds = array<i64: 1, 150>}, {pipeline_mode = #tpu.pipeline_mode<synchronous>, transform_indices = @transform_5, window_bounds = array<i64: 150, 10>}, {pipeline_mode = #tpu.pipeline_mode<synchronous>, transform_indices = @transform_6, window_bounds = array<i64: 1, 10>}, {pipeline_mode = #tpu.pipeline_mode<synchronous>, transform_indices = @transform_7, window_bounds = array<i64: 2, 10>}]} {
    tpu.enqueue_dma source(%arg4 : memref<30x169x150xbf16, #tpu.memory_space<any>>) target(%arg9 : memref<30x169x150xbf16, #tpu.memory_space<vmem>>) target_semaphore(%arg10 : memref<!tpu.dma_semaphore, #tpu.memory_space<semaphore_mem>>)
    %c0 = arith.constant 0 : index
    %c0_0 = arith.constant 0 : index
    %0 = vector.load %arg2[%c0, %c0_0] : memref<30x9xf32, #tpu.memory_space<vmem>>, vector<30x9xf32>
    %c0_1 = arith.constant 0 : index
    %c0_2 = arith.constant 0 : index
    %1 = vector.load %arg3[%c0_1, %c0_2] : memref<30x1xf32, #tpu.memory_space<vmem>>, vector<30x1xf32>
    %c0_3 = arith.constant 0 : index
    %c0_4 = arith.constant 0 : index
    %c0_5 = arith.constant 0 : index
    %2 = vector.load %arg1[%c0_3, %c0_4, %c0_5] : memref<2x9x1024xf32, #tpu.memory_space<vmem>>, vector<1x9x1024xf32>
    %3 = vector.shape_cast %2 : vector<1x9x1024xf32> to vector<9x1024xf32>
    %cst = arith.constant dense<0.000000e+00> : vector<30x1024xf32>
    %4 = tpu.matmul %0, %3, %cst {dimension_numbers = #tpu.dot_dimension_numbers<[1], [0], [0], [1], [0, 0, 1, 1], [], []>} : vector<30x9xf32>, vector<9x1024xf32>, vector<30x1024xf32> -> vector<30x1024xf32>
    %5 = vector.extract_strided_slice %4 {offsets = [0, 0], sizes = [30, 256], strides = [1, 1]} : vector<30x1024xf32> to vector<30x256xf32>
    %6 = vector.extract_strided_slice %4 {offsets = [0, 256], sizes = [30, 256], strides = [1, 1]} : vector<30x1024xf32> to vector<30x256xf32>
    %7 = vector.extract_strided_slice %4 {offsets = [0, 512], sizes = [30, 256], strides = [1, 1]} : vector<30x1024xf32> to vector<30x256xf32>
    %8 = vector.extract_strided_slice %4 {offsets = [0, 768], sizes = [30, 256], strides = [1, 1]} : vector<30x1024xf32> to vector<30x256xf32>
    %9 = arith.maximumf %5, %6 : vector<30x256xf32>
    %10 = arith.maximumf %7, %8 : vector<30x256xf32>
    %11 = arith.maximumf %9, %10 : vector<30x256xf32>
    %12 = vector.extract_strided_slice %11 {offsets = [0, 0], sizes = [30, 169], strides = [1, 1]} : vector<30x256xf32> to vector<30x169xf32>
    %13 = vector.broadcast %1 : vector<30x1xf32> to vector<30x169xf32>
    %14 = arith.addf %12, %13 : vector<30x169xf32>
    %15 = vector.shape_cast %14 : vector<30x169xf32> to vector<1x30x169xf32>
    %cst_6 = arith.constant dense<0x7F800000> : vector<1xf32>
    %16 = vector.multi_reduction <minimumf>, %15, %cst_6 [1, 2] : vector<1x30x169xf32> to vector<1xf32>
    %17 = vector.shape_cast %16 : vector<1xf32> to vector<1x1x1xf32>
    %18 = vector.extract %17[0, 0, 0] : f32 from vector<1x1x1xf32>
    %19 = vector.broadcast %18 : f32 to vector<1x1xf32>
    %20 = vector.shape_cast %14 : vector<30x169xf32> to vector<1x30x169xf32>
    %cst_7 = arith.constant dense<0xFF800000> : vector<1xf32>
    %21 = vector.multi_reduction <maximumf>, %20, %cst_7 [1, 2] : vector<1x30x169xf32> to vector<1xf32>
    %22 = vector.shape_cast %21 : vector<1xf32> to vector<1x1x1xf32>
    %23 = vector.extract %22[0, 0, 0] : f32 from vector<1x1x1xf32>
    %24 = vector.broadcast %23 : f32 to vector<1x1xf32>
    %c0_i32 = arith.constant 0 : i32
    %c13_i32 = arith.constant 13 : i32
    %25 = arith.addi %c0_i32, %c13_i32 : i32
    %c1_i32 = arith.constant 1 : i32
    %26:2 = scf.for %arg11 = %c0_i32 to %25 step %c1_i32 iter_args(%arg12 = %19, %arg13 = %24) -> (vector<1x1xf32>, vector<1x1xf32>)  : i32 {
      %320 = arith.addf %arg12, %arg13 : vector<1x1xf32>
      %cst_126 = arith.constant 5.000000e-01 : f32
      %321 = vector.broadcast %cst_126 : f32 to vector<1x1xf32>
      %322 = arith.mulf %320, %321 : vector<1x1xf32>
      %323 = vector.broadcast %322 : vector<1x1xf32> to vector<30x169xf32>
      %324 = arith.cmpf oge, %14, %323 : vector<30x169xf32>
      %325 = arith.extui %324 : vector<30x169xi1> to vector<30x169xi32>
      %326 = arith.sitofp %325 : vector<30x169xi32> to vector<30x169xf32>
      %327 = vector.shape_cast %326 : vector<30x169xf32> to vector<1x30x169xf32>
      %cst_127 = arith.constant dense<0.000000e+00> : vector<1xf32>
      %328 = vector.multi_reduction <add>, %327, %cst_127 [1, 2] : vector<1x30x169xf32> to vector<1xf32>
      %329 = vector.shape_cast %328 : vector<1xf32> to vector<1x1x1xf32>
      %330 = vector.extract %329[0, 0, 0] : f32 from vector<1x1x1xf32>
      %331 = vector.broadcast %330 : f32 to vector<1x1xf32>
      %cst_128 = arith.constant 4.000000e+02 : f32
      %332 = vector.broadcast %cst_128 : f32 to vector<1x1xf32>
      %333 = arith.cmpf oge, %331, %332 : vector<1x1xf32>
      %334 = arith.select %333, %322, %arg12 : vector<1x1xi1>, vector<1x1xf32>
      %335 = arith.select %333, %arg13, %322 : vector<1x1xi1>, vector<1x1xf32>
      scf.yield %334, %335 : vector<1x1xf32>, vector<1x1xf32>
    }
    %27 = vector.broadcast %26#0 : vector<1x1xf32> to vector<30x169xf32>
    %28 = arith.cmpf oge, %14, %27 : vector<30x169xf32>
    %cst_8 = arith.constant 0.000000e+00 : f32
    %29 = vector.broadcast %cst_8 : f32 to vector<30x169xf32>
    %30 = arith.select %28, %14, %29 : vector<30x169xi1>, vector<30x169xf32>
    %c1 = arith.constant 1 : index
    %c0_9 = arith.constant 0 : index
    %c0_10 = arith.constant 0 : index
    %31 = vector.load %arg1[%c1, %c0_9, %c0_10] : memref<2x9x1024xf32, #tpu.memory_space<vmem>>, vector<1x9x1024xf32>
    %32 = vector.shape_cast %31 : vector<1x9x1024xf32> to vector<9x1024xf32>
    %cst_11 = arith.constant dense<0.000000e+00> : vector<30x1024xf32>
    %33 = tpu.matmul %0, %32, %cst_11 {dimension_numbers = #tpu.dot_dimension_numbers<[1], [0], [0], [1], [0, 0, 1, 1], [], []>} : vector<30x9xf32>, vector<9x1024xf32>, vector<30x1024xf32> -> vector<30x1024xf32>
    %34 = vector.extract_strided_slice %33 {offsets = [0, 0], sizes = [30, 256], strides = [1, 1]} : vector<30x1024xf32> to vector<30x256xf32>
    %35 = vector.extract_strided_slice %33 {offsets = [0, 256], sizes = [30, 256], strides = [1, 1]} : vector<30x1024xf32> to vector<30x256xf32>
    %36 = vector.extract_strided_slice %33 {offsets = [0, 512], sizes = [30, 256], strides = [1, 1]} : vector<30x1024xf32> to vector<30x256xf32>
    %37 = vector.extract_strided_slice %33 {offsets = [0, 768], sizes = [30, 256], strides = [1, 1]} : vector<30x1024xf32> to vector<30x256xf32>
    %38 = arith.maximumf %34, %35 : vector<30x256xf32>
    %39 = arith.maximumf %36, %37 : vector<30x256xf32>
    %40 = arith.maximumf %38, %39 : vector<30x256xf32>
    %41 = vector.extract_strided_slice %40 {offsets = [0, 0], sizes = [30, 169], strides = [1, 1]} : vector<30x256xf32> to vector<30x169xf32>
    %42 = vector.broadcast %1 : vector<30x1xf32> to vector<30x169xf32>
    %43 = arith.addf %41, %42 : vector<30x169xf32>
    %44 = vector.shape_cast %43 : vector<30x169xf32> to vector<1x30x169xf32>
    %cst_12 = arith.constant dense<0x7F800000> : vector<1xf32>
    %45 = vector.multi_reduction <minimumf>, %44, %cst_12 [1, 2] : vector<1x30x169xf32> to vector<1xf32>
    %46 = vector.shape_cast %45 : vector<1xf32> to vector<1x1x1xf32>
    %47 = vector.extract %46[0, 0, 0] : f32 from vector<1x1x1xf32>
    %48 = vector.broadcast %47 : f32 to vector<1x1xf32>
    %49 = vector.shape_cast %43 : vector<30x169xf32> to vector<1x30x169xf32>
    %cst_13 = arith.constant dense<0xFF800000> : vector<1xf32>
    %50 = vector.multi_reduction <maximumf>, %49, %cst_13 [1, 2] : vector<1x30x169xf32> to vector<1xf32>
    %51 = vector.shape_cast %50 : vector<1xf32> to vector<1x1x1xf32>
    %52 = vector.extract %51[0, 0, 0] : f32 from vector<1x1x1xf32>
    %53 = vector.broadcast %52 : f32 to vector<1x1xf32>
    %c0_i32_14 = arith.constant 0 : i32
    %c13_i32_15 = arith.constant 13 : i32
    %54 = arith.addi %c0_i32_14, %c13_i32_15 : i32
    %c1_i32_16 = arith.constant 1 : i32
    %55:2 = scf.for %arg11 = %c0_i32_14 to %54 step %c1_i32_16 iter_args(%arg12 = %48, %arg13 = %53) -> (vector<1x1xf32>, vector<1x1xf32>)  : i32 {
      %320 = arith.addf %arg12, %arg13 : vector<1x1xf32>
      %cst_126 = arith.constant 5.000000e-01 : f32
      %321 = vector.broadcast %cst_126 : f32 to vector<1x1xf32>
      %322 = arith.mulf %320, %321 : vector<1x1xf32>
      %323 = vector.broadcast %322 : vector<1x1xf32> to vector<30x169xf32>
      %324 = arith.cmpf oge, %43, %323 : vector<30x169xf32>
      %325 = arith.extui %324 : vector<30x169xi1> to vector<30x169xi32>
      %326 = arith.sitofp %325 : vector<30x169xi32> to vector<30x169xf32>
      %327 = vector.shape_cast %326 : vector<30x169xf32> to vector<1x30x169xf32>
      %cst_127 = arith.constant dense<0.000000e+00> : vector<1xf32>
      %328 = vector.multi_reduction <add>, %327, %cst_127 [1, 2] : vector<1x30x169xf32> to vector<1xf32>
      %329 = vector.shape_cast %328 : vector<1xf32> to vector<1x1x1xf32>
      %330 = vector.extract %329[0, 0, 0] : f32 from vector<1x1x1xf32>
      %331 = vector.broadcast %330 : f32 to vector<1x1xf32>
      %cst_128 = arith.constant 4.000000e+02 : f32
      %332 = vector.broadcast %cst_128 : f32 to vector<1x1xf32>
      %333 = arith.cmpf oge, %331, %332 : vector<1x1xf32>
      %334 = arith.select %333, %322, %arg12 : vector<1x1xi1>, vector<1x1xf32>
      %335 = arith.select %333, %arg13, %322 : vector<1x1xi1>, vector<1x1xf32>
      scf.yield %334, %335 : vector<1x1xf32>, vector<1x1xf32>
    }
    %56 = vector.broadcast %55#0 : vector<1x1xf32> to vector<30x169xf32>
    %57 = arith.cmpf oge, %43, %56 : vector<30x169xf32>
    %cst_17 = arith.constant 0.000000e+00 : f32
    %58 = vector.broadcast %cst_17 : f32 to vector<30x169xf32>
    %59 = arith.select %57, %43, %58 : vector<30x169xi1>, vector<30x169xf32>
    tpu.wait_dma2 semaphore(%arg10 : memref<!tpu.dma_semaphore, #tpu.memory_space<semaphore_mem>>) src(%arg4 : memref<30x169x150xbf16, #tpu.memory_space<any>>) dst(%arg9 : memref<30x169x150xbf16, #tpu.memory_space<vmem>>)
    %cst_18 = arith.constant 0.000000e+00 : f32
    %60 = vector.broadcast %cst_18 : f32 to vector<2x150xf32>
    %61 = vector.extract_strided_slice %30 {offsets = [0, 0], sizes = [1, 169], strides = [1, 1]} : vector<30x169xf32> to vector<1x169xf32>
    %62 = vector.extract_strided_slice %59 {offsets = [0, 0], sizes = [1, 169], strides = [1, 1]} : vector<30x169xf32> to vector<1x169xf32>
    %63 = tpu.concatenate %61, %62 in 0 : vector<1x169xf32>, vector<1x169xf32> -> vector<2x169xf32>
    %64 = arith.truncf %63 : vector<2x169xf32> to vector<2x169xbf16>
    %c0_19 = arith.constant 0 : index
    %c0_20 = arith.constant 0 : index
    %c0_21 = arith.constant 0 : index
    %65 = vector.load %arg9[%c0_19, %c0_20, %c0_21] : memref<30x169x150xbf16, #tpu.memory_space<vmem>>, vector<1x169x150xbf16>
    %66 = vector.shape_cast %65 : vector<1x169x150xbf16> to vector<169x150xbf16>
    %cst_22 = arith.constant dense<0.000000e+00> : vector<2x150xf32>
    %67 = tpu.matmul %64, %66, %cst_22 {dimension_numbers = #tpu.dot_dimension_numbers<[1], [0], [0], [1], [0, 0, 1, 1], [], []>} : vector<2x169xbf16>, vector<169x150xbf16>, vector<2x150xf32> -> vector<2x150xf32>
    %68 = arith.addf %60, %67 : vector<2x150xf32>
    %69 = vector.extract_strided_slice %30 {offsets = [1, 0], sizes = [1, 169], strides = [1, 1]} : vector<30x169xf32> to vector<1x169xf32>
    %70 = vector.extract_strided_slice %59 {offsets = [1, 0], sizes = [1, 169], strides = [1, 1]} : vector<30x169xf32> to vector<1x169xf32>
    %71 = tpu.concatenate %69, %70 in 0 : vector<1x169xf32>, vector<1x169xf32> -> vector<2x169xf32>
    %72 = arith.truncf %71 : vector<2x169xf32> to vector<2x169xbf16>
    %c1_23 = arith.constant 1 : index
    %c0_24 = arith.constant 0 : index
    %c0_25 = arith.constant 0 : index
    %73 = vector.load %arg9[%c1_23, %c0_24, %c0_25] : memref<30x169x150xbf16, #tpu.memory_space<vmem>>, vector<1x169x150xbf16>
    %74 = vector.shape_cast %73 : vector<1x169x150xbf16> to vector<169x150xbf16>
    %cst_26 = arith.constant dense<0.000000e+00> : vector<2x150xf32>
    %75 = tpu.matmul %72, %74, %cst_26 {dimension_numbers = #tpu.dot_dimension_numbers<[1], [0], [0], [1], [0, 0, 1, 1], [], []>} : vector<2x169xbf16>, vector<169x150xbf16>, vector<2x150xf32> -> vector<2x150xf32>
    %76 = arith.addf %68, %75 : vector<2x150xf32>
    %77 = vector.extract_strided_slice %30 {offsets = [2, 0], sizes = [1, 169], strides = [1, 1]} : vector<30x169xf32> to vector<1x169xf32>
    %78 = vector.extract_strided_slice %59 {offsets = [2, 0], sizes = [1, 169], strides = [1, 1]} : vector<30x169xf32> to vector<1x169xf32>
    %79 = tpu.concatenate %77, %78 in 0 : vector<1x169xf32>, vector<1x169xf32> -> vector<2x169xf32>
    %80 = arith.truncf %79 : vector<2x169xf32> to vector<2x169xbf16>
    %c2 = arith.constant 2 : index
    %c0_27 = arith.constant 0 : index
    %c0_28 = arith.constant 0 : index
    %81 = vector.load %arg9[%c2, %c0_27, %c0_28] : memref<30x169x150xbf16, #tpu.memory_space<vmem>>, vector<1x169x150xbf16>
    %82 = vector.shape_cast %81 : vector<1x169x150xbf16> to vector<169x150xbf16>
    %cst_29 = arith.constant dense<0.000000e+00> : vector<2x150xf32>
    %83 = tpu.matmul %80, %82, %cst_29 {dimension_numbers = #tpu.dot_dimension_numbers<[1], [0], [0], [1], [0, 0, 1, 1], [], []>} : vector<2x169xbf16>, vector<169x150xbf16>, vector<2x150xf32> -> vector<2x150xf32>
    %84 = arith.addf %76, %83 : vector<2x150xf32>
    %85 = vector.extract_strided_slice %30 {offsets = [3, 0], sizes = [1, 169], strides = [1, 1]} : vector<30x169xf32> to vector<1x169xf32>
    %86 = vector.extract_strided_slice %59 {offsets = [3, 0], sizes = [1, 169], strides = [1, 1]} : vector<30x169xf32> to vector<1x169xf32>
    %87 = tpu.concatenate %85, %86 in 0 : vector<1x169xf32>, vector<1x169xf32> -> vector<2x169xf32>
    %88 = arith.truncf %87 : vector<2x169xf32> to vector<2x169xbf16>
    %c3 = arith.constant 3 : index
    %c0_30 = arith.constant 0 : index
    %c0_31 = arith.constant 0 : index
    %89 = vector.load %arg9[%c3, %c0_30, %c0_31] : memref<30x169x150xbf16, #tpu.memory_space<vmem>>, vector<1x169x150xbf16>
    %90 = vector.shape_cast %89 : vector<1x169x150xbf16> to vector<169x150xbf16>
    %cst_32 = arith.constant dense<0.000000e+00> : vector<2x150xf32>
    %91 = tpu.matmul %88, %90, %cst_32 {dimension_numbers = #tpu.dot_dimension_numbers<[1], [0], [0], [1], [0, 0, 1, 1], [], []>} : vector<2x169xbf16>, vector<169x150xbf16>, vector<2x150xf32> -> vector<2x150xf32>
    %92 = arith.addf %84, %91 : vector<2x150xf32>
    %93 = vector.extract_strided_slice %30 {offsets = [4, 0], sizes = [1, 169], strides = [1, 1]} : vector<30x169xf32> to vector<1x169xf32>
    %94 = vector.extract_strided_slice %59 {offsets = [4, 0], sizes = [1, 169], strides = [1, 1]} : vector<30x169xf32> to vector<1x169xf32>
    %95 = tpu.concatenate %93, %94 in 0 : vector<1x169xf32>, vector<1x169xf32> -> vector<2x169xf32>
    %96 = arith.truncf %95 : vector<2x169xf32> to vector<2x169xbf16>
    %c4 = arith.constant 4 : index
    %c0_33 = arith.constant 0 : index
    %c0_34 = arith.constant 0 : index
    %97 = vector.load %arg9[%c4, %c0_33, %c0_34] : memref<30x169x150xbf16, #tpu.memory_space<vmem>>, vector<1x169x150xbf16>
    %98 = vector.shape_cast %97 : vector<1x169x150xbf16> to vector<169x150xbf16>
    %cst_35 = arith.constant dense<0.000000e+00> : vector<2x150xf32>
    %99 = tpu.matmul %96, %98, %cst_35 {dimension_numbers = #tpu.dot_dimension_numbers<[1], [0], [0], [1], [0, 0, 1, 1], [], []>} : vector<2x169xbf16>, vector<169x150xbf16>, vector<2x150xf32> -> vector<2x150xf32>
    %100 = arith.addf %92, %99 : vector<2x150xf32>
    %101 = vector.extract_strided_slice %30 {offsets = [5, 0], sizes = [1, 169], strides = [1, 1]} : vector<30x169xf32> to vector<1x169xf32>
    %102 = vector.extract_strided_slice %59 {offsets = [5, 0], sizes = [1, 169], strides = [1, 1]} : vector<30x169xf32> to vector<1x169xf32>
    %103 = tpu.concatenate %101, %102 in 0 : vector<1x169xf32>, vector<1x169xf32> -> vector<2x169xf32>
    %104 = arith.truncf %103 : vector<2x169xf32> to vector<2x169xbf16>
    %c5 = arith.constant 5 : index
    %c0_36 = arith.constant 0 : index
    %c0_37 = arith.constant 0 : index
    %105 = vector.load %arg9[%c5, %c0_36, %c0_37] : memref<30x169x150xbf16, #tpu.memory_space<vmem>>, vector<1x169x150xbf16>
    %106 = vector.shape_cast %105 : vector<1x169x150xbf16> to vector<169x150xbf16>
    %cst_38 = arith.constant dense<0.000000e+00> : vector<2x150xf32>
    %107 = tpu.matmul %104, %106, %cst_38 {dimension_numbers = #tpu.dot_dimension_numbers<[1], [0], [0], [1], [0, 0, 1, 1], [], []>} : vector<2x169xbf16>, vector<169x150xbf16>, vector<2x150xf32> -> vector<2x150xf32>
    %108 = arith.addf %100, %107 : vector<2x150xf32>
    %109 = vector.extract_strided_slice %30 {offsets = [6, 0], sizes = [1, 169], strides = [1, 1]} : vector<30x169xf32> to vector<1x169xf32>
    %110 = vector.extract_strided_slice %59 {offsets = [6, 0], sizes = [1, 169], strides = [1, 1]} : vector<30x169xf32> to vector<1x169xf32>
    %111 = tpu.concatenate %109, %110 in 0 : vector<1x169xf32>, vector<1x169xf32> -> vector<2x169xf32>
    %112 = arith.truncf %111 : vector<2x169xf32> to vector<2x169xbf16>
    %c6 = arith.constant 6 : index
    %c0_39 = arith.constant 0 : index
    %c0_40 = arith.constant 0 : index
    %113 = vector.load %arg9[%c6, %c0_39, %c0_40] : memref<30x169x150xbf16, #tpu.memory_space<vmem>>, vector<1x169x150xbf16>
    %114 = vector.shape_cast %113 : vector<1x169x150xbf16> to vector<169x150xbf16>
    %cst_41 = arith.constant dense<0.000000e+00> : vector<2x150xf32>
    %115 = tpu.matmul %112, %114, %cst_41 {dimension_numbers = #tpu.dot_dimension_numbers<[1], [0], [0], [1], [0, 0, 1, 1], [], []>} : vector<2x169xbf16>, vector<169x150xbf16>, vector<2x150xf32> -> vector<2x150xf32>
    %116 = arith.addf %108, %115 : vector<2x150xf32>
    %117 = vector.extract_strided_slice %30 {offsets = [7, 0], sizes = [1, 169], strides = [1, 1]} : vector<30x169xf32> to vector<1x169xf32>
    %118 = vector.extract_strided_slice %59 {offsets = [7, 0], sizes = [1, 169], strides = [1, 1]} : vector<30x169xf32> to vector<1x169xf32>
    %119 = tpu.concatenate %117, %118 in 0 : vector<1x169xf32>, vector<1x169xf32> -> vector<2x169xf32>
    %120 = arith.truncf %119 : vector<2x169xf32> to vector<2x169xbf16>
    %c7 = arith.constant 7 : index
    %c0_42 = arith.constant 0 : index
    %c0_43 = arith.constant 0 : index
    %121 = vector.load %arg9[%c7, %c0_42, %c0_43] : memref<30x169x150xbf16, #tpu.memory_space<vmem>>, vector<1x169x150xbf16>
    %122 = vector.shape_cast %121 : vector<1x169x150xbf16> to vector<169x150xbf16>
    %cst_44 = arith.constant dense<0.000000e+00> : vector<2x150xf32>
    %123 = tpu.matmul %120, %122, %cst_44 {dimension_numbers = #tpu.dot_dimension_numbers<[1], [0], [0], [1], [0, 0, 1, 1], [], []>} : vector<2x169xbf16>, vector<169x150xbf16>, vector<2x150xf32> -> vector<2x150xf32>
    %124 = arith.addf %116, %123 : vector<2x150xf32>
    %125 = vector.extract_strided_slice %30 {offsets = [8, 0], sizes = [1, 169], strides = [1, 1]} : vector<30x169xf32> to vector<1x169xf32>
    %126 = vector.extract_strided_slice %59 {offsets = [8, 0], sizes = [1, 169], strides = [1, 1]} : vector<30x169xf32> to vector<1x169xf32>
    %127 = tpu.concatenate %125, %126 in 0 : vector<1x169xf32>, vector<1x169xf32> -> vector<2x169xf32>
    %128 = arith.truncf %127 : vector<2x169xf32> to vector<2x169xbf16>
    %c8 = arith.constant 8 : index
    %c0_45 = arith.constant 0 : index
    %c0_46 = arith.constant 0 : index
    %129 = vector.load %arg9[%c8, %c0_45, %c0_46] : memref<30x169x150xbf16, #tpu.memory_space<vmem>>, vector<1x169x150xbf16>
    %130 = vector.shape_cast %129 : vector<1x169x150xbf16> to vector<169x150xbf16>
    %cst_47 = arith.constant dense<0.000000e+00> : vector<2x150xf32>
    %131 = tpu.matmul %128, %130, %cst_47 {dimension_numbers = #tpu.dot_dimension_numbers<[1], [0], [0], [1], [0, 0, 1, 1], [], []>} : vector<2x169xbf16>, vector<169x150xbf16>, vector<2x150xf32> -> vector<2x150xf32>
    %132 = arith.addf %124, %131 : vector<2x150xf32>
    %133 = vector.extract_strided_slice %30 {offsets = [9, 0], sizes = [1, 169], strides = [1, 1]} : vector<30x169xf32> to vector<1x169xf32>
    %134 = vector.extract_strided_slice %59 {offsets = [9, 0], sizes = [1, 169], strides = [1, 1]} : vector<30x169xf32> to vector<1x169xf32>
    %135 = tpu.concatenate %133, %134 in 0 : vector<1x169xf32>, vector<1x169xf32> -> vector<2x169xf32>
    %136 = arith.truncf %135 : vector<2x169xf32> to vector<2x169xbf16>
    %c9 = arith.constant 9 : index
    %c0_48 = arith.constant 0 : index
    %c0_49 = arith.constant 0 : index
    %137 = vector.load %arg9[%c9, %c0_48, %c0_49] : memref<30x169x150xbf16, #tpu.memory_space<vmem>>, vector<1x169x150xbf16>
    %138 = vector.shape_cast %137 : vector<1x169x150xbf16> to vector<169x150xbf16>
    %cst_50 = arith.constant dense<0.000000e+00> : vector<2x150xf32>
    %139 = tpu.matmul %136, %138, %cst_50 {dimension_numbers = #tpu.dot_dimension_numbers<[1], [0], [0], [1], [0, 0, 1, 1], [], []>} : vector<2x169xbf16>, vector<169x150xbf16>, vector<2x150xf32> -> vector<2x150xf32>
    %140 = arith.addf %132, %139 : vector<2x150xf32>
    %141 = vector.extract_strided_slice %30 {offsets = [10, 0], sizes = [1, 169], strides = [1, 1]} : vector<30x169xf32> to vector<1x169xf32>
    %142 = vector.extract_strided_slice %59 {offsets = [10, 0], sizes = [1, 169], strides = [1, 1]} : vector<30x169xf32> to vector<1x169xf32>
    %143 = tpu.concatenate %141, %142 in 0 : vector<1x169xf32>, vector<1x169xf32> -> vector<2x169xf32>
    %144 = arith.truncf %143 : vector<2x169xf32> to vector<2x169xbf16>
    %c10 = arith.constant 10 : index
    %c0_51 = arith.constant 0 : index
    %c0_52 = arith.constant 0 : index
    %145 = vector.load %arg9[%c10, %c0_51, %c0_52] : memref<30x169x150xbf16, #tpu.memory_space<vmem>>, vector<1x169x150xbf16>
    %146 = vector.shape_cast %145 : vector<1x169x150xbf16> to vector<169x150xbf16>
    %cst_53 = arith.constant dense<0.000000e+00> : vector<2x150xf32>
    %147 = tpu.matmul %144, %146, %cst_53 {dimension_numbers = #tpu.dot_dimension_numbers<[1], [0], [0], [1], [0, 0, 1, 1], [], []>} : vector<2x169xbf16>, vector<169x150xbf16>, vector<2x150xf32> -> vector<2x150xf32>
    %148 = arith.addf %140, %147 : vector<2x150xf32>
    %149 = vector.extract_strided_slice %30 {offsets = [11, 0], sizes = [1, 169], strides = [1, 1]} : vector<30x169xf32> to vector<1x169xf32>
    %150 = vector.extract_strided_slice %59 {offsets = [11, 0], sizes = [1, 169], strides = [1, 1]} : vector<30x169xf32> to vector<1x169xf32>
    %151 = tpu.concatenate %149, %150 in 0 : vector<1x169xf32>, vector<1x169xf32> -> vector<2x169xf32>
    %152 = arith.truncf %151 : vector<2x169xf32> to vector<2x169xbf16>
    %c11 = arith.constant 11 : index
    %c0_54 = arith.constant 0 : index
    %c0_55 = arith.constant 0 : index
    %153 = vector.load %arg9[%c11, %c0_54, %c0_55] : memref<30x169x150xbf16, #tpu.memory_space<vmem>>, vector<1x169x150xbf16>
    %154 = vector.shape_cast %153 : vector<1x169x150xbf16> to vector<169x150xbf16>
    %cst_56 = arith.constant dense<0.000000e+00> : vector<2x150xf32>
    %155 = tpu.matmul %152, %154, %cst_56 {dimension_numbers = #tpu.dot_dimension_numbers<[1], [0], [0], [1], [0, 0, 1, 1], [], []>} : vector<2x169xbf16>, vector<169x150xbf16>, vector<2x150xf32> -> vector<2x150xf32>
    %156 = arith.addf %148, %155 : vector<2x150xf32>
    %157 = vector.extract_strided_slice %30 {offsets = [12, 0], sizes = [1, 169], strides = [1, 1]} : vector<30x169xf32> to vector<1x169xf32>
    %158 = vector.extract_strided_slice %59 {offsets = [12, 0], sizes = [1, 169], strides = [1, 1]} : vector<30x169xf32> to vector<1x169xf32>
    %159 = tpu.concatenate %157, %158 in 0 : vector<1x169xf32>, vector<1x169xf32> -> vector<2x169xf32>
    %160 = arith.truncf %159 : vector<2x169xf32> to vector<2x169xbf16>
    %c12 = arith.constant 12 : index
    %c0_57 = arith.constant 0 : index
    %c0_58 = arith.constant 0 : index
    %161 = vector.load %arg9[%c12, %c0_57, %c0_58] : memref<30x169x150xbf16, #tpu.memory_space<vmem>>, vector<1x169x150xbf16>
    %162 = vector.shape_cast %161 : vector<1x169x150xbf16> to vector<169x150xbf16>
    %cst_59 = arith.constant dense<0.000000e+00> : vector<2x150xf32>
    %163 = tpu.matmul %160, %162, %cst_59 {dimension_numbers = #tpu.dot_dimension_numbers<[1], [0], [0], [1], [0, 0, 1, 1], [], []>} : vector<2x169xbf16>, vector<169x150xbf16>, vector<2x150xf32> -> vector<2x150xf32>
    %164 = arith.addf %156, %163 : vector<2x150xf32>
    %165 = vector.extract_strided_slice %30 {offsets = [13, 0], sizes = [1, 169], strides = [1, 1]} : vector<30x169xf32> to vector<1x169xf32>
    %166 = vector.extract_strided_slice %59 {offsets = [13, 0], sizes = [1, 169], strides = [1, 1]} : vector<30x169xf32> to vector<1x169xf32>
    %167 = tpu.concatenate %165, %166 in 0 : vector<1x169xf32>, vector<1x169xf32> -> vector<2x169xf32>
    %168 = arith.truncf %167 : vector<2x169xf32> to vector<2x169xbf16>
    %c13 = arith.constant 13 : index
    %c0_60 = arith.constant 0 : index
    %c0_61 = arith.constant 0 : index
    %169 = vector.load %arg9[%c13, %c0_60, %c0_61] : memref<30x169x150xbf16, #tpu.memory_space<vmem>>, vector<1x169x150xbf16>
    %170 = vector.shape_cast %169 : vector<1x169x150xbf16> to vector<169x150xbf16>
    %cst_62 = arith.constant dense<0.000000e+00> : vector<2x150xf32>
    %171 = tpu.matmul %168, %170, %cst_62 {dimension_numbers = #tpu.dot_dimension_numbers<[1], [0], [0], [1], [0, 0, 1, 1], [], []>} : vector<2x169xbf16>, vector<169x150xbf16>, vector<2x150xf32> -> vector<2x150xf32>
    %172 = arith.addf %164, %171 : vector<2x150xf32>
    %173 = vector.extract_strided_slice %30 {offsets = [14, 0], sizes = [1, 169], strides = [1, 1]} : vector<30x169xf32> to vector<1x169xf32>
    %174 = vector.extract_strided_slice %59 {offsets = [14, 0], sizes = [1, 169], strides = [1, 1]} : vector<30x169xf32> to vector<1x169xf32>
    %175 = tpu.concatenate %173, %174 in 0 : vector<1x169xf32>, vector<1x169xf32> -> vector<2x169xf32>
    %176 = arith.truncf %175 : vector<2x169xf32> to vector<2x169xbf16>
    %c14 = arith.constant 14 : index
    %c0_63 = arith.constant 0 : index
    %c0_64 = arith.constant 0 : index
    %177 = vector.load %arg9[%c14, %c0_63, %c0_64] : memref<30x169x150xbf16, #tpu.memory_space<vmem>>, vector<1x169x150xbf16>
    %178 = vector.shape_cast %177 : vector<1x169x150xbf16> to vector<169x150xbf16>
    %cst_65 = arith.constant dense<0.000000e+00> : vector<2x150xf32>
    %179 = tpu.matmul %176, %178, %cst_65 {dimension_numbers = #tpu.dot_dimension_numbers<[1], [0], [0], [1], [0, 0, 1, 1], [], []>} : vector<2x169xbf16>, vector<169x150xbf16>, vector<2x150xf32> -> vector<2x150xf32>
    %180 = arith.addf %172, %179 : vector<2x150xf32>
    %181 = vector.extract_strided_slice %30 {offsets = [15, 0], sizes = [1, 169], strides = [1, 1]} : vector<30x169xf32> to vector<1x169xf32>
    %182 = vector.extract_strided_slice %59 {offsets = [15, 0], sizes = [1, 169], strides = [1, 1]} : vector<30x169xf32> to vector<1x169xf32>
    %183 = tpu.concatenate %181, %182 in 0 : vector<1x169xf32>, vector<1x169xf32> -> vector<2x169xf32>
    %184 = arith.truncf %183 : vector<2x169xf32> to vector<2x169xbf16>
    %c15 = arith.constant 15 : index
    %c0_66 = arith.constant 0 : index
    %c0_67 = arith.constant 0 : index
    %185 = vector.load %arg9[%c15, %c0_66, %c0_67] : memref<30x169x150xbf16, #tpu.memory_space<vmem>>, vector<1x169x150xbf16>
    %186 = vector.shape_cast %185 : vector<1x169x150xbf16> to vector<169x150xbf16>
    %cst_68 = arith.constant dense<0.000000e+00> : vector<2x150xf32>
    %187 = tpu.matmul %184, %186, %cst_68 {dimension_numbers = #tpu.dot_dimension_numbers<[1], [0], [0], [1], [0, 0, 1, 1], [], []>} : vector<2x169xbf16>, vector<169x150xbf16>, vector<2x150xf32> -> vector<2x150xf32>
    %188 = arith.addf %180, %187 : vector<2x150xf32>
    %189 = vector.extract_strided_slice %30 {offsets = [16, 0], sizes = [1, 169], strides = [1, 1]} : vector<30x169xf32> to vector<1x169xf32>
    %190 = vector.extract_strided_slice %59 {offsets = [16, 0], sizes = [1, 169], strides = [1, 1]} : vector<30x169xf32> to vector<1x169xf32>
    %191 = tpu.concatenate %189, %190 in 0 : vector<1x169xf32>, vector<1x169xf32> -> vector<2x169xf32>
    %192 = arith.truncf %191 : vector<2x169xf32> to vector<2x169xbf16>
    %c16 = arith.constant 16 : index
    %c0_69 = arith.constant 0 : index
    %c0_70 = arith.constant 0 : index
    %193 = vector.load %arg9[%c16, %c0_69, %c0_70] : memref<30x169x150xbf16, #tpu.memory_space<vmem>>, vector<1x169x150xbf16>
    %194 = vector.shape_cast %193 : vector<1x169x150xbf16> to vector<169x150xbf16>
    %cst_71 = arith.constant dense<0.000000e+00> : vector<2x150xf32>
    %195 = tpu.matmul %192, %194, %cst_71 {dimension_numbers = #tpu.dot_dimension_numbers<[1], [0], [0], [1], [0, 0, 1, 1], [], []>} : vector<2x169xbf16>, vector<169x150xbf16>, vector<2x150xf32> -> vector<2x150xf32>
    %196 = arith.addf %188, %195 : vector<2x150xf32>
    %197 = vector.extract_strided_slice %30 {offsets = [17, 0], sizes = [1, 169], strides = [1, 1]} : vector<30x169xf32> to vector<1x169xf32>
    %198 = vector.extract_strided_slice %59 {offsets = [17, 0], sizes = [1, 169], strides = [1, 1]} : vector<30x169xf32> to vector<1x169xf32>
    %199 = tpu.concatenate %197, %198 in 0 : vector<1x169xf32>, vector<1x169xf32> -> vector<2x169xf32>
    %200 = arith.truncf %199 : vector<2x169xf32> to vector<2x169xbf16>
    %c17 = arith.constant 17 : index
    %c0_72 = arith.constant 0 : index
    %c0_73 = arith.constant 0 : index
    %201 = vector.load %arg9[%c17, %c0_72, %c0_73] : memref<30x169x150xbf16, #tpu.memory_space<vmem>>, vector<1x169x150xbf16>
    %202 = vector.shape_cast %201 : vector<1x169x150xbf16> to vector<169x150xbf16>
    %cst_74 = arith.constant dense<0.000000e+00> : vector<2x150xf32>
    %203 = tpu.matmul %200, %202, %cst_74 {dimension_numbers = #tpu.dot_dimension_numbers<[1], [0], [0], [1], [0, 0, 1, 1], [], []>} : vector<2x169xbf16>, vector<169x150xbf16>, vector<2x150xf32> -> vector<2x150xf32>
    %204 = arith.addf %196, %203 : vector<2x150xf32>
    %205 = vector.extract_strided_slice %30 {offsets = [18, 0], sizes = [1, 169], strides = [1, 1]} : vector<30x169xf32> to vector<1x169xf32>
    %206 = vector.extract_strided_slice %59 {offsets = [18, 0], sizes = [1, 169], strides = [1, 1]} : vector<30x169xf32> to vector<1x169xf32>
    %207 = tpu.concatenate %205, %206 in 0 : vector<1x169xf32>, vector<1x169xf32> -> vector<2x169xf32>
    %208 = arith.truncf %207 : vector<2x169xf32> to vector<2x169xbf16>
    %c18 = arith.constant 18 : index
    %c0_75 = arith.constant 0 : index
    %c0_76 = arith.constant 0 : index
    %209 = vector.load %arg9[%c18, %c0_75, %c0_76] : memref<30x169x150xbf16, #tpu.memory_space<vmem>>, vector<1x169x150xbf16>
    %210 = vector.shape_cast %209 : vector<1x169x150xbf16> to vector<169x150xbf16>
    %cst_77 = arith.constant dense<0.000000e+00> : vector<2x150xf32>
    %211 = tpu.matmul %208, %210, %cst_77 {dimension_numbers = #tpu.dot_dimension_numbers<[1], [0], [0], [1], [0, 0, 1, 1], [], []>} : vector<2x169xbf16>, vector<169x150xbf16>, vector<2x150xf32> -> vector<2x150xf32>
    %212 = arith.addf %204, %211 : vector<2x150xf32>
    %213 = vector.extract_strided_slice %30 {offsets = [19, 0], sizes = [1, 169], strides = [1, 1]} : vector<30x169xf32> to vector<1x169xf32>
    %214 = vector.extract_strided_slice %59 {offsets = [19, 0], sizes = [1, 169], strides = [1, 1]} : vector<30x169xf32> to vector<1x169xf32>
    %215 = tpu.concatenate %213, %214 in 0 : vector<1x169xf32>, vector<1x169xf32> -> vector<2x169xf32>
    %216 = arith.truncf %215 : vector<2x169xf32> to vector<2x169xbf16>
    %c19 = arith.constant 19 : index
    %c0_78 = arith.constant 0 : index
    %c0_79 = arith.constant 0 : index
    %217 = vector.load %arg9[%c19, %c0_78, %c0_79] : memref<30x169x150xbf16, #tpu.memory_space<vmem>>, vector<1x169x150xbf16>
    %218 = vector.shape_cast %217 : vector<1x169x150xbf16> to vector<169x150xbf16>
    %cst_80 = arith.constant dense<0.000000e+00> : vector<2x150xf32>
    %219 = tpu.matmul %216, %218, %cst_80 {dimension_numbers = #tpu.dot_dimension_numbers<[1], [0], [0], [1], [0, 0, 1, 1], [], []>} : vector<2x169xbf16>, vector<169x150xbf16>, vector<2x150xf32> -> vector<2x150xf32>
    %220 = arith.addf %212, %219 : vector<2x150xf32>
    %221 = vector.extract_strided_slice %30 {offsets = [20, 0], sizes = [1, 169], strides = [1, 1]} : vector<30x169xf32> to vector<1x169xf32>
    %222 = vector.extract_strided_slice %59 {offsets = [20, 0], sizes = [1, 169], strides = [1, 1]} : vector<30x169xf32> to vector<1x169xf32>
    %223 = tpu.concatenate %221, %222 in 0 : vector<1x169xf32>, vector<1x169xf32> -> vector<2x169xf32>
    %224 = arith.truncf %223 : vector<2x169xf32> to vector<2x169xbf16>
    %c20 = arith.constant 20 : index
    %c0_81 = arith.constant 0 : index
    %c0_82 = arith.constant 0 : index
    %225 = vector.load %arg9[%c20, %c0_81, %c0_82] : memref<30x169x150xbf16, #tpu.memory_space<vmem>>, vector<1x169x150xbf16>
    %226 = vector.shape_cast %225 : vector<1x169x150xbf16> to vector<169x150xbf16>
    %cst_83 = arith.constant dense<0.000000e+00> : vector<2x150xf32>
    %227 = tpu.matmul %224, %226, %cst_83 {dimension_numbers = #tpu.dot_dimension_numbers<[1], [0], [0], [1], [0, 0, 1, 1], [], []>} : vector<2x169xbf16>, vector<169x150xbf16>, vector<2x150xf32> -> vector<2x150xf32>
    %228 = arith.addf %220, %227 : vector<2x150xf32>
    %229 = vector.extract_strided_slice %30 {offsets = [21, 0], sizes = [1, 169], strides = [1, 1]} : vector<30x169xf32> to vector<1x169xf32>
    %230 = vector.extract_strided_slice %59 {offsets = [21, 0], sizes = [1, 169], strides = [1, 1]} : vector<30x169xf32> to vector<1x169xf32>
    %231 = tpu.concatenate %229, %230 in 0 : vector<1x169xf32>, vector<1x169xf32> -> vector<2x169xf32>
    %232 = arith.truncf %231 : vector<2x169xf32> to vector<2x169xbf16>
    %c21 = arith.constant 21 : index
    %c0_84 = arith.constant 0 : index
    %c0_85 = arith.constant 0 : index
    %233 = vector.load %arg9[%c21, %c0_84, %c0_85] : memref<30x169x150xbf16, #tpu.memory_space<vmem>>, vector<1x169x150xbf16>
    %234 = vector.shape_cast %233 : vector<1x169x150xbf16> to vector<169x150xbf16>
    %cst_86 = arith.constant dense<0.000000e+00> : vector<2x150xf32>
    %235 = tpu.matmul %232, %234, %cst_86 {dimension_numbers = #tpu.dot_dimension_numbers<[1], [0], [0], [1], [0, 0, 1, 1], [], []>} : vector<2x169xbf16>, vector<169x150xbf16>, vector<2x150xf32> -> vector<2x150xf32>
    %236 = arith.addf %228, %235 : vector<2x150xf32>
    %237 = vector.extract_strided_slice %30 {offsets = [22, 0], sizes = [1, 169], strides = [1, 1]} : vector<30x169xf32> to vector<1x169xf32>
    %238 = vector.extract_strided_slice %59 {offsets = [22, 0], sizes = [1, 169], strides = [1, 1]} : vector<30x169xf32> to vector<1x169xf32>
    %239 = tpu.concatenate %237, %238 in 0 : vector<1x169xf32>, vector<1x169xf32> -> vector<2x169xf32>
    %240 = arith.truncf %239 : vector<2x169xf32> to vector<2x169xbf16>
    %c22 = arith.constant 22 : index
    %c0_87 = arith.constant 0 : index
    %c0_88 = arith.constant 0 : index
    %241 = vector.load %arg9[%c22, %c0_87, %c0_88] : memref<30x169x150xbf16, #tpu.memory_space<vmem>>, vector<1x169x150xbf16>
    %242 = vector.shape_cast %241 : vector<1x169x150xbf16> to vector<169x150xbf16>
    %cst_89 = arith.constant dense<0.000000e+00> : vector<2x150xf32>
    %243 = tpu.matmul %240, %242, %cst_89 {dimension_numbers = #tpu.dot_dimension_numbers<[1], [0], [0], [1], [0, 0, 1, 1], [], []>} : vector<2x169xbf16>, vector<169x150xbf16>, vector<2x150xf32> -> vector<2x150xf32>
    %244 = arith.addf %236, %243 : vector<2x150xf32>
    %245 = vector.extract_strided_slice %30 {offsets = [23, 0], sizes = [1, 169], strides = [1, 1]} : vector<30x169xf32> to vector<1x169xf32>
    %246 = vector.extract_strided_slice %59 {offsets = [23, 0], sizes = [1, 169], strides = [1, 1]} : vector<30x169xf32> to vector<1x169xf32>
    %247 = tpu.concatenate %245, %246 in 0 : vector<1x169xf32>, vector<1x169xf32> -> vector<2x169xf32>
    %248 = arith.truncf %247 : vector<2x169xf32> to vector<2x169xbf16>
    %c23 = arith.constant 23 : index
    %c0_90 = arith.constant 0 : index
    %c0_91 = arith.constant 0 : index
    %249 = vector.load %arg9[%c23, %c0_90, %c0_91] : memref<30x169x150xbf16, #tpu.memory_space<vmem>>, vector<1x169x150xbf16>
    %250 = vector.shape_cast %249 : vector<1x169x150xbf16> to vector<169x150xbf16>
    %cst_92 = arith.constant dense<0.000000e+00> : vector<2x150xf32>
    %251 = tpu.matmul %248, %250, %cst_92 {dimension_numbers = #tpu.dot_dimension_numbers<[1], [0], [0], [1], [0, 0, 1, 1], [], []>} : vector<2x169xbf16>, vector<169x150xbf16>, vector<2x150xf32> -> vector<2x150xf32>
    %252 = arith.addf %244, %251 : vector<2x150xf32>
    %253 = vector.extract_strided_slice %30 {offsets = [24, 0], sizes = [1, 169], strides = [1, 1]} : vector<30x169xf32> to vector<1x169xf32>
    %254 = vector.extract_strided_slice %59 {offsets = [24, 0], sizes = [1, 169], strides = [1, 1]} : vector<30x169xf32> to vector<1x169xf32>
    %255 = tpu.concatenate %253, %254 in 0 : vector<1x169xf32>, vector<1x169xf32> -> vector<2x169xf32>
    %256 = arith.truncf %255 : vector<2x169xf32> to vector<2x169xbf16>
    %c24 = arith.constant 24 : index
    %c0_93 = arith.constant 0 : index
    %c0_94 = arith.constant 0 : index
    %257 = vector.load %arg9[%c24, %c0_93, %c0_94] : memref<30x169x150xbf16, #tpu.memory_space<vmem>>, vector<1x169x150xbf16>
    %258 = vector.shape_cast %257 : vector<1x169x150xbf16> to vector<169x150xbf16>
    %cst_95 = arith.constant dense<0.000000e+00> : vector<2x150xf32>
    %259 = tpu.matmul %256, %258, %cst_95 {dimension_numbers = #tpu.dot_dimension_numbers<[1], [0], [0], [1], [0, 0, 1, 1], [], []>} : vector<2x169xbf16>, vector<169x150xbf16>, vector<2x150xf32> -> vector<2x150xf32>
    %260 = arith.addf %252, %259 : vector<2x150xf32>
    %261 = vector.extract_strided_slice %30 {offsets = [25, 0], sizes = [1, 169], strides = [1, 1]} : vector<30x169xf32> to vector<1x169xf32>
    %262 = vector.extract_strided_slice %59 {offsets = [25, 0], sizes = [1, 169], strides = [1, 1]} : vector<30x169xf32> to vector<1x169xf32>
    %263 = tpu.concatenate %261, %262 in 0 : vector<1x169xf32>, vector<1x169xf32> -> vector<2x169xf32>
    %264 = arith.truncf %263 : vector<2x169xf32> to vector<2x169xbf16>
    %c25 = arith.constant 25 : index
    %c0_96 = arith.constant 0 : index
    %c0_97 = arith.constant 0 : index
    %265 = vector.load %arg9[%c25, %c0_96, %c0_97] : memref<30x169x150xbf16, #tpu.memory_space<vmem>>, vector<1x169x150xbf16>
    %266 = vector.shape_cast %265 : vector<1x169x150xbf16> to vector<169x150xbf16>
    %cst_98 = arith.constant dense<0.000000e+00> : vector<2x150xf32>
    %267 = tpu.matmul %264, %266, %cst_98 {dimension_numbers = #tpu.dot_dimension_numbers<[1], [0], [0], [1], [0, 0, 1, 1], [], []>} : vector<2x169xbf16>, vector<169x150xbf16>, vector<2x150xf32> -> vector<2x150xf32>
    %268 = arith.addf %260, %267 : vector<2x150xf32>
    %269 = vector.extract_strided_slice %30 {offsets = [26, 0], sizes = [1, 169], strides = [1, 1]} : vector<30x169xf32> to vector<1x169xf32>
    %270 = vector.extract_strided_slice %59 {offsets = [26, 0], sizes = [1, 169], strides = [1, 1]} : vector<30x169xf32> to vector<1x169xf32>
    %271 = tpu.concatenate %269, %270 in 0 : vector<1x169xf32>, vector<1x169xf32> -> vector<2x169xf32>
    %272 = arith.truncf %271 : vector<2x169xf32> to vector<2x169xbf16>
    %c26 = arith.constant 26 : index
    %c0_99 = arith.constant 0 : index
    %c0_100 = arith.constant 0 : index
    %273 = vector.load %arg9[%c26, %c0_99, %c0_100] : memref<30x169x150xbf16, #tpu.memory_space<vmem>>, vector<1x169x150xbf16>
    %274 = vector.shape_cast %273 : vector<1x169x150xbf16> to vector<169x150xbf16>
    %cst_101 = arith.constant dense<0.000000e+00> : vector<2x150xf32>
    %275 = tpu.matmul %272, %274, %cst_101 {dimension_numbers = #tpu.dot_dimension_numbers<[1], [0], [0], [1], [0, 0, 1, 1], [], []>} : vector<2x169xbf16>, vector<169x150xbf16>, vector<2x150xf32> -> vector<2x150xf32>
    %276 = arith.addf %268, %275 : vector<2x150xf32>
    %277 = vector.extract_strided_slice %30 {offsets = [27, 0], sizes = [1, 169], strides = [1, 1]} : vector<30x169xf32> to vector<1x169xf32>
    %278 = vector.extract_strided_slice %59 {offsets = [27, 0], sizes = [1, 169], strides = [1, 1]} : vector<30x169xf32> to vector<1x169xf32>
    %279 = tpu.concatenate %277, %278 in 0 : vector<1x169xf32>, vector<1x169xf32> -> vector<2x169xf32>
    %280 = arith.truncf %279 : vector<2x169xf32> to vector<2x169xbf16>
    %c27 = arith.constant 27 : index
    %c0_102 = arith.constant 0 : index
    %c0_103 = arith.constant 0 : index
    %281 = vector.load %arg9[%c27, %c0_102, %c0_103] : memref<30x169x150xbf16, #tpu.memory_space<vmem>>, vector<1x169x150xbf16>
    %282 = vector.shape_cast %281 : vector<1x169x150xbf16> to vector<169x150xbf16>
    %cst_104 = arith.constant dense<0.000000e+00> : vector<2x150xf32>
    %283 = tpu.matmul %280, %282, %cst_104 {dimension_numbers = #tpu.dot_dimension_numbers<[1], [0], [0], [1], [0, 0, 1, 1], [], []>} : vector<2x169xbf16>, vector<169x150xbf16>, vector<2x150xf32> -> vector<2x150xf32>
    %284 = arith.addf %276, %283 : vector<2x150xf32>
    %285 = vector.extract_strided_slice %30 {offsets = [28, 0], sizes = [1, 169], strides = [1, 1]} : vector<30x169xf32> to vector<1x169xf32>
    %286 = vector.extract_strided_slice %59 {offsets = [28, 0], sizes = [1, 169], strides = [1, 1]} : vector<30x169xf32> to vector<1x169xf32>
    %287 = tpu.concatenate %285, %286 in 0 : vector<1x169xf32>, vector<1x169xf32> -> vector<2x169xf32>
    %288 = arith.truncf %287 : vector<2x169xf32> to vector<2x169xbf16>
    %c28 = arith.constant 28 : index
    %c0_105 = arith.constant 0 : index
    %c0_106 = arith.constant 0 : index
    %289 = vector.load %arg9[%c28, %c0_105, %c0_106] : memref<30x169x150xbf16, #tpu.memory_space<vmem>>, vector<1x169x150xbf16>
    %290 = vector.shape_cast %289 : vector<1x169x150xbf16> to vector<169x150xbf16>
    %cst_107 = arith.constant dense<0.000000e+00> : vector<2x150xf32>
    %291 = tpu.matmul %288, %290, %cst_107 {dimension_numbers = #tpu.dot_dimension_numbers<[1], [0], [0], [1], [0, 0, 1, 1], [], []>} : vector<2x169xbf16>, vector<169x150xbf16>, vector<2x150xf32> -> vector<2x150xf32>
    %292 = arith.addf %284, %291 : vector<2x150xf32>
    %293 = vector.extract_strided_slice %30 {offsets = [29, 0], sizes = [1, 169], strides = [1, 1]} : vector<30x169xf32> to vector<1x169xf32>
    %294 = vector.extract_strided_slice %59 {offsets = [29, 0], sizes = [1, 169], strides = [1, 1]} : vector<30x169xf32> to vector<1x169xf32>
    %295 = tpu.concatenate %293, %294 in 0 : vector<1x169xf32>, vector<1x169xf32> -> vector<2x169xf32>
    %296 = arith.truncf %295 : vector<2x169xf32> to vector<2x169xbf16>
    %c29 = arith.constant 29 : index
    %c0_108 = arith.constant 0 : index
    %c0_109 = arith.constant 0 : index
    %297 = vector.load %arg9[%c29, %c0_108, %c0_109] : memref<30x169x150xbf16, #tpu.memory_space<vmem>>, vector<1x169x150xbf16>
    %298 = vector.shape_cast %297 : vector<1x169x150xbf16> to vector<169x150xbf16>
    %cst_110 = arith.constant dense<0.000000e+00> : vector<2x150xf32>
    %299 = tpu.matmul %296, %298, %cst_110 {dimension_numbers = #tpu.dot_dimension_numbers<[1], [0], [0], [1], [0, 0, 1, 1], [], []>} : vector<2x169xbf16>, vector<169x150xbf16>, vector<2x150xf32> -> vector<2x150xf32>
    %300 = arith.addf %292, %299 : vector<2x150xf32>
    %c0_111 = arith.constant 0 : index
    %c0_112 = arith.constant 0 : index
    %301 = vector.load %arg5[%c0_111, %c0_112] : memref<1x150xf32, #tpu.memory_space<vmem>>, vector<1x150xf32>
    %302 = vector.broadcast %301 : vector<1x150xf32> to vector<2x150xf32>
    %303 = arith.addf %300, %302 : vector<2x150xf32>
    %cst_113 = arith.constant dense<0x7F800000> : vector<2xf32>
    %304 = vector.multi_reduction <minimumf>, %303, %cst_113 [1] : vector<2x150xf32> to vector<2xf32>
    %305 = vector.shape_cast %304 : vector<2xf32> to vector<2x1xf32>
    %cst_114 = arith.constant dense<0xFF800000> : vector<2xf32>
    %306 = vector.multi_reduction <maximumf>, %303, %cst_114 [1] : vector<2x150xf32> to vector<2xf32>
    %307 = vector.shape_cast %306 : vector<2xf32> to vector<2x1xf32>
    %c0_i32_115 = arith.constant 0 : i32
    %c13_i32_116 = arith.constant 13 : i32
    %308 = arith.addi %c0_i32_115, %c13_i32_116 : i32
    %c1_i32_117 = arith.constant 1 : i32
    %309:2 = scf.for %arg11 = %c0_i32_115 to %308 step %c1_i32_117 iter_args(%arg12 = %305, %arg13 = %307) -> (vector<2x1xf32>, vector<2x1xf32>)  : i32 {
      %320 = arith.addf %arg12, %arg13 : vector<2x1xf32>
      %cst_126 = arith.constant 5.000000e-01 : f32
      %321 = vector.broadcast %cst_126 : f32 to vector<2x1xf32>
      %322 = arith.mulf %320, %321 : vector<2x1xf32>
      %323 = vector.broadcast %322 : vector<2x1xf32> to vector<2x150xf32>
      %324 = arith.cmpf oge, %303, %323 : vector<2x150xf32>
      %325 = arith.extui %324 : vector<2x150xi1> to vector<2x150xi32>
      %326 = arith.sitofp %325 : vector<2x150xi32> to vector<2x150xf32>
      %cst_127 = arith.constant dense<0.000000e+00> : vector<2xf32>
      %327 = vector.multi_reduction <add>, %326, %cst_127 [1] : vector<2x150xf32> to vector<2xf32>
      %328 = vector.shape_cast %327 : vector<2xf32> to vector<2x1xf32>
      %cst_128 = arith.constant 5.000000e+01 : f32
      %329 = vector.broadcast %cst_128 : f32 to vector<2x1xf32>
      %330 = arith.cmpf oge, %328, %329 : vector<2x1xf32>
      %331 = arith.select %330, %322, %arg12 : vector<2x1xi1>, vector<2x1xf32>
      %332 = arith.select %330, %arg13, %322 : vector<2x1xi1>, vector<2x1xf32>
      scf.yield %331, %332 : vector<2x1xf32>, vector<2x1xf32>
    }
    %310 = vector.broadcast %309#0 : vector<2x1xf32> to vector<2x150xf32>
    %311 = arith.cmpf oge, %303, %310 : vector<2x150xf32>
    %cst_118 = arith.constant 0.000000e+00 : f32
    %312 = vector.broadcast %cst_118 : f32 to vector<2x150xf32>
    %313 = arith.select %311, %303, %312 : vector<2x150xi1>, vector<2x150xf32>
    %c0_119 = arith.constant 0 : index
    %c0_120 = arith.constant 0 : index
    %314 = vector.load %arg6[%c0_119, %c0_120] : memref<150x10xf32, #tpu.memory_space<vmem>>, vector<150x10xf32>
    %cst_121 = arith.constant dense<0.000000e+00> : vector<2x10xf32>
    %315 = tpu.matmul %313, %314, %cst_121 {dimension_numbers = #tpu.dot_dimension_numbers<[1], [0], [0], [1], [0, 0, 1, 1], [], []>} : vector<2x150xf32>, vector<150x10xf32>, vector<2x10xf32> -> vector<2x10xf32>
    %c0_122 = arith.constant 0 : index
    %c0_123 = arith.constant 0 : index
    %316 = vector.load %arg7[%c0_122, %c0_123] : memref<1x10xf32, #tpu.memory_space<vmem>>, vector<1x10xf32>
    %317 = vector.broadcast %316 : vector<1x10xf32> to vector<2x10xf32>
    %318 = arith.addf %315, %317 : vector<2x10xf32>
    %c0_124 = arith.constant 0 : index
    %c0_125 = arith.constant 0 : index
    %319 = vector.load %arg8[%c0_124, %c0_125] : memref<2x10xf32, #tpu.memory_space<vmem>>, vector<2x10xf32>
    tpu.vector_store %arg8[%c0_124, %c0_125], %318 {strides = array<i32>} : memref<2x10xf32, #tpu.memory_space<vmem>>, vector<2x10xf32>,
    return
  }
  func.func @transform_0(%arg0: i32) -> (i32, i32, i32) {
    %c0_i32 = arith.constant 0 : i32
    %c0_i32_0 = arith.constant 0 : i32
    %c0_i32_1 = arith.constant 0 : i32
    %c0_i32_2 = arith.constant 0 : i32
    return %c0_i32, %c0_i32_0, %c0_i32_1 : i32, i32, i32
  }
  func.func @transform_1(%arg0: i32) -> (i32, i32) {
    %c0_i32 = arith.constant 0 : i32
    %c0_i32_0 = arith.constant 0 : i32
    %c0_i32_1 = arith.constant 0 : i32
    return %c0_i32, %c0_i32_0 : i32, i32
  }
  func.func @transform_2(%arg0: i32) -> (i32, i32) {
    %c0_i32 = arith.constant 0 : i32
    %c0_i32_0 = arith.constant 0 : i32
    %c0_i32_1 = arith.constant 0 : i32
    return %c0_i32, %c0_i32_0 : i32, i32
  }
  func.func @transform_4(%arg0: i32) -> (i32, i32) {
    %c0_i32 = arith.constant 0 : i32
    %c0_i32_0 = arith.constant 0 : i32
    %c0_i32_1 = arith.constant 0 : i32
    return %c0_i32, %c0_i32_0 : i32, i32
  }
  func.func @transform_5(%arg0: i32) -> (i32, i32) {
    %c0_i32 = arith.constant 0 : i32
    %c0_i32_0 = arith.constant 0 : i32
    %c0_i32_1 = arith.constant 0 : i32
    return %c0_i32, %c0_i32_0 : i32, i32
  }
  func.func @transform_6(%arg0: i32) -> (i32, i32) {
    %c0_i32 = arith.constant 0 : i32
    %c0_i32_0 = arith.constant 0 : i32
    %c0_i32_1 = arith.constant 0 : i32
    return %c0_i32, %c0_i32_0 : i32, i32
  }
  func.func @transform_7(%arg0: i32) -> (i32, i32) {
    %c0_i32 = arith.constant 0 : i32
    %c0_i32_0 = arith.constant 0 : i32
    %c0_i32_1 = arith.constant 0 : i32
    return %c0_i32, %c0_i32_0 : i32, i32
  }
}

</mosaic_0001>

<llo_original>
// kernel: _lambda_.1
$region0: #{_lambda_.1}
  #allocation0 [shape = 'u32[]', space=smem, size = 0x4, offset = 0x4, fixed_abs, tag = 'smem constant byte address 0x4 - core index']
  #allocation1 [shape = 'u32[72,128]{1,0:T(1,128)}', space=vmem, size = 0x9000, scoped, tag = 'internal scratch']
  #allocation2 [shape = 'bf16[30,169,150]{2,1,0:T(8,128)(2,1)}', space=vmem, size = 0x294000, scoped, tag = 'scratch operand']
  #allocation3 [shape = 's32[1]{0}', space=sflag, size = 0x4, scoped, tag = 'scratch operand']
  #allocation14 [shape = 's32[]', space=sflag, size = 0x4, offset = 0, fixed_abs, tag = 'sflag constant byte address 0x0 - dummy sync flag']
  #allocation15 [shape = 's32[]', space=sflag, size = 0x4, offset = 0, fixed_abs, tag = 'sflag constant byte address 0x0 - dummy sync flag']
  #allocation16 [shape = 'u32[]', space=smem, size = 0x4, offset = 0x44, fixed_abs, tag = 'smem constant byte address 0x44 - assertion arg 0']
  #allocation17 [shape = 'u32[]', space=smem, size = 0x4, offset = 0x48, fixed_abs, tag = 'smem constant byte address 0x48 - assertion arg 1']
  %s0 = inlined_call_operand.vmem [shape: f32[2,9,1024], index: 0, kind: input, shape index: {}]
  %s1 = inlined_call_operand.hbm [shape: f32[30,9], index: 1, kind: input, shape index: {}]
  %s2 = inlined_call_operand.hbm [shape: f32[30,1], index: 2, kind: input, shape index: {}]
  %s3 = inlined_call_operand.hbm [shape: bf16[30,169,150], index: 3, kind: input, shape index: {}]
  %s4 = inlined_call_operand.hbm [shape: f32[1,150], index: 4, kind: input, shape index: {}]
  %s5 = inlined_call_operand.hbm [shape: f32[150,10], index: 5, kind: input, shape index: {}]
  %s6 = inlined_call_operand.hbm [shape: f32[1,10], index: 6, kind: input, shape index: {}]
  %s7 = inlined_call_operand.hbm [shape: f32[2,10], index: 7, kind: output, shape index: {}]
  %s8 = sld [smem:[#allocation0]]
  $region79: #{_lambda_.1} parent=0
    _
  %s10 = ssub.s32 1, %s8
  %s11 = scalar_select 0, %s10, %s8
  $region1: #{_lambda_.1} parent=0
    #allocation4 [shape = 'u8[16384]{0}', space=vmem, size = 0x4000, scoped, tag = 'input window, operand 1, single buffered']
    #allocation5 [shape = 's32[1]{0}', space=sflag, size = 0x4, scoped, tag = 'scoped memory for _lambda_.1']
    #allocation6 [shape = 's32[1]{0}', space=sflag, size = 0x4, scoped, tag = 'scoped memory for _lambda_.1']
    #allocation7 [shape = 'u8[16384]{0}', space=vmem, size = 0x4000, scoped, tag = 'input window, operand 2, single buffered']
    #allocation8 [shape = 's32[1]{0}', space=sflag, size = 0x4, scoped, tag = 'scoped memory for _lambda_.1']
    #allocation9 [shape = 'u8[1024]{0}', space=vmem, size = 0x400, scoped, tag = 'input window, operand 4, single buffered']
    #allocation10 [shape = 'u8[77824]{0}', space=vmem, size = 0x13000, scoped, tag = 'input window, operand 5, single buffered']
    #allocation11 [shape = 's32[1]{0}', space=sflag, size = 0x4, scoped, tag = 'scoped memory for _lambda_.1']
    #allocation12 [shape = 'u8[512]{0}', space=vmem, size = 0x400, scoped, tag = 'input window, operand 6, single buffered']
    #allocation13 [shape = 'u8[1024]{0}', space=vmem, size = 0x400, scoped, tag = 'output window, operand 0, single buffered']
    %12 = vsyncpa [#allocation5], 0
    %13 = vsyncpa [#allocation8], 0
    %14 = vsyncpa [#allocation11], 0
    %15 = vsyncpa [#allocation6], 0
    // Predicated region
    $region2: #{_lambda_.1} parent=1 // pred_check
      _
    $region3: #{_lambda_.1} parent=1 // pred_check_branch
      %17 = sbr.rel (0) target = $region5
    $region4: #{_lambda_.1} parent=1 // pred_region
      _
    $region5: #{_lambda_.1} parent=1 // pred_fallthru
      _
    // Predicated region
    $region6: #{_lambda_.1} parent=1 // pred_check
      _
    $region7: #{_lambda_.1} parent=1 // pred_check_branch
      %19 = sbr.rel (0) target = $region9
    $region8: #{_lambda_.1} parent=1 // pred_region
      %21 = vsyncadd [#allocation5], 0
      %s22 = sshll.u32 %s1, 4
      %s23 = int_to_ptr.hbm [resolvable:$true] %s22
      %s24 = sshll.u32 [#allocation4], 4
      %s25 = int_to_ptr.vmem [resolvable:$true] %s24
      %30 = dma.hbm_to_vmem [thread:$0]  %s23, 512, %s25, [#allocation5], 128, 128, 8
    $region9: #{_lambda_.1} parent=1 // pred_fallthru
      _
    // Predicated region
    $region10: #{_lambda_.1} parent=1 // pred_check
      _
    $region11: #{_lambda_.1} parent=1 // pred_check_branch
      %32 = sbr.rel (0) target = $region13
    $region12: #{_lambda_.1} parent=1 // pred_region
      %34 = vsyncadd [#allocation8], 0
      %s35 = sshll.u32 %s2, 4
      %s36 = int_to_ptr.hbm [resolvable:$true] %s35
      %s37 = sshll.u32 [#allocation7], 4
      %s38 = int_to_ptr.vmem [resolvable:$true] %s37
      %43 = dma.hbm_to_vmem [thread:$0]  %s36, 512, %s38, [#allocation8], 128, 128, 8
    $region13: #{_lambda_.1} parent=1 // pred_fallthru
      _
    // Predicated region
    $region14: #{_lambda_.1} parent=1 // pred_check
      _
    $region15: #{_lambda_.1} parent=1 // pred_check_branch
      %45 = sbr.rel (0) target = $region17
    $region16: #{_lambda_.1} parent=1 // pred_region
      %47 = vsyncadd [#allocation8], 0
      %s49 = sshll.u32 %s4, 4
      %s50 = int_to_ptr.hbm [resolvable:$true] %s49
      %s51 = sshll.u32 [#allocation9], 4
      %s52 = int_to_ptr.vmem [resolvable:$true] %s51
      %54 = dma.hbm_to_vmem [thread:$0]  %s50, 32, %s52, [#allocation8]
    $region17: #{_lambda_.1} parent=1 // pred_fallthru
      _
    // Predicated region
    $region18: #{_lambda_.1} parent=1 // pred_check
      _
    $region19: #{_lambda_.1} parent=1 // pred_check_branch
      %56 = sbr.rel (0) target = $region21
    $region20: #{_lambda_.1} parent=1 // pred_region
      %58 = vsyncadd [#allocation11], 0
      %s59 = sshll.u32 %s5, 4
      %s60 = int_to_ptr.hbm [resolvable:$true] %s59
      %s61 = sshll.u32 [#allocation10], 4
      %s62 = int_to_ptr.vmem [resolvable:$true] %s61
      %67 = dma.hbm_to_vmem [thread:$0]  %s60, 2432, %s62, [#allocation11], 128, 128, 8
    $region21: #{_lambda_.1} parent=1 // pred_fallthru
      _
    // Predicated region
    $region22: #{_lambda_.1} parent=1 // pred_check
      _
    $region23: #{_lambda_.1} parent=1 // pred_check_branch
      %69 = sbr.rel (0) target = $region25
    $region24: #{_lambda_.1} parent=1 // pred_region
      %71 = vsyncadd [#allocation11], 0
      %s73 = sshll.u32 %s6, 4
      %s74 = int_to_ptr.hbm [resolvable:$true] %s73
      %s75 = sshll.u32 [#allocation12], 4
      %s76 = int_to_ptr.vmem [resolvable:$true] %s75
      %78 = dma.hbm_to_vmem [thread:$0]  %s74, 16, %s76, [#allocation11]
    $region25: #{_lambda_.1} parent=1 // pred_fallthru
      _
    // Predicated region
    $region26: #{_lambda_.1} parent=1 // pred_check
      _
    $region27: #{_lambda_.1} parent=1 // pred_check_branch
      %80 = sbr.rel (0) target = $region29
    $region28: #{_lambda_.1} parent=1 // pred_region
      %82 = dma.done [#allocation5], 512
    $region29: #{_lambda_.1} parent=1 // pred_fallthru
      _
    // Predicated region
    $region30: #{_lambda_.1} parent=1 // pred_check
      _
    $region31: #{_lambda_.1} parent=1 // pred_check_branch
      %84 = sbr.rel (0) target = $region33
    $region32: #{_lambda_.1} parent=1 // pred_region
      %86 = dma.done [#allocation8], 512
    $region33: #{_lambda_.1} parent=1 // pred_fallthru
      _
    // Predicated region
    $region34: #{_lambda_.1} parent=1 // pred_check
      _
    $region35: #{_lambda_.1} parent=1 // pred_check_branch
      %88 = sbr.rel (0) target = $region37
    $region36: #{_lambda_.1} parent=1 // pred_region
      %90 = dma.done [#allocation8], 32
    $region37: #{_lambda_.1} parent=1 // pred_fallthru
      _
    // Predicated region
    $region38: #{_lambda_.1} parent=1 // pred_check
      _
    $region39: #{_lambda_.1} parent=1 // pred_check_branch
      %92 = sbr.rel (0) target = $region41
    $region40: #{_lambda_.1} parent=1 // pred_region
      %94 = dma.done [#allocation11], 2432
    $region41: #{_lambda_.1} parent=1 // pred_fallthru
      _
    // Predicated region
    $region42: #{_lambda_.1} parent=1 // pred_check
      _
    $region43: #{_lambda_.1} parent=1 // pred_check_branch
      %96 = sbr.rel (0) target = $region45
    $region44: #{_lambda_.1} parent=1 // pred_region
      %98 = dma.done [#allocation11], 16
    $region45: #{_lambda_.1} parent=1 // pred_fallthru
      _
    // Predicated region
    $region46: #{_lambda_.1} parent=1 // pred_check
      _
    $region47: #{_lambda_.1} parent=1 // pred_check_branch
      %101 = sbr.rel target = $region49
    $region48: #{_lambda_.1} parent=1 // pred_region
      %102 = sst [smem:[#allocation16]] [#allocation15]
      %103 = sst [smem:[#allocation17]] [#allocation14]
    $region49: #{_lambda_.1} parent=1 // pred_fallthru
      _
    %105 = shalt.err (0)
    %s107 = sshll.u32 %s3, 4
    %s108 = int_to_ptr.hbm [resolvable:$true] %s107
    %s109 = sshll.u32 [#allocation2], 4
    %s110 = int_to_ptr.vmem [resolvable:$true] %s109
    %112 = dma.hbm_to_vmem [thread:$0]  %s108, 84480, %s110, [#allocation3]
    %v113 = vld [vmem:[#allocation4] sm:$0xff]
    %v114 = vld [vmem:[#allocation4 + $0x8] sm:$0xff]
    %v115 = vld [vmem:[#allocation4 + $0x10] sm:$0xff]
    %v116 = vld [vmem:[#allocation4 + $0x18] sm:$0x3f]
    %v117 = vld [vmem:[#allocation7] sm:$0xff]
    %v118 = vld [vmem:[#allocation7 + $0x8] sm:$0xff]
    %v119 = vld [vmem:[#allocation7 + $0x10] sm:$0xff]
    %v120 = vld [vmem:[#allocation7 + $0x18] sm:$0x3f]
    %v121 = vld [vmem:[%s0] sm:$0xff]
    %v122 = vld [vmem:[%s0 + $0x8] sm:$0xff]
    %v123 = vld [vmem:[%s0 + $0x10] sm:$0xff]
    %v124 = vld [vmem:[%s0 + $0x18] sm:$0xff]
    %v125 = vld [vmem:[%s0 + $0x20] sm:$0xff]
    %v126 = vld [vmem:[%s0 + $0x28] sm:$0xff]
    %v127 = vld [vmem:[%s0 + $0x30] sm:$0xff]
    %v128 = vld [vmem:[%s0 + $0x38] sm:$0xff]
    %v129 = vld [vmem:[%s0 + $0x40] sm:$0x1]
    %v130 = vld [vmem:[%s0 + $0x48] sm:$0x1]
    %v131 = vld [vmem:[%s0 + $0x50] sm:$0x1]
    %v132 = vld [vmem:[%s0 + $0x58] sm:$0x1]
    %v133 = vld [vmem:[%s0 + $0x60] sm:$0x1]
    %v134 = vld [vmem:[%s0 + $0x68] sm:$0x1]
    %v135 = vld [vmem:[%s0 + $0x70] sm:$0x1]
    %v136 = vld [vmem:[%s0 + $0x78] sm:$0x1]
    %vm137 = vcmask 72704
    %v139 = vsel %vm137, %v113, 0
    %v142 = vsel %vm137, %v114, 0
    %v145 = vsel %vm137, %v115, 0
    %v148 = vsel %vm137, %v116, 0
    %vm150 = vcmask 1040384
    %v152 = vsel %vm150, %v129, 0
    %v155 = vsel %vm150, %v130, 0
    %v158 = vsel %vm150, %v131, 0
    %v161 = vsel %vm150, %v132, 0
    %v164 = vsel %vm150, %v133, 0
    %v167 = vsel %vm150, %v134, 0
    %v170 = vsel %vm150, %v135, 0
    %v173 = vsel %vm150, %v136, 0
    %175 = vmatpush.msra.mxu0 0.0
    %176 = vmatpush.msra.mxu0 0.0
    %177 = vmatpush.msra.mxu0 0.0
    %178 = vmatpush.msra.mxu0 0.0
    %179 = vmatpush.msra.mxu0 0.0
    %180 = vmatpush.msra.mxu0 0.0
    %181 = vmatpush.msra.mxu0 0.0
    %182 = vmatpush.msra.mxu0 0.0
    %183 = vmatpush.msra.mxu0 0.0
    %184 = vmatpush.msra.mxu0 0.0
    %185 = vmatpush.msra.mxu0 0.0
    %186 = vmatpush.msra.mxu0 0.0
    %187 = vmatpush.msra.mxu0 0.0
    %188 = vmatpush.msra.mxu0 0.0
    %189 = vmatpush.msra.mxu0 %v152
    %190 = vmatpush.msra.mxu0 %v121
    %191 = vmatmul.f32.gmra.mxu0 %v139
    %v192 = vpop.f32.mrf.mxu0
    %v193 = vadd.f32 0.0, %v192
    %194 = vmatmul.f32.gmra.mxu0 %v142
    %v195 = vpop.f32.mrf.mxu0
    %v196 = vadd.f32 0.0, %v195
    %197 = vmatmul.f32.gmra.mxu0 %v145
    %v198 = vpop.f32.mrf.mxu0
    %v199 = vadd.f32 0.0, %v198
    %200 = vmatmul.f32.gmra.mxu0 %v148
    %v201 = vpop.f32.mrf.mxu0
    %v202 = vadd.f32 0.0, %v201
    %203 = vdwg.mxu0
    %204 = vmatpush.msra.mxu0 0.0
    %205 = vmatpush.msra.mxu0 0.0
    %206 = vmatpush.msra.mxu0 0.0
    %207 = vmatpush.msra.mxu0 0.0
    %208 = vmatpush.msra.mxu0 0.0
    %209 = vmatpush.msra.mxu0 0.0
    %210 = vmatpush.msra.mxu0 0.0
    %211 = vmatpush.msra.mxu0 0.0
    %212 = vmatpush.msra.mxu0 0.0
    %213 = vmatpush.msra.mxu0 0.0
    %214 = vmatpush.msra.mxu0 0.0
    %215 = vmatpush.msra.mxu0 0.0
    %216 = vmatpush.msra.mxu0 0.0
    %217 = vmatpush.msra.mxu0 0.0
    %218 = vmatpush.msra.mxu0 %v155
    %219 = vmatpush.msra.mxu0 %v122
    %220 = vmatmul.f32.gmra.mxu0 %v139
    %v221 = vpop.f32.mrf.mxu0
    %v222 = vadd.f32 0.0, %v221
    %223 = vmatmul.f32.gmra.mxu0 %v142
    %v224 = vpop.f32.mrf.mxu0
    %v225 = vadd.f32 0.0, %v224
    %226 = vmatmul.f32.gmra.mxu0 %v145
    %v227 = vpop.f32.mrf.mxu0
    %v228 = vadd.f32 0.0, %v227
    %229 = vmatmul.f32.gmra.mxu0 %v148
    %v230 = vpop.f32.mrf.mxu0
    %v231 = vadd.f32 0.0, %v230
    %232 = vdwg.mxu0
    %233 = vmatpush.msra.mxu0 0.0
    %234 = vmatpush.msra.mxu0 0.0
    %235 = vmatpush.msra.mxu0 0.0
    %236 = vmatpush.msra.mxu0 0.0
    %237 = vmatpush.msra.mxu0 0.0
    %238 = vmatpush.msra.mxu0 0.0
    %239 = vmatpush.msra.mxu0 0.0
    %240 = vmatpush.msra.mxu0 0.0
    %241 = vmatpush.msra.mxu0 0.0
    %242 = vmatpush.msra.mxu0 0.0
    %243 = vmatpush.msra.mxu0 0.0
    %244 = vmatpush.msra.mxu0 0.0
    %245 = vmatpush.msra.mxu0 0.0
    %246 = vmatpush.msra.mxu0 0.0
    %247 = vmatpush.msra.mxu0 %v158
    %248 = vmatpush.msra.mxu0 %v123
    %249 = vmatmul.f32.gmra.mxu0 %v139
    %v250 = vpop.f32.mrf.mxu0
    %v251 = vadd.f32 0.0, %v250
    %252 = vmatmul.f32.gmra.mxu0 %v142
    %v253 = vpop.f32.mrf.mxu0
    %v254 = vadd.f32 0.0, %v253
    %255 = vmatmul.f32.gmra.mxu0 %v145
    %v256 = vpop.f32.mrf.mxu0
    %v257 = vadd.f32 0.0, %v256
    %258 = vmatmul.f32.gmra.mxu0 %v148
    %v259 = vpop.f32.mrf.mxu0
    %v260 = vadd.f32 0.0, %v259
    %261 = vdwg.mxu0
    %262 = vmatpush.msra.mxu0 0.0
    %263 = vmatpush.msra.mxu0 0.0
    %264 = vmatpush.msra.mxu0 0.0
    %265 = vmatpush.msra.mxu0 0.0
    %266 = vmatpush.msra.mxu0 0.0
    %267 = vmatpush.msra.mxu0 0.0
    %268 = vmatpush.msra.mxu0 0.0
    %269 = vmatpush.msra.mxu0 0.0
    %270 = vmatpush.msra.mxu0 0.0
    %271 = vmatpush.msra.mxu0 0.0
    %272 = vmatpush.msra.mxu0 0.0
    %273 = vmatpush.msra.mxu0 0.0
    %274 = vmatpush.msra.mxu0 0.0
    %275 = vmatpush.msra.mxu0 0.0
    %276 = vmatpush.msra.mxu0 %v161
    %277 = vmatpush.msra.mxu0 %v124
    %278 = vmatmul.f32.gmra.mxu0 %v139
    %v279 = vpop.f32.mrf.mxu0
    %v280 = vadd.f32 0.0, %v279
    %281 = vmatmul.f32.gmra.mxu0 %v142
    %v282 = vpop.f32.mrf.mxu0
    %v283 = vadd.f32 0.0, %v282
    %284 = vmatmul.f32.gmra.mxu0 %v145
    %v285 = vpop.f32.mrf.mxu0
    %v286 = vadd.f32 0.0, %v285
    %287 = vmatmul.f32.gmra.mxu0 %v148
    %v288 = vpop.f32.mrf.mxu0
    %v289 = vadd.f32 0.0, %v288
    %290 = vdwg.mxu0
    %291 = vmatpush.msra.mxu0 0.0
    %292 = vmatpush.msra.mxu0 0.0
    %293 = vmatpush.msra.mxu0 0.0
    %294 = vmatpush.msra.mxu0 0.0
    %295 = vmatpush.msra.mxu0 0.0
    %296 = vmatpush.msra.mxu0 0.0
    %297 = vmatpush.msra.mxu0 0.0
    %298 = vmatpush.msra.mxu0 0.0
    %299 = vmatpush.msra.mxu0 0.0
    %300 = vmatpush.msra.mxu0 0.0
    %301 = vmatpush.msra.mxu0 0.0
    %302 = vmatpush.msra.mxu0 0.0
    %303 = vmatpush.msra.mxu0 0.0
    %304 = vmatpush.msra.mxu0 0.0
    %305 = vmatpush.msra.mxu0 %v164
    %306 = vmatpush.msra.mxu0 %v125
    %307 = vmatmul.f32.gmra.mxu0 %v139
    %v308 = vpop.f32.mrf.mxu0
    %v309 = vadd.f32 0.0, %v308
    %310 = vmatmul.f32.gmra.mxu0 %v142
    %v311 = vpop.f32.mrf.mxu0
    %v312 = vadd.f32 0.0, %v311
    %313 = vmatmul.f32.gmra.mxu0 %v145
    %v314 = vpop.f32.mrf.mxu0
    %v315 = vadd.f32 0.0, %v314
    %316 = vmatmul.f32.gmra.mxu0 %v148
    %v317 = vpop.f32.mrf.mxu0
    %v318 = vadd.f32 0.0, %v317
    %319 = vdwg.mxu0
    %320 = vmatpush.msra.mxu0 0.0
    %321 = vmatpush.msra.mxu0 0.0
    %322 = vmatpush.msra.mxu0 0.0
    %323 = vmatpush.msra.mxu0 0.0
    %324 = vmatpush.msra.mxu0 0.0
    %325 = vmatpush.msra.mxu0 0.0
    %326 = vmatpush.msra.mxu0 0.0
    %327 = vmatpush.msra.mxu0 0.0
    %328 = vmatpush.msra.mxu0 0.0
    %329 = vmatpush.msra.mxu0 0.0
    %330 = vmatpush.msra.mxu0 0.0
    %331 = vmatpush.msra.mxu0 0.0
    %332 = vmatpush.msra.mxu0 0.0
    %333 = vmatpush.msra.mxu0 0.0
    %334 = vmatpush.msra.mxu0 %v167
    %335 = vmatpush.msra.mxu0 %v126
    %336 = vmatmul.f32.gmra.mxu0 %v139
    %v337 = vpop.f32.mrf.mxu0
    %v338 = vadd.f32 0.0, %v337
    %339 = vmatmul.f32.gmra.mxu0 %v142
    %v340 = vpop.f32.mrf.mxu0
    %v341 = vadd.f32 0.0, %v340
    %342 = vmatmul.f32.gmra.mxu0 %v145
    %v343 = vpop.f32.mrf.mxu0
    %v344 = vadd.f32 0.0, %v343
    %345 = vmatmul.f32.gmra.mxu0 %v148
    %v346 = vpop.f32.mrf.mxu0
    %v347 = vadd.f32 0.0, %v346
    %348 = vdwg.mxu0
    %349 = vmatpush.msra.mxu0 0.0
    %350 = vmatpush.msra.mxu0 0.0
    %351 = vmatpush.msra.mxu0 0.0
    %352 = vmatpush.msra.mxu0 0.0
    %353 = vmatpush.msra.mxu0 0.0
    %354 = vmatpush.msra.mxu0 0.0
    %355 = vmatpush.msra.mxu0 0.0
    %356 = vmatpush.msra.mxu0 0.0
    %357 = vmatpush.msra.mxu0 0.0
    %358 = vmatpush.msra.mxu0 0.0
    %359 = vmatpush.msra.mxu0 0.0
    %360 = vmatpush.msra.mxu0 0.0
    %361 = vmatpush.msra.mxu0 0.0
    %362 = vmatpush.msra.mxu0 0.0
    %363 = vmatpush.msra.mxu0 %v170
    %364 = vmatpush.msra.mxu0 %v127
    %365 = vmatmul.f32.gmra.mxu0 %v139
    %v366 = vpop.f32.mrf.mxu0
    %v367 = vadd.f32 0.0, %v366
    %368 = vmatmul.f32.gmra.mxu0 %v142
    %v369 = vpop.f32.mrf.mxu0
    %v370 = vadd.f32 0.0, %v369
    %371 = vmatmul.f32.gmra.mxu0 %v145
    %v372 = vpop.f32.mrf.mxu0
    %v373 = vadd.f32 0.0, %v372
    %374 = vmatmul.f32.gmra.mxu0 %v148
    %v375 = vpop.f32.mrf.mxu0
    %v376 = vadd.f32 0.0, %v375
    %377 = vdwg.mxu0
    %378 = vmatpush.msra.mxu0 0.0
    %379 = vmatpush.msra.mxu0 0.0
    %380 = vmatpush.msra.mxu0 0.0
    %381 = vmatpush.msra.mxu0 0.0
    %382 = vmatpush.msra.mxu0 0.0
    %383 = vmatpush.msra.mxu0 0.0
    %384 = vmatpush.msra.mxu0 0.0
    %385 = vmatpush.msra.mxu0 0.0
    %386 = vmatpush.msra.mxu0 0.0
    %387 = vmatpush.msra.mxu0 0.0
    %388 = vmatpush.msra.mxu0 0.0
    %389 = vmatpush.msra.mxu0 0.0
    %390 = vmatpush.msra.mxu0 0.0
    %391 = vmatpush.msra.mxu0 0.0
    %392 = vmatpush.msra.mxu0 %v173
    %393 = vmatpush.msra.mxu0 %v128
    %394 = vmatmul.f32.gmra.mxu0 %v139
    %v395 = vpop.f32.mrf.mxu0
    %v396 = vadd.f32 0.0, %v395
    %397 = vmatmul.f32.gmra.mxu0 %v142
    %v398 = vpop.f32.mrf.mxu0
    %v399 = vadd.f32 0.0, %v398
    %400 = vmatmul.f32.gmra.mxu0 %v145
    %v401 = vpop.f32.mrf.mxu0
    %v402 = vadd.f32 0.0, %v401
    %403 = vmatmul.f32.gmra.mxu0 %v148
    %v404 = vpop.f32.mrf.mxu0
    %v405 = vadd.f32 0.0, %v404
    %406 = vdwg.mxu0
    %v407 = vmax.f32 %v193, %v251
    %v408 = vmax.f32 %v222, %v280
    %v409 = vmax.f32 %v196, %v254
    %v410 = vmax.f32 %v225, %v283
    %v411 = vmax.f32 %v199, %v257
    %v412 = vmax.f32 %v228, %v286
    %v413 = vmax.f32 %v202, %v260
    %v414 = vmax.f32 %v231, %v289
    %v415 = vmax.f32 %v309, %v367
    %v416 = vmax.f32 %v338, %v396
    %v417 = vmax.f32 %v312, %v370
    %v418 = vmax.f32 %v341, %v399
    %v419 = vmax.f32 %v315, %v373
    %v420 = vmax.f32 %v344, %v402
    %v421 = vmax.f32 %v318, %v376
    %v422 = vmax.f32 %v347, %v405
    %v423 = vmax.f32 %v407, %v415
    %v424 = vmax.f32 %v408, %v416
    %v425 = vmax.f32 %v409, %v417
    %v426 = vmax.f32 %v410, %v418
    %v427 = vmax.f32 %v411, %v419
    %v428 = vmax.f32 %v412, %v420
    %v429 = vmax.f32 %v413, %v421
    %v430 = vmax.f32 %v414, %v422
    %432 = vset.pattern.permute.xlu0 0
    %433 = vperm.xlu0 %432, %v117
    %v434 = vpop.permute.xlu0 %433
    %437 = vset.pattern.permute.xlu0 0
    %438 = vperm.xlu0 %437, %v118
    %v439 = vpop.permute.xlu0 %438
    %442 = vset.pattern.permute.xlu0 0
    %443 = vperm.xlu0 %442, %v119
    %v444 = vpop.permute.xlu0 %443
    %447 = vset.pattern.permute.xlu0 0
    %448 = vperm.xlu0 %447, %v120
    %v449 = vpop.permute.xlu0 %448
    %v451 = vadd.f32 %v423, %v434
    %v452 = vadd.f32 %v424, %v434
    %v453 = vadd.f32 %v425, %v439
    %v454 = vadd.f32 %v426, %v439
    %v455 = vadd.f32 %v427, %v444
    %v456 = vadd.f32 %v428, %v444
    %v457 = vadd.f32 %v429, %v449
    %v458 = vadd.f32 %v430, %v449
    %vm459 = vcmask 334848
    %v460 = vsel %vm459, %v452, inf
    %v461 = vsel %vm459, %v454, inf
    %v462 = vmin.f32 %v451, %v455
    %v463 = vsel %vm459, %v456, inf
    %v464 = vmin.f32 %v460, %v463
    %vm465 = vcmask 1045504
    %v466 = vsel %vm465, %v457, inf
    %v467 = vmin.f32 %v453, %v466
    %vm468 = vcmask 332800
    %v469 = vsel %vm468, %v458, inf
    %v470 = vmin.f32 %v461, %v469
    %v471 = vmin.f32 %v462, %v464
    %v472 = vmin.f32 %v467, %v470
    %v473 = vmin.f32 %v471, %v472
    %474 = vmin.xlane.f32.xlu0 %v473
    %v475 = vpop.xlane.xlu0 %474
    %v476 = vrot.slane %v475, 4
    %v477 = vmin.f32 %v475, %v476
    %v478 = vrot.slane %v477, 2
    %v479 = vmin.f32 %v477, %v478
    %v480 = vrot.slane %v479, 1
    %v481 = vmin.f32 %v479, %v480
    %s482 = vtos %v481
    %v483 = vstv %s482
    %v484 = vsel %vm459, %v452, -inf
    %v485 = vsel %vm459, %v454, -inf
    %v486 = vmax.f32 %v451, %v455
    %v487 = vsel %vm459, %v456, -inf
    %v488 = vmax.f32 %v484, %v487
    %v489 = vsel %vm465, %v457, -inf
    %v490 = vmax.f32 %v453, %v489
    %v491 = vsel %vm468, %v458, -inf
    %v492 = vmax.f32 %v485, %v491
    %v493 = vmax.f32 %v486, %v488
    %v494 = vmax.f32 %v490, %v492
    %v495 = vmax.f32 %v493, %v494
    %496 = vmax.xlane.f32.xlu0 %v495
    %v497 = vpop.xlane.xlu0 %496
    %v498 = vrot.slane %v497, 4
    %v499 = vmax.f32 %v497, %v498
    %v500 = vrot.slane %v499, 2
    %v501 = vmax.f32 %v499, %v500
    %v502 = vrot.slane %v501, 1
    %v503 = vmax.f32 %v501, %v502
    %s504 = vtos %v503
    %v505 = vstv %s504
    loop: start=0, step=1, limit=13
    $region50: #{_lambda_.1} parent=1 // loop_pre_header
      _
    $region51: #{_lambda_.1} parent=1 // loop_header
      %s507 = sphi 0, %s511
      %p508 = scmp.ge.s32.totalorder %s507, 13
      %v512 = vphi %v483, %v563
      %v513 = vphi %v505, %v564
    $region52: #{_lambda_.1} parent=1 // loop_header_branch
      %510 = sbr.rel (%p508) target = $region56
    $region53: #{_lambda_.1} parent=1 // loop_body
      %v514 = vadd.f32 %v512, %v513
      %v515 = vmul.f32 %v514, 0.5
      %vm516 = vcmp.ge.f32.partialorder %v451, %v515
      %vm517 = vcmp.ge.f32.partialorder %v452, %v515
      %vm518 = vcmp.ge.f32.partialorder %v453, %v515
      %vm519 = vcmp.ge.f32.partialorder %v454, %v515
      %vm520 = vcmp.ge.f32.partialorder %v455, %v515
      %vm521 = vcmp.ge.f32.partialorder %v456, %v515
      %vm522 = vcmp.ge.f32.partialorder %v457, %v515
      %vm523 = vcmp.ge.f32.partialorder %v458, %v515
      %v524 = vsel %vm516, 1, 0
      %v525 = vsel %vm517, 1, 0
      %v526 = vsel %vm518, 1, 0
      %v527 = vsel %vm519, 1, 0
      %v528 = vsel %vm520, 1, 0
      %v529 = vsel %vm521, 1, 0
      %v530 = vsel %vm522, 1, 0
      %v531 = vsel %vm523, 1, 0
      %v532 = vcvt.s32.f32 %v524
      %v533 = vcvt.s32.f32 %v525
      %v534 = vcvt.s32.f32 %v526
      %v535 = vcvt.s32.f32 %v527
      %v536 = vcvt.s32.f32 %v528
      %v537 = vcvt.s32.f32 %v529
      %v538 = vcvt.s32.f32 %v530
      %v539 = vcvt.s32.f32 %v531
      %v540 = vsel %vm459, %v533, 0.0
      %v541 = vadd.f32 %v532, %v540
      %v542 = vadd.f32 %v541, %v534
      %v543 = vsel %vm459, %v535, 0.0
      %v544 = vadd.f32 %v542, %v543
      %v545 = vadd.f32 %v544, %v536
      %v546 = vsel %vm459, %v537, 0.0
      %v547 = vadd.f32 %v545, %v546
      %v548 = vsel %vm465, %v538, 0.0
      %v549 = vadd.f32 %v547, %v548
      %v550 = vsel %vm468, %v539, 0.0
      %v551 = vadd.f32 %v549, %v550
      %552 = vadd.xlane.f32.xlu0 %v551
      %v553 = vpop.xlane.xlu0 %552
      %v554 = vrot.slane %v553, 4
      %v555 = vadd.f32 %v553, %v554
      %v556 = vrot.slane %v555, 2
      %v557 = vadd.f32 %v555, %v556
      %v558 = vrot.slane %v557, 1
      %v559 = vadd.f32 %v557, %v558
      %s560 = vtos %v559
      %v561 = vstv %s560
      %vm562 = vcmp.ge.f32.partialorder %v561, 400.0
      %v563 = vsel %vm562, %v515, %v512
      %v564 = vsel %vm562, %v513, %v515
    $region54: #{_lambda_.1} parent=1 // loop_footer
      %s511 = sadd.s32 1, %s507
    $region55: #{_lambda_.1} parent=1 // loop_footer_branch
      %506 = sbr.rel target = $region51
    $region56: #{_lambda_.1} parent=1 // loop_exit
      _
    %vm565 = vcmp.ge.f32.partialorder %v451, %v512
    %vm566 = vcmp.ge.f32.partialorder %v452, %v512
    %vm567 = vcmp.ge.f32.partialorder %v453, %v512
    %vm568 = vcmp.ge.f32.partialorder %v454, %v512
    %vm569 = vcmp.ge.f32.partialorder %v455, %v512
    %vm570 = vcmp.ge.f32.partialorder %v456, %v512
    %vm571 = vcmp.ge.f32.partialorder %v457, %v512
    %vm572 = vcmp.ge.f32.partialorder %v458, %v512
    %v573 = vsel %vm565, %v451, 0.0
    %v574 = vsel %vm566, %v452, 0.0
    %v575 = vsel %vm567, %v453, 0.0
    %v576 = vsel %vm568, %v454, 0.0
    %v577 = vsel %vm569, %v455, 0.0
    %v578 = vsel %vm570, %v456, 0.0
    %v579 = vsel %vm571, %v457, 0.0
    %v580 = vsel %vm572, %v458, 0.0
    %s581 = scalar_lea.vmem %s0, 128
    %v582 = vld [vmem:[%s581] sm:$0xff]
    %v583 = vld [vmem:[%s581 + $0x8] sm:$0xff]
    %v584 = vld [vmem:[%s581 + $0x10] sm:$0xff]
    %v585 = vld [vmem:[%s581 + $0x18] sm:$0xff]
    %v586 = vld [vmem:[%s581 + $0x20] sm:$0xff]
    %v587 = vld [vmem:[%s581 + $0x28] sm:$0xff]
    %v588 = vld [vmem:[%s581 + $0x30] sm:$0xff]
    %v589 = vld [vmem:[%s581 + $0x38] sm:$0xff]
    %v590 = vld [vmem:[%s581 + $0x40] sm:$0x1]
    %v591 = vld [vmem:[%s581 + $0x48] sm:$0x1]
    %v592 = vld [vmem:[%s581 + $0x50] sm:$0x1]
    %v593 = vld [vmem:[%s581 + $0x58] sm:$0x1]
    %v594 = vld [vmem:[%s581 + $0x60] sm:$0x1]
    %v595 = vld [vmem:[%s581 + $0x68] sm:$0x1]
    %v596 = vld [vmem:[%s581 + $0x70] sm:$0x1]
    %v597 = vld [vmem:[%s581 + $0x78] sm:$0x1]
    %v599 = vsel %vm150, %v590, 0
    %v602 = vsel %vm150, %v591, 0
    %v605 = vsel %vm150, %v592, 0
    %v608 = vsel %vm150, %v593, 0
    %v611 = vsel %vm150, %v594, 0
    %v614 = vsel %vm150, %v595, 0
    %v617 = vsel %vm150, %v596, 0
    %v620 = vsel %vm150, %v597, 0
    %622 = vmatpush.msra.mxu0 0.0
    %623 = vmatpush.msra.mxu0 0.0
    %624 = vmatpush.msra.mxu0 0.0
    %625 = vmatpush.msra.mxu0 0.0
    %626 = vmatpush.msra.mxu0 0.0
    %627 = vmatpush.msra.mxu0 0.0
    %628 = vmatpush.msra.mxu0 0.0
    %629 = vmatpush.msra.mxu0 0.0
    %630 = vmatpush.msra.mxu0 0.0
    %631 = vmatpush.msra.mxu0 0.0
    %632 = vmatpush.msra.mxu0 0.0
    %633 = vmatpush.msra.mxu0 0.0
    %634 = vmatpush.msra.mxu0 0.0
    %635 = vmatpush.msra.mxu0 0.0
    %636 = vmatpush.msra.mxu0 %v599
    %637 = vmatpush.msra.mxu0 %v582
    %638 = vmatmul.f32.gmra.mxu0 %v139
    %v639 = vpop.f32.mrf.mxu0
    %v640 = vadd.f32 0.0, %v639
    %641 = vmatmul.f32.gmra.mxu0 %v142
    %v642 = vpop.f32.mrf.mxu0
    %v643 = vadd.f32 0.0, %v642
    %644 = vmatmul.f32.gmra.mxu0 %v145
    %v645 = vpop.f32.mrf.mxu0
    %v646 = vadd.f32 0.0, %v645
    %647 = vmatmul.f32.gmra.mxu0 %v148
    %v648 = vpop.f32.mrf.mxu0
    %v649 = vadd.f32 0.0, %v648
    %650 = vdwg.mxu0
    %651 = vmatpush.msra.mxu0 0.0
    %652 = vmatpush.msra.mxu0 0.0
    %653 = vmatpush.msra.mxu0 0.0
    %654 = vmatpush.msra.mxu0 0.0
    %655 = vmatpush.msra.mxu0 0.0
    %656 = vmatpush.msra.mxu0 0.0
    %657 = vmatpush.msra.mxu0 0.0
    %658 = vmatpush.msra.mxu0 0.0
    %659 = vmatpush.msra.mxu0 0.0
    %660 = vmatpush.msra.mxu0 0.0
    %661 = vmatpush.msra.mxu0 0.0
    %662 = vmatpush.msra.mxu0 0.0
    %663 = vmatpush.msra.mxu0 0.0
    %664 = vmatpush.msra.mxu0 0.0
    %665 = vmatpush.msra.mxu0 %v602
    %666 = vmatpush.msra.mxu0 %v583
    %667 = vmatmul.f32.gmra.mxu0 %v139
    %v668 = vpop.f32.mrf.mxu0
    %v669 = vadd.f32 0.0, %v668
    %670 = vmatmul.f32.gmra.mxu0 %v142
    %v671 = vpop.f32.mrf.mxu0
    %v672 = vadd.f32 0.0, %v671
    %673 = vmatmul.f32.gmra.mxu0 %v145
    %v674 = vpop.f32.mrf.mxu0
    %v675 = vadd.f32 0.0, %v674
    %676 = vmatmul.f32.gmra.mxu0 %v148
    %v677 = vpop.f32.mrf.mxu0
    %v678 = vadd.f32 0.0, %v677
    %679 = vdwg.mxu0
    %680 = vmatpush.msra.mxu0 0.0
    %681 = vmatpush.msra.mxu0 0.0
    %682 = vmatpush.msra.mxu0 0.0
    %683 = vmatpush.msra.mxu0 0.0
    %684 = vmatpush.msra.mxu0 0.0
    %685 = vmatpush.msra.mxu0 0.0
    %686 = vmatpush.msra.mxu0 0.0
    %687 = vmatpush.msra.mxu0 0.0
    %688 = vmatpush.msra.mxu0 0.0
    %689 = vmatpush.msra.mxu0 0.0
    %690 = vmatpush.msra.mxu0 0.0
    %691 = vmatpush.msra.mxu0 0.0
    %692 = vmatpush.msra.mxu0 0.0
    %693 = vmatpush.msra.mxu0 0.0
    %694 = vmatpush.msra.mxu0 %v605
    %695 = vmatpush.msra.mxu0 %v584
    %696 = vmatmul.f32.gmra.mxu0 %v139
    %v697 = vpop.f32.mrf.mxu0
    %v698 = vadd.f32 0.0, %v697
    %699 = vmatmul.f32.gmra.mxu0 %v142
    %v700 = vpop.f32.mrf.mxu0
    %v701 = vadd.f32 0.0, %v700
    %702 = vmatmul.f32.gmra.mxu0 %v145
    %v703 = vpop.f32.mrf.mxu0
    %v704 = vadd.f32 0.0, %v703
    %705 = vmatmul.f32.gmra.mxu0 %v148
    %v706 = vpop.f32.mrf.mxu0
    %v707 = vadd.f32 0.0, %v706
    %708 = vdwg.mxu0
    %709 = vmatpush.msra.mxu0 0.0
    %710 = vmatpush.msra.mxu0 0.0
    %711 = vmatpush.msra.mxu0 0.0
    %712 = vmatpush.msra.mxu0 0.0
    %713 = vmatpush.msra.mxu0 0.0
    %714 = vmatpush.msra.mxu0 0.0
    %715 = vmatpush.msra.mxu0 0.0
    %716 = vmatpush.msra.mxu0 0.0
    %717 = vmatpush.msra.mxu0 0.0
    %718 = vmatpush.msra.mxu0 0.0
    %719 = vmatpush.msra.mxu0 0.0
    %720 = vmatpush.msra.mxu0 0.0
    %721 = vmatpush.msra.mxu0 0.0
    %722 = vmatpush.msra.mxu0 0.0
    %723 = vmatpush.msra.mxu0 %v608
    %724 = vmatpush.msra.mxu0 %v585
    %725 = vmatmul.f32.gmra.mxu0 %v139
    %v726 = vpop.f32.mrf.mxu0
    %v727 = vadd.f32 0.0, %v726
    %728 = vmatmul.f32.gmra.mxu0 %v142
    %v729 = vpop.f32.mrf.mxu0
    %v730 = vadd.f32 0.0, %v729
    %731 = vmatmul.f32.gmra.mxu0 %v145
    %v732 = vpop.f32.mrf.mxu0
    %v733 = vadd.f32 0.0, %v732
    %734 = vmatmul.f32.gmra.mxu0 %v148
    %v735 = vpop.f32.mrf.mxu0
    %v736 = vadd.f32 0.0, %v735
    %737 = vdwg.mxu0
    %738 = vmatpush.msra.mxu0 0.0
    %739 = vmatpush.msra.mxu0 0.0
    %740 = vmatpush.msra.mxu0 0.0
    %741 = vmatpush.msra.mxu0 0.0
    %742 = vmatpush.msra.mxu0 0.0
    %743 = vmatpush.msra.mxu0 0.0
    %744 = vmatpush.msra.mxu0 0.0
    %745 = vmatpush.msra.mxu0 0.0
    %746 = vmatpush.msra.mxu0 0.0
    %747 = vmatpush.msra.mxu0 0.0
    %748 = vmatpush.msra.mxu0 0.0
    %749 = vmatpush.msra.mxu0 0.0
    %750 = vmatpush.msra.mxu0 0.0
    %751 = vmatpush.msra.mxu0 0.0
    %752 = vmatpush.msra.mxu0 %v611
    %753 = vmatpush.msra.mxu0 %v586
    %754 = vmatmul.f32.gmra.mxu0 %v139
    %v755 = vpop.f32.mrf.mxu0
    %v756 = vadd.f32 0.0, %v755
    %757 = vmatmul.f32.gmra.mxu0 %v142
    %v758 = vpop.f32.mrf.mxu0
    %v759 = vadd.f32 0.0, %v758
    %760 = vmatmul.f32.gmra.mxu0 %v145
    %v761 = vpop.f32.mrf.mxu0
    %v762 = vadd.f32 0.0, %v761
    %763 = vmatmul.f32.gmra.mxu0 %v148
    %v764 = vpop.f32.mrf.mxu0
    %v765 = vadd.f32 0.0, %v764
    %766 = vdwg.mxu0
    %767 = vmatpush.msra.mxu0 0.0
    %768 = vmatpush.msra.mxu0 0.0
    %769 = vmatpush.msra.mxu0 0.0
    %770 = vmatpush.msra.mxu0 0.0
    %771 = vmatpush.msra.mxu0 0.0
    %772 = vmatpush.msra.mxu0 0.0
    %773 = vmatpush.msra.mxu0 0.0
    %774 = vmatpush.msra.mxu0 0.0
    %775 = vmatpush.msra.mxu0 0.0
    %776 = vmatpush.msra.mxu0 0.0
    %777 = vmatpush.msra.mxu0 0.0
    %778 = vmatpush.msra.mxu0 0.0
    %779 = vmatpush.msra.mxu0 0.0
    %780 = vmatpush.msra.mxu0 0.0
    %781 = vmatpush.msra.mxu0 %v614
    %782 = vmatpush.msra.mxu0 %v587
    %783 = vmatmul.f32.gmra.mxu0 %v139
    %v784 = vpop.f32.mrf.mxu0
    %v785 = vadd.f32 0.0, %v784
    %786 = vmatmul.f32.gmra.mxu0 %v142
    %v787 = vpop.f32.mrf.mxu0
    %v788 = vadd.f32 0.0, %v787
    %789 = vmatmul.f32.gmra.mxu0 %v145
    %v790 = vpop.f32.mrf.mxu0
    %v791 = vadd.f32 0.0, %v790
    %792 = vmatmul.f32.gmra.mxu0 %v148
    %v793 = vpop.f32.mrf.mxu0
    %v794 = vadd.f32 0.0, %v793
    %795 = vdwg.mxu0
    %796 = vmatpush.msra.mxu0 0.0
    %797 = vmatpush.msra.mxu0 0.0
    %798 = vmatpush.msra.mxu0 0.0
    %799 = vmatpush.msra.mxu0 0.0
    %800 = vmatpush.msra.mxu0 0.0
    %801 = vmatpush.msra.mxu0 0.0
    %802 = vmatpush.msra.mxu0 0.0
    %803 = vmatpush.msra.mxu0 0.0
    %804 = vmatpush.msra.mxu0 0.0
    %805 = vmatpush.msra.mxu0 0.0
    %806 = vmatpush.msra.mxu0 0.0
    %807 = vmatpush.msra.mxu0 0.0
    %808 = vmatpush.msra.mxu0 0.0
    %809 = vmatpush.msra.mxu0 0.0
    %810 = vmatpush.msra.mxu0 %v617
    %811 = vmatpush.msra.mxu0 %v588
    %812 = vmatmul.f32.gmra.mxu0 %v139
    %v813 = vpop.f32.mrf.mxu0
    %v814 = vadd.f32 0.0, %v813
    %815 = vmatmul.f32.gmra.mxu0 %v142
    %v816 = vpop.f32.mrf.mxu0
    %v817 = vadd.f32 0.0, %v816
    %818 = vmatmul.f32.gmra.mxu0 %v145
    %v819 = vpop.f32.mrf.mxu0
    %v820 = vadd.f32 0.0, %v819
    %821 = vmatmul.f32.gmra.mxu0 %v148
    %v822 = vpop.f32.mrf.mxu0
    %v823 = vadd.f32 0.0, %v822
    %824 = vdwg.mxu0
    %825 = vmatpush.msra.mxu0 0.0
    %826 = vmatpush.msra.mxu0 0.0
    %827 = vmatpush.msra.mxu0 0.0
    %828 = vmatpush.msra.mxu0 0.0
    %829 = vmatpush.msra.mxu0 0.0
    %830 = vmatpush.msra.mxu0 0.0
    %831 = vmatpush.msra.mxu0 0.0
    %832 = vmatpush.msra.mxu0 0.0
    %833 = vmatpush.msra.mxu0 0.0
    %834 = vmatpush.msra.mxu0 0.0
    %835 = vmatpush.msra.mxu0 0.0
    %836 = vmatpush.msra.mxu0 0.0
    %837 = vmatpush.msra.mxu0 0.0
    %838 = vmatpush.msra.mxu0 0.0
    %839 = vmatpush.msra.mxu0 %v620
    %840 = vmatpush.msra.mxu0 %v589
    %841 = vmatmul.f32.gmra.mxu0 %v139
    %v842 = vpop.f32.mrf.mxu0
    %v843 = vadd.f32 0.0, %v842
    %844 = vmatmul.f32.gmra.mxu0 %v142
    %v845 = vpop.f32.mrf.mxu0
    %v846 = vadd.f32 0.0, %v845
    %847 = vmatmul.f32.gmra.mxu0 %v145
    %v848 = vpop.f32.mrf.mxu0
    %v849 = vadd.f32 0.0, %v848
    %850 = vmatmul.f32.gmra.mxu0 %v148
    %v851 = vpop.f32.mrf.mxu0
    %v852 = vadd.f32 0.0, %v851
    %853 = vdwg.mxu0
    %v854 = vmax.f32 %v640, %v698
    %v855 = vmax.f32 %v669, %v727
    %v856 = vmax.f32 %v643, %v701
    %v857 = vmax.f32 %v672, %v730
    %v858 = vmax.f32 %v646, %v704
    %v859 = vmax.f32 %v675, %v733
    %v860 = vmax.f32 %v649, %v707
    %v861 = vmax.f32 %v678, %v736
    %v862 = vmax.f32 %v756, %v814
    %v863 = vmax.f32 %v785, %v843
    %v864 = vmax.f32 %v759, %v817
    %v865 = vmax.f32 %v788, %v846
    %v866 = vmax.f32 %v762, %v820
    %v867 = vmax.f32 %v791, %v849
    %v868 = vmax.f32 %v765, %v823
    %v869 = vmax.f32 %v794, %v852
    %v870 = vmax.f32 %v854, %v862
    %v871 = vmax.f32 %v855, %v863
    %v872 = vmax.f32 %v856, %v864
    %v873 = vmax.f32 %v857, %v865
    %v874 = vmax.f32 %v858, %v866
    %v875 = vmax.f32 %v859, %v867
    %v876 = vmax.f32 %v860, %v868
    %v877 = vmax.f32 %v861, %v869
    %v878 = vadd.f32 %v870, %v434
    %v879 = vadd.f32 %v871, %v434
    %v880 = vadd.f32 %v872, %v439
    %v881 = vadd.f32 %v873, %v439
    %v882 = vadd.f32 %v874, %v444
    %v883 = vadd.f32 %v875, %v444
    %v884 = vadd.f32 %v876, %v449
    %v885 = vadd.f32 %v877, %v449
    %v886 = vsel %vm459, %v879, inf
    %v887 = vsel %vm459, %v881, inf
    %v888 = vmin.f32 %v878, %v882
    %v889 = vsel %vm459, %v883, inf
    %v890 = vmin.f32 %v886, %v889
    %v891 = vsel %vm465, %v884, inf
    %v892 = vmin.f32 %v880, %v891
    %v893 = vsel %vm468, %v885, inf
    %v894 = vmin.f32 %v887, %v893
    %v895 = vmin.f32 %v888, %v890
    %v896 = vmin.f32 %v892, %v894
    %v897 = vmin.f32 %v895, %v896
    %898 = vmin.xlane.f32.xlu0 %v897
    %v899 = vpop.xlane.xlu0 %898
    %v900 = vrot.slane %v899, 4
    %v901 = vmin.f32 %v899, %v900
    %v902 = vrot.slane %v901, 2
    %v903 = vmin.f32 %v901, %v902
    %v904 = vrot.slane %v903, 1
    %v905 = vmin.f32 %v903, %v904
    %s906 = vtos %v905
    %v907 = vstv %s906
    %v908 = vsel %vm459, %v879, -inf
    %v909 = vsel %vm459, %v881, -inf
    %v910 = vmax.f32 %v878, %v882
    %v911 = vsel %vm459, %v883, -inf
    %v912 = vmax.f32 %v908, %v911
    %v913 = vsel %vm465, %v884, -inf
    %v914 = vmax.f32 %v880, %v913
    %v915 = vsel %vm468, %v885, -inf
    %v916 = vmax.f32 %v909, %v915
    %v917 = vmax.f32 %v910, %v912
    %v918 = vmax.f32 %v914, %v916
    %v919 = vmax.f32 %v917, %v918
    %920 = vmax.xlane.f32.xlu0 %v919
    %v921 = vpop.xlane.xlu0 %920
    %v922 = vrot.slane %v921, 4
    %v923 = vmax.f32 %v921, %v922
    %v924 = vrot.slane %v923, 2
    %v925 = vmax.f32 %v923, %v924
    %v926 = vrot.slane %v925, 1
    %v927 = vmax.f32 %v925, %v926
    %s928 = vtos %v927
    %v929 = vstv %s928
    loop: start=0, step=1, limit=13
    $region57: #{_lambda_.1} parent=1 // loop_pre_header
      _
    $region58: #{_lambda_.1} parent=1 // loop_header
      %s931 = sphi 0, %s935
      %p932 = scmp.ge.s32.totalorder %s931, 13
      %v936 = vphi %v907, %v987
      %v937 = vphi %v929, %v988
    $region59: #{_lambda_.1} parent=1 // loop_header_branch
      %934 = sbr.rel (%p932) target = $region63
    $region60: #{_lambda_.1} parent=1 // loop_body
      %v938 = vadd.f32 %v936, %v937
      %v939 = vmul.f32 %v938, 0.5
      %vm940 = vcmp.ge.f32.partialorder %v878, %v939
      %vm941 = vcmp.ge.f32.partialorder %v879, %v939
      %vm942 = vcmp.ge.f32.partialorder %v880, %v939
      %vm943 = vcmp.ge.f32.partialorder %v881, %v939
      %vm944 = vcmp.ge.f32.partialorder %v882, %v939
      %vm945 = vcmp.ge.f32.partialorder %v883, %v939
      %vm946 = vcmp.ge.f32.partialorder %v884, %v939
      %vm947 = vcmp.ge.f32.partialorder %v885, %v939
      %v948 = vsel %vm940, 1, 0
      %v949 = vsel %vm941, 1, 0
      %v950 = vsel %vm942, 1, 0
      %v951 = vsel %vm943, 1, 0
      %v952 = vsel %vm944, 1, 0
      %v953 = vsel %vm945, 1, 0
      %v954 = vsel %vm946, 1, 0
      %v955 = vsel %vm947, 1, 0
      %v956 = vcvt.s32.f32 %v948
      %v957 = vcvt.s32.f32 %v949
      %v958 = vcvt.s32.f32 %v950
      %v959 = vcvt.s32.f32 %v951
      %v960 = vcvt.s32.f32 %v952
      %v961 = vcvt.s32.f32 %v953
      %v962 = vcvt.s32.f32 %v954
      %v963 = vcvt.s32.f32 %v955
      %v964 = vsel %vm459, %v957, 0.0
      %v965 = vadd.f32 %v956, %v964
      %v966 = vadd.f32 %v965, %v958
      %v967 = vsel %vm459, %v959, 0.0
      %v968 = vadd.f32 %v966, %v967
      %v969 = vadd.f32 %v968, %v960
      %v970 = vsel %vm459, %v961, 0.0
      %v971 = vadd.f32 %v969, %v970
      %v972 = vsel %vm465, %v962, 0.0
      %v973 = vadd.f32 %v971, %v972
      %v974 = vsel %vm468, %v963, 0.0
      %v975 = vadd.f32 %v973, %v974
      %976 = vadd.xlane.f32.xlu0 %v975
      %v977 = vpop.xlane.xlu0 %976
      %v978 = vrot.slane %v977, 4
      %v979 = vadd.f32 %v977, %v978
      %v980 = vrot.slane %v979, 2
      %v981 = vadd.f32 %v979, %v980
      %v982 = vrot.slane %v981, 1
      %v983 = vadd.f32 %v981, %v982
      %s984 = vtos %v983
      %v985 = vstv %s984
      %vm986 = vcmp.ge.f32.partialorder %v985, 400.0
      %v987 = vsel %vm986, %v939, %v936
      %v988 = vsel %vm986, %v937, %v939
    $region61: #{_lambda_.1} parent=1 // loop_footer
      %s935 = sadd.s32 1, %s931
    $region62: #{_lambda_.1} parent=1 // loop_footer_branch
      %930 = sbr.rel target = $region58
    $region63: #{_lambda_.1} parent=1 // loop_exit
      _
    %vm989 = vcmp.ge.f32.partialorder %v878, %v936
    %vm990 = vcmp.ge.f32.partialorder %v879, %v936
    %vm991 = vcmp.ge.f32.partialorder %v880, %v936
    %vm992 = vcmp.ge.f32.partialorder %v881, %v936
    %vm993 = vcmp.ge.f32.partialorder %v882, %v936
    %vm994 = vcmp.ge.f32.partialorder %v883, %v936
    %vm995 = vcmp.ge.f32.partialorder %v884, %v936
    %vm996 = vcmp.ge.f32.partialorder %v885, %v936
    %v997 = vsel %vm989, %v878, 0.0
    %v998 = vsel %vm990, %v879, 0.0
    %v999 = vsel %vm991, %v880, 0.0
    %v1000 = vsel %vm992, %v881, 0.0
    %v1001 = vsel %vm993, %v882, 0.0
    %v1002 = vsel %vm994, %v883, 0.0
    %v1003 = vsel %vm995, %v884, 0.0
    %v1004 = vsel %vm996, %v885, 0.0
    %s1005 = smul.u32 4, 30
    %s1006 = smul.u32 %s1005, 22
    %s1007 = smul.u32 %s1006, 2
    %s1008 = sshll.u32 %s1007, 4
    %1009 = dma.done [#allocation3], %s1008
    %v1012 = vrot.slane %v997, 7
    %v1013 = vrot.slane %v998, 7
    %v1016 = vsel %vm150, %v573, %v1012
    %v1017 = vsel %vm150, %v574, %v1013
    %v1018 = vpack.c.bf16 %v1016, %v1016
    %v1019 = vpack.c.bf16 %v1017, %v1017
    %v1020 = vld [vmem:[#allocation2] sm:$0xff]
    %v1021 = vld [vmem:[#allocation2 + $0x8] sm:$0xff]
    %v1022 = vld [vmem:[#allocation2 + $0x10] sm:$0xff]
    %v1023 = vld [vmem:[#allocation2 + $0x18] sm:$0xff]
    %v1024 = vld [vmem:[#allocation2 + $0x20] sm:$0xff]
    %v1025 = vld [vmem:[#allocation2 + $0x28] sm:$0xff]
    %v1026 = vld [vmem:[#allocation2 + $0x30] sm:$0xff]
    %v1027 = vld [vmem:[#allocation2 + $0x38] sm:$0xff]
    %v1028 = vld [vmem:[#allocation2 + $0x40] sm:$0xff]
    %v1029 = vld [vmem:[#allocation2 + $0x48] sm:$0xff]
    %v1030 = vld [vmem:[#allocation2 + $0x50] sm:$0xff]
    %v1031 = vld [vmem:[#allocation2 + $0x58] sm:$0xff]
    %v1032 = vld [vmem:[#allocation2 + $0x60] sm:$0xff]
    %v1033 = vld [vmem:[#allocation2 + $0x68] sm:$0xff]
    %v1034 = vld [vmem:[#allocation2 + $0x70] sm:$0xff]
    %v1035 = vld [vmem:[#allocation2 + $0x78] sm:$0xff]
    %v1036 = vld [vmem:[#allocation2 + $0x80] sm:$0xff]
    %v1037 = vld [vmem:[#allocation2 + $0x88] sm:$0xff]
    %v1038 = vld [vmem:[#allocation2 + $0x90] sm:$0xff]
    %v1039 = vld [vmem:[#allocation2 + $0x98] sm:$0xff]
    %v1040 = vld [vmem:[#allocation2 + $0xa0] sm:$0xff]
    %v1041 = vld [vmem:[#allocation2 + $0xa8] sm:$0x11]
    %v1044 = vrot.slane %v573, 1
    %v1045 = vrot.slane %v574, 1
    %v1048 = vsel %vm150, %v1044, %v997
    %v1049 = vsel %vm150, %v1045, %v998
    %v1050 = vpack.c.bf16 %v1048, %v1048
    %v1051 = vpack.c.bf16 %v1049, %v1049
    %s1052 = scalar_lea.vmem [#allocation2], 176
    %v1053 = vld [vmem:[%s1052] sm:$0xff]
    %v1054 = vld [vmem:[%s1052 + $0x8] sm:$0xff]
    %v1055 = vld [vmem:[%s1052 + $0x10] sm:$0xff]
    %v1056 = vld [vmem:[%s1052 + $0x18] sm:$0xff]
    %v1057 = vld [vmem:[%s1052 + $0x20] sm:$0xff]
    %v1058 = vld [vmem:[%s1052 + $0x28] sm:$0xff]
    %v1059 = vld [vmem:[%s1052 + $0x30] sm:$0xff]
    %v1060 = vld [vmem:[%s1052 + $0x38] sm:$0xff]
    %v1061 = vld [vmem:[%s1052 + $0x40] sm:$0xff]
    %v1062 = vld [vmem:[%s1052 + $0x48] sm:$0xff]
    %v1063 = vld [vmem:[%s1052 + $0x50] sm:$0xff]
    %v1064 = vld [vmem:[%s1052 + $0x58] sm:$0xff]
    %v1065 = vld [vmem:[%s1052 + $0x60] sm:$0xff]
    %v1066 = vld [vmem:[%s1052 + $0x68] sm:$0xff]
    %v1067 = vld [vmem:[%s1052 + $0x70] sm:$0xff]
    %v1068 = vld [vmem:[%s1052 + $0x78] sm:$0xff]
    %v1069 = vld [vmem:[%s1052 + $0x80] sm:$0xff]
    %v1070 = vld [vmem:[%s1052 + $0x88] sm:$0xff]
    %v1071 = vld [vmem:[%s1052 + $0x90] sm:$0xff]
    %v1072 = vld [vmem:[%s1052 + $0x98] sm:$0xff]
    %v1073 = vld [vmem:[%s1052 + $0xa0] sm:$0xff]
    %v1074 = vld [vmem:[%s1052 + $0xa8] sm:$0x11]
    %v1097 = vunpack.c.l.b16 %v1053
    %v1098 = vunpack.c.h.b16 %v1053
    %v1099 = vunpack.c.l.b16 %v1054
    %v1100 = vunpack.c.h.b16 %v1054
    %v1101 = vunpack.c.l.b16 %v1055
    %v1102 = vunpack.c.h.b16 %v1055
    %v1103 = vunpack.c.l.b16 %v1056
    %v1104 = vunpack.c.h.b16 %v1056
    %v1105 = vunpack.c.l.b16 %v1057
    %v1106 = vunpack.c.h.b16 %v1057
    %v1107 = vunpack.c.l.b16 %v1058
    %v1108 = vunpack.c.h.b16 %v1058
    %v1109 = vunpack.c.l.b16 %v1059
    %v1110 = vunpack.c.h.b16 %v1059
    %v1111 = vunpack.c.l.b16 %v1060
    %v1112 = vunpack.c.h.b16 %v1060
    %v1113 = vunpack.c.l.b16 %v1061
    %v1114 = vunpack.c.h.b16 %v1061
    %v1115 = vunpack.c.l.b16 %v1062
    %v1116 = vunpack.c.h.b16 %v1062
    %v1117 = vunpack.c.l.b16 %v1063
    %v1118 = vunpack.c.h.b16 %v1063
    %v1119 = vunpack.c.l.b16 %v1064
    %v1120 = vunpack.c.h.b16 %v1064
    %v1121 = vunpack.c.l.b16 %v1065
    %v1122 = vunpack.c.h.b16 %v1065
    %v1123 = vunpack.c.l.b16 %v1066
    %v1124 = vunpack.c.h.b16 %v1066
    %v1125 = vunpack.c.l.b16 %v1067
    %v1126 = vunpack.c.h.b16 %v1067
    %v1127 = vunpack.c.l.b16 %v1068
    %v1128 = vunpack.c.h.b16 %v1068
    %v1129 = vunpack.c.l.b16 %v1069
    %v1130 = vunpack.c.h.b16 %v1069
    %v1131 = vunpack.c.l.b16 %v1070
    %v1132 = vunpack.c.h.b16 %v1070
    %v1133 = vunpack.c.l.b16 %v1071
    %v1134 = vunpack.c.h.b16 %v1071
    %v1135 = vunpack.c.l.b16 %v1072
    %v1136 = vunpack.c.h.b16 %v1072
    %v1137 = vunpack.c.l.b16 %v1073
    %v1138 = vunpack.c.h.b16 %v1073
    %v1139 = vunpack.c.l.b16 %v1074
    %v1140 = vunpack.c.h.b16 %v1074
    %v1141 = vpack.c.b16 %v1099, %v1097
    %v1142 = vpack.c.b16 %v1100, %v1098
    %v1143 = vpack.c.b16 %v1103, %v1101
    %v1144 = vpack.c.b16 %v1104, %v1102
    %v1145 = vpack.c.b16 %v1107, %v1105
    %v1146 = vpack.c.b16 %v1108, %v1106
    %v1147 = vpack.c.b16 %v1111, %v1109
    %v1148 = vpack.c.b16 %v1112, %v1110
    %v1149 = vpack.c.b16 %v1115, %v1113
    %v1150 = vpack.c.b16 %v1116, %v1114
    %v1151 = vpack.c.b16 %v1119, %v1117
    %v1152 = vpack.c.b16 %v1120, %v1118
    %v1153 = vpack.c.b16 %v1123, %v1121
    %v1154 = vpack.c.b16 %v1124, %v1122
    %v1155 = vpack.c.b16 %v1127, %v1125
    %v1156 = vpack.c.b16 %v1128, %v1126
    %v1157 = vpack.c.b16 %v1131, %v1129
    %v1158 = vpack.c.b16 %v1132, %v1130
    %v1159 = vpack.c.b16 %v1135, %v1133
    %v1160 = vpack.c.b16 %v1136, %v1134
    %v1161 = vpack.c.b16 %v1139, %v1137
    %v1162 = vpack.c.b16 %v1140, %v1138
    %v1184 = vsel %vm459, %v1051, 0
    %vm1186 = vcmask 1043456
    %vm1187 = vcmask 1044480
    %v1188 = vsel %vm1186, 4294967295, 65535
    %v1189 = vsel %vm1187, %v1188, 0
    %v1191 = vand.u32 %v1161, %v1189
    %v1194 = vand.u32 %v1162, %v1189
    %1196 = vmatpush.bf16.msra.mxu0 %v1155
    %1197 = vmatpush.bf16.msra.mxu0 %v1153
    %1198 = vmatpush.bf16.msra.mxu0 %v1151
    %1199 = vmatpush.bf16.msra.mxu0 %v1149
    %1200 = vmatpush.bf16.msra.mxu0 %v1147
    %1201 = vmatpush.bf16.msra.mxu0 %v1145
    %1202 = vmatpush.bf16.msra.mxu0 %v1143
    %1203 = vmatpush.bf16.msra.mxu0 %v1141
    %1204 = vmatmul.bf16.gmra.mxu0 %v1050
    %v1205 = vpop.f32.mrf.mxu0
    %v1206 = vadd.f32 0.0, %v1205
    %v1207 = vpop.f32.mrf.mxu0
    %1208 = vdwg.mxu0
    %1209 = vmatpush.bf16.msra.mxu0 0
    %1210 = vmatpush.bf16.msra.mxu0 0
    %1211 = vmatpush.bf16.msra.mxu0 0
    %1212 = vmatpush.bf16.msra.mxu0 0
    %1213 = vmatpush.bf16.msra.mxu0 0
    %1214 = vmatpush.bf16.msra.mxu0 %v1191
    %1215 = vmatpush.bf16.msra.mxu0 %v1159
    %1216 = vmatpush.bf16.msra.mxu0 %v1157
    %1217 = vmatmul.bf16.gmra.mxu0 %v1184
    %v1218 = vpop.f32.mrf.mxu0
    %v1219 = vadd.f32 %v1206, %v1218
    %v1220 = vpop.f32.mrf.mxu0
    %1221 = vdwg.mxu0
    %1222 = vmatpush.bf16.msra.mxu0 %v1156
    %1223 = vmatpush.bf16.msra.mxu0 %v1154
    %1224 = vmatpush.bf16.msra.mxu0 %v1152
    %1225 = vmatpush.bf16.msra.mxu0 %v1150
    %1226 = vmatpush.bf16.msra.mxu0 %v1148
    %1227 = vmatpush.bf16.msra.mxu0 %v1146
    %1228 = vmatpush.bf16.msra.mxu0 %v1144
    %1229 = vmatpush.bf16.msra.mxu0 %v1142
    %1230 = vmatmul.bf16.gmra.mxu0 %v1050
    %v1231 = vpop.f32.mrf.mxu0
    %v1232 = vadd.f32 0.0, %v1231
    %v1233 = vpop.f32.mrf.mxu0
    %1234 = vdwg.mxu0
    %1235 = vmatpush.bf16.msra.mxu0 0
    %1236 = vmatpush.bf16.msra.mxu0 0
    %1237 = vmatpush.bf16.msra.mxu0 0
    %1238 = vmatpush.bf16.msra.mxu0 0
    %1239 = vmatpush.bf16.msra.mxu0 0
    %1240 = vmatpush.bf16.msra.mxu0 %v1194
    %1241 = vmatpush.bf16.msra.mxu0 %v1160
    %1242 = vmatpush.bf16.msra.mxu0 %v1158
    %1243 = vmatmul.bf16.gmra.mxu0 %v1184
    %v1244 = vpop.f32.mrf.mxu0
    %v1245 = vadd.f32 %v1232, %v1244
    %v1246 = vpop.f32.mrf.mxu0
    %1247 = vdwg.mxu0
    %v1270 = vunpack.c.l.b16 %v1020
    %v1271 = vunpack.c.h.b16 %v1020
    %v1272 = vunpack.c.l.b16 %v1021
    %v1273 = vunpack.c.h.b16 %v1021
    %v1274 = vunpack.c.l.b16 %v1022
    %v1275 = vunpack.c.h.b16 %v1022
    %v1276 = vunpack.c.l.b16 %v1023
    %v1277 = vunpack.c.h.b16 %v1023
    %v1278 = vunpack.c.l.b16 %v1024
    %v1279 = vunpack.c.h.b16 %v1024
    %v1280 = vunpack.c.l.b16 %v1025
    %v1281 = vunpack.c.h.b16 %v1025
    %v1282 = vunpack.c.l.b16 %v1026
    %v1283 = vunpack.c.h.b16 %v1026
    %v1284 = vunpack.c.l.b16 %v1027
    %v1285 = vunpack.c.h.b16 %v1027
    %v1286 = vunpack.c.l.b16 %v1028
    %v1287 = vunpack.c.h.b16 %v1028
    %v1288 = vunpack.c.l.b16 %v1029
    %v1289 = vunpack.c.h.b16 %v1029
    %v1290 = vunpack.c.l.b16 %v1030
    %v1291 = vunpack.c.h.b16 %v1030
    %v1292 = vunpack.c.l.b16 %v1031
    %v1293 = vunpack.c.h.b16 %v1031
    %v1294 = vunpack.c.l.b16 %v1032
    %v1295 = vunpack.c.h.b16 %v1032
    %v1296 = vunpack.c.l.b16 %v1033
    %v1297 = vunpack.c.h.b16 %v1033
    %v1298 = vunpack.c.l.b16 %v1034
    %v1299 = vunpack.c.h.b16 %v1034
    %v1300 = vunpack.c.l.b16 %v1035
    %v1301 = vunpack.c.h.b16 %v1035
    %v1302 = vunpack.c.l.b16 %v1036
    %v1303 = vunpack.c.h.b16 %v1036
    %v1304 = vunpack.c.l.b16 %v1037
    %v1305 = vunpack.c.h.b16 %v1037
    %v1306 = vunpack.c.l.b16 %v1038
    %v1307 = vunpack.c.h.b16 %v1038
    %v1308 = vunpack.c.l.b16 %v1039
    %v1309 = vunpack.c.h.b16 %v1039
    %v1310 = vunpack.c.l.b16 %v1040
    %v1311 = vunpack.c.h.b16 %v1040
    %v1312 = vunpack.c.l.b16 %v1041
    %v1313 = vunpack.c.h.b16 %v1041
    %v1314 = vpack.c.b16 %v1272, %v1270
    %v1315 = vpack.c.b16 %v1273, %v1271
    %v1316 = vpack.c.b16 %v1276, %v1274
    %v1317 = vpack.c.b16 %v1277, %v1275
    %v1318 = vpack.c.b16 %v1280, %v1278
    %v1319 = vpack.c.b16 %v1281, %v1279
    %v1320 = vpack.c.b16 %v1284, %v1282
    %v1321 = vpack.c.b16 %v1285, %v1283
    %v1322 = vpack.c.b16 %v1288, %v1286
    %v1323 = vpack.c.b16 %v1289, %v1287
    %v1324 = vpack.c.b16 %v1292, %v1290
    %v1325 = vpack.c.b16 %v1293, %v1291
    %v1326 = vpack.c.b16 %v1296, %v1294
    %v1327 = vpack.c.b16 %v1297, %v1295
    %v1328 = vpack.c.b16 %v1300, %v1298
    %v1329 = vpack.c.b16 %v1301, %v1299
    %v1330 = vpack.c.b16 %v1304, %v1302
    %v1331 = vpack.c.b16 %v1305, %v1303
    %v1332 = vpack.c.b16 %v1308, %v1306
    %v1333 = vpack.c.b16 %v1309, %v1307
    %v1334 = vpack.c.b16 %v1312, %v1310
    %v1335 = vpack.c.b16 %v1313, %v1311
    %v1357 = vsel %vm459, %v1019, 0
    %v1360 = vand.u32 %v1334, %v1189
    %v1363 = vand.u32 %v1335, %v1189
    %1365 = vmatpush.bf16.msra.mxu0 %v1328
    %1366 = vmatpush.bf16.msra.mxu0 %v1326
    %1367 = vmatpush.bf16.msra.mxu0 %v1324
    %1368 = vmatpush.bf16.msra.mxu0 %v1322
    %1369 = vmatpush.bf16.msra.mxu0 %v1320
    %1370 = vmatpush.bf16.msra.mxu0 %v1318
    %1371 = vmatpush.bf16.msra.mxu0 %v1316
    %1372 = vmatpush.bf16.msra.mxu0 %v1314
    %1373 = vmatmul.bf16.gmra.mxu0 %v1018
    %v1374 = vpop.f32.mrf.mxu0
    %v1375 = vadd.f32 %v1219, %v1374
    %v1376 = vpop.f32.mrf.mxu0
    %1377 = vdwg.mxu0
    %1378 = vmatpush.bf16.msra.mxu0 0
    %1379 = vmatpush.bf16.msra.mxu0 0
    %1380 = vmatpush.bf16.msra.mxu0 0
    %1381 = vmatpush.bf16.msra.mxu0 0
    %1382 = vmatpush.bf16.msra.mxu0 0
    %1383 = vmatpush.bf16.msra.mxu0 %v1360
    %1384 = vmatpush.bf16.msra.mxu0 %v1332
    %1385 = vmatpush.bf16.msra.mxu0 %v1330
    %1386 = vmatmul.bf16.gmra.mxu0 %v1357
    %v1387 = vpop.f32.mrf.mxu0
    %v1388 = vadd.f32 %v1375, %v1387
    %v1389 = vpop.f32.mrf.mxu0
    %1390 = vdwg.mxu0
    %1391 = vmatpush.bf16.msra.mxu0 %v1329
    %1392 = vmatpush.bf16.msra.mxu0 %v1327
    %1393 = vmatpush.bf16.msra.mxu0 %v1325
    %1394 = vmatpush.bf16.msra.mxu0 %v1323
    %1395 = vmatpush.bf16.msra.mxu0 %v1321
    %1396 = vmatpush.bf16.msra.mxu0 %v1319
    %1397 = vmatpush.bf16.msra.mxu0 %v1317
    %1398 = vmatpush.bf16.msra.mxu0 %v1315
    %1399 = vmatmul.bf16.gmra.mxu0 %v1018
    %v1400 = vpop.f32.mrf.mxu0
    %v1401 = vadd.f32 %v1245, %v1400
    %v1402 = vpop.f32.mrf.mxu0
    %1403 = vdwg.mxu0
    %1404 = vmatpush.bf16.msra.mxu0 0
    %1405 = vmatpush.bf16.msra.mxu0 0
    %1406 = vmatpush.bf16.msra.mxu0 0
    %1407 = vmatpush.bf16.msra.mxu0 0
    %1408 = vmatpush.bf16.msra.mxu0 0
    %1409 = vmatpush.bf16.msra.mxu0 %v1363
    %1410 = vmatpush.bf16.msra.mxu0 %v1333
    %1411 = vmatpush.bf16.msra.mxu0 %v1331
    %1412 = vmatmul.bf16.gmra.mxu0 %v1357
    %v1413 = vpop.f32.mrf.mxu0
    %v1414 = vadd.f32 %v1401, %v1413
    %v1415 = vpop.f32.mrf.mxu0
    %1416 = vdwg.mxu0
    %v1417 = vrot.slane %v573, 2
    %v1418 = vrot.slane %v574, 2
    %v1421 = vrot.slane %v997, 1
    %v1422 = vrot.slane %v998, 1
    %v1425 = vsel %vm150, %v1417, %v1421
    %v1426 = vsel %vm150, %v1418, %v1422
    %v1427 = vpack.c.bf16 %v1425, %v1425
    %v1428 = vpack.c.bf16 %v1426, %v1426
    %s1429 = scalar_lea.vmem [#allocation2], 352
    %v1430 = vld [vmem:[%s1429] sm:$0xff]
    %v1431 = vld [vmem:[%s1429 + $0x8] sm:$0xff]
    %v1432 = vld [vmem:[%s1429 + $0x10] sm:$0xff]
    %v1433 = vld [vmem:[%s1429 + $0x18] sm:$0xff]
    %v1434 = vld [vmem:[%s1429 + $0x20] sm:$0xff]
    %v1435 = vld [vmem:[%s1429 + $0x28] sm:$0xff]
    %v1436 = vld [vmem:[%s1429 + $0x30] sm:$0xff]
    %v1437 = vld [vmem:[%s1429 + $0x38] sm:$0xff]
    %v1438 = vld [vmem:[%s1429 + $0x40] sm:$0xff]
    %v1439 = vld [vmem:[%s1429 + $0x48] sm:$0xff]
    %v1440 = vld [vmem:[%s1429 + $0x50] sm:$0xff]
    %v1441 = vld [vmem:[%s1429 + $0x58] sm:$0xff]
    %v1442 = vld [vmem:[%s1429 + $0x60] sm:$0xff]
    %v1443 = vld [vmem:[%s1429 + $0x68] sm:$0xff]
    %v1444 = vld [vmem:[%s1429 + $0x70] sm:$0xff]
    %v1445 = vld [vmem:[%s1429 + $0x78] sm:$0xff]
    %v1446 = vld [vmem:[%s1429 + $0x80] sm:$0xff]
    %v1447 = vld [vmem:[%s1429 + $0x88] sm:$0xff]
    %v1448 = vld [vmem:[%s1429 + $0x90] sm:$0xff]
    %v1449 = vld [vmem:[%s1429 + $0x98] sm:$0xff]
    %v1450 = vld [vmem:[%s1429 + $0xa0] sm:$0xff]
    %v1451 = vld [vmem:[%s1429 + $0xa8] sm:$0x11]
    %v1474 = vunpack.c.l.b16 %v1430
    %v1475 = vunpack.c.h.b16 %v1430
    %v1476 = vunpack.c.l.b16 %v1431
    %v1477 = vunpack.c.h.b16 %v1431
    %v1478 = vunpack.c.l.b16 %v1432
    %v1479 = vunpack.c.h.b16 %v1432
    %v1480 = vunpack.c.l.b16 %v1433
    %v1481 = vunpack.c.h.b16 %v1433
    %v1482 = vunpack.c.l.b16 %v1434
    %v1483 = vunpack.c.h.b16 %v1434
    %v1484 = vunpack.c.l.b16 %v1435
    %v1485 = vunpack.c.h.b16 %v1435
    %v1486 = vunpack.c.l.b16 %v1436
    %v1487 = vunpack.c.h.b16 %v1436
    %v1488 = vunpack.c.l.b16 %v1437
    %v1489 = vunpack.c.h.b16 %v1437
    %v1490 = vunpack.c.l.b16 %v1438
    %v1491 = vunpack.c.h.b16 %v1438
    %v1492 = vunpack.c.l.b16 %v1439
    %v1493 = vunpack.c.h.b16 %v1439
    %v1494 = vunpack.c.l.b16 %v1440
    %v1495 = vunpack.c.h.b16 %v1440
    %v1496 = vunpack.c.l.b16 %v1441
    %v1497 = vunpack.c.h.b16 %v1441
    %v1498 = vunpack.c.l.b16 %v1442
    %v1499 = vunpack.c.h.b16 %v1442
    %v1500 = vunpack.c.l.b16 %v1443
    %v1501 = vunpack.c.h.b16 %v1443
    %v1502 = vunpack.c.l.b16 %v1444
    %v1503 = vunpack.c.h.b16 %v1444
    %v1504 = vunpack.c.l.b16 %v1445
    %v1505 = vunpack.c.h.b16 %v1445
    %v1506 = vunpack.c.l.b16 %v1446
    %v1507 = vunpack.c.h.b16 %v1446
    %v1508 = vunpack.c.l.b16 %v1447
    %v1509 = vunpack.c.h.b16 %v1447
    %v1510 = vunpack.c.l.b16 %v1448
    %v1511 = vunpack.c.h.b16 %v1448
    %v1512 = vunpack.c.l.b16 %v1449
    %v1513 = vunpack.c.h.b16 %v1449
    %v1514 = vunpack.c.l.b16 %v1450
    %v1515 = vunpack.c.h.b16 %v1450
    %v1516 = vunpack.c.l.b16 %v1451
    %v1517 = vunpack.c.h.b16 %v1451
    %v1518 = vpack.c.b16 %v1476, %v1474
    %v1519 = vpack.c.b16 %v1477, %v1475
    %v1520 = vpack.c.b16 %v1480, %v1478
    %v1521 = vpack.c.b16 %v1481, %v1479
    %v1522 = vpack.c.b16 %v1484, %v1482
    %v1523 = vpack.c.b16 %v1485, %v1483
    %v1524 = vpack.c.b16 %v1488, %v1486
    %v1525 = vpack.c.b16 %v1489, %v1487
    %v1526 = vpack.c.b16 %v1492, %v1490
    %v1527 = vpack.c.b16 %v1493, %v1491
    %v1528 = vpack.c.b16 %v1496, %v1494
    %v1529 = vpack.c.b16 %v1497, %v1495
    %v1530 = vpack.c.b16 %v1500, %v1498
    %v1531 = vpack.c.b16 %v1501, %v1499
    %v1532 = vpack.c.b16 %v1504, %v1502
    %v1533 = vpack.c.b16 %v1505, %v1503
    %v1534 = vpack.c.b16 %v1508, %v1506
    %v1535 = vpack.c.b16 %v1509, %v1507
    %v1536 = vpack.c.b16 %v1512, %v1510
    %v1537 = vpack.c.b16 %v1513, %v1511
    %v1538 = vpack.c.b16 %v1516, %v1514
    %v1539 = vpack.c.b16 %v1517, %v1515
    %v1561 = vsel %vm459, %v1428, 0
    %v1564 = vand.u32 %v1538, %v1189
    %v1567 = vand.u32 %v1539, %v1189
    %1569 = vmatpush.bf16.msra.mxu0 %v1532
    %1570 = vmatpush.bf16.msra.mxu0 %v1530
    %1571 = vmatpush.bf16.msra.mxu0 %v1528
    %1572 = vmatpush.bf16.msra.mxu0 %v1526
    %1573 = vmatpush.bf16.msra.mxu0 %v1524
    %1574 = vmatpush.bf16.msra.mxu0 %v1522
    %1575 = vmatpush.bf16.msra.mxu0 %v1520
    %1576 = vmatpush.bf16.msra.mxu0 %v1518
    %1577 = vmatmul.bf16.gmra.mxu0 %v1427
    %v1578 = vpop.f32.mrf.mxu0
    %v1579 = vadd.f32 0.0, %v1578
    %v1580 = vpop.f32.mrf.mxu0
    %1581 = vdwg.mxu0
    %1582 = vmatpush.bf16.msra.mxu0 0
    %1583 = vmatpush.bf16.msra.mxu0 0
    %1584 = vmatpush.bf16.msra.mxu0 0
    %1585 = vmatpush.bf16.msra.mxu0 0
    %1586 = vmatpush.bf16.msra.mxu0 0
    %1587 = vmatpush.bf16.msra.mxu0 %v1564
    %1588 = vmatpush.bf16.msra.mxu0 %v1536
    %1589 = vmatpush.bf16.msra.mxu0 %v1534
    %1590 = vmatmul.bf16.gmra.mxu0 %v1561
    %v1591 = vpop.f32.mrf.mxu0
    %v1592 = vadd.f32 %v1579, %v1591
    %v1593 = vpop.f32.mrf.mxu0
    %1594 = vdwg.mxu0
    %1595 = vmatpush.bf16.msra.mxu0 %v1533
    %1596 = vmatpush.bf16.msra.mxu0 %v1531
    %1597 = vmatpush.bf16.msra.mxu0 %v1529
    %1598 = vmatpush.bf16.msra.mxu0 %v1527
    %1599 = vmatpush.bf16.msra.mxu0 %v1525
    %1600 = vmatpush.bf16.msra.mxu0 %v1523
    %1601 = vmatpush.bf16.msra.mxu0 %v1521
    %1602 = vmatpush.bf16.msra.mxu0 %v1519
    %1603 = vmatmul.bf16.gmra.mxu0 %v1427
    %v1604 = vpop.f32.mrf.mxu0
    %v1605 = vadd.f32 0.0, %v1604
    %v1606 = vpop.f32.mrf.mxu0
    %1607 = vdwg.mxu0
    %1608 = vmatpush.bf16.msra.mxu0 0
    %1609 = vmatpush.bf16.msra.mxu0 0
    %1610 = vmatpush.bf16.msra.mxu0 0
    %1611 = vmatpush.bf16.msra.mxu0 0
    %1612 = vmatpush.bf16.msra.mxu0 0
    %1613 = vmatpush.bf16.msra.mxu0 %v1567
    %1614 = vmatpush.bf16.msra.mxu0 %v1537
    %1615 = vmatpush.bf16.msra.mxu0 %v1535
    %1616 = vmatmul.bf16.gmra.mxu0 %v1561
    %v1617 = vpop.f32.mrf.mxu0
    %v1618 = vadd.f32 %v1605, %v1617
    %v1619 = vpop.f32.mrf.mxu0
    %1620 = vdwg.mxu0
    %v1621 = vadd.f32 %v1388, %v1592
    %v1622 = vadd.f32 %v1414, %v1618
    %v1623 = vrot.slane %v573, 3
    %v1624 = vrot.slane %v574, 3
    %v1627 = vrot.slane %v997, 2
    %v1628 = vrot.slane %v998, 2
    %v1631 = vsel %vm150, %v1623, %v1627
    %v1632 = vsel %vm150, %v1624, %v1628
    %v1633 = vpack.c.bf16 %v1631, %v1631
    %v1634 = vpack.c.bf16 %v1632, %v1632
    %s1635 = scalar_lea.vmem [#allocation2], 528
    %v1636 = vld [vmem:[%s1635] sm:$0xff]
    %v1637 = vld [vmem:[%s1635 + $0x8] sm:$0xff]
    %v1638 = vld [vmem:[%s1635 + $0x10] sm:$0xff]
    %v1639 = vld [vmem:[%s1635 + $0x18] sm:$0xff]
    %v1640 = vld [vmem:[%s1635 + $0x20] sm:$0xff]
    %v1641 = vld [vmem:[%s1635 + $0x28] sm:$0xff]
    %v1642 = vld [vmem:[%s1635 + $0x30] sm:$0xff]
    %v1643 = vld [vmem:[%s1635 + $0x38] sm:$0xff]
    %v1644 = vld [vmem:[%s1635 + $0x40] sm:$0xff]
    %v1645 = vld [vmem:[%s1635 + $0x48] sm:$0xff]
    %v1646 = vld [vmem:[%s1635 + $0x50] sm:$0xff]
    %v1647 = vld [vmem:[%s1635 + $0x58] sm:$0xff]
    %v1648 = vld [vmem:[%s1635 + $0x60] sm:$0xff]
    %v1649 = vld [vmem:[%s1635 + $0x68] sm:$0xff]
    %v1650 = vld [vmem:[%s1635 + $0x70] sm:$0xff]
    %v1651 = vld [vmem:[%s1635 + $0x78] sm:$0xff]
    %v1652 = vld [vmem:[%s1635 + $0x80] sm:$0xff]
    %v1653 = vld [vmem:[%s1635 + $0x88] sm:$0xff]
    %v1654 = vld [vmem:[%s1635 + $0x90] sm:$0xff]
    %v1655 = vld [vmem:[%s1635 + $0x98] sm:$0xff]
    %v1656 = vld [vmem:[%s1635 + $0xa0] sm:$0xff]
    %v1657 = vld [vmem:[%s1635 + $0xa8] sm:$0x11]
    %v1680 = vunpack.c.l.b16 %v1636
    %v1681 = vunpack.c.h.b16 %v1636
    %v1682 = vunpack.c.l.b16 %v1637
    %v1683 = vunpack.c.h.b16 %v1637
    %v1684 = vunpack.c.l.b16 %v1638
    %v1685 = vunpack.c.h.b16 %v1638
    %v1686 = vunpack.c.l.b16 %v1639
    %v1687 = vunpack.c.h.b16 %v1639
    %v1688 = vunpack.c.l.b16 %v1640
    %v1689 = vunpack.c.h.b16 %v1640
    %v1690 = vunpack.c.l.b16 %v1641
    %v1691 = vunpack.c.h.b16 %v1641
    %v1692 = vunpack.c.l.b16 %v1642
    %v1693 = vunpack.c.h.b16 %v1642
    %v1694 = vunpack.c.l.b16 %v1643
    %v1695 = vunpack.c.h.b16 %v1643
    %v1696 = vunpack.c.l.b16 %v1644
    %v1697 = vunpack.c.h.b16 %v1644
    %v1698 = vunpack.c.l.b16 %v1645
    %v1699 = vunpack.c.h.b16 %v1645
    %v1700 = vunpack.c.l.b16 %v1646
    %v1701 = vunpack.c.h.b16 %v1646
    %v1702 = vunpack.c.l.b16 %v1647
    %v1703 = vunpack.c.h.b16 %v1647
    %v1704 = vunpack.c.l.b16 %v1648
    %v1705 = vunpack.c.h.b16 %v1648
    %v1706 = vunpack.c.l.b16 %v1649
    %v1707 = vunpack.c.h.b16 %v1649
    %v1708 = vunpack.c.l.b16 %v1650
    %v1709 = vunpack.c.h.b16 %v1650
    %v1710 = vunpack.c.l.b16 %v1651
    %v1711 = vunpack.c.h.b16 %v1651
    %v1712 = vunpack.c.l.b16 %v1652
    %v1713 = vunpack.c.h.b16 %v1652
    %v1714 = vunpack.c.l.b16 %v1653
    %v1715 = vunpack.c.h.b16 %v1653
    %v1716 = vunpack.c.l.b16 %v1654
    %v1717 = vunpack.c.h.b16 %v1654
    %v1718 = vunpack.c.l.b16 %v1655
    %v1719 = vunpack.c.h.b16 %v1655
    %v1720 = vunpack.c.l.b16 %v1656
    %v1721 = vunpack.c.h.b16 %v1656
    %v1722 = vunpack.c.l.b16 %v1657
    %v1723 = vunpack.c.h.b16 %v1657
    %v1724 = vpack.c.b16 %v1682, %v1680
    %v1725 = vpack.c.b16 %v1683, %v1681
    %v1726 = vpack.c.b16 %v1686, %v1684
    %v1727 = vpack.c.b16 %v1687, %v1685
    %v1728 = vpack.c.b16 %v1690, %v1688
    %v1729 = vpack.c.b16 %v1691, %v1689
    %v1730 = vpack.c.b16 %v1694, %v1692
    %v1731 = vpack.c.b16 %v1695, %v1693
    %v1732 = vpack.c.b16 %v1698, %v1696
    %v1733 = vpack.c.b16 %v1699, %v1697
    %v1734 = vpack.c.b16 %v1702, %v1700
    %v1735 = vpack.c.b16 %v1703, %v1701
    %v1736 = vpack.c.b16 %v1706, %v1704
    %v1737 = vpack.c.b16 %v1707, %v1705
    %v1738 = vpack.c.b16 %v1710, %v1708
    %v1739 = vpack.c.b16 %v1711, %v1709
    %v1740 = vpack.c.b16 %v1714, %v1712
    %v1741 = vpack.c.b16 %v1715, %v1713
    %v1742 = vpack.c.b16 %v1718, %v1716
    %v1743 = vpack.c.b16 %v1719, %v1717
    %v1744 = vpack.c.b16 %v1722, %v1720
    %v1745 = vpack.c.b16 %v1723, %v1721
    %v1767 = vsel %vm459, %v1634, 0
    %v1770 = vand.u32 %v1744, %v1189
    %v1773 = vand.u32 %v1745, %v1189
    %1775 = vmatpush.bf16.msra.mxu0 %v1738
    %1776 = vmatpush.bf16.msra.mxu0 %v1736
    %1777 = vmatpush.bf16.msra.mxu0 %v1734
    %1778 = vmatpush.bf16.msra.mxu0 %v1732
    %1779 = vmatpush.bf16.msra.mxu0 %v1730
    %1780 = vmatpush.bf16.msra.mxu0 %v1728
    %1781 = vmatpush.bf16.msra.mxu0 %v1726
    %1782 = vmatpush.bf16.msra.mxu0 %v1724
    %1783 = vmatmul.bf16.gmra.mxu0 %v1633
    %v1784 = vpop.f32.mrf.mxu0
    %v1785 = vadd.f32 0.0, %v1784
    %v1786 = vpop.f32.mrf.mxu0
    %1787 = vdwg.mxu0
    %1788 = vmatpush.bf16.msra.mxu0 0
    %1789 = vmatpush.bf16.msra.mxu0 0
    %1790 = vmatpush.bf16.msra.mxu0 0
    %1791 = vmatpush.bf16.msra.mxu0 0
    %1792 = vmatpush.bf16.msra.mxu0 0
    %1793 = vmatpush.bf16.msra.mxu0 %v1770
    %1794 = vmatpush.bf16.msra.mxu0 %v1742
    %1795 = vmatpush.bf16.msra.mxu0 %v1740
    %1796 = vmatmul.bf16.gmra.mxu0 %v1767
    %v1797 = vpop.f32.mrf.mxu0
    %v1798 = vadd.f32 %v1785, %v1797
    %v1799 = vpop.f32.mrf.mxu0
    %1800 = vdwg.mxu0
    %1801 = vmatpush.bf16.msra.mxu0 %v1739
    %1802 = vmatpush.bf16.msra.mxu0 %v1737
    %1803 = vmatpush.bf16.msra.mxu0 %v1735
    %1804 = vmatpush.bf16.msra.mxu0 %v1733
    %1805 = vmatpush.bf16.msra.mxu0 %v1731
    %1806 = vmatpush.bf16.msra.mxu0 %v1729
    %1807 = vmatpush.bf16.msra.mxu0 %v1727
    %1808 = vmatpush.bf16.msra.mxu0 %v1725
    %1809 = vmatmul.bf16.gmra.mxu0 %v1633
    %v1810 = vpop.f32.mrf.mxu0
    %v1811 = vadd.f32 0.0, %v1810
    %v1812 = vpop.f32.mrf.mxu0
    %1813 = vdwg.mxu0
    %1814 = vmatpush.bf16.msra.mxu0 0
    %1815 = vmatpush.bf16.msra.mxu0 0
    %1816 = vmatpush.bf16.msra.mxu0 0
    %1817 = vmatpush.bf16.msra.mxu0 0
    %1818 = vmatpush.bf16.msra.mxu0 0
    %1819 = vmatpush.bf16.msra.mxu0 %v1773
    %1820 = vmatpush.bf16.msra.mxu0 %v1743
    %1821 = vmatpush.bf16.msra.mxu0 %v1741
    %1822 = vmatmul.bf16.gmra.mxu0 %v1767
    %v1823 = vpop.f32.mrf.mxu0
    %v1824 = vadd.f32 %v1811, %v1823
    %v1825 = vpop.f32.mrf.mxu0
    %1826 = vdwg.mxu0
    %v1827 = vadd.f32 %v1621, %v1798
    %v1828 = vadd.f32 %v1622, %v1824
    %v1829 = vrot.slane %v573, 4
    %v1830 = vrot.slane %v574, 4
    %v1833 = vrot.slane %v997, 3
    %v1834 = vrot.slane %v998, 3
    %v1837 = vsel %vm150, %v1829, %v1833
    %v1838 = vsel %vm150, %v1830, %v1834
    %v1839 = vpack.c.bf16 %v1837, %v1837
    %v1840 = vpack.c.bf16 %v1838, %v1838
    %s1841 = scalar_lea.vmem [#allocation2], 704
    %v1842 = vld [vmem:[%s1841] sm:$0xff]
    %v1843 = vld [vmem:[%s1841 + $0x8] sm:$0xff]
    %v1844 = vld [vmem:[%s1841 + $0x10] sm:$0xff]
    %v1845 = vld [vmem:[%s1841 + $0x18] sm:$0xff]
    %v1846 = vld [vmem:[%s1841 + $0x20] sm:$0xff]
    %v1847 = vld [vmem:[%s1841 + $0x28] sm:$0xff]
    %v1848 = vld [vmem:[%s1841 + $0x30] sm:$0xff]
    %v1849 = vld [vmem:[%s1841 + $0x38] sm:$0xff]
    %v1850 = vld [vmem:[%s1841 + $0x40] sm:$0xff]
    %v1851 = vld [vmem:[%s1841 + $0x48] sm:$0xff]
    %v1852 = vld [vmem:[%s1841 + $0x50] sm:$0xff]
    %v1853 = vld [vmem:[%s1841 + $0x58] sm:$0xff]
    %v1854 = vld [vmem:[%s1841 + $0x60] sm:$0xff]
    %v1855 = vld [vmem:[%s1841 + $0x68] sm:$0xff]
    %v1856 = vld [vmem:[%s1841 + $0x70] sm:$0xff]
    %v1857 = vld [vmem:[%s1841 + $0x78] sm:$0xff]
    %v1858 = vld [vmem:[%s1841 + $0x80] sm:$0xff]
    %v1859 = vld [vmem:[%s1841 + $0x88] sm:$0xff]
    %v1860 = vld [vmem:[%s1841 + $0x90] sm:$0xff]
    %v1861 = vld [vmem:[%s1841 + $0x98] sm:$0xff]
    %v1862 = vld [vmem:[%s1841 + $0xa0] sm:$0xff]
    %v1863 = vld [vmem:[%s1841 + $0xa8] sm:$0x11]
    %v1886 = vunpack.c.l.b16 %v1842
    %v1887 = vunpack.c.h.b16 %v1842
    %v1888 = vunpack.c.l.b16 %v1843
    %v1889 = vunpack.c.h.b16 %v1843
    %v1890 = vunpack.c.l.b16 %v1844
    %v1891 = vunpack.c.h.b16 %v1844
    %v1892 = vunpack.c.l.b16 %v1845
    %v1893 = vunpack.c.h.b16 %v1845
    %v1894 = vunpack.c.l.b16 %v1846
    %v1895 = vunpack.c.h.b16 %v1846
    %v1896 = vunpack.c.l.b16 %v1847
    %v1897 = vunpack.c.h.b16 %v1847
    %v1898 = vunpack.c.l.b16 %v1848
    %v1899 = vunpack.c.h.b16 %v1848
    %v1900 = vunpack.c.l.b16 %v1849
    %v1901 = vunpack.c.h.b16 %v1849
    %v1902 = vunpack.c.l.b16 %v1850
    %v1903 = vunpack.c.h.b16 %v1850
    %v1904 = vunpack.c.l.b16 %v1851
    %v1905 = vunpack.c.h.b16 %v1851
    %v1906 = vunpack.c.l.b16 %v1852
    %v1907 = vunpack.c.h.b16 %v1852
    %v1908 = vunpack.c.l.b16 %v1853
    %v1909 = vunpack.c.h.b16 %v1853
    %v1910 = vunpack.c.l.b16 %v1854
    %v1911 = vunpack.c.h.b16 %v1854
    %v1912 = vunpack.c.l.b16 %v1855
    %v1913 = vunpack.c.h.b16 %v1855
    %v1914 = vunpack.c.l.b16 %v1856
    %v1915 = vunpack.c.h.b16 %v1856
    %v1916 = vunpack.c.l.b16 %v1857
    %v1917 = vunpack.c.h.b16 %v1857
    %v1918 = vunpack.c.l.b16 %v1858
    %v1919 = vunpack.c.h.b16 %v1858
    %v1920 = vunpack.c.l.b16 %v1859
    %v1921 = vunpack.c.h.b16 %v1859
    %v1922 = vunpack.c.l.b16 %v1860
    %v1923 = vunpack.c.h.b16 %v1860
    %v1924 = vunpack.c.l.b16 %v1861
    %v1925 = vunpack.c.h.b16 %v1861
    %v1926 = vunpack.c.l.b16 %v1862
    %v1927 = vunpack.c.h.b16 %v1862
    %v1928 = vunpack.c.l.b16 %v1863
    %v1929 = vunpack.c.h.b16 %v1863
    %v1930 = vpack.c.b16 %v1888, %v1886
    %v1931 = vpack.c.b16 %v1889, %v1887
    %v1932 = vpack.c.b16 %v1892, %v1890
    %v1933 = vpack.c.b16 %v1893, %v1891
    %v1934 = vpack.c.b16 %v1896, %v1894
    %v1935 = vpack.c.b16 %v1897, %v1895
    %v1936 = vpack.c.b16 %v1900, %v1898
    %v1937 = vpack.c.b16 %v1901, %v1899
    %v1938 = vpack.c.b16 %v1904, %v1902
    %v1939 = vpack.c.b16 %v1905, %v1903
    %v1940 = vpack.c.b16 %v1908, %v1906
    %v1941 = vpack.c.b16 %v1909, %v1907
    %v1942 = vpack.c.b16 %v1912, %v1910
    %v1943 = vpack.c.b16 %v1913, %v1911
    %v1944 = vpack.c.b16 %v1916, %v1914
    %v1945 = vpack.c.b16 %v1917, %v1915
    %v1946 = vpack.c.b16 %v1920, %v1918
    %v1947 = vpack.c.b16 %v1921, %v1919
    %v1948 = vpack.c.b16 %v1924, %v1922
    %v1949 = vpack.c.b16 %v1925, %v1923
    %v1950 = vpack.c.b16 %v1928, %v1926
    %v1951 = vpack.c.b16 %v1929, %v1927
    %v1973 = vsel %vm459, %v1840, 0
    %v1976 = vand.u32 %v1950, %v1189
    %v1979 = vand.u32 %v1951, %v1189
    %1981 = vmatpush.bf16.msra.mxu0 %v1944
    %1982 = vmatpush.bf16.msra.mxu0 %v1942
    %1983 = vmatpush.bf16.msra.mxu0 %v1940
    %1984 = vmatpush.bf16.msra.mxu0 %v1938
    %1985 = vmatpush.bf16.msra.mxu0 %v1936
    %1986 = vmatpush.bf16.msra.mxu0 %v1934
    %1987 = vmatpush.bf16.msra.mxu0 %v1932
    %1988 = vmatpush.bf16.msra.mxu0 %v1930
    %1989 = vmatmul.bf16.gmra.mxu0 %v1839
    %v1990 = vpop.f32.mrf.mxu0
    %v1991 = vadd.f32 0.0, %v1990
    %v1992 = vpop.f32.mrf.mxu0
    %1993 = vdwg.mxu0
    %1994 = vmatpush.bf16.msra.mxu0 0
    %1995 = vmatpush.bf16.msra.mxu0 0
    %1996 = vmatpush.bf16.msra.mxu0 0
    %1997 = vmatpush.bf16.msra.mxu0 0
    %1998 = vmatpush.bf16.msra.mxu0 0
    %1999 = vmatpush.bf16.msra.mxu0 %v1976
    %2000 = vmatpush.bf16.msra.mxu0 %v1948
    %2001 = vmatpush.bf16.msra.mxu0 %v1946
    %2002 = vmatmul.bf16.gmra.mxu0 %v1973
    %v2003 = vpop.f32.mrf.mxu0
    %v2004 = vadd.f32 %v1991, %v2003
    %v2005 = vpop.f32.mrf.mxu0
    %2006 = vdwg.mxu0
    %2007 = vmatpush.bf16.msra.mxu0 %v1945
    %2008 = vmatpush.bf16.msra.mxu0 %v1943
    %2009 = vmatpush.bf16.msra.mxu0 %v1941
    %2010 = vmatpush.bf16.msra.mxu0 %v1939
    %2011 = vmatpush.bf16.msra.mxu0 %v1937
    %2012 = vmatpush.bf16.msra.mxu0 %v1935
    %2013 = vmatpush.bf16.msra.mxu0 %v1933
    %2014 = vmatpush.bf16.msra.mxu0 %v1931
    %2015 = vmatmul.bf16.gmra.mxu0 %v1839
    %v2016 = vpop.f32.mrf.mxu0
    %v2017 = vadd.f32 0.0, %v2016
    %v2018 = vpop.f32.mrf.mxu0
    %2019 = vdwg.mxu0
    %2020 = vmatpush.bf16.msra.mxu0 0
    %2021 = vmatpush.bf16.msra.mxu0 0
    %2022 = vmatpush.bf16.msra.mxu0 0
    %2023 = vmatpush.bf16.msra.mxu0 0
    %2024 = vmatpush.bf16.msra.mxu0 0
    %2025 = vmatpush.bf16.msra.mxu0 %v1979
    %2026 = vmatpush.bf16.msra.mxu0 %v1949
    %2027 = vmatpush.bf16.msra.mxu0 %v1947
    %2028 = vmatmul.bf16.gmra.mxu0 %v1973
    %v2029 = vpop.f32.mrf.mxu0
    %v2030 = vadd.f32 %v2017, %v2029
    %v2031 = vpop.f32.mrf.mxu0
    %2032 = vdwg.mxu0
    %v2033 = vadd.f32 %v1827, %v2004
    %v2034 = vadd.f32 %v1828, %v2030
    %v2035 = vrot.slane %v573, 5
    %v2036 = vrot.slane %v574, 5
    %v2039 = vrot.slane %v997, 4
    %v2040 = vrot.slane %v998, 4
    %v2043 = vsel %vm150, %v2035, %v2039
    %v2044 = vsel %vm150, %v2036, %v2040
    %v2045 = vpack.c.bf16 %v2043, %v2043
    %v2046 = vpack.c.bf16 %v2044, %v2044
    %s2047 = scalar_lea.vmem [#allocation2], 880
    %v2048 = vld [vmem:[%s2047] sm:$0xff]
    %v2049 = vld [vmem:[%s2047 + $0x8] sm:$0xff]
    %v2050 = vld [vmem:[%s2047 + $0x10] sm:$0xff]
    %v2051 = vld [vmem:[%s2047 + $0x18] sm:$0xff]
    %v2052 = vld [vmem:[%s2047 + $0x20] sm:$0xff]
    %v2053 = vld [vmem:[%s2047 + $0x28] sm:$0xff]
    %v2054 = vld [vmem:[%s2047 + $0x30] sm:$0xff]
    %v2055 = vld [vmem:[%s2047 + $0x38] sm:$0xff]
    %v2056 = vld [vmem:[%s2047 + $0x40] sm:$0xff]
    %v2057 = vld [vmem:[%s2047 + $0x48] sm:$0xff]
    %v2058 = vld [vmem:[%s2047 + $0x50] sm:$0xff]
    %v2059 = vld [vmem:[%s2047 + $0x58] sm:$0xff]
    %v2060 = vld [vmem:[%s2047 + $0x60] sm:$0xff]
    %v2061 = vld [vmem:[%s2047 + $0x68] sm:$0xff]
    %v2062 = vld [vmem:[%s2047 + $0x70] sm:$0xff]
    %v2063 = vld [vmem:[%s2047 + $0x78] sm:$0xff]
    %v2064 = vld [vmem:[%s2047 + $0x80] sm:$0xff]
    %v2065 = vld [vmem:[%s2047 + $0x88] sm:$0xff]
    %v2066 = vld [vmem:[%s2047 + $0x90] sm:$0xff]
    %v2067 = vld [vmem:[%s2047 + $0x98] sm:$0xff]
    %v2068 = vld [vmem:[%s2047 + $0xa0] sm:$0xff]
    %v2069 = vld [vmem:[%s2047 + $0xa8] sm:$0x11]
    %v2092 = vunpack.c.l.b16 %v2048
    %v2093 = vunpack.c.h.b16 %v2048
    %v2094 = vunpack.c.l.b16 %v2049
    %v2095 = vunpack.c.h.b16 %v2049
    %v2096 = vunpack.c.l.b16 %v2050
    %v2097 = vunpack.c.h.b16 %v2050
    %v2098 = vunpack.c.l.b16 %v2051
    %v2099 = vunpack.c.h.b16 %v2051
    %v2100 = vunpack.c.l.b16 %v2052
    %v2101 = vunpack.c.h.b16 %v2052
    %v2102 = vunpack.c.l.b16 %v2053
    %v2103 = vunpack.c.h.b16 %v2053
    %v2104 = vunpack.c.l.b16 %v2054
    %v2105 = vunpack.c.h.b16 %v2054
    %v2106 = vunpack.c.l.b16 %v2055
    %v2107 = vunpack.c.h.b16 %v2055
    %v2108 = vunpack.c.l.b16 %v2056
    %v2109 = vunpack.c.h.b16 %v2056
    %v2110 = vunpack.c.l.b16 %v2057
    %v2111 = vunpack.c.h.b16 %v2057
    %v2112 = vunpack.c.l.b16 %v2058
    %v2113 = vunpack.c.h.b16 %v2058
    %v2114 = vunpack.c.l.b16 %v2059
    %v2115 = vunpack.c.h.b16 %v2059
    %v2116 = vunpack.c.l.b16 %v2060
    %v2117 = vunpack.c.h.b16 %v2060
    %v2118 = vunpack.c.l.b16 %v2061
    %v2119 = vunpack.c.h.b16 %v2061
    %v2120 = vunpack.c.l.b16 %v2062
    %v2121 = vunpack.c.h.b16 %v2062
    %v2122 = vunpack.c.l.b16 %v2063
    %v2123 = vunpack.c.h.b16 %v2063
    %v2124 = vunpack.c.l.b16 %v2064
    %v2125 = vunpack.c.h.b16 %v2064
    %v2126 = vunpack.c.l.b16 %v2065
    %v2127 = vunpack.c.h.b16 %v2065
    %v2128 = vunpack.c.l.b16 %v2066
    %v2129 = vunpack.c.h.b16 %v2066
    %v2130 = vunpack.c.l.b16 %v2067
    %v2131 = vunpack.c.h.b16 %v2067
    %v2132 = vunpack.c.l.b16 %v2068
    %v2133 = vunpack.c.h.b16 %v2068
    %v2134 = vunpack.c.l.b16 %v2069
    %v2135 = vunpack.c.h.b16 %v2069
    %v2136 = vpack.c.b16 %v2094, %v2092
    %v2137 = vpack.c.b16 %v2095, %v2093
    %v2138 = vpack.c.b16 %v2098, %v2096
    %v2139 = vpack.c.b16 %v2099, %v2097
    %v2140 = vpack.c.b16 %v2102, %v2100
    %v2141 = vpack.c.b16 %v2103, %v2101
    %v2142 = vpack.c.b16 %v2106, %v2104
    %v2143 = vpack.c.b16 %v2107, %v2105
    %v2144 = vpack.c.b16 %v2110, %v2108
    %v2145 = vpack.c.b16 %v2111, %v2109
    %v2146 = vpack.c.b16 %v2114, %v2112
    %v2147 = vpack.c.b16 %v2115, %v2113
    %v2148 = vpack.c.b16 %v2118, %v2116
    %v2149 = vpack.c.b16 %v2119, %v2117
    %v2150 = vpack.c.b16 %v2122, %v2120
    %v2151 = vpack.c.b16 %v2123, %v2121
    %v2152 = vpack.c.b16 %v2126, %v2124
    %v2153 = vpack.c.b16 %v2127, %v2125
    %v2154 = vpack.c.b16 %v2130, %v2128
    %v2155 = vpack.c.b16 %v2131, %v2129
    %v2156 = vpack.c.b16 %v2134, %v2132
    %v2157 = vpack.c.b16 %v2135, %v2133
    %v2179 = vsel %vm459, %v2046, 0
    %v2182 = vand.u32 %v2156, %v1189
    %v2185 = vand.u32 %v2157, %v1189
    %2187 = vmatpush.bf16.msra.mxu0 %v2150
    %2188 = vmatpush.bf16.msra.mxu0 %v2148
    %2189 = vmatpush.bf16.msra.mxu0 %v2146
    %2190 = vmatpush.bf16.msra.mxu0 %v2144
    %2191 = vmatpush.bf16.msra.mxu0 %v2142
    %2192 = vmatpush.bf16.msra.mxu0 %v2140
    %2193 = vmatpush.bf16.msra.mxu0 %v2138
    %2194 = vmatpush.bf16.msra.mxu0 %v2136
    %2195 = vmatmul.bf16.gmra.mxu0 %v2045
    %v2196 = vpop.f32.mrf.mxu0
    %v2197 = vadd.f32 0.0, %v2196
    %v2198 = vpop.f32.mrf.mxu0
    %2199 = vdwg.mxu0
    %2200 = vmatpush.bf16.msra.mxu0 0
    %2201 = vmatpush.bf16.msra.mxu0 0
    %2202 = vmatpush.bf16.msra.mxu0 0
    %2203 = vmatpush.bf16.msra.mxu0 0
    %2204 = vmatpush.bf16.msra.mxu0 0
    %2205 = vmatpush.bf16.msra.mxu0 %v2182
    %2206 = vmatpush.bf16.msra.mxu0 %v2154
    %2207 = vmatpush.bf16.msra.mxu0 %v2152
    %2208 = vmatmul.bf16.gmra.mxu0 %v2179
    %v2209 = vpop.f32.mrf.mxu0
    %v2210 = vadd.f32 %v2197, %v2209
    %v2211 = vpop.f32.mrf.mxu0
    %2212 = vdwg.mxu0
    %2213 = vmatpush.bf16.msra.mxu0 %v2151
    %2214 = vmatpush.bf16.msra.mxu0 %v2149
    %2215 = vmatpush.bf16.msra.mxu0 %v2147
    %2216 = vmatpush.bf16.msra.mxu0 %v2145
    %2217 = vmatpush.bf16.msra.mxu0 %v2143
    %2218 = vmatpush.bf16.msra.mxu0 %v2141
    %2219 = vmatpush.bf16.msra.mxu0 %v2139
    %2220 = vmatpush.bf16.msra.mxu0 %v2137
    %2221 = vmatmul.bf16.gmra.mxu0 %v2045
    %v2222 = vpop.f32.mrf.mxu0
    %v2223 = vadd.f32 0.0, %v2222
    %v2224 = vpop.f32.mrf.mxu0
    %2225 = vdwg.mxu0
    %2226 = vmatpush.bf16.msra.mxu0 0
    %2227 = vmatpush.bf16.msra.mxu0 0
    %2228 = vmatpush.bf16.msra.mxu0 0
    %2229 = vmatpush.bf16.msra.mxu0 0
    %2230 = vmatpush.bf16.msra.mxu0 0
    %2231 = vmatpush.bf16.msra.mxu0 %v2185
    %2232 = vmatpush.bf16.msra.mxu0 %v2155
    %2233 = vmatpush.bf16.msra.mxu0 %v2153
    %2234 = vmatmul.bf16.gmra.mxu0 %v2179
    %v2235 = vpop.f32.mrf.mxu0
    %v2236 = vadd.f32 %v2223, %v2235
    %v2237 = vpop.f32.mrf.mxu0
    %2238 = vdwg.mxu0
    %v2239 = vadd.f32 %v2033, %v2210
    %v2240 = vadd.f32 %v2034, %v2236
    %v2241 = vrot.slane %v573, 6
    %v2242 = vrot.slane %v574, 6
    %v2245 = vrot.slane %v997, 5
    %v2246 = vrot.slane %v998, 5
    %v2249 = vsel %vm150, %v2241, %v2245
    %v2250 = vsel %vm150, %v2242, %v2246
    %v2251 = vpack.c.bf16 %v2249, %v2249
    %v2252 = vpack.c.bf16 %v2250, %v2250
    %s2253 = scalar_lea.vmem [#allocation2], 1056
    %v2254 = vld [vmem:[%s2253] sm:$0xff]
    %v2255 = vld [vmem:[%s2253 + $0x8] sm:$0xff]
    %v2256 = vld [vmem:[%s2253 + $0x10] sm:$0xff]
    %v2257 = vld [vmem:[%s2253 + $0x18] sm:$0xff]
    %v2258 = vld [vmem:[%s2253 + $0x20] sm:$0xff]
    %v2259 = vld [vmem:[%s2253 + $0x28] sm:$0xff]
    %v2260 = vld [vmem:[%s2253 + $0x30] sm:$0xff]
    %v2261 = vld [vmem:[%s2253 + $0x38] sm:$0xff]
    %v2262 = vld [vmem:[%s2253 + $0x40] sm:$0xff]
    %v2263 = vld [vmem:[%s2253 + $0x48] sm:$0xff]
    %v2264 = vld [vmem:[%s2253 + $0x50] sm:$0xff]
    %v2265 = vld [vmem:[%s2253 + $0x58] sm:$0xff]
    %v2266 = vld [vmem:[%s2253 + $0x60] sm:$0xff]
    %v2267 = vld [vmem:[%s2253 + $0x68] sm:$0xff]
    %v2268 = vld [vmem:[%s2253 + $0x70] sm:$0xff]
    %v2269 = vld [vmem:[%s2253 + $0x78] sm:$0xff]
    %v2270 = vld [vmem:[%s2253 + $0x80] sm:$0xff]
    %v2271 = vld [vmem:[%s2253 + $0x88] sm:$0xff]
    %v2272 = vld [vmem:[%s2253 + $0x90] sm:$0xff]
    %v2273 = vld [vmem:[%s2253 + $0x98] sm:$0xff]
    %v2274 = vld [vmem:[%s2253 + $0xa0] sm:$0xff]
    %v2275 = vld [vmem:[%s2253 + $0xa8] sm:$0x11]
    %v2298 = vunpack.c.l.b16 %v2254
    %v2299 = vunpack.c.h.b16 %v2254
    %v2300 = vunpack.c.l.b16 %v2255
    %v2301 = vunpack.c.h.b16 %v2255
    %v2302 = vunpack.c.l.b16 %v2256
    %v2303 = vunpack.c.h.b16 %v2256
    %v2304 = vunpack.c.l.b16 %v2257
    %v2305 = vunpack.c.h.b16 %v2257
    %v2306 = vunpack.c.l.b16 %v2258
    %v2307 = vunpack.c.h.b16 %v2258
    %v2308 = vunpack.c.l.b16 %v2259
    %v2309 = vunpack.c.h.b16 %v2259
    %v2310 = vunpack.c.l.b16 %v2260
    %v2311 = vunpack.c.h.b16 %v2260
    %v2312 = vunpack.c.l.b16 %v2261
    %v2313 = vunpack.c.h.b16 %v2261
    %v2314 = vunpack.c.l.b16 %v2262
    %v2315 = vunpack.c.h.b16 %v2262
    %v2316 = vunpack.c.l.b16 %v2263
    %v2317 = vunpack.c.h.b16 %v2263
    %v2318 = vunpack.c.l.b16 %v2264
    %v2319 = vunpack.c.h.b16 %v2264
    %v2320 = vunpack.c.l.b16 %v2265
    %v2321 = vunpack.c.h.b16 %v2265
    %v2322 = vunpack.c.l.b16 %v2266
    %v2323 = vunpack.c.h.b16 %v2266
    %v2324 = vunpack.c.l.b16 %v2267
    %v2325 = vunpack.c.h.b16 %v2267
    %v2326 = vunpack.c.l.b16 %v2268
    %v2327 = vunpack.c.h.b16 %v2268
    %v2328 = vunpack.c.l.b16 %v2269
    %v2329 = vunpack.c.h.b16 %v2269
    %v2330 = vunpack.c.l.b16 %v2270
    %v2331 = vunpack.c.h.b16 %v2270
    %v2332 = vunpack.c.l.b16 %v2271
    %v2333 = vunpack.c.h.b16 %v2271
    %v2334 = vunpack.c.l.b16 %v2272
    %v2335 = vunpack.c.h.b16 %v2272
    %v2336 = vunpack.c.l.b16 %v2273
    %v2337 = vunpack.c.h.b16 %v2273
    %v2338 = vunpack.c.l.b16 %v2274
    %v2339 = vunpack.c.h.b16 %v2274
    %v2340 = vunpack.c.l.b16 %v2275
    %v2341 = vunpack.c.h.b16 %v2275
    %v2342 = vpack.c.b16 %v2300, %v2298
    %v2343 = vpack.c.b16 %v2301, %v2299
    %v2344 = vpack.c.b16 %v2304, %v2302
    %v2345 = vpack.c.b16 %v2305, %v2303
    %v2346 = vpack.c.b16 %v2308, %v2306
    %v2347 = vpack.c.b16 %v2309, %v2307
    %v2348 = vpack.c.b16 %v2312, %v2310
    %v2349 = vpack.c.b16 %v2313, %v2311
    %v2350 = vpack.c.b16 %v2316, %v2314
    %v2351 = vpack.c.b16 %v2317, %v2315
    %v2352 = vpack.c.b16 %v2320, %v2318
    %v2353 = vpack.c.b16 %v2321, %v2319
    %v2354 = vpack.c.b16 %v2324, %v2322
    %v2355 = vpack.c.b16 %v2325, %v2323
    %v2356 = vpack.c.b16 %v2328, %v2326
    %v2357 = vpack.c.b16 %v2329, %v2327
    %v2358 = vpack.c.b16 %v2332, %v2330
    %v2359 = vpack.c.b16 %v2333, %v2331
    %v2360 = vpack.c.b16 %v2336, %v2334
    %v2361 = vpack.c.b16 %v2337, %v2335
    %v2362 = vpack.c.b16 %v2340, %v2338
    %v2363 = vpack.c.b16 %v2341, %v2339
    %v2385 = vsel %vm459, %v2252, 0
    %v2388 = vand.u32 %v2362, %v1189
    %v2391 = vand.u32 %v2363, %v1189
    %2393 = vmatpush.bf16.msra.mxu0 %v2356
    %2394 = vmatpush.bf16.msra.mxu0 %v2354
    %2395 = vmatpush.bf16.msra.mxu0 %v2352
    %2396 = vmatpush.bf16.msra.mxu0 %v2350
    %2397 = vmatpush.bf16.msra.mxu0 %v2348
    %2398 = vmatpush.bf16.msra.mxu0 %v2346
    %2399 = vmatpush.bf16.msra.mxu0 %v2344
    %2400 = vmatpush.bf16.msra.mxu0 %v2342
    %2401 = vmatmul.bf16.gmra.mxu0 %v2251
    %v2402 = vpop.f32.mrf.mxu0
    %v2403 = vadd.f32 0.0, %v2402
    %v2404 = vpop.f32.mrf.mxu0
    %2405 = vdwg.mxu0
    %2406 = vmatpush.bf16.msra.mxu0 0
    %2407 = vmatpush.bf16.msra.mxu0 0
    %2408 = vmatpush.bf16.msra.mxu0 0
    %2409 = vmatpush.bf16.msra.mxu0 0
    %2410 = vmatpush.bf16.msra.mxu0 0
    %2411 = vmatpush.bf16.msra.mxu0 %v2388
    %2412 = vmatpush.bf16.msra.mxu0 %v2360
    %2413 = vmatpush.bf16.msra.mxu0 %v2358
    %2414 = vmatmul.bf16.gmra.mxu0 %v2385
    %v2415 = vpop.f32.mrf.mxu0
    %v2416 = vadd.f32 %v2403, %v2415
    %v2417 = vpop.f32.mrf.mxu0
    %2418 = vdwg.mxu0
    %2419 = vmatpush.bf16.msra.mxu0 %v2357
    %2420 = vmatpush.bf16.msra.mxu0 %v2355
    %2421 = vmatpush.bf16.msra.mxu0 %v2353
    %2422 = vmatpush.bf16.msra.mxu0 %v2351
    %2423 = vmatpush.bf16.msra.mxu0 %v2349
    %2424 = vmatpush.bf16.msra.mxu0 %v2347
    %2425 = vmatpush.bf16.msra.mxu0 %v2345
    %2426 = vmatpush.bf16.msra.mxu0 %v2343
    %2427 = vmatmul.bf16.gmra.mxu0 %v2251
    %v2428 = vpop.f32.mrf.mxu0
    %v2429 = vadd.f32 0.0, %v2428
    %v2430 = vpop.f32.mrf.mxu0
    %2431 = vdwg.mxu0
    %2432 = vmatpush.bf16.msra.mxu0 0
    %2433 = vmatpush.bf16.msra.mxu0 0
    %2434 = vmatpush.bf16.msra.mxu0 0
    %2435 = vmatpush.bf16.msra.mxu0 0
    %2436 = vmatpush.bf16.msra.mxu0 0
    %2437 = vmatpush.bf16.msra.mxu0 %v2391
    %2438 = vmatpush.bf16.msra.mxu0 %v2361
    %2439 = vmatpush.bf16.msra.mxu0 %v2359
    %2440 = vmatmul.bf16.gmra.mxu0 %v2385
    %v2441 = vpop.f32.mrf.mxu0
    %v2442 = vadd.f32 %v2429, %v2441
    %v2443 = vpop.f32.mrf.mxu0
    %2444 = vdwg.mxu0
    %v2445 = vadd.f32 %v2239, %v2416
    %v2446 = vadd.f32 %v2240, %v2442
    %v2447 = vrot.slane %v573, 7
    %v2448 = vrot.slane %v574, 7
    %v2451 = vrot.slane %v997, 6
    %v2452 = vrot.slane %v998, 6
    %v2455 = vsel %vm150, %v2447, %v2451
    %v2456 = vsel %vm150, %v2448, %v2452
    %v2457 = vpack.c.bf16 %v2455, %v2455
    %v2458 = vpack.c.bf16 %v2456, %v2456
    %s2459 = scalar_lea.vmem [#allocation2], 1232
    %v2460 = vld [vmem:[%s2459] sm:$0xff]
    %v2461 = vld [vmem:[%s2459 + $0x8] sm:$0xff]
    %v2462 = vld [vmem:[%s2459 + $0x10] sm:$0xff]
    %v2463 = vld [vmem:[%s2459 + $0x18] sm:$0xff]
    %v2464 = vld [vmem:[%s2459 + $0x20] sm:$0xff]
    %v2465 = vld [vmem:[%s2459 + $0x28] sm:$0xff]
    %v2466 = vld [vmem:[%s2459 + $0x30] sm:$0xff]
    %v2467 = vld [vmem:[%s2459 + $0x38] sm:$0xff]
    %v2468 = vld [vmem:[%s2459 + $0x40] sm:$0xff]
    %v2469 = vld [vmem:[%s2459 + $0x48] sm:$0xff]
    %v2470 = vld [vmem:[%s2459 + $0x50] sm:$0xff]
    %v2471 = vld [vmem:[%s2459 + $0x58] sm:$0xff]
    %v2472 = vld [vmem:[%s2459 + $0x60] sm:$0xff]
    %v2473 = vld [vmem:[%s2459 + $0x68] sm:$0xff]
    %v2474 = vld [vmem:[%s2459 + $0x70] sm:$0xff]
    %v2475 = vld [vmem:[%s2459 + $0x78] sm:$0xff]
    %v2476 = vld [vmem:[%s2459 + $0x80] sm:$0xff]
    %v2477 = vld [vmem:[%s2459 + $0x88] sm:$0xff]
    %v2478 = vld [vmem:[%s2459 + $0x90] sm:$0xff]
    %v2479 = vld [vmem:[%s2459 + $0x98] sm:$0xff]
    %v2480 = vld [vmem:[%s2459 + $0xa0] sm:$0xff]
    %v2481 = vld [vmem:[%s2459 + $0xa8] sm:$0x11]
    %v2504 = vunpack.c.l.b16 %v2460
    %v2505 = vunpack.c.h.b16 %v2460
    %v2506 = vunpack.c.l.b16 %v2461
    %v2507 = vunpack.c.h.b16 %v2461
    %v2508 = vunpack.c.l.b16 %v2462
    %v2509 = vunpack.c.h.b16 %v2462
    %v2510 = vunpack.c.l.b16 %v2463
    %v2511 = vunpack.c.h.b16 %v2463
    %v2512 = vunpack.c.l.b16 %v2464
    %v2513 = vunpack.c.h.b16 %v2464
    %v2514 = vunpack.c.l.b16 %v2465
    %v2515 = vunpack.c.h.b16 %v2465
    %v2516 = vunpack.c.l.b16 %v2466
    %v2517 = vunpack.c.h.b16 %v2466
    %v2518 = vunpack.c.l.b16 %v2467
    %v2519 = vunpack.c.h.b16 %v2467
    %v2520 = vunpack.c.l.b16 %v2468
    %v2521 = vunpack.c.h.b16 %v2468
    %v2522 = vunpack.c.l.b16 %v2469
    %v2523 = vunpack.c.h.b16 %v2469
    %v2524 = vunpack.c.l.b16 %v2470
    %v2525 = vunpack.c.h.b16 %v2470
    %v2526 = vunpack.c.l.b16 %v2471
    %v2527 = vunpack.c.h.b16 %v2471
    %v2528 = vunpack.c.l.b16 %v2472
    %v2529 = vunpack.c.h.b16 %v2472
    %v2530 = vunpack.c.l.b16 %v2473
    %v2531 = vunpack.c.h.b16 %v2473
    %v2532 = vunpack.c.l.b16 %v2474
    %v2533 = vunpack.c.h.b16 %v2474
    %v2534 = vunpack.c.l.b16 %v2475
    %v2535 = vunpack.c.h.b16 %v2475
    %v2536 = vunpack.c.l.b16 %v2476
    %v2537 = vunpack.c.h.b16 %v2476
    %v2538 = vunpack.c.l.b16 %v2477
    %v2539 = vunpack.c.h.b16 %v2477
    %v2540 = vunpack.c.l.b16 %v2478
    %v2541 = vunpack.c.h.b16 %v2478
    %v2542 = vunpack.c.l.b16 %v2479
    %v2543 = vunpack.c.h.b16 %v2479
    %v2544 = vunpack.c.l.b16 %v2480
    %v2545 = vunpack.c.h.b16 %v2480
    %v2546 = vunpack.c.l.b16 %v2481
    %v2547 = vunpack.c.h.b16 %v2481
    %v2548 = vpack.c.b16 %v2506, %v2504
    %v2549 = vpack.c.b16 %v2507, %v2505
    %v2550 = vpack.c.b16 %v2510, %v2508
    %v2551 = vpack.c.b16 %v2511, %v2509
    %v2552 = vpack.c.b16 %v2514, %v2512
    %v2553 = vpack.c.b16 %v2515, %v2513
    %v2554 = vpack.c.b16 %v2518, %v2516
    %v2555 = vpack.c.b16 %v2519, %v2517
    %v2556 = vpack.c.b16 %v2522, %v2520
    %v2557 = vpack.c.b16 %v2523, %v2521
    %v2558 = vpack.c.b16 %v2526, %v2524
    %v2559 = vpack.c.b16 %v2527, %v2525
    %v2560 = vpack.c.b16 %v2530, %v2528
    %v2561 = vpack.c.b16 %v2531, %v2529
    %v2562 = vpack.c.b16 %v2534, %v2532
    %v2563 = vpack.c.b16 %v2535, %v2533
    %v2564 = vpack.c.b16 %v2538, %v2536
    %v2565 = vpack.c.b16 %v2539, %v2537
    %v2566 = vpack.c.b16 %v2542, %v2540
    %v2567 = vpack.c.b16 %v2543, %v2541
    %v2568 = vpack.c.b16 %v2546, %v2544
    %v2569 = vpack.c.b16 %v2547, %v2545
    %v2591 = vsel %vm459, %v2458, 0
    %v2594 = vand.u32 %v2568, %v1189
    %v2597 = vand.u32 %v2569, %v1189
    %2599 = vmatpush.bf16.msra.mxu0 %v2562
    %2600 = vmatpush.bf16.msra.mxu0 %v2560
    %2601 = vmatpush.bf16.msra.mxu0 %v2558
    %2602 = vmatpush.bf16.msra.mxu0 %v2556
    %2603 = vmatpush.bf16.msra.mxu0 %v2554
    %2604 = vmatpush.bf16.msra.mxu0 %v2552
    %2605 = vmatpush.bf16.msra.mxu0 %v2550
    %2606 = vmatpush.bf16.msra.mxu0 %v2548
    %2607 = vmatmul.bf16.gmra.mxu0 %v2457
    %v2608 = vpop.f32.mrf.mxu0
    %v2609 = vadd.f32 0.0, %v2608
    %v2610 = vpop.f32.mrf.mxu0
    %2611 = vdwg.mxu0
    %2612 = vmatpush.bf16.msra.mxu0 0
    %2613 = vmatpush.bf16.msra.mxu0 0
    %2614 = vmatpush.bf16.msra.mxu0 0
    %2615 = vmatpush.bf16.msra.mxu0 0
    %2616 = vmatpush.bf16.msra.mxu0 0
    %2617 = vmatpush.bf16.msra.mxu0 %v2594
    %2618 = vmatpush.bf16.msra.mxu0 %v2566
    %2619 = vmatpush.bf16.msra.mxu0 %v2564
    %2620 = vmatmul.bf16.gmra.mxu0 %v2591
    %v2621 = vpop.f32.mrf.mxu0
    %v2622 = vadd.f32 %v2609, %v2621
    %v2623 = vpop.f32.mrf.mxu0
    %2624 = vdwg.mxu0
    %2625 = vmatpush.bf16.msra.mxu0 %v2563
    %2626 = vmatpush.bf16.msra.mxu0 %v2561
    %2627 = vmatpush.bf16.msra.mxu0 %v2559
    %2628 = vmatpush.bf16.msra.mxu0 %v2557
    %2629 = vmatpush.bf16.msra.mxu0 %v2555
    %2630 = vmatpush.bf16.msra.mxu0 %v2553
    %2631 = vmatpush.bf16.msra.mxu0 %v2551
    %2632 = vmatpush.bf16.msra.mxu0 %v2549
    %2633 = vmatmul.bf16.gmra.mxu0 %v2457
    %v2634 = vpop.f32.mrf.mxu0
    %v2635 = vadd.f32 0.0, %v2634
    %v2636 = vpop.f32.mrf.mxu0
    %2637 = vdwg.mxu0
    %2638 = vmatpush.bf16.msra.mxu0 0
    %2639 = vmatpush.bf16.msra.mxu0 0
    %2640 = vmatpush.bf16.msra.mxu0 0
    %2641 = vmatpush.bf16.msra.mxu0 0
    %2642 = vmatpush.bf16.msra.mxu0 0
    %2643 = vmatpush.bf16.msra.mxu0 %v2597
    %2644 = vmatpush.bf16.msra.mxu0 %v2567
    %2645 = vmatpush.bf16.msra.mxu0 %v2565
    %2646 = vmatmul.bf16.gmra.mxu0 %v2591
    %v2647 = vpop.f32.mrf.mxu0
    %v2648 = vadd.f32 %v2635, %v2647
    %v2649 = vpop.f32.mrf.mxu0
    %2650 = vdwg.mxu0
    %v2651 = vadd.f32 %v2445, %v2622
    %v2652 = vadd.f32 %v2446, %v2648
    %v2655 = vrot.slane %v999, 7
    %v2656 = vrot.slane %v1000, 7
    %v2659 = vsel %vm150, %v575, %v2655
    %v2660 = vsel %vm150, %v576, %v2656
    %v2661 = vpack.c.bf16 %v2659, %v2659
    %v2662 = vpack.c.bf16 %v2660, %v2660
    %s2663 = scalar_lea.vmem [#allocation2], 1408
    %v2664 = vld [vmem:[%s2663] sm:$0xff]
    %v2665 = vld [vmem:[%s2663 + $0x8] sm:$0xff]
    %v2666 = vld [vmem:[%s2663 + $0x10] sm:$0xff]
    %v2667 = vld [vmem:[%s2663 + $0x18] sm:$0xff]
    %v2668 = vld [vmem:[%s2663 + $0x20] sm:$0xff]
    %v2669 = vld [vmem:[%s2663 + $0x28] sm:$0xff]
    %v2670 = vld [vmem:[%s2663 + $0x30] sm:$0xff]
    %v2671 = vld [vmem:[%s2663 + $0x38] sm:$0xff]
    %v2672 = vld [vmem:[%s2663 + $0x40] sm:$0xff]
    %v2673 = vld [vmem:[%s2663 + $0x48] sm:$0xff]
    %v2674 = vld [vmem:[%s2663 + $0x50] sm:$0xff]
    %v2675 = vld [vmem:[%s2663 + $0x58] sm:$0xff]
    %v2676 = vld [vmem:[%s2663 + $0x60] sm:$0xff]
    %v2677 = vld [vmem:[%s2663 + $0x68] sm:$0xff]
    %v2678 = vld [vmem:[%s2663 + $0x70] sm:$0xff]
    %v2679 = vld [vmem:[%s2663 + $0x78] sm:$0xff]
    %v2680 = vld [vmem:[%s2663 + $0x80] sm:$0xff]
    %v2681 = vld [vmem:[%s2663 + $0x88] sm:$0xff]
    %v2682 = vld [vmem:[%s2663 + $0x90] sm:$0xff]
    %v2683 = vld [vmem:[%s2663 + $0x98] sm:$0xff]
    %v2684 = vld [vmem:[%s2663 + $0xa0] sm:$0xff]
    %v2685 = vld [vmem:[%s2663 + $0xa8] sm:$0x11]
    %v2708 = vunpack.c.l.b16 %v2664
    %v2709 = vunpack.c.h.b16 %v2664
    %v2710 = vunpack.c.l.b16 %v2665
    %v2711 = vunpack.c.h.b16 %v2665
    %v2712 = vunpack.c.l.b16 %v2666
    %v2713 = vunpack.c.h.b16 %v2666
    %v2714 = vunpack.c.l.b16 %v2667
    %v2715 = vunpack.c.h.b16 %v2667
    %v2716 = vunpack.c.l.b16 %v2668
    %v2717 = vunpack.c.h.b16 %v2668
    %v2718 = vunpack.c.l.b16 %v2669
    %v2719 = vunpack.c.h.b16 %v2669
    %v2720 = vunpack.c.l.b16 %v2670
    %v2721 = vunpack.c.h.b16 %v2670
    %v2722 = vunpack.c.l.b16 %v2671
    %v2723 = vunpack.c.h.b16 %v2671
    %v2724 = vunpack.c.l.b16 %v2672
    %v2725 = vunpack.c.h.b16 %v2672
    %v2726 = vunpack.c.l.b16 %v2673
    %v2727 = vunpack.c.h.b16 %v2673
    %v2728 = vunpack.c.l.b16 %v2674
    %v2729 = vunpack.c.h.b16 %v2674
    %v2730 = vunpack.c.l.b16 %v2675
    %v2731 = vunpack.c.h.b16 %v2675
    %v2732 = vunpack.c.l.b16 %v2676
    %v2733 = vunpack.c.h.b16 %v2676
    %v2734 = vunpack.c.l.b16 %v2677
    %v2735 = vunpack.c.h.b16 %v2677
    %v2736 = vunpack.c.l.b16 %v2678
    %v2737 = vunpack.c.h.b16 %v2678
    %v2738 = vunpack.c.l.b16 %v2679
    %v2739 = vunpack.c.h.b16 %v2679
    %v2740 = vunpack.c.l.b16 %v2680
    %v2741 = vunpack.c.h.b16 %v2680
    %v2742 = vunpack.c.l.b16 %v2681
    %v2743 = vunpack.c.h.b16 %v2681
    %v2744 = vunpack.c.l.b16 %v2682
    %v2745 = vunpack.c.h.b16 %v2682
    %v2746 = vunpack.c.l.b16 %v2683
    %v2747 = vunpack.c.h.b16 %v2683
    %v2748 = vunpack.c.l.b16 %v2684
    %v2749 = vunpack.c.h.b16 %v2684
    %v2750 = vunpack.c.l.b16 %v2685
    %v2751 = vunpack.c.h.b16 %v2685
    %v2752 = vpack.c.b16 %v2710, %v2708
    %v2753 = vpack.c.b16 %v2711, %v2709
    %v2754 = vpack.c.b16 %v2714, %v2712
    %v2755 = vpack.c.b16 %v2715, %v2713
    %v2756 = vpack.c.b16 %v2718, %v2716
    %v2757 = vpack.c.b16 %v2719, %v2717
    %v2758 = vpack.c.b16 %v2722, %v2720
    %v2759 = vpack.c.b16 %v2723, %v2721
    %v2760 = vpack.c.b16 %v2726, %v2724
    %v2761 = vpack.c.b16 %v2727, %v2725
    %v2762 = vpack.c.b16 %v2730, %v2728
    %v2763 = vpack.c.b16 %v2731, %v2729
    %v2764 = vpack.c.b16 %v2734, %v2732
    %v2765 = vpack.c.b16 %v2735, %v2733
    %v2766 = vpack.c.b16 %v2738, %v2736
    %v2767 = vpack.c.b16 %v2739, %v2737
    %v2768 = vpack.c.b16 %v2742, %v2740
    %v2769 = vpack.c.b16 %v2743, %v2741
    %v2770 = vpack.c.b16 %v2746, %v2744
    %v2771 = vpack.c.b16 %v2747, %v2745
    %v2772 = vpack.c.b16 %v2750, %v2748
    %v2773 = vpack.c.b16 %v2751, %v2749
    %v2795 = vsel %vm459, %v2662, 0
    %v2798 = vand.u32 %v2772, %v1189
    %v2801 = vand.u32 %v2773, %v1189
    %2803 = vmatpush.bf16.msra.mxu0 %v2766
    %2804 = vmatpush.bf16.msra.mxu0 %v2764
    %2805 = vmatpush.bf16.msra.mxu0 %v2762
    %2806 = vmatpush.bf16.msra.mxu0 %v2760
    %2807 = vmatpush.bf16.msra.mxu0 %v2758
    %2808 = vmatpush.bf16.msra.mxu0 %v2756
    %2809 = vmatpush.bf16.msra.mxu0 %v2754
    %2810 = vmatpush.bf16.msra.mxu0 %v2752
    %2811 = vmatmul.bf16.gmra.mxu0 %v2661
    %v2812 = vpop.f32.mrf.mxu0
    %v2813 = vadd.f32 0.0, %v2812
    %v2814 = vpop.f32.mrf.mxu0
    %2815 = vdwg.mxu0
    %2816 = vmatpush.bf16.msra.mxu0 0
    %2817 = vmatpush.bf16.msra.mxu0 0
    %2818 = vmatpush.bf16.msra.mxu0 0
    %2819 = vmatpush.bf16.msra.mxu0 0
    %2820 = vmatpush.bf16.msra.mxu0 0
    %2821 = vmatpush.bf16.msra.mxu0 %v2798
    %2822 = vmatpush.bf16.msra.mxu0 %v2770
    %2823 = vmatpush.bf16.msra.mxu0 %v2768
    %2824 = vmatmul.bf16.gmra.mxu0 %v2795
    %v2825 = vpop.f32.mrf.mxu0
    %v2826 = vadd.f32 %v2813, %v2825
    %v2827 = vpop.f32.mrf.mxu0
    %2828 = vdwg.mxu0
    %2829 = vmatpush.bf16.msra.mxu0 %v2767
    %2830 = vmatpush.bf16.msra.mxu0 %v2765
    %2831 = vmatpush.bf16.msra.mxu0 %v2763
    %2832 = vmatpush.bf16.msra.mxu0 %v2761
    %2833 = vmatpush.bf16.msra.mxu0 %v2759
    %2834 = vmatpush.bf16.msra.mxu0 %v2757
    %2835 = vmatpush.bf16.msra.mxu0 %v2755
    %2836 = vmatpush.bf16.msra.mxu0 %v2753
    %2837 = vmatmul.bf16.gmra.mxu0 %v2661
    %v2838 = vpop.f32.mrf.mxu0
    %v2839 = vadd.f32 0.0, %v2838
    %v2840 = vpop.f32.mrf.mxu0
    %2841 = vdwg.mxu0
    %2842 = vmatpush.bf16.msra.mxu0 0
    %2843 = vmatpush.bf16.msra.mxu0 0
    %2844 = vmatpush.bf16.msra.mxu0 0
    %2845 = vmatpush.bf16.msra.mxu0 0
    %2846 = vmatpush.bf16.msra.mxu0 0
    %2847 = vmatpush.bf16.msra.mxu0 %v2801
    %2848 = vmatpush.bf16.msra.mxu0 %v2771
    %2849 = vmatpush.bf16.msra.mxu0 %v2769
    %2850 = vmatmul.bf16.gmra.mxu0 %v2795
    %v2851 = vpop.f32.mrf.mxu0
    %v2852 = vadd.f32 %v2839, %v2851
    %v2853 = vpop.f32.mrf.mxu0
    %2854 = vdwg.mxu0
    %v2855 = vadd.f32 %v2651, %v2826
    %v2856 = vadd.f32 %v2652, %v2852
    %v2859 = vrot.slane %v575, 1
    %v2860 = vrot.slane %v576, 1
    %v2863 = vsel %vm150, %v2859, %v999
    %v2864 = vsel %vm150, %v2860, %v1000
    %v2865 = vpack.c.bf16 %v2863, %v2863
    %v2866 = vpack.c.bf16 %v2864, %v2864
    %s2867 = scalar_lea.vmem [#allocation2], 1584
    %v2868 = vld [vmem:[%s2867] sm:$0xff]
    %v2869 = vld [vmem:[%s2867 + $0x8] sm:$0xff]
    %v2870 = vld [vmem:[%s2867 + $0x10] sm:$0xff]
    %v2871 = vld [vmem:[%s2867 + $0x18] sm:$0xff]
    %v2872 = vld [vmem:[%s2867 + $0x20] sm:$0xff]
    %v2873 = vld [vmem:[%s2867 + $0x28] sm:$0xff]
    %v2874 = vld [vmem:[%s2867 + $0x30] sm:$0xff]
    %v2875 = vld [vmem:[%s2867 + $0x38] sm:$0xff]
    %v2876 = vld [vmem:[%s2867 + $0x40] sm:$0xff]
    %v2877 = vld [vmem:[%s2867 + $0x48] sm:$0xff]
    %v2878 = vld [vmem:[%s2867 + $0x50] sm:$0xff]
    %v2879 = vld [vmem:[%s2867 + $0x58] sm:$0xff]
    %v2880 = vld [vmem:[%s2867 + $0x60] sm:$0xff]
    %v2881 = vld [vmem:[%s2867 + $0x68] sm:$0xff]
    %v2882 = vld [vmem:[%s2867 + $0x70] sm:$0xff]
    %v2883 = vld [vmem:[%s2867 + $0x78] sm:$0xff]
    %v2884 = vld [vmem:[%s2867 + $0x80] sm:$0xff]
    %v2885 = vld [vmem:[%s2867 + $0x88] sm:$0xff]
    %v2886 = vld [vmem:[%s2867 + $0x90] sm:$0xff]
    %v2887 = vld [vmem:[%s2867 + $0x98] sm:$0xff]
    %v2888 = vld [vmem:[%s2867 + $0xa0] sm:$0xff]
    %v2889 = vld [vmem:[%s2867 + $0xa8] sm:$0x11]
    %v2912 = vunpack.c.l.b16 %v2868
    %v2913 = vunpack.c.h.b16 %v2868
    %v2914 = vunpack.c.l.b16 %v2869
    %v2915 = vunpack.c.h.b16 %v2869
    %v2916 = vunpack.c.l.b16 %v2870
    %v2917 = vunpack.c.h.b16 %v2870
    %v2918 = vunpack.c.l.b16 %v2871
    %v2919 = vunpack.c.h.b16 %v2871
    %v2920 = vunpack.c.l.b16 %v2872
    %v2921 = vunpack.c.h.b16 %v2872
    %v2922 = vunpack.c.l.b16 %v2873
    %v2923 = vunpack.c.h.b16 %v2873
    %v2924 = vunpack.c.l.b16 %v2874
    %v2925 = vunpack.c.h.b16 %v2874
    %v2926 = vunpack.c.l.b16 %v2875
    %v2927 = vunpack.c.h.b16 %v2875
    %v2928 = vunpack.c.l.b16 %v2876
    %v2929 = vunpack.c.h.b16 %v2876
    %v2930 = vunpack.c.l.b16 %v2877
    %v2931 = vunpack.c.h.b16 %v2877
    %v2932 = vunpack.c.l.b16 %v2878
    %v2933 = vunpack.c.h.b16 %v2878
    %v2934 = vunpack.c.l.b16 %v2879
    %v2935 = vunpack.c.h.b16 %v2879
    %v2936 = vunpack.c.l.b16 %v2880
    %v2937 = vunpack.c.h.b16 %v2880
    %v2938 = vunpack.c.l.b16 %v2881
    %v2939 = vunpack.c.h.b16 %v2881
    %v2940 = vunpack.c.l.b16 %v2882
    %v2941 = vunpack.c.h.b16 %v2882
    %v2942 = vunpack.c.l.b16 %v2883
    %v2943 = vunpack.c.h.b16 %v2883
    %v2944 = vunpack.c.l.b16 %v2884
    %v2945 = vunpack.c.h.b16 %v2884
    %v2946 = vunpack.c.l.b16 %v2885
    %v2947 = vunpack.c.h.b16 %v2885
    %v2948 = vunpack.c.l.b16 %v2886
    %v2949 = vunpack.c.h.b16 %v2886
    %v2950 = vunpack.c.l.b16 %v2887
    %v2951 = vunpack.c.h.b16 %v2887
    %v2952 = vunpack.c.l.b16 %v2888
    %v2953 = vunpack.c.h.b16 %v2888
    %v2954 = vunpack.c.l.b16 %v2889
    %v2955 = vunpack.c.h.b16 %v2889
    %v2956 = vpack.c.b16 %v2914, %v2912
    %v2957 = vpack.c.b16 %v2915, %v2913
    %v2958 = vpack.c.b16 %v2918, %v2916
    %v2959 = vpack.c.b16 %v2919, %v2917
    %v2960 = vpack.c.b16 %v2922, %v2920
    %v2961 = vpack.c.b16 %v2923, %v2921
    %v2962 = vpack.c.b16 %v2926, %v2924
    %v2963 = vpack.c.b16 %v2927, %v2925
    %v2964 = vpack.c.b16 %v2930, %v2928
    %v2965 = vpack.c.b16 %v2931, %v2929
    %v2966 = vpack.c.b16 %v2934, %v2932
    %v2967 = vpack.c.b16 %v2935, %v2933
    %v2968 = vpack.c.b16 %v2938, %v2936
    %v2969 = vpack.c.b16 %v2939, %v2937
    %v2970 = vpack.c.b16 %v2942, %v2940
    %v2971 = vpack.c.b16 %v2943, %v2941
    %v2972 = vpack.c.b16 %v2946, %v2944
    %v2973 = vpack.c.b16 %v2947, %v2945
    %v2974 = vpack.c.b16 %v2950, %v2948
    %v2975 = vpack.c.b16 %v2951, %v2949
    %v2976 = vpack.c.b16 %v2954, %v2952
    %v2977 = vpack.c.b16 %v2955, %v2953
    %v2999 = vsel %vm459, %v2866, 0
    %v3002 = vand.u32 %v2976, %v1189
    %v3005 = vand.u32 %v2977, %v1189
    %3007 = vmatpush.bf16.msra.mxu0 %v2970
    %3008 = vmatpush.bf16.msra.mxu0 %v2968
    %3009 = vmatpush.bf16.msra.mxu0 %v2966
    %3010 = vmatpush.bf16.msra.mxu0 %v2964
    %3011 = vmatpush.bf16.msra.mxu0 %v2962
    %3012 = vmatpush.bf16.msra.mxu0 %v2960
    %3013 = vmatpush.bf16.msra.mxu0 %v2958
    %3014 = vmatpush.bf16.msra.mxu0 %v2956
    %3015 = vmatmul.bf16.gmra.mxu0 %v2865
    %v3016 = vpop.f32.mrf.mxu0
    %v3017 = vadd.f32 0.0, %v3016
    %v3018 = vpop.f32.mrf.mxu0
    %3019 = vdwg.mxu0
    %3020 = vmatpush.bf16.msra.mxu0 0
    %3021 = vmatpush.bf16.msra.mxu0 0
    %3022 = vmatpush.bf16.msra.mxu0 0
    %3023 = vmatpush.bf16.msra.mxu0 0
    %3024 = vmatpush.bf16.msra.mxu0 0
    %3025 = vmatpush.bf16.msra.mxu0 %v3002
    %3026 = vmatpush.bf16.msra.mxu0 %v2974
    %3027 = vmatpush.bf16.msra.mxu0 %v2972
    %3028 = vmatmul.bf16.gmra.mxu0 %v2999
    %v3029 = vpop.f32.mrf.mxu0
    %v3030 = vadd.f32 %v3017, %v3029
    %v3031 = vpop.f32.mrf.mxu0
    %3032 = vdwg.mxu0
    %3033 = vmatpush.bf16.msra.mxu0 %v2971
    %3034 = vmatpush.bf16.msra.mxu0 %v2969
    %3035 = vmatpush.bf16.msra.mxu0 %v2967
    %3036 = vmatpush.bf16.msra.mxu0 %v2965
    %3037 = vmatpush.bf16.msra.mxu0 %v2963
    %3038 = vmatpush.bf16.msra.mxu0 %v2961
    %3039 = vmatpush.bf16.msra.mxu0 %v2959
    %3040 = vmatpush.bf16.msra.mxu0 %v2957
    %3041 = vmatmul.bf16.gmra.mxu0 %v2865
    %v3042 = vpop.f32.mrf.mxu0
    %v3043 = vadd.f32 0.0, %v3042
    %v3044 = vpop.f32.mrf.mxu0
    %3045 = vdwg.mxu0
    %3046 = vmatpush.bf16.msra.mxu0 0
    %3047 = vmatpush.bf16.msra.mxu0 0
    %3048 = vmatpush.bf16.msra.mxu0 0
    %3049 = vmatpush.bf16.msra.mxu0 0
    %3050 = vmatpush.bf16.msra.mxu0 0
    %3051 = vmatpush.bf16.msra.mxu0 %v3005
    %3052 = vmatpush.bf16.msra.mxu0 %v2975
    %3053 = vmatpush.bf16.msra.mxu0 %v2973
    %3054 = vmatmul.bf16.gmra.mxu0 %v2999
    %v3055 = vpop.f32.mrf.mxu0
    %v3056 = vadd.f32 %v3043, %v3055
    %v3057 = vpop.f32.mrf.mxu0
    %3058 = vdwg.mxu0
    %v3059 = vadd.f32 %v2855, %v3030
    %v3060 = vadd.f32 %v2856, %v3056
    %v3061 = vrot.slane %v575, 2
    %v3062 = vrot.slane %v576, 2
    %v3065 = vrot.slane %v999, 1
    %v3066 = vrot.slane %v1000, 1
    %v3069 = vsel %vm150, %v3061, %v3065
    %v3070 = vsel %vm150, %v3062, %v3066
    %v3071 = vpack.c.bf16 %v3069, %v3069
    %v3072 = vpack.c.bf16 %v3070, %v3070
    %s3073 = scalar_lea.vmem [#allocation2], 1760
    %v3074 = vld [vmem:[%s3073] sm:$0xff]
    %v3075 = vld [vmem:[%s3073 + $0x8] sm:$0xff]
    %v3076 = vld [vmem:[%s3073 + $0x10] sm:$0xff]
    %v3077 = vld [vmem:[%s3073 + $0x18] sm:$0xff]
    %v3078 = vld [vmem:[%s3073 + $0x20] sm:$0xff]
    %v3079 = vld [vmem:[%s3073 + $0x28] sm:$0xff]
    %v3080 = vld [vmem:[%s3073 + $0x30] sm:$0xff]
    %v3081 = vld [vmem:[%s3073 + $0x38] sm:$0xff]
    %v3082 = vld [vmem:[%s3073 + $0x40] sm:$0xff]
    %v3083 = vld [vmem:[%s3073 + $0x48] sm:$0xff]
    %v3084 = vld [vmem:[%s3073 + $0x50] sm:$0xff]
    %v3085 = vld [vmem:[%s3073 + $0x58] sm:$0xff]
    %v3086 = vld [vmem:[%s3073 + $0x60] sm:$0xff]
    %v3087 = vld [vmem:[%s3073 + $0x68] sm:$0xff]
    %v3088 = vld [vmem:[%s3073 + $0x70] sm:$0xff]
    %v3089 = vld [vmem:[%s3073 + $0x78] sm:$0xff]
    %v3090 = vld [vmem:[%s3073 + $0x80] sm:$0xff]
    %v3091 = vld [vmem:[%s3073 + $0x88] sm:$0xff]
    %v3092 = vld [vmem:[%s3073 + $0x90] sm:$0xff]
    %v3093 = vld [vmem:[%s3073 + $0x98] sm:$0xff]
    %v3094 = vld [vmem:[%s3073 + $0xa0] sm:$0xff]
    %v3095 = vld [vmem:[%s3073 + $0xa8] sm:$0x11]
    %v3118 = vunpack.c.l.b16 %v3074
    %v3119 = vunpack.c.h.b16 %v3074
    %v3120 = vunpack.c.l.b16 %v3075
    %v3121 = vunpack.c.h.b16 %v3075
    %v3122 = vunpack.c.l.b16 %v3076
    %v3123 = vunpack.c.h.b16 %v3076
    %v3124 = vunpack.c.l.b16 %v3077
    %v3125 = vunpack.c.h.b16 %v3077
    %v3126 = vunpack.c.l.b16 %v3078
    %v3127 = vunpack.c.h.b16 %v3078
    %v3128 = vunpack.c.l.b16 %v3079
    %v3129 = vunpack.c.h.b16 %v3079
    %v3130 = vunpack.c.l.b16 %v3080
    %v3131 = vunpack.c.h.b16 %v3080
    %v3132 = vunpack.c.l.b16 %v3081
    %v3133 = vunpack.c.h.b16 %v3081
    %v3134 = vunpack.c.l.b16 %v3082
    %v3135 = vunpack.c.h.b16 %v3082
    %v3136 = vunpack.c.l.b16 %v3083
    %v3137 = vunpack.c.h.b16 %v3083
    %v3138 = vunpack.c.l.b16 %v3084
    %v3139 = vunpack.c.h.b16 %v3084
    %v3140 = vunpack.c.l.b16 %v3085
    %v3141 = vunpack.c.h.b16 %v3085
    %v3142 = vunpack.c.l.b16 %v3086
    %v3143 = vunpack.c.h.b16 %v3086
    %v3144 = vunpack.c.l.b16 %v3087
    %v3145 = vunpack.c.h.b16 %v3087
    %v3146 = vunpack.c.l.b16 %v3088
    %v3147 = vunpack.c.h.b16 %v3088
    %v3148 = vunpack.c.l.b16 %v3089
    %v3149 = vunpack.c.h.b16 %v3089
    %v3150 = vunpack.c.l.b16 %v3090
    %v3151 = vunpack.c.h.b16 %v3090
    %v3152 = vunpack.c.l.b16 %v3091
    %v3153 = vunpack.c.h.b16 %v3091
    %v3154 = vunpack.c.l.b16 %v3092
    %v3155 = vunpack.c.h.b16 %v3092
    %v3156 = vunpack.c.l.b16 %v3093
    %v3157 = vunpack.c.h.b16 %v3093
    %v3158 = vunpack.c.l.b16 %v3094
    %v3159 = vunpack.c.h.b16 %v3094
    %v3160 = vunpack.c.l.b16 %v3095
    %v3161 = vunpack.c.h.b16 %v3095
    %v3162 = vpack.c.b16 %v3120, %v3118
    %v3163 = vpack.c.b16 %v3121, %v3119
    %v3164 = vpack.c.b16 %v3124, %v3122
    %v3165 = vpack.c.b16 %v3125, %v3123
    %v3166 = vpack.c.b16 %v3128, %v3126
    %v3167 = vpack.c.b16 %v3129, %v3127
    %v3168 = vpack.c.b16 %v3132, %v3130
    %v3169 = vpack.c.b16 %v3133, %v3131
    %v3170 = vpack.c.b16 %v3136, %v3134
    %v3171 = vpack.c.b16 %v3137, %v3135
    %v3172 = vpack.c.b16 %v3140, %v3138
    %v3173 = vpack.c.b16 %v3141, %v3139
    %v3174 = vpack.c.b16 %v3144, %v3142
    %v3175 = vpack.c.b16 %v3145, %v3143
    %v3176 = vpack.c.b16 %v3148, %v3146
    %v3177 = vpack.c.b16 %v3149, %v3147
    %v3178 = vpack.c.b16 %v3152, %v3150
    %v3179 = vpack.c.b16 %v3153, %v3151
    %v3180 = vpack.c.b16 %v3156, %v3154
    %v3181 = vpack.c.b16 %v3157, %v3155
    %v3182 = vpack.c.b16 %v3160, %v3158
    %v3183 = vpack.c.b16 %v3161, %v3159
    %v3205 = vsel %vm459, %v3072, 0
    %v3208 = vand.u32 %v3182, %v1189
    %v3211 = vand.u32 %v3183, %v1189
    %3213 = vmatpush.bf16.msra.mxu0 %v3176
    %3214 = vmatpush.bf16.msra.mxu0 %v3174
    %3215 = vmatpush.bf16.msra.mxu0 %v3172
    %3216 = vmatpush.bf16.msra.mxu0 %v3170
    %3217 = vmatpush.bf16.msra.mxu0 %v3168
    %3218 = vmatpush.bf16.msra.mxu0 %v3166
    %3219 = vmatpush.bf16.msra.mxu0 %v3164
    %3220 = vmatpush.bf16.msra.mxu0 %v3162
    %3221 = vmatmul.bf16.gmra.mxu0 %v3071
    %v3222 = vpop.f32.mrf.mxu0
    %v3223 = vadd.f32 0.0, %v3222
    %v3224 = vpop.f32.mrf.mxu0
    %3225 = vdwg.mxu0
    %3226 = vmatpush.bf16.msra.mxu0 0
    %3227 = vmatpush.bf16.msra.mxu0 0
    %3228 = vmatpush.bf16.msra.mxu0 0
    %3229 = vmatpush.bf16.msra.mxu0 0
    %3230 = vmatpush.bf16.msra.mxu0 0
    %3231 = vmatpush.bf16.msra.mxu0 %v3208
    %3232 = vmatpush.bf16.msra.mxu0 %v3180
    %3233 = vmatpush.bf16.msra.mxu0 %v3178
    %3234 = vmatmul.bf16.gmra.mxu0 %v3205
    %v3235 = vpop.f32.mrf.mxu0
    %v3236 = vadd.f32 %v3223, %v3235
    %v3237 = vpop.f32.mrf.mxu0
    %3238 = vdwg.mxu0
    %3239 = vmatpush.bf16.msra.mxu0 %v3177
    %3240 = vmatpush.bf16.msra.mxu0 %v3175
    %3241 = vmatpush.bf16.msra.mxu0 %v3173
    %3242 = vmatpush.bf16.msra.mxu0 %v3171
    %3243 = vmatpush.bf16.msra.mxu0 %v3169
    %3244 = vmatpush.bf16.msra.mxu0 %v3167
    %3245 = vmatpush.bf16.msra.mxu0 %v3165
    %3246 = vmatpush.bf16.msra.mxu0 %v3163
    %3247 = vmatmul.bf16.gmra.mxu0 %v3071
    %v3248 = vpop.f32.mrf.mxu0
    %v3249 = vadd.f32 0.0, %v3248
    %v3250 = vpop.f32.mrf.mxu0
    %3251 = vdwg.mxu0
    %3252 = vmatpush.bf16.msra.mxu0 0
    %3253 = vmatpush.bf16.msra.mxu0 0
    %3254 = vmatpush.bf16.msra.mxu0 0
    %3255 = vmatpush.bf16.msra.mxu0 0
    %3256 = vmatpush.bf16.msra.mxu0 0
    %3257 = vmatpush.bf16.msra.mxu0 %v3211
    %3258 = vmatpush.bf16.msra.mxu0 %v3181
    %3259 = vmatpush.bf16.msra.mxu0 %v3179
    %3260 = vmatmul.bf16.gmra.mxu0 %v3205
    %v3261 = vpop.f32.mrf.mxu0
    %v3262 = vadd.f32 %v3249, %v3261
    %v3263 = vpop.f32.mrf.mxu0
    %3264 = vdwg.mxu0
    %v3265 = vadd.f32 %v3059, %v3236
    %v3266 = vadd.f32 %v3060, %v3262
    %v3267 = vrot.slane %v575, 3
    %v3268 = vrot.slane %v576, 3
    %v3271 = vrot.slane %v999, 2
    %v3272 = vrot.slane %v1000, 2
    %v3275 = vsel %vm150, %v3267, %v3271
    %v3276 = vsel %vm150, %v3268, %v3272
    %v3277 = vpack.c.bf16 %v3275, %v3275
    %v3278 = vpack.c.bf16 %v3276, %v3276
    %s3279 = scalar_lea.vmem [#allocation2], 1936
    %v3280 = vld [vmem:[%s3279] sm:$0xff]
    %v3281 = vld [vmem:[%s3279 + $0x8] sm:$0xff]
    %v3282 = vld [vmem:[%s3279 + $0x10] sm:$0xff]
    %v3283 = vld [vmem:[%s3279 + $0x18] sm:$0xff]
    %v3284 = vld [vmem:[%s3279 + $0x20] sm:$0xff]
    %v3285 = vld [vmem:[%s3279 + $0x28] sm:$0xff]
    %v3286 = vld [vmem:[%s3279 + $0x30] sm:$0xff]
    %v3287 = vld [vmem:[%s3279 + $0x38] sm:$0xff]
    %v3288 = vld [vmem:[%s3279 + $0x40] sm:$0xff]
    %v3289 = vld [vmem:[%s3279 + $0x48] sm:$0xff]
    %v3290 = vld [vmem:[%s3279 + $0x50] sm:$0xff]
    %v3291 = vld [vmem:[%s3279 + $0x58] sm:$0xff]
    %v3292 = vld [vmem:[%s3279 + $0x60] sm:$0xff]
    %v3293 = vld [vmem:[%s3279 + $0x68] sm:$0xff]
    %v3294 = vld [vmem:[%s3279 + $0x70] sm:$0xff]
    %v3295 = vld [vmem:[%s3279 + $0x78] sm:$0xff]
    %v3296 = vld [vmem:[%s3279 + $0x80] sm:$0xff]
    %v3297 = vld [vmem:[%s3279 + $0x88] sm:$0xff]
    %v3298 = vld [vmem:[%s3279 + $0x90] sm:$0xff]
    %v3299 = vld [vmem:[%s3279 + $0x98] sm:$0xff]
    %v3300 = vld [vmem:[%s3279 + $0xa0] sm:$0xff]
    %v3301 = vld [vmem:[%s3279 + $0xa8] sm:$0x11]
    %v3324 = vunpack.c.l.b16 %v3280
    %v3325 = vunpack.c.h.b16 %v3280
    %v3326 = vunpack.c.l.b16 %v3281
    %v3327 = vunpack.c.h.b16 %v3281
    %v3328 = vunpack.c.l.b16 %v3282
    %v3329 = vunpack.c.h.b16 %v3282
    %v3330 = vunpack.c.l.b16 %v3283
    %v3331 = vunpack.c.h.b16 %v3283
    %v3332 = vunpack.c.l.b16 %v3284
    %v3333 = vunpack.c.h.b16 %v3284
    %v3334 = vunpack.c.l.b16 %v3285
    %v3335 = vunpack.c.h.b16 %v3285
    %v3336 = vunpack.c.l.b16 %v3286
    %v3337 = vunpack.c.h.b16 %v3286
    %v3338 = vunpack.c.l.b16 %v3287
    %v3339 = vunpack.c.h.b16 %v3287
    %v3340 = vunpack.c.l.b16 %v3288
    %v3341 = vunpack.c.h.b16 %v3288
    %v3342 = vunpack.c.l.b16 %v3289
    %v3343 = vunpack.c.h.b16 %v3289
    %v3344 = vunpack.c.l.b16 %v3290
    %v3345 = vunpack.c.h.b16 %v3290
    %v3346 = vunpack.c.l.b16 %v3291
    %v3347 = vunpack.c.h.b16 %v3291
    %v3348 = vunpack.c.l.b16 %v3292
    %v3349 = vunpack.c.h.b16 %v3292
    %v3350 = vunpack.c.l.b16 %v3293
    %v3351 = vunpack.c.h.b16 %v3293
    %v3352 = vunpack.c.l.b16 %v3294
    %v3353 = vunpack.c.h.b16 %v3294
    %v3354 = vunpack.c.l.b16 %v3295
    %v3355 = vunpack.c.h.b16 %v3295
    %v3356 = vunpack.c.l.b16 %v3296
    %v3357 = vunpack.c.h.b16 %v3296
    %v3358 = vunpack.c.l.b16 %v3297
    %v3359 = vunpack.c.h.b16 %v3297
    %v3360 = vunpack.c.l.b16 %v3298
    %v3361 = vunpack.c.h.b16 %v3298
    %v3362 = vunpack.c.l.b16 %v3299
    %v3363 = vunpack.c.h.b16 %v3299
    %v3364 = vunpack.c.l.b16 %v3300
    %v3365 = vunpack.c.h.b16 %v3300
    %v3366 = vunpack.c.l.b16 %v3301
    %v3367 = vunpack.c.h.b16 %v3301
    %v3368 = vpack.c.b16 %v3326, %v3324
    %v3369 = vpack.c.b16 %v3327, %v3325
    %v3370 = vpack.c.b16 %v3330, %v3328
    %v3371 = vpack.c.b16 %v3331, %v3329
    %v3372 = vpack.c.b16 %v3334, %v3332
    %v3373 = vpack.c.b16 %v3335, %v3333
    %v3374 = vpack.c.b16 %v3338, %v3336
    %v3375 = vpack.c.b16 %v3339, %v3337
    %v3376 = vpack.c.b16 %v3342, %v3340
    %v3377 = vpack.c.b16 %v3343, %v3341
    %v3378 = vpack.c.b16 %v3346, %v3344
    %v3379 = vpack.c.b16 %v3347, %v3345
    %v3380 = vpack.c.b16 %v3350, %v3348
    %v3381 = vpack.c.b16 %v3351, %v3349
    %v3382 = vpack.c.b16 %v3354, %v3352
    %v3383 = vpack.c.b16 %v3355, %v3353
    %v3384 = vpack.c.b16 %v3358, %v3356
    %v3385 = vpack.c.b16 %v3359, %v3357
    %v3386 = vpack.c.b16 %v3362, %v3360
    %v3387 = vpack.c.b16 %v3363, %v3361
    %v3388 = vpack.c.b16 %v3366, %v3364
    %v3389 = vpack.c.b16 %v3367, %v3365
    %v3411 = vsel %vm459, %v3278, 0
    %v3414 = vand.u32 %v3388, %v1189
    %v3417 = vand.u32 %v3389, %v1189
    %3419 = vmatpush.bf16.msra.mxu0 %v3382
    %3420 = vmatpush.bf16.msra.mxu0 %v3380
    %3421 = vmatpush.bf16.msra.mxu0 %v3378
    %3422 = vmatpush.bf16.msra.mxu0 %v3376
    %3423 = vmatpush.bf16.msra.mxu0 %v3374
    %3424 = vmatpush.bf16.msra.mxu0 %v3372
    %3425 = vmatpush.bf16.msra.mxu0 %v3370
    %3426 = vmatpush.bf16.msra.mxu0 %v3368
    %3427 = vmatmul.bf16.gmra.mxu0 %v3277
    %v3428 = vpop.f32.mrf.mxu0
    %v3429 = vadd.f32 0.0, %v3428
    %v3430 = vpop.f32.mrf.mxu0
    %3431 = vdwg.mxu0
    %3432 = vmatpush.bf16.msra.mxu0 0
    %3433 = vmatpush.bf16.msra.mxu0 0
    %3434 = vmatpush.bf16.msra.mxu0 0
    %3435 = vmatpush.bf16.msra.mxu0 0
    %3436 = vmatpush.bf16.msra.mxu0 0
    %3437 = vmatpush.bf16.msra.mxu0 %v3414
    %3438 = vmatpush.bf16.msra.mxu0 %v3386
    %3439 = vmatpush.bf16.msra.mxu0 %v3384
    %3440 = vmatmul.bf16.gmra.mxu0 %v3411
    %v3441 = vpop.f32.mrf.mxu0
    %v3442 = vadd.f32 %v3429, %v3441
    %v3443 = vpop.f32.mrf.mxu0
    %3444 = vdwg.mxu0
    %3445 = vmatpush.bf16.msra.mxu0 %v3383
    %3446 = vmatpush.bf16.msra.mxu0 %v3381
    %3447 = vmatpush.bf16.msra.mxu0 %v3379
    %3448 = vmatpush.bf16.msra.mxu0 %v3377
    %3449 = vmatpush.bf16.msra.mxu0 %v3375
    %3450 = vmatpush.bf16.msra.mxu0 %v3373
    %3451 = vmatpush.bf16.msra.mxu0 %v3371
    %3452 = vmatpush.bf16.msra.mxu0 %v3369
    %3453 = vmatmul.bf16.gmra.mxu0 %v3277
    %v3454 = vpop.f32.mrf.mxu0
    %v3455 = vadd.f32 0.0, %v3454
    %v3456 = vpop.f32.mrf.mxu0
    %3457 = vdwg.mxu0
    %3458 = vmatpush.bf16.msra.mxu0 0
    %3459 = vmatpush.bf16.msra.mxu0 0
    %3460 = vmatpush.bf16.msra.mxu0 0
    %3461 = vmatpush.bf16.msra.mxu0 0
    %3462 = vmatpush.bf16.msra.mxu0 0
    %3463 = vmatpush.bf16.msra.mxu0 %v3417
    %3464 = vmatpush.bf16.msra.mxu0 %v3387
    %3465 = vmatpush.bf16.msra.mxu0 %v3385
    %3466 = vmatmul.bf16.gmra.mxu0 %v3411
    %v3467 = vpop.f32.mrf.mxu0
    %v3468 = vadd.f32 %v3455, %v3467
    %v3469 = vpop.f32.mrf.mxu0
    %3470 = vdwg.mxu0
    %v3471 = vadd.f32 %v3265, %v3442
    %v3472 = vadd.f32 %v3266, %v3468
    %v3473 = vrot.slane %v575, 4
    %v3474 = vrot.slane %v576, 4
    %v3477 = vrot.slane %v999, 3
    %v3478 = vrot.slane %v1000, 3
    %v3481 = vsel %vm150, %v3473, %v3477
    %v3482 = vsel %vm150, %v3474, %v3478
    %v3483 = vpack.c.bf16 %v3481, %v3481
    %v3484 = vpack.c.bf16 %v3482, %v3482
    %s3485 = scalar_lea.vmem [#allocation2], 2112
    %v3486 = vld [vmem:[%s3485] sm:$0xff]
    %v3487 = vld [vmem:[%s3485 + $0x8] sm:$0xff]
    %v3488 = vld [vmem:[%s3485 + $0x10] sm:$0xff]
    %v3489 = vld [vmem:[%s3485 + $0x18] sm:$0xff]
    %v3490 = vld [vmem:[%s3485 + $0x20] sm:$0xff]
    %v3491 = vld [vmem:[%s3485 + $0x28] sm:$0xff]
    %v3492 = vld [vmem:[%s3485 + $0x30] sm:$0xff]
    %v3493 = vld [vmem:[%s3485 + $0x38] sm:$0xff]
    %v3494 = vld [vmem:[%s3485 + $0x40] sm:$0xff]
    %v3495 = vld [vmem:[%s3485 + $0x48] sm:$0xff]
    %v3496 = vld [vmem:[%s3485 + $0x50] sm:$0xff]
    %v3497 = vld [vmem:[%s3485 + $0x58] sm:$0xff]
    %v3498 = vld [vmem:[%s3485 + $0x60] sm:$0xff]
    %v3499 = vld [vmem:[%s3485 + $0x68] sm:$0xff]
    %v3500 = vld [vmem:[%s3485 + $0x70] sm:$0xff]
    %v3501 = vld [vmem:[%s3485 + $0x78] sm:$0xff]
    %v3502 = vld [vmem:[%s3485 + $0x80] sm:$0xff]
    %v3503 = vld [vmem:[%s3485 + $0x88] sm:$0xff]
    %v3504 = vld [vmem:[%s3485 + $0x90] sm:$0xff]
    %v3505 = vld [vmem:[%s3485 + $0x98] sm:$0xff]
    %v3506 = vld [vmem:[%s3485 + $0xa0] sm:$0xff]
    %v3507 = vld [vmem:[%s3485 + $0xa8] sm:$0x11]
    %v3530 = vunpack.c.l.b16 %v3486
    %v3531 = vunpack.c.h.b16 %v3486
    %v3532 = vunpack.c.l.b16 %v3487
    %v3533 = vunpack.c.h.b16 %v3487
    %v3534 = vunpack.c.l.b16 %v3488
    %v3535 = vunpack.c.h.b16 %v3488
    %v3536 = vunpack.c.l.b16 %v3489
    %v3537 = vunpack.c.h.b16 %v3489
    %v3538 = vunpack.c.l.b16 %v3490
    %v3539 = vunpack.c.h.b16 %v3490
    %v3540 = vunpack.c.l.b16 %v3491
    %v3541 = vunpack.c.h.b16 %v3491
    %v3542 = vunpack.c.l.b16 %v3492
    %v3543 = vunpack.c.h.b16 %v3492
    %v3544 = vunpack.c.l.b16 %v3493
    %v3545 = vunpack.c.h.b16 %v3493
    %v3546 = vunpack.c.l.b16 %v3494
    %v3547 = vunpack.c.h.b16 %v3494
    %v3548 = vunpack.c.l.b16 %v3495
    %v3549 = vunpack.c.h.b16 %v3495
    %v3550 = vunpack.c.l.b16 %v3496
    %v3551 = vunpack.c.h.b16 %v3496
    %v3552 = vunpack.c.l.b16 %v3497
    %v3553 = vunpack.c.h.b16 %v3497
    %v3554 = vunpack.c.l.b16 %v3498
    %v3555 = vunpack.c.h.b16 %v3498
    %v3556 = vunpack.c.l.b16 %v3499
    %v3557 = vunpack.c.h.b16 %v3499
    %v3558 = vunpack.c.l.b16 %v3500
    %v3559 = vunpack.c.h.b16 %v3500
    %v3560 = vunpack.c.l.b16 %v3501
    %v3561 = vunpack.c.h.b16 %v3501
    %v3562 = vunpack.c.l.b16 %v3502
    %v3563 = vunpack.c.h.b16 %v3502
    %v3564 = vunpack.c.l.b16 %v3503
    %v3565 = vunpack.c.h.b16 %v3503
    %v3566 = vunpack.c.l.b16 %v3504
    %v3567 = vunpack.c.h.b16 %v3504
    %v3568 = vunpack.c.l.b16 %v3505
    %v3569 = vunpack.c.h.b16 %v3505
    %v3570 = vunpack.c.l.b16 %v3506
    %v3571 = vunpack.c.h.b16 %v3506
    %v3572 = vunpack.c.l.b16 %v3507
    %v3573 = vunpack.c.h.b16 %v3507
    %v3574 = vpack.c.b16 %v3532, %v3530
    %v3575 = vpack.c.b16 %v3533, %v3531
    %v3576 = vpack.c.b16 %v3536, %v3534
    %v3577 = vpack.c.b16 %v3537, %v3535
    %v3578 = vpack.c.b16 %v3540, %v3538
    %v3579 = vpack.c.b16 %v3541, %v3539
    %v3580 = vpack.c.b16 %v3544, %v3542
    %v3581 = vpack.c.b16 %v3545, %v3543
    %v3582 = vpack.c.b16 %v3548, %v3546
    %v3583 = vpack.c.b16 %v3549, %v3547
    %v3584 = vpack.c.b16 %v3552, %v3550
    %v3585 = vpack.c.b16 %v3553, %v3551
    %v3586 = vpack.c.b16 %v3556, %v3554
    %v3587 = vpack.c.b16 %v3557, %v3555
    %v3588 = vpack.c.b16 %v3560, %v3558
    %v3589 = vpack.c.b16 %v3561, %v3559
    %v3590 = vpack.c.b16 %v3564, %v3562
    %v3591 = vpack.c.b16 %v3565, %v3563
    %v3592 = vpack.c.b16 %v3568, %v3566
    %v3593 = vpack.c.b16 %v3569, %v3567
    %v3594 = vpack.c.b16 %v3572, %v3570
    %v3595 = vpack.c.b16 %v3573, %v3571
    %v3617 = vsel %vm459, %v3484, 0
    %v3620 = vand.u32 %v3594, %v1189
    %v3623 = vand.u32 %v3595, %v1189
    %3625 = vmatpush.bf16.msra.mxu0 %v3588
    %3626 = vmatpush.bf16.msra.mxu0 %v3586
    %3627 = vmatpush.bf16.msra.mxu0 %v3584
    %3628 = vmatpush.bf16.msra.mxu0 %v3582
    %3629 = vmatpush.bf16.msra.mxu0 %v3580
    %3630 = vmatpush.bf16.msra.mxu0 %v3578
    %3631 = vmatpush.bf16.msra.mxu0 %v3576
    %3632 = vmatpush.bf16.msra.mxu0 %v3574
    %3633 = vmatmul.bf16.gmra.mxu0 %v3483
    %v3634 = vpop.f32.mrf.mxu0
    %v3635 = vadd.f32 0.0, %v3634
    %v3636 = vpop.f32.mrf.mxu0
    %3637 = vdwg.mxu0
    %3638 = vmatpush.bf16.msra.mxu0 0
    %3639 = vmatpush.bf16.msra.mxu0 0
    %3640 = vmatpush.bf16.msra.mxu0 0
    %3641 = vmatpush.bf16.msra.mxu0 0
    %3642 = vmatpush.bf16.msra.mxu0 0
    %3643 = vmatpush.bf16.msra.mxu0 %v3620
    %3644 = vmatpush.bf16.msra.mxu0 %v3592
    %3645 = vmatpush.bf16.msra.mxu0 %v3590
    %3646 = vmatmul.bf16.gmra.mxu0 %v3617
    %v3647 = vpop.f32.mrf.mxu0
    %v3648 = vadd.f32 %v3635, %v3647
    %v3649 = vpop.f32.mrf.mxu0
    %3650 = vdwg.mxu0
    %3651 = vmatpush.bf16.msra.mxu0 %v3589
    %3652 = vmatpush.bf16.msra.mxu0 %v3587
    %3653 = vmatpush.bf16.msra.mxu0 %v3585
    %3654 = vmatpush.bf16.msra.mxu0 %v3583
    %3655 = vmatpush.bf16.msra.mxu0 %v3581
    %3656 = vmatpush.bf16.msra.mxu0 %v3579
    %3657 = vmatpush.bf16.msra.mxu0 %v3577
    %3658 = vmatpush.bf16.msra.mxu0 %v3575
    %3659 = vmatmul.bf16.gmra.mxu0 %v3483
    %v3660 = vpop.f32.mrf.mxu0
    %v3661 = vadd.f32 0.0, %v3660
    %v3662 = vpop.f32.mrf.mxu0
    %3663 = vdwg.mxu0
    %3664 = vmatpush.bf16.msra.mxu0 0
    %3665 = vmatpush.bf16.msra.mxu0 0
    %3666 = vmatpush.bf16.msra.mxu0 0
    %3667 = vmatpush.bf16.msra.mxu0 0
    %3668 = vmatpush.bf16.msra.mxu0 0
    %3669 = vmatpush.bf16.msra.mxu0 %v3623
    %3670 = vmatpush.bf16.msra.mxu0 %v3593
    %3671 = vmatpush.bf16.msra.mxu0 %v3591
    %3672 = vmatmul.bf16.gmra.mxu0 %v3617
    %v3673 = vpop.f32.mrf.mxu0
    %v3674 = vadd.f32 %v3661, %v3673
    %v3675 = vpop.f32.mrf.mxu0
    %3676 = vdwg.mxu0
    %v3677 = vadd.f32 %v3471, %v3648
    %v3678 = vadd.f32 %v3472, %v3674
    %v3679 = vrot.slane %v575, 5
    %v3680 = vrot.slane %v576, 5
    %v3683 = vrot.slane %v999, 4
    %v3684 = vrot.slane %v1000, 4
    %v3687 = vsel %vm150, %v3679, %v3683
    %v3688 = vsel %vm150, %v3680, %v3684
    %v3689 = vpack.c.bf16 %v3687, %v3687
    %v3690 = vpack.c.bf16 %v3688, %v3688
    %s3691 = scalar_lea.vmem [#allocation2], 2288
    %v3692 = vld [vmem:[%s3691] sm:$0xff]
    %v3693 = vld [vmem:[%s3691 + $0x8] sm:$0xff]
    %v3694 = vld [vmem:[%s3691 + $0x10] sm:$0xff]
    %v3695 = vld [vmem:[%s3691 + $0x18] sm:$0xff]
    %v3696 = vld [vmem:[%s3691 + $0x20] sm:$0xff]
    %v3697 = vld [vmem:[%s3691 + $0x28] sm:$0xff]
    %v3698 = vld [vmem:[%s3691 + $0x30] sm:$0xff]
    %v3699 = vld [vmem:[%s3691 + $0x38] sm:$0xff]
    %v3700 = vld [vmem:[%s3691 + $0x40] sm:$0xff]
    %v3701 = vld [vmem:[%s3691 + $0x48] sm:$0xff]
    %v3702 = vld [vmem:[%s3691 + $0x50] sm:$0xff]
    %v3703 = vld [vmem:[%s3691 + $0x58] sm:$0xff]
    %v3704 = vld [vmem:[%s3691 + $0x60] sm:$0xff]
    %v3705 = vld [vmem:[%s3691 + $0x68] sm:$0xff]
    %v3706 = vld [vmem:[%s3691 + $0x70] sm:$0xff]
    %v3707 = vld [vmem:[%s3691 + $0x78] sm:$0xff]
    %v3708 = vld [vmem:[%s3691 + $0x80] sm:$0xff]
    %v3709 = vld [vmem:[%s3691 + $0x88] sm:$0xff]
    %v3710 = vld [vmem:[%s3691 + $0x90] sm:$0xff]
    %v3711 = vld [vmem:[%s3691 + $0x98] sm:$0xff]
    %v3712 = vld [vmem:[%s3691 + $0xa0] sm:$0xff]
    %v3713 = vld [vmem:[%s3691 + $0xa8] sm:$0x11]
    %v3736 = vunpack.c.l.b16 %v3692
    %v3737 = vunpack.c.h.b16 %v3692
    %v3738 = vunpack.c.l.b16 %v3693
    %v3739 = vunpack.c.h.b16 %v3693
    %v3740 = vunpack.c.l.b16 %v3694
    %v3741 = vunpack.c.h.b16 %v3694
    %v3742 = vunpack.c.l.b16 %v3695
    %v3743 = vunpack.c.h.b16 %v3695
    %v3744 = vunpack.c.l.b16 %v3696
    %v3745 = vunpack.c.h.b16 %v3696
    %v3746 = vunpack.c.l.b16 %v3697
    %v3747 = vunpack.c.h.b16 %v3697
    %v3748 = vunpack.c.l.b16 %v3698
    %v3749 = vunpack.c.h.b16 %v3698
    %v3750 = vunpack.c.l.b16 %v3699
    %v3751 = vunpack.c.h.b16 %v3699
    %v3752 = vunpack.c.l.b16 %v3700
    %v3753 = vunpack.c.h.b16 %v3700
    %v3754 = vunpack.c.l.b16 %v3701
    %v3755 = vunpack.c.h.b16 %v3701
    %v3756 = vunpack.c.l.b16 %v3702
    %v3757 = vunpack.c.h.b16 %v3702
    %v3758 = vunpack.c.l.b16 %v3703
    %v3759 = vunpack.c.h.b16 %v3703
    %v3760 = vunpack.c.l.b16 %v3704
    %v3761 = vunpack.c.h.b16 %v3704
    %v3762 = vunpack.c.l.b16 %v3705
    %v3763 = vunpack.c.h.b16 %v3705
    %v3764 = vunpack.c.l.b16 %v3706
    %v3765 = vunpack.c.h.b16 %v3706
    %v3766 = vunpack.c.l.b16 %v3707
    %v3767 = vunpack.c.h.b16 %v3707
    %v3768 = vunpack.c.l.b16 %v3708
    %v3769 = vunpack.c.h.b16 %v3708
    %v3770 = vunpack.c.l.b16 %v3709
    %v3771 = vunpack.c.h.b16 %v3709
    %v3772 = vunpack.c.l.b16 %v3710
    %v3773 = vunpack.c.h.b16 %v3710
    %v3774 = vunpack.c.l.b16 %v3711
    %v3775 = vunpack.c.h.b16 %v3711
    %v3776 = vunpack.c.l.b16 %v3712
    %v3777 = vunpack.c.h.b16 %v3712
    %v3778 = vunpack.c.l.b16 %v3713
    %v3779 = vunpack.c.h.b16 %v3713
    %v3780 = vpack.c.b16 %v3738, %v3736
    %v3781 = vpack.c.b16 %v3739, %v3737
    %v3782 = vpack.c.b16 %v3742, %v3740
    %v3783 = vpack.c.b16 %v3743, %v3741
    %v3784 = vpack.c.b16 %v3746, %v3744
    %v3785 = vpack.c.b16 %v3747, %v3745
    %v3786 = vpack.c.b16 %v3750, %v3748
    %v3787 = vpack.c.b16 %v3751, %v3749
    %v3788 = vpack.c.b16 %v3754, %v3752
    %v3789 = vpack.c.b16 %v3755, %v3753
    %v3790 = vpack.c.b16 %v3758, %v3756
    %v3791 = vpack.c.b16 %v3759, %v3757
    %v3792 = vpack.c.b16 %v3762, %v3760
    %v3793 = vpack.c.b16 %v3763, %v3761
    %v3794 = vpack.c.b16 %v3766, %v3764
    %v3795 = vpack.c.b16 %v3767, %v3765
    %v3796 = vpack.c.b16 %v3770, %v3768
    %v3797 = vpack.c.b16 %v3771, %v3769
    %v3798 = vpack.c.b16 %v3774, %v3772
    %v3799 = vpack.c.b16 %v3775, %v3773
    %v3800 = vpack.c.b16 %v3778, %v3776
    %v3801 = vpack.c.b16 %v3779, %v3777
    %v3823 = vsel %vm459, %v3690, 0
    %v3826 = vand.u32 %v3800, %v1189
    %v3829 = vand.u32 %v3801, %v1189
    %3831 = vmatpush.bf16.msra.mxu0 %v3794
    %3832 = vmatpush.bf16.msra.mxu0 %v3792
    %3833 = vmatpush.bf16.msra.mxu0 %v3790
    %3834 = vmatpush.bf16.msra.mxu0 %v3788
    %3835 = vmatpush.bf16.msra.mxu0 %v3786
    %3836 = vmatpush.bf16.msra.mxu0 %v3784
    %3837 = vmatpush.bf16.msra.mxu0 %v3782
    %3838 = vmatpush.bf16.msra.mxu0 %v3780
    %3839 = vmatmul.bf16.gmra.mxu0 %v3689
    %v3840 = vpop.f32.mrf.mxu0
    %v3841 = vadd.f32 0.0, %v3840
    %v3842 = vpop.f32.mrf.mxu0
    %3843 = vdwg.mxu0
    %3844 = vmatpush.bf16.msra.mxu0 0
    %3845 = vmatpush.bf16.msra.mxu0 0
    %3846 = vmatpush.bf16.msra.mxu0 0
    %3847 = vmatpush.bf16.msra.mxu0 0
    %3848 = vmatpush.bf16.msra.mxu0 0
    %3849 = vmatpush.bf16.msra.mxu0 %v3826
    %3850 = vmatpush.bf16.msra.mxu0 %v3798
    %3851 = vmatpush.bf16.msra.mxu0 %v3796
    %3852 = vmatmul.bf16.gmra.mxu0 %v3823
    %v3853 = vpop.f32.mrf.mxu0
    %v3854 = vadd.f32 %v3841, %v3853
    %v3855 = vpop.f32.mrf.mxu0
    %3856 = vdwg.mxu0
    %3857 = vmatpush.bf16.msra.mxu0 %v3795
    %3858 = vmatpush.bf16.msra.mxu0 %v3793
    %3859 = vmatpush.bf16.msra.mxu0 %v3791
    %3860 = vmatpush.bf16.msra.mxu0 %v3789
    %3861 = vmatpush.bf16.msra.mxu0 %v3787
    %3862 = vmatpush.bf16.msra.mxu0 %v3785
    %3863 = vmatpush.bf16.msra.mxu0 %v3783
    %3864 = vmatpush.bf16.msra.mxu0 %v3781
    %3865 = vmatmul.bf16.gmra.mxu0 %v3689
    %v3866 = vpop.f32.mrf.mxu0
    %v3867 = vadd.f32 0.0, %v3866
    %v3868 = vpop.f32.mrf.mxu0
    %3869 = vdwg.mxu0
    %3870 = vmatpush.bf16.msra.mxu0 0
    %3871 = vmatpush.bf16.msra.mxu0 0
    %3872 = vmatpush.bf16.msra.mxu0 0
    %3873 = vmatpush.bf16.msra.mxu0 0
    %3874 = vmatpush.bf16.msra.mxu0 0
    %3875 = vmatpush.bf16.msra.mxu0 %v3829
    %3876 = vmatpush.bf16.msra.mxu0 %v3799
    %3877 = vmatpush.bf16.msra.mxu0 %v3797
    %3878 = vmatmul.bf16.gmra.mxu0 %v3823
    %v3879 = vpop.f32.mrf.mxu0
    %v3880 = vadd.f32 %v3867, %v3879
    %v3881 = vpop.f32.mrf.mxu0
    %3882 = vdwg.mxu0
    %v3883 = vadd.f32 %v3677, %v3854
    %v3884 = vadd.f32 %v3678, %v3880
    %v3885 = vrot.slane %v575, 6
    %v3886 = vrot.slane %v576, 6
    %v3889 = vrot.slane %v999, 5
    %v3890 = vrot.slane %v1000, 5
    %v3893 = vsel %vm150, %v3885, %v3889
    %v3894 = vsel %vm150, %v3886, %v3890
    %v3895 = vpack.c.bf16 %v3893, %v3893
    %v3896 = vpack.c.bf16 %v3894, %v3894
    %s3897 = scalar_lea.vmem [#allocation2], 2464
    %v3898 = vld [vmem:[%s3897] sm:$0xff]
    %v3899 = vld [vmem:[%s3897 + $0x8] sm:$0xff]
    %v3900 = vld [vmem:[%s3897 + $0x10] sm:$0xff]
    %v3901 = vld [vmem:[%s3897 + $0x18] sm:$0xff]
    %v3902 = vld [vmem:[%s3897 + $0x20] sm:$0xff]
    %v3903 = vld [vmem:[%s3897 + $0x28] sm:$0xff]
    %v3904 = vld [vmem:[%s3897 + $0x30] sm:$0xff]
    %v3905 = vld [vmem:[%s3897 + $0x38] sm:$0xff]
    %v3906 = vld [vmem:[%s3897 + $0x40] sm:$0xff]
    %v3907 = vld [vmem:[%s3897 + $0x48] sm:$0xff]
    %v3908 = vld [vmem:[%s3897 + $0x50] sm:$0xff]
    %v3909 = vld [vmem:[%s3897 + $0x58] sm:$0xff]
    %v3910 = vld [vmem:[%s3897 + $0x60] sm:$0xff]
    %v3911 = vld [vmem:[%s3897 + $0x68] sm:$0xff]
    %v3912 = vld [vmem:[%s3897 + $0x70] sm:$0xff]
    %v3913 = vld [vmem:[%s3897 + $0x78] sm:$0xff]
    %v3914 = vld [vmem:[%s3897 + $0x80] sm:$0xff]
    %v3915 = vld [vmem:[%s3897 + $0x88] sm:$0xff]
    %v3916 = vld [vmem:[%s3897 + $0x90] sm:$0xff]
    %v3917 = vld [vmem:[%s3897 + $0x98] sm:$0xff]
    %v3918 = vld [vmem:[%s3897 + $0xa0] sm:$0xff]
    %v3919 = vld [vmem:[%s3897 + $0xa8] sm:$0x11]
    %v3942 = vunpack.c.l.b16 %v3898
    %v3943 = vunpack.c.h.b16 %v3898
    %v3944 = vunpack.c.l.b16 %v3899
    %v3945 = vunpack.c.h.b16 %v3899
    %v3946 = vunpack.c.l.b16 %v3900
    %v3947 = vunpack.c.h.b16 %v3900
    %v3948 = vunpack.c.l.b16 %v3901
    %v3949 = vunpack.c.h.b16 %v3901
    %v3950 = vunpack.c.l.b16 %v3902
    %v3951 = vunpack.c.h.b16 %v3902
    %v3952 = vunpack.c.l.b16 %v3903
    %v3953 = vunpack.c.h.b16 %v3903
    %v3954 = vunpack.c.l.b16 %v3904
    %v3955 = vunpack.c.h.b16 %v3904
    %v3956 = vunpack.c.l.b16 %v3905
    %v3957 = vunpack.c.h.b16 %v3905
    %v3958 = vunpack.c.l.b16 %v3906
    %v3959 = vunpack.c.h.b16 %v3906
    %v3960 = vunpack.c.l.b16 %v3907
    %v3961 = vunpack.c.h.b16 %v3907
    %v3962 = vunpack.c.l.b16 %v3908
    %v3963 = vunpack.c.h.b16 %v3908
    %v3964 = vunpack.c.l.b16 %v3909
    %v3965 = vunpack.c.h.b16 %v3909
    %v3966 = vunpack.c.l.b16 %v3910
    %v3967 = vunpack.c.h.b16 %v3910
    %v3968 = vunpack.c.l.b16 %v3911
    %v3969 = vunpack.c.h.b16 %v3911
    %v3970 = vunpack.c.l.b16 %v3912
    %v3971 = vunpack.c.h.b16 %v3912
    %v3972 = vunpack.c.l.b16 %v3913
    %v3973 = vunpack.c.h.b16 %v3913
    %v3974 = vunpack.c.l.b16 %v3914
    %v3975 = vunpack.c.h.b16 %v3914
    %v3976 = vunpack.c.l.b16 %v3915
    %v3977 = vunpack.c.h.b16 %v3915
    %v3978 = vunpack.c.l.b16 %v3916
    %v3979 = vunpack.c.h.b16 %v3916
    %v3980 = vunpack.c.l.b16 %v3917
    %v3981 = vunpack.c.h.b16 %v3917
    %v3982 = vunpack.c.l.b16 %v3918
    %v3983 = vunpack.c.h.b16 %v3918
    %v3984 = vunpack.c.l.b16 %v3919
    %v3985 = vunpack.c.h.b16 %v3919
    %v3986 = vpack.c.b16 %v3944, %v3942
    %v3987 = vpack.c.b16 %v3945, %v3943
    %v3988 = vpack.c.b16 %v3948, %v3946
    %v3989 = vpack.c.b16 %v3949, %v3947
    %v3990 = vpack.c.b16 %v3952, %v3950
    %v3991 = vpack.c.b16 %v3953, %v3951
    %v3992 = vpack.c.b16 %v3956, %v3954
    %v3993 = vpack.c.b16 %v3957, %v3955
    %v3994 = vpack.c.b16 %v3960, %v3958
    %v3995 = vpack.c.b16 %v3961, %v3959
    %v3996 = vpack.c.b16 %v3964, %v3962
    %v3997 = vpack.c.b16 %v3965, %v3963
    %v3998 = vpack.c.b16 %v3968, %v3966
    %v3999 = vpack.c.b16 %v3969, %v3967
    %v4000 = vpack.c.b16 %v3972, %v3970
    %v4001 = vpack.c.b16 %v3973, %v3971
    %v4002 = vpack.c.b16 %v3976, %v3974
    %v4003 = vpack.c.b16 %v3977, %v3975
    %v4004 = vpack.c.b16 %v3980, %v3978
    %v4005 = vpack.c.b16 %v3981, %v3979
    %v4006 = vpack.c.b16 %v3984, %v3982
    %v4007 = vpack.c.b16 %v3985, %v3983
    %v4029 = vsel %vm459, %v3896, 0
    %v4032 = vand.u32 %v4006, %v1189
    %v4035 = vand.u32 %v4007, %v1189
    %4037 = vmatpush.bf16.msra.mxu0 %v4000
    %4038 = vmatpush.bf16.msra.mxu0 %v3998
    %4039 = vmatpush.bf16.msra.mxu0 %v3996
    %4040 = vmatpush.bf16.msra.mxu0 %v3994
    %4041 = vmatpush.bf16.msra.mxu0 %v3992
    %4042 = vmatpush.bf16.msra.mxu0 %v3990
    %4043 = vmatpush.bf16.msra.mxu0 %v3988
    %4044 = vmatpush.bf16.msra.mxu0 %v3986
    %4045 = vmatmul.bf16.gmra.mxu0 %v3895
    %v4046 = vpop.f32.mrf.mxu0
    %v4047 = vadd.f32 0.0, %v4046
    %v4048 = vpop.f32.mrf.mxu0
    %4049 = vdwg.mxu0
    %4050 = vmatpush.bf16.msra.mxu0 0
    %4051 = vmatpush.bf16.msra.mxu0 0
    %4052 = vmatpush.bf16.msra.mxu0 0
    %4053 = vmatpush.bf16.msra.mxu0 0
    %4054 = vmatpush.bf16.msra.mxu0 0
    %4055 = vmatpush.bf16.msra.mxu0 %v4032
    %4056 = vmatpush.bf16.msra.mxu0 %v4004
    %4057 = vmatpush.bf16.msra.mxu0 %v4002
    %4058 = vmatmul.bf16.gmra.mxu0 %v4029
    %v4059 = vpop.f32.mrf.mxu0
    %v4060 = vadd.f32 %v4047, %v4059
    %v4061 = vpop.f32.mrf.mxu0
    %4062 = vdwg.mxu0
    %4063 = vmatpush.bf16.msra.mxu0 %v4001
    %4064 = vmatpush.bf16.msra.mxu0 %v3999
    %4065 = vmatpush.bf16.msra.mxu0 %v3997
    %4066 = vmatpush.bf16.msra.mxu0 %v3995
    %4067 = vmatpush.bf16.msra.mxu0 %v3993
    %4068 = vmatpush.bf16.msra.mxu0 %v3991
    %4069 = vmatpush.bf16.msra.mxu0 %v3989
    %4070 = vmatpush.bf16.msra.mxu0 %v3987
    %4071 = vmatmul.bf16.gmra.mxu0 %v3895
    %v4072 = vpop.f32.mrf.mxu0
    %v4073 = vadd.f32 0.0, %v4072
    %v4074 = vpop.f32.mrf.mxu0
    %4075 = vdwg.mxu0
    %4076 = vmatpush.bf16.msra.mxu0 0
    %4077 = vmatpush.bf16.msra.mxu0 0
    %4078 = vmatpush.bf16.msra.mxu0 0
    %4079 = vmatpush.bf16.msra.mxu0 0
    %4080 = vmatpush.bf16.msra.mxu0 0
    %4081 = vmatpush.bf16.msra.mxu0 %v4035
    %4082 = vmatpush.bf16.msra.mxu0 %v4005
    %4083 = vmatpush.bf16.msra.mxu0 %v4003
    %4084 = vmatmul.bf16.gmra.mxu0 %v4029
    %v4085 = vpop.f32.mrf.mxu0
    %v4086 = vadd.f32 %v4073, %v4085
    %v4087 = vpop.f32.mrf.mxu0
    %4088 = vdwg.mxu0
    %v4089 = vadd.f32 %v3883, %v4060
    %v4090 = vadd.f32 %v3884, %v4086
    %v4091 = vrot.slane %v575, 7
    %v4092 = vrot.slane %v576, 7
    %v4095 = vrot.slane %v999, 6
    %v4096 = vrot.slane %v1000, 6
    %v4099 = vsel %vm150, %v4091, %v4095
    %v4100 = vsel %vm150, %v4092, %v4096
    %v4101 = vpack.c.bf16 %v4099, %v4099
    %v4102 = vpack.c.bf16 %v4100, %v4100
    %s4103 = scalar_lea.vmem [#allocation2], 2640
    %v4104 = vld [vmem:[%s4103] sm:$0xff]
    %v4105 = vld [vmem:[%s4103 + $0x8] sm:$0xff]
    %v4106 = vld [vmem:[%s4103 + $0x10] sm:$0xff]
    %v4107 = vld [vmem:[%s4103 + $0x18] sm:$0xff]
    %v4108 = vld [vmem:[%s4103 + $0x20] sm:$0xff]
    %v4109 = vld [vmem:[%s4103 + $0x28] sm:$0xff]
    %v4110 = vld [vmem:[%s4103 + $0x30] sm:$0xff]
    %v4111 = vld [vmem:[%s4103 + $0x38] sm:$0xff]
    %v4112 = vld [vmem:[%s4103 + $0x40] sm:$0xff]
    %v4113 = vld [vmem:[%s4103 + $0x48] sm:$0xff]
    %v4114 = vld [vmem:[%s4103 + $0x50] sm:$0xff]
    %v4115 = vld [vmem:[%s4103 + $0x58] sm:$0xff]
    %v4116 = vld [vmem:[%s4103 + $0x60] sm:$0xff]
    %v4117 = vld [vmem:[%s4103 + $0x68] sm:$0xff]
    %v4118 = vld [vmem:[%s4103 + $0x70] sm:$0xff]
    %v4119 = vld [vmem:[%s4103 + $0x78] sm:$0xff]
    %v4120 = vld [vmem:[%s4103 + $0x80] sm:$0xff]
    %v4121 = vld [vmem:[%s4103 + $0x88] sm:$0xff]
    %v4122 = vld [vmem:[%s4103 + $0x90] sm:$0xff]
    %v4123 = vld [vmem:[%s4103 + $0x98] sm:$0xff]
    %v4124 = vld [vmem:[%s4103 + $0xa0] sm:$0xff]
    %v4125 = vld [vmem:[%s4103 + $0xa8] sm:$0x11]
    %v4148 = vunpack.c.l.b16 %v4104
    %v4149 = vunpack.c.h.b16 %v4104
    %v4150 = vunpack.c.l.b16 %v4105
    %v4151 = vunpack.c.h.b16 %v4105
    %v4152 = vunpack.c.l.b16 %v4106
    %v4153 = vunpack.c.h.b16 %v4106
    %v4154 = vunpack.c.l.b16 %v4107
    %v4155 = vunpack.c.h.b16 %v4107
    %v4156 = vunpack.c.l.b16 %v4108
    %v4157 = vunpack.c.h.b16 %v4108
    %v4158 = vunpack.c.l.b16 %v4109
    %v4159 = vunpack.c.h.b16 %v4109
    %v4160 = vunpack.c.l.b16 %v4110
    %v4161 = vunpack.c.h.b16 %v4110
    %v4162 = vunpack.c.l.b16 %v4111
    %v4163 = vunpack.c.h.b16 %v4111
    %v4164 = vunpack.c.l.b16 %v4112
    %v4165 = vunpack.c.h.b16 %v4112
    %v4166 = vunpack.c.l.b16 %v4113
    %v4167 = vunpack.c.h.b16 %v4113
    %v4168 = vunpack.c.l.b16 %v4114
    %v4169 = vunpack.c.h.b16 %v4114
    %v4170 = vunpack.c.l.b16 %v4115
    %v4171 = vunpack.c.h.b16 %v4115
    %v4172 = vunpack.c.l.b16 %v4116
    %v4173 = vunpack.c.h.b16 %v4116
    %v4174 = vunpack.c.l.b16 %v4117
    %v4175 = vunpack.c.h.b16 %v4117
    %v4176 = vunpack.c.l.b16 %v4118
    %v4177 = vunpack.c.h.b16 %v4118
    %v4178 = vunpack.c.l.b16 %v4119
    %v4179 = vunpack.c.h.b16 %v4119
    %v4180 = vunpack.c.l.b16 %v4120
    %v4181 = vunpack.c.h.b16 %v4120
    %v4182 = vunpack.c.l.b16 %v4121
    %v4183 = vunpack.c.h.b16 %v4121
    %v4184 = vunpack.c.l.b16 %v4122
    %v4185 = vunpack.c.h.b16 %v4122
    %v4186 = vunpack.c.l.b16 %v4123
    %v4187 = vunpack.c.h.b16 %v4123
    %v4188 = vunpack.c.l.b16 %v4124
    %v4189 = vunpack.c.h.b16 %v4124
    %v4190 = vunpack.c.l.b16 %v4125
    %v4191 = vunpack.c.h.b16 %v4125
    %v4192 = vpack.c.b16 %v4150, %v4148
    %v4193 = vpack.c.b16 %v4151, %v4149
    %v4194 = vpack.c.b16 %v4154, %v4152
    %v4195 = vpack.c.b16 %v4155, %v4153
    %v4196 = vpack.c.b16 %v4158, %v4156
    %v4197 = vpack.c.b16 %v4159, %v4157
    %v4198 = vpack.c.b16 %v4162, %v4160
    %v4199 = vpack.c.b16 %v4163, %v4161
    %v4200 = vpack.c.b16 %v4166, %v4164
    %v4201 = vpack.c.b16 %v4167, %v4165
    %v4202 = vpack.c.b16 %v4170, %v4168
    %v4203 = vpack.c.b16 %v4171, %v4169
    %v4204 = vpack.c.b16 %v4174, %v4172
    %v4205 = vpack.c.b16 %v4175, %v4173
    %v4206 = vpack.c.b16 %v4178, %v4176
    %v4207 = vpack.c.b16 %v4179, %v4177
    %v4208 = vpack.c.b16 %v4182, %v4180
    %v4209 = vpack.c.b16 %v4183, %v4181
    %v4210 = vpack.c.b16 %v4186, %v4184
    %v4211 = vpack.c.b16 %v4187, %v4185
    %v4212 = vpack.c.b16 %v4190, %v4188
    %v4213 = vpack.c.b16 %v4191, %v4189
    %v4235 = vsel %vm459, %v4102, 0
    %v4238 = vand.u32 %v4212, %v1189
    %v4241 = vand.u32 %v4213, %v1189
    %4243 = vmatpush.bf16.msra.mxu0 %v4206
    %4244 = vmatpush.bf16.msra.mxu0 %v4204
    %4245 = vmatpush.bf16.msra.mxu0 %v4202
    %4246 = vmatpush.bf16.msra.mxu0 %v4200
    %4247 = vmatpush.bf16.msra.mxu0 %v4198
    %4248 = vmatpush.bf16.msra.mxu0 %v4196
    %4249 = vmatpush.bf16.msra.mxu0 %v4194
    %4250 = vmatpush.bf16.msra.mxu0 %v4192
    %4251 = vmatmul.bf16.gmra.mxu0 %v4101
    %v4252 = vpop.f32.mrf.mxu0
    %v4253 = vadd.f32 0.0, %v4252
    %v4254 = vpop.f32.mrf.mxu0
    %4255 = vdwg.mxu0
    %4256 = vmatpush.bf16.msra.mxu0 0
    %4257 = vmatpush.bf16.msra.mxu0 0
    %4258 = vmatpush.bf16.msra.mxu0 0
    %4259 = vmatpush.bf16.msra.mxu0 0
    %4260 = vmatpush.bf16.msra.mxu0 0
    %4261 = vmatpush.bf16.msra.mxu0 %v4238
    %4262 = vmatpush.bf16.msra.mxu0 %v4210
    %4263 = vmatpush.bf16.msra.mxu0 %v4208
    %4264 = vmatmul.bf16.gmra.mxu0 %v4235
    %v4265 = vpop.f32.mrf.mxu0
    %v4266 = vadd.f32 %v4253, %v4265
    %v4267 = vpop.f32.mrf.mxu0
    %4268 = vdwg.mxu0
    %4269 = vmatpush.bf16.msra.mxu0 %v4207
    %4270 = vmatpush.bf16.msra.mxu0 %v4205
    %4271 = vmatpush.bf16.msra.mxu0 %v4203
    %4272 = vmatpush.bf16.msra.mxu0 %v4201
    %4273 = vmatpush.bf16.msra.mxu0 %v4199
    %4274 = vmatpush.bf16.msra.mxu0 %v4197
    %4275 = vmatpush.bf16.msra.mxu0 %v4195
    %4276 = vmatpush.bf16.msra.mxu0 %v4193
    %4277 = vmatmul.bf16.gmra.mxu0 %v4101
    %v4278 = vpop.f32.mrf.mxu0
    %v4279 = vadd.f32 0.0, %v4278
    %v4280 = vpop.f32.mrf.mxu0
    %4281 = vdwg.mxu0
    %4282 = vmatpush.bf16.msra.mxu0 0
    %4283 = vmatpush.bf16.msra.mxu0 0
    %4284 = vmatpush.bf16.msra.mxu0 0
    %4285 = vmatpush.bf16.msra.mxu0 0
    %4286 = vmatpush.bf16.msra.mxu0 0
    %4287 = vmatpush.bf16.msra.mxu0 %v4241
    %4288 = vmatpush.bf16.msra.mxu0 %v4211
    %4289 = vmatpush.bf16.msra.mxu0 %v4209
    %4290 = vmatmul.bf16.gmra.mxu0 %v4235
    %v4291 = vpop.f32.mrf.mxu0
    %v4292 = vadd.f32 %v4279, %v4291
    %v4293 = vpop.f32.mrf.mxu0
    %4294 = vdwg.mxu0
    %v4295 = vadd.f32 %v4089, %v4266
    %v4296 = vadd.f32 %v4090, %v4292
    %v4299 = vrot.slane %v1001, 7
    %v4300 = vrot.slane %v1002, 7
    %v4303 = vsel %vm150, %v577, %v4299
    %v4304 = vsel %vm150, %v578, %v4300
    %v4305 = vpack.c.bf16 %v4303, %v4303
    %v4306 = vpack.c.bf16 %v4304, %v4304
    %s4307 = scalar_lea.vmem [#allocation2], 2816
    %v4308 = vld [vmem:[%s4307] sm:$0xff]
    %v4309 = vld [vmem:[%s4307 + $0x8] sm:$0xff]
    %v4310 = vld [vmem:[%s4307 + $0x10] sm:$0xff]
    %v4311 = vld [vmem:[%s4307 + $0x18] sm:$0xff]
    %v4312 = vld [vmem:[%s4307 + $0x20] sm:$0xff]
    %v4313 = vld [vmem:[%s4307 + $0x28] sm:$0xff]
    %v4314 = vld [vmem:[%s4307 + $0x30] sm:$0xff]
    %v4315 = vld [vmem:[%s4307 + $0x38] sm:$0xff]
    %v4316 = vld [vmem:[%s4307 + $0x40] sm:$0xff]
    %v4317 = vld [vmem:[%s4307 + $0x48] sm:$0xff]
    %v4318 = vld [vmem:[%s4307 + $0x50] sm:$0xff]
    %v4319 = vld [vmem:[%s4307 + $0x58] sm:$0xff]
    %v4320 = vld [vmem:[%s4307 + $0x60] sm:$0xff]
    %v4321 = vld [vmem:[%s4307 + $0x68] sm:$0xff]
    %v4322 = vld [vmem:[%s4307 + $0x70] sm:$0xff]
    %v4323 = vld [vmem:[%s4307 + $0x78] sm:$0xff]
    %v4324 = vld [vmem:[%s4307 + $0x80] sm:$0xff]
    %v4325 = vld [vmem:[%s4307 + $0x88] sm:$0xff]
    %v4326 = vld [vmem:[%s4307 + $0x90] sm:$0xff]
    %v4327 = vld [vmem:[%s4307 + $0x98] sm:$0xff]
    %v4328 = vld [vmem:[%s4307 + $0xa0] sm:$0xff]
    %v4329 = vld [vmem:[%s4307 + $0xa8] sm:$0x11]
    %v4352 = vunpack.c.l.b16 %v4308
    %v4353 = vunpack.c.h.b16 %v4308
    %v4354 = vunpack.c.l.b16 %v4309
    %v4355 = vunpack.c.h.b16 %v4309
    %v4356 = vunpack.c.l.b16 %v4310
    %v4357 = vunpack.c.h.b16 %v4310
    %v4358 = vunpack.c.l.b16 %v4311
    %v4359 = vunpack.c.h.b16 %v4311
    %v4360 = vunpack.c.l.b16 %v4312
    %v4361 = vunpack.c.h.b16 %v4312
    %v4362 = vunpack.c.l.b16 %v4313
    %v4363 = vunpack.c.h.b16 %v4313
    %v4364 = vunpack.c.l.b16 %v4314
    %v4365 = vunpack.c.h.b16 %v4314
    %v4366 = vunpack.c.l.b16 %v4315
    %v4367 = vunpack.c.h.b16 %v4315
    %v4368 = vunpack.c.l.b16 %v4316
    %v4369 = vunpack.c.h.b16 %v4316
    %v4370 = vunpack.c.l.b16 %v4317
    %v4371 = vunpack.c.h.b16 %v4317
    %v4372 = vunpack.c.l.b16 %v4318
    %v4373 = vunpack.c.h.b16 %v4318
    %v4374 = vunpack.c.l.b16 %v4319
    %v4375 = vunpack.c.h.b16 %v4319
    %v4376 = vunpack.c.l.b16 %v4320
    %v4377 = vunpack.c.h.b16 %v4320
    %v4378 = vunpack.c.l.b16 %v4321
    %v4379 = vunpack.c.h.b16 %v4321
    %v4380 = vunpack.c.l.b16 %v4322
    %v4381 = vunpack.c.h.b16 %v4322
    %v4382 = vunpack.c.l.b16 %v4323
    %v4383 = vunpack.c.h.b16 %v4323
    %v4384 = vunpack.c.l.b16 %v4324
    %v4385 = vunpack.c.h.b16 %v4324
    %v4386 = vunpack.c.l.b16 %v4325
    %v4387 = vunpack.c.h.b16 %v4325
    %v4388 = vunpack.c.l.b16 %v4326
    %v4389 = vunpack.c.h.b16 %v4326
    %v4390 = vunpack.c.l.b16 %v4327
    %v4391 = vunpack.c.h.b16 %v4327
    %v4392 = vunpack.c.l.b16 %v4328
    %v4393 = vunpack.c.h.b16 %v4328
    %v4394 = vunpack.c.l.b16 %v4329
    %v4395 = vunpack.c.h.b16 %v4329
    %v4396 = vpack.c.b16 %v4354, %v4352
    %v4397 = vpack.c.b16 %v4355, %v4353
    %v4398 = vpack.c.b16 %v4358, %v4356
    %v4399 = vpack.c.b16 %v4359, %v4357
    %v4400 = vpack.c.b16 %v4362, %v4360
    %v4401 = vpack.c.b16 %v4363, %v4361
    %v4402 = vpack.c.b16 %v4366, %v4364
    %v4403 = vpack.c.b16 %v4367, %v4365
    %v4404 = vpack.c.b16 %v4370, %v4368
    %v4405 = vpack.c.b16 %v4371, %v4369
    %v4406 = vpack.c.b16 %v4374, %v4372
    %v4407 = vpack.c.b16 %v4375, %v4373
    %v4408 = vpack.c.b16 %v4378, %v4376
    %v4409 = vpack.c.b16 %v4379, %v4377
    %v4410 = vpack.c.b16 %v4382, %v4380
    %v4411 = vpack.c.b16 %v4383, %v4381
    %v4412 = vpack.c.b16 %v4386, %v4384
    %v4413 = vpack.c.b16 %v4387, %v4385
    %v4414 = vpack.c.b16 %v4390, %v4388
    %v4415 = vpack.c.b16 %v4391, %v4389
    %v4416 = vpack.c.b16 %v4394, %v4392
    %v4417 = vpack.c.b16 %v4395, %v4393
    %v4439 = vsel %vm459, %v4306, 0
    %v4442 = vand.u32 %v4416, %v1189
    %v4445 = vand.u32 %v4417, %v1189
    %4447 = vmatpush.bf16.msra.mxu0 %v4410
    %4448 = vmatpush.bf16.msra.mxu0 %v4408
    %4449 = vmatpush.bf16.msra.mxu0 %v4406
    %4450 = vmatpush.bf16.msra.mxu0 %v4404
    %4451 = vmatpush.bf16.msra.mxu0 %v4402
    %4452 = vmatpush.bf16.msra.mxu0 %v4400
    %4453 = vmatpush.bf16.msra.mxu0 %v4398
    %4454 = vmatpush.bf16.msra.mxu0 %v4396
    %4455 = vmatmul.bf16.gmra.mxu0 %v4305
    %v4456 = vpop.f32.mrf.mxu0
    %v4457 = vadd.f32 0.0, %v4456
    %v4458 = vpop.f32.mrf.mxu0
    %4459 = vdwg.mxu0
    %4460 = vmatpush.bf16.msra.mxu0 0
    %4461 = vmatpush.bf16.msra.mxu0 0
    %4462 = vmatpush.bf16.msra.mxu0 0
    %4463 = vmatpush.bf16.msra.mxu0 0
    %4464 = vmatpush.bf16.msra.mxu0 0
    %4465 = vmatpush.bf16.msra.mxu0 %v4442
    %4466 = vmatpush.bf16.msra.mxu0 %v4414
    %4467 = vmatpush.bf16.msra.mxu0 %v4412
    %4468 = vmatmul.bf16.gmra.mxu0 %v4439
    %v4469 = vpop.f32.mrf.mxu0
    %v4470 = vadd.f32 %v4457, %v4469
    %v4471 = vpop.f32.mrf.mxu0
    %4472 = vdwg.mxu0
    %4473 = vmatpush.bf16.msra.mxu0 %v4411
    %4474 = vmatpush.bf16.msra.mxu0 %v4409
    %4475 = vmatpush.bf16.msra.mxu0 %v4407
    %4476 = vmatpush.bf16.msra.mxu0 %v4405
    %4477 = vmatpush.bf16.msra.mxu0 %v4403
    %4478 = vmatpush.bf16.msra.mxu0 %v4401
    %4479 = vmatpush.bf16.msra.mxu0 %v4399
    %4480 = vmatpush.bf16.msra.mxu0 %v4397
    %4481 = vmatmul.bf16.gmra.mxu0 %v4305
    %v4482 = vpop.f32.mrf.mxu0
    %v4483 = vadd.f32 0.0, %v4482
    %v4484 = vpop.f32.mrf.mxu0
    %4485 = vdwg.mxu0
    %4486 = vmatpush.bf16.msra.mxu0 0
    %4487 = vmatpush.bf16.msra.mxu0 0
    %4488 = vmatpush.bf16.msra.mxu0 0
    %4489 = vmatpush.bf16.msra.mxu0 0
    %4490 = vmatpush.bf16.msra.mxu0 0
    %4491 = vmatpush.bf16.msra.mxu0 %v4445
    %4492 = vmatpush.bf16.msra.mxu0 %v4415
    %4493 = vmatpush.bf16.msra.mxu0 %v4413
    %4494 = vmatmul.bf16.gmra.mxu0 %v4439
    %v4495 = vpop.f32.mrf.mxu0
    %v4496 = vadd.f32 %v4483, %v4495
    %v4497 = vpop.f32.mrf.mxu0
    %4498 = vdwg.mxu0
    %v4499 = vadd.f32 %v4295, %v4470
    %v4500 = vadd.f32 %v4296, %v4496
    %v4503 = vrot.slane %v577, 1
    %v4504 = vrot.slane %v578, 1
    %v4507 = vsel %vm150, %v4503, %v1001
    %v4508 = vsel %vm150, %v4504, %v1002
    %v4509 = vpack.c.bf16 %v4507, %v4507
    %v4510 = vpack.c.bf16 %v4508, %v4508
    %s4511 = scalar_lea.vmem [#allocation2], 2992
    %v4512 = vld [vmem:[%s4511] sm:$0xff]
    %v4513 = vld [vmem:[%s4511 + $0x8] sm:$0xff]
    %v4514 = vld [vmem:[%s4511 + $0x10] sm:$0xff]
    %v4515 = vld [vmem:[%s4511 + $0x18] sm:$0xff]
    %v4516 = vld [vmem:[%s4511 + $0x20] sm:$0xff]
    %v4517 = vld [vmem:[%s4511 + $0x28] sm:$0xff]
    %v4518 = vld [vmem:[%s4511 + $0x30] sm:$0xff]
    %v4519 = vld [vmem:[%s4511 + $0x38] sm:$0xff]
    %v4520 = vld [vmem:[%s4511 + $0x40] sm:$0xff]
    %v4521 = vld [vmem:[%s4511 + $0x48] sm:$0xff]
    %v4522 = vld [vmem:[%s4511 + $0x50] sm:$0xff]
    %v4523 = vld [vmem:[%s4511 + $0x58] sm:$0xff]
    %v4524 = vld [vmem:[%s4511 + $0x60] sm:$0xff]
    %v4525 = vld [vmem:[%s4511 + $0x68] sm:$0xff]
    %v4526 = vld [vmem:[%s4511 + $0x70] sm:$0xff]
    %v4527 = vld [vmem:[%s4511 + $0x78] sm:$0xff]
    %v4528 = vld [vmem:[%s4511 + $0x80] sm:$0xff]
    %v4529 = vld [vmem:[%s4511 + $0x88] sm:$0xff]
    %v4530 = vld [vmem:[%s4511 + $0x90] sm:$0xff]
    %v4531 = vld [vmem:[%s4511 + $0x98] sm:$0xff]
    %v4532 = vld [vmem:[%s4511 + $0xa0] sm:$0xff]
    %v4533 = vld [vmem:[%s4511 + $0xa8] sm:$0x11]
    %v4556 = vunpack.c.l.b16 %v4512
    %v4557 = vunpack.c.h.b16 %v4512
    %v4558 = vunpack.c.l.b16 %v4513
    %v4559 = vunpack.c.h.b16 %v4513
    %v4560 = vunpack.c.l.b16 %v4514
    %v4561 = vunpack.c.h.b16 %v4514
    %v4562 = vunpack.c.l.b16 %v4515
    %v4563 = vunpack.c.h.b16 %v4515
    %v4564 = vunpack.c.l.b16 %v4516
    %v4565 = vunpack.c.h.b16 %v4516
    %v4566 = vunpack.c.l.b16 %v4517
    %v4567 = vunpack.c.h.b16 %v4517
    %v4568 = vunpack.c.l.b16 %v4518
    %v4569 = vunpack.c.h.b16 %v4518
    %v4570 = vunpack.c.l.b16 %v4519
    %v4571 = vunpack.c.h.b16 %v4519
    %v4572 = vunpack.c.l.b16 %v4520
    %v4573 = vunpack.c.h.b16 %v4520
    %v4574 = vunpack.c.l.b16 %v4521
    %v4575 = vunpack.c.h.b16 %v4521
    %v4576 = vunpack.c.l.b16 %v4522
    %v4577 = vunpack.c.h.b16 %v4522
    %v4578 = vunpack.c.l.b16 %v4523
    %v4579 = vunpack.c.h.b16 %v4523
    %v4580 = vunpack.c.l.b16 %v4524
    %v4581 = vunpack.c.h.b16 %v4524
    %v4582 = vunpack.c.l.b16 %v4525
    %v4583 = vunpack.c.h.b16 %v4525
    %v4584 = vunpack.c.l.b16 %v4526
    %v4585 = vunpack.c.h.b16 %v4526
    %v4586 = vunpack.c.l.b16 %v4527
    %v4587 = vunpack.c.h.b16 %v4527
    %v4588 = vunpack.c.l.b16 %v4528
    %v4589 = vunpack.c.h.b16 %v4528
    %v4590 = vunpack.c.l.b16 %v4529
    %v4591 = vunpack.c.h.b16 %v4529
    %v4592 = vunpack.c.l.b16 %v4530
    %v4593 = vunpack.c.h.b16 %v4530
    %v4594 = vunpack.c.l.b16 %v4531
    %v4595 = vunpack.c.h.b16 %v4531
    %v4596 = vunpack.c.l.b16 %v4532
    %v4597 = vunpack.c.h.b16 %v4532
    %v4598 = vunpack.c.l.b16 %v4533
    %v4599 = vunpack.c.h.b16 %v4533
    %v4600 = vpack.c.b16 %v4558, %v4556
    %v4601 = vpack.c.b16 %v4559, %v4557
    %v4602 = vpack.c.b16 %v4562, %v4560
    %v4603 = vpack.c.b16 %v4563, %v4561
    %v4604 = vpack.c.b16 %v4566, %v4564
    %v4605 = vpack.c.b16 %v4567, %v4565
    %v4606 = vpack.c.b16 %v4570, %v4568
    %v4607 = vpack.c.b16 %v4571, %v4569
    %v4608 = vpack.c.b16 %v4574, %v4572
    %v4609 = vpack.c.b16 %v4575, %v4573
    %v4610 = vpack.c.b16 %v4578, %v4576
    %v4611 = vpack.c.b16 %v4579, %v4577
    %v4612 = vpack.c.b16 %v4582, %v4580
    %v4613 = vpack.c.b16 %v4583, %v4581
    %v4614 = vpack.c.b16 %v4586, %v4584
    %v4615 = vpack.c.b16 %v4587, %v4585
    %v4616 = vpack.c.b16 %v4590, %v4588
    %v4617 = vpack.c.b16 %v4591, %v4589
    %v4618 = vpack.c.b16 %v4594, %v4592
    %v4619 = vpack.c.b16 %v4595, %v4593
    %v4620 = vpack.c.b16 %v4598, %v4596
    %v4621 = vpack.c.b16 %v4599, %v4597
    %v4643 = vsel %vm459, %v4510, 0
    %v4646 = vand.u32 %v4620, %v1189
    %v4649 = vand.u32 %v4621, %v1189
    %4651 = vmatpush.bf16.msra.mxu0 %v4614
    %4652 = vmatpush.bf16.msra.mxu0 %v4612
    %4653 = vmatpush.bf16.msra.mxu0 %v4610
    %4654 = vmatpush.bf16.msra.mxu0 %v4608
    %4655 = vmatpush.bf16.msra.mxu0 %v4606
    %4656 = vmatpush.bf16.msra.mxu0 %v4604
    %4657 = vmatpush.bf16.msra.mxu0 %v4602
    %4658 = vmatpush.bf16.msra.mxu0 %v4600
    %4659 = vmatmul.bf16.gmra.mxu0 %v4509
    %v4660 = vpop.f32.mrf.mxu0
    %v4661 = vadd.f32 0.0, %v4660
    %v4662 = vpop.f32.mrf.mxu0
    %4663 = vdwg.mxu0
    %4664 = vmatpush.bf16.msra.mxu0 0
    %4665 = vmatpush.bf16.msra.mxu0 0
    %4666 = vmatpush.bf16.msra.mxu0 0
    %4667 = vmatpush.bf16.msra.mxu0 0
    %4668 = vmatpush.bf16.msra.mxu0 0
    %4669 = vmatpush.bf16.msra.mxu0 %v4646
    %4670 = vmatpush.bf16.msra.mxu0 %v4618
    %4671 = vmatpush.bf16.msra.mxu0 %v4616
    %4672 = vmatmul.bf16.gmra.mxu0 %v4643
    %v4673 = vpop.f32.mrf.mxu0
    %v4674 = vadd.f32 %v4661, %v4673
    %v4675 = vpop.f32.mrf.mxu0
    %4676 = vdwg.mxu0
    %4677 = vmatpush.bf16.msra.mxu0 %v4615
    %4678 = vmatpush.bf16.msra.mxu0 %v4613
    %4679 = vmatpush.bf16.msra.mxu0 %v4611
    %4680 = vmatpush.bf16.msra.mxu0 %v4609
    %4681 = vmatpush.bf16.msra.mxu0 %v4607
    %4682 = vmatpush.bf16.msra.mxu0 %v4605
    %4683 = vmatpush.bf16.msra.mxu0 %v4603
    %4684 = vmatpush.bf16.msra.mxu0 %v4601
    %4685 = vmatmul.bf16.gmra.mxu0 %v4509
    %v4686 = vpop.f32.mrf.mxu0
    %v4687 = vadd.f32 0.0, %v4686
    %v4688 = vpop.f32.mrf.mxu0
    %4689 = vdwg.mxu0
    %4690 = vmatpush.bf16.msra.mxu0 0
    %4691 = vmatpush.bf16.msra.mxu0 0
    %4692 = vmatpush.bf16.msra.mxu0 0
    %4693 = vmatpush.bf16.msra.mxu0 0
    %4694 = vmatpush.bf16.msra.mxu0 0
    %4695 = vmatpush.bf16.msra.mxu0 %v4649
    %4696 = vmatpush.bf16.msra.mxu0 %v4619
    %4697 = vmatpush.bf16.msra.mxu0 %v4617
    %4698 = vmatmul.bf16.gmra.mxu0 %v4643
    %v4699 = vpop.f32.mrf.mxu0
    %v4700 = vadd.f32 %v4687, %v4699
    %v4701 = vpop.f32.mrf.mxu0
    %4702 = vdwg.mxu0
    %v4703 = vadd.f32 %v4499, %v4674
    %v4704 = vadd.f32 %v4500, %v4700
    %v4705 = vrot.slane %v577, 2
    %v4706 = vrot.slane %v578, 2
    %v4709 = vrot.slane %v1001, 1
    %v4710 = vrot.slane %v1002, 1
    %v4713 = vsel %vm150, %v4705, %v4709
    %v4714 = vsel %vm150, %v4706, %v4710
    %v4715 = vpack.c.bf16 %v4713, %v4713
    %v4716 = vpack.c.bf16 %v4714, %v4714
    %s4717 = scalar_lea.vmem [#allocation2], 3168
    %v4718 = vld [vmem:[%s4717] sm:$0xff]
    %v4719 = vld [vmem:[%s4717 + $0x8] sm:$0xff]
    %v4720 = vld [vmem:[%s4717 + $0x10] sm:$0xff]
    %v4721 = vld [vmem:[%s4717 + $0x18] sm:$0xff]
    %v4722 = vld [vmem:[%s4717 + $0x20] sm:$0xff]
    %v4723 = vld [vmem:[%s4717 + $0x28] sm:$0xff]
    %v4724 = vld [vmem:[%s4717 + $0x30] sm:$0xff]
    %v4725 = vld [vmem:[%s4717 + $0x38] sm:$0xff]
    %v4726 = vld [vmem:[%s4717 + $0x40] sm:$0xff]
    %v4727 = vld [vmem:[%s4717 + $0x48] sm:$0xff]
    %v4728 = vld [vmem:[%s4717 + $0x50] sm:$0xff]
    %v4729 = vld [vmem:[%s4717 + $0x58] sm:$0xff]
    %v4730 = vld [vmem:[%s4717 + $0x60] sm:$0xff]
    %v4731 = vld [vmem:[%s4717 + $0x68] sm:$0xff]
    %v4732 = vld [vmem:[%s4717 + $0x70] sm:$0xff]
    %v4733 = vld [vmem:[%s4717 + $0x78] sm:$0xff]
    %v4734 = vld [vmem:[%s4717 + $0x80] sm:$0xff]
    %v4735 = vld [vmem:[%s4717 + $0x88] sm:$0xff]
    %v4736 = vld [vmem:[%s4717 + $0x90] sm:$0xff]
    %v4737 = vld [vmem:[%s4717 + $0x98] sm:$0xff]
    %v4738 = vld [vmem:[%s4717 + $0xa0] sm:$0xff]
    %v4739 = vld [vmem:[%s4717 + $0xa8] sm:$0x11]
    %v4762 = vunpack.c.l.b16 %v4718
    %v4763 = vunpack.c.h.b16 %v4718
    %v4764 = vunpack.c.l.b16 %v4719
    %v4765 = vunpack.c.h.b16 %v4719
    %v4766 = vunpack.c.l.b16 %v4720
    %v4767 = vunpack.c.h.b16 %v4720
    %v4768 = vunpack.c.l.b16 %v4721
    %v4769 = vunpack.c.h.b16 %v4721
    %v4770 = vunpack.c.l.b16 %v4722
    %v4771 = vunpack.c.h.b16 %v4722
    %v4772 = vunpack.c.l.b16 %v4723
    %v4773 = vunpack.c.h.b16 %v4723
    %v4774 = vunpack.c.l.b16 %v4724
    %v4775 = vunpack.c.h.b16 %v4724
    %v4776 = vunpack.c.l.b16 %v4725
    %v4777 = vunpack.c.h.b16 %v4725
    %v4778 = vunpack.c.l.b16 %v4726
    %v4779 = vunpack.c.h.b16 %v4726
    %v4780 = vunpack.c.l.b16 %v4727
    %v4781 = vunpack.c.h.b16 %v4727
    %v4782 = vunpack.c.l.b16 %v4728
    %v4783 = vunpack.c.h.b16 %v4728
    %v4784 = vunpack.c.l.b16 %v4729
    %v4785 = vunpack.c.h.b16 %v4729
    %v4786 = vunpack.c.l.b16 %v4730
    %v4787 = vunpack.c.h.b16 %v4730
    %v4788 = vunpack.c.l.b16 %v4731
    %v4789 = vunpack.c.h.b16 %v4731
    %v4790 = vunpack.c.l.b16 %v4732
    %v4791 = vunpack.c.h.b16 %v4732
    %v4792 = vunpack.c.l.b16 %v4733
    %v4793 = vunpack.c.h.b16 %v4733
    %v4794 = vunpack.c.l.b16 %v4734
    %v4795 = vunpack.c.h.b16 %v4734
    %v4796 = vunpack.c.l.b16 %v4735
    %v4797 = vunpack.c.h.b16 %v4735
    %v4798 = vunpack.c.l.b16 %v4736
    %v4799 = vunpack.c.h.b16 %v4736
    %v4800 = vunpack.c.l.b16 %v4737
    %v4801 = vunpack.c.h.b16 %v4737
    %v4802 = vunpack.c.l.b16 %v4738
    %v4803 = vunpack.c.h.b16 %v4738
    %v4804 = vunpack.c.l.b16 %v4739
    %v4805 = vunpack.c.h.b16 %v4739
    %v4806 = vpack.c.b16 %v4764, %v4762
    %v4807 = vpack.c.b16 %v4765, %v4763
    %v4808 = vpack.c.b16 %v4768, %v4766
    %v4809 = vpack.c.b16 %v4769, %v4767
    %v4810 = vpack.c.b16 %v4772, %v4770
    %v4811 = vpack.c.b16 %v4773, %v4771
    %v4812 = vpack.c.b16 %v4776, %v4774
    %v4813 = vpack.c.b16 %v4777, %v4775
    %v4814 = vpack.c.b16 %v4780, %v4778
    %v4815 = vpack.c.b16 %v4781, %v4779
    %v4816 = vpack.c.b16 %v4784, %v4782
    %v4817 = vpack.c.b16 %v4785, %v4783
    %v4818 = vpack.c.b16 %v4788, %v4786
    %v4819 = vpack.c.b16 %v4789, %v4787
    %v4820 = vpack.c.b16 %v4792, %v4790
    %v4821 = vpack.c.b16 %v4793, %v4791
    %v4822 = vpack.c.b16 %v4796, %v4794
    %v4823 = vpack.c.b16 %v4797, %v4795
    %v4824 = vpack.c.b16 %v4800, %v4798
    %v4825 = vpack.c.b16 %v4801, %v4799
    %v4826 = vpack.c.b16 %v4804, %v4802
    %v4827 = vpack.c.b16 %v4805, %v4803
    %v4849 = vsel %vm459, %v4716, 0
    %v4852 = vand.u32 %v4826, %v1189
    %v4855 = vand.u32 %v4827, %v1189
    %4857 = vmatpush.bf16.msra.mxu0 %v4820
    %4858 = vmatpush.bf16.msra.mxu0 %v4818
    %4859 = vmatpush.bf16.msra.mxu0 %v4816
    %4860 = vmatpush.bf16.msra.mxu0 %v4814
    %4861 = vmatpush.bf16.msra.mxu0 %v4812
    %4862 = vmatpush.bf16.msra.mxu0 %v4810
    %4863 = vmatpush.bf16.msra.mxu0 %v4808
    %4864 = vmatpush.bf16.msra.mxu0 %v4806
    %4865 = vmatmul.bf16.gmra.mxu0 %v4715
    %v4866 = vpop.f32.mrf.mxu0
    %v4867 = vadd.f32 0.0, %v4866
    %v4868 = vpop.f32.mrf.mxu0
    %4869 = vdwg.mxu0
    %4870 = vmatpush.bf16.msra.mxu0 0
    %4871 = vmatpush.bf16.msra.mxu0 0
    %4872 = vmatpush.bf16.msra.mxu0 0
    %4873 = vmatpush.bf16.msra.mxu0 0
    %4874 = vmatpush.bf16.msra.mxu0 0
    %4875 = vmatpush.bf16.msra.mxu0 %v4852
    %4876 = vmatpush.bf16.msra.mxu0 %v4824
    %4877 = vmatpush.bf16.msra.mxu0 %v4822
    %4878 = vmatmul.bf16.gmra.mxu0 %v4849
    %v4879 = vpop.f32.mrf.mxu0
    %v4880 = vadd.f32 %v4867, %v4879
    %v4881 = vpop.f32.mrf.mxu0
    %4882 = vdwg.mxu0
    %4883 = vmatpush.bf16.msra.mxu0 %v4821
    %4884 = vmatpush.bf16.msra.mxu0 %v4819
    %4885 = vmatpush.bf16.msra.mxu0 %v4817
    %4886 = vmatpush.bf16.msra.mxu0 %v4815
    %4887 = vmatpush.bf16.msra.mxu0 %v4813
    %4888 = vmatpush.bf16.msra.mxu0 %v4811
    %4889 = vmatpush.bf16.msra.mxu0 %v4809
    %4890 = vmatpush.bf16.msra.mxu0 %v4807
    %4891 = vmatmul.bf16.gmra.mxu0 %v4715
    %v4892 = vpop.f32.mrf.mxu0
    %v4893 = vadd.f32 0.0, %v4892
    %v4894 = vpop.f32.mrf.mxu0
    %4895 = vdwg.mxu0
    %4896 = vmatpush.bf16.msra.mxu0 0
    %4897 = vmatpush.bf16.msra.mxu0 0
    %4898 = vmatpush.bf16.msra.mxu0 0
    %4899 = vmatpush.bf16.msra.mxu0 0
    %4900 = vmatpush.bf16.msra.mxu0 0
    %4901 = vmatpush.bf16.msra.mxu0 %v4855
    %4902 = vmatpush.bf16.msra.mxu0 %v4825
    %4903 = vmatpush.bf16.msra.mxu0 %v4823
    %4904 = vmatmul.bf16.gmra.mxu0 %v4849
    %v4905 = vpop.f32.mrf.mxu0
    %v4906 = vadd.f32 %v4893, %v4905
    %v4907 = vpop.f32.mrf.mxu0
    %4908 = vdwg.mxu0
    %v4909 = vadd.f32 %v4703, %v4880
    %v4910 = vadd.f32 %v4704, %v4906
    %v4911 = vrot.slane %v577, 3
    %v4912 = vrot.slane %v578, 3
    %v4915 = vrot.slane %v1001, 2
    %v4916 = vrot.slane %v1002, 2
    %v4919 = vsel %vm150, %v4911, %v4915
    %v4920 = vsel %vm150, %v4912, %v4916
    %v4921 = vpack.c.bf16 %v4919, %v4919
    %v4922 = vpack.c.bf16 %v4920, %v4920
    %s4923 = scalar_lea.vmem [#allocation2], 3344
    %v4924 = vld [vmem:[%s4923] sm:$0xff]
    %v4925 = vld [vmem:[%s4923 + $0x8] sm:$0xff]
    %v4926 = vld [vmem:[%s4923 + $0x10] sm:$0xff]
    %v4927 = vld [vmem:[%s4923 + $0x18] sm:$0xff]
    %v4928 = vld [vmem:[%s4923 + $0x20] sm:$0xff]
    %v4929 = vld [vmem:[%s4923 + $0x28] sm:$0xff]
    %v4930 = vld [vmem:[%s4923 + $0x30] sm:$0xff]
    %v4931 = vld [vmem:[%s4923 + $0x38] sm:$0xff]
    %v4932 = vld [vmem:[%s4923 + $0x40] sm:$0xff]
    %v4933 = vld [vmem:[%s4923 + $0x48] sm:$0xff]
    %v4934 = vld [vmem:[%s4923 + $0x50] sm:$0xff]
    %v4935 = vld [vmem:[%s4923 + $0x58] sm:$0xff]
    %v4936 = vld [vmem:[%s4923 + $0x60] sm:$0xff]
    %v4937 = vld [vmem:[%s4923 + $0x68] sm:$0xff]
    %v4938 = vld [vmem:[%s4923 + $0x70] sm:$0xff]
    %v4939 = vld [vmem:[%s4923 + $0x78] sm:$0xff]
    %v4940 = vld [vmem:[%s4923 + $0x80] sm:$0xff]
    %v4941 = vld [vmem:[%s4923 + $0x88] sm:$0xff]
    %v4942 = vld [vmem:[%s4923 + $0x90] sm:$0xff]
    %v4943 = vld [vmem:[%s4923 + $0x98] sm:$0xff]
    %v4944 = vld [vmem:[%s4923 + $0xa0] sm:$0xff]
    %v4945 = vld [vmem:[%s4923 + $0xa8] sm:$0x11]
    %v4968 = vunpack.c.l.b16 %v4924
    %v4969 = vunpack.c.h.b16 %v4924
    %v4970 = vunpack.c.l.b16 %v4925
    %v4971 = vunpack.c.h.b16 %v4925
    %v4972 = vunpack.c.l.b16 %v4926
    %v4973 = vunpack.c.h.b16 %v4926
    %v4974 = vunpack.c.l.b16 %v4927
    %v4975 = vunpack.c.h.b16 %v4927
    %v4976 = vunpack.c.l.b16 %v4928
    %v4977 = vunpack.c.h.b16 %v4928
    %v4978 = vunpack.c.l.b16 %v4929
    %v4979 = vunpack.c.h.b16 %v4929
    %v4980 = vunpack.c.l.b16 %v4930
    %v4981 = vunpack.c.h.b16 %v4930
    %v4982 = vunpack.c.l.b16 %v4931
    %v4983 = vunpack.c.h.b16 %v4931
    %v4984 = vunpack.c.l.b16 %v4932
    %v4985 = vunpack.c.h.b16 %v4932
    %v4986 = vunpack.c.l.b16 %v4933
    %v4987 = vunpack.c.h.b16 %v4933
    %v4988 = vunpack.c.l.b16 %v4934
    %v4989 = vunpack.c.h.b16 %v4934
    %v4990 = vunpack.c.l.b16 %v4935
    %v4991 = vunpack.c.h.b16 %v4935
    %v4992 = vunpack.c.l.b16 %v4936
    %v4993 = vunpack.c.h.b16 %v4936
    %v4994 = vunpack.c.l.b16 %v4937
    %v4995 = vunpack.c.h.b16 %v4937
    %v4996 = vunpack.c.l.b16 %v4938
    %v4997 = vunpack.c.h.b16 %v4938
    %v4998 = vunpack.c.l.b16 %v4939
    %v4999 = vunpack.c.h.b16 %v4939
    %v5000 = vunpack.c.l.b16 %v4940
    %v5001 = vunpack.c.h.b16 %v4940
    %v5002 = vunpack.c.l.b16 %v4941
    %v5003 = vunpack.c.h.b16 %v4941
    %v5004 = vunpack.c.l.b16 %v4942
    %v5005 = vunpack.c.h.b16 %v4942
    %v5006 = vunpack.c.l.b16 %v4943
    %v5007 = vunpack.c.h.b16 %v4943
    %v5008 = vunpack.c.l.b16 %v4944
    %v5009 = vunpack.c.h.b16 %v4944
    %v5010 = vunpack.c.l.b16 %v4945
    %v5011 = vunpack.c.h.b16 %v4945
    %v5012 = vpack.c.b16 %v4970, %v4968
    %v5013 = vpack.c.b16 %v4971, %v4969
    %v5014 = vpack.c.b16 %v4974, %v4972
    %v5015 = vpack.c.b16 %v4975, %v4973
    %v5016 = vpack.c.b16 %v4978, %v4976
    %v5017 = vpack.c.b16 %v4979, %v4977
    %v5018 = vpack.c.b16 %v4982, %v4980
    %v5019 = vpack.c.b16 %v4983, %v4981
    %v5020 = vpack.c.b16 %v4986, %v4984
    %v5021 = vpack.c.b16 %v4987, %v4985
    %v5022 = vpack.c.b16 %v4990, %v4988
    %v5023 = vpack.c.b16 %v4991, %v4989
    %v5024 = vpack.c.b16 %v4994, %v4992
    %v5025 = vpack.c.b16 %v4995, %v4993
    %v5026 = vpack.c.b16 %v4998, %v4996
    %v5027 = vpack.c.b16 %v4999, %v4997
    %v5028 = vpack.c.b16 %v5002, %v5000
    %v5029 = vpack.c.b16 %v5003, %v5001
    %v5030 = vpack.c.b16 %v5006, %v5004
    %v5031 = vpack.c.b16 %v5007, %v5005
    %v5032 = vpack.c.b16 %v5010, %v5008
    %v5033 = vpack.c.b16 %v5011, %v5009
    %v5055 = vsel %vm459, %v4922, 0
    %v5058 = vand.u32 %v5032, %v1189
    %v5061 = vand.u32 %v5033, %v1189
    %5063 = vmatpush.bf16.msra.mxu0 %v5026
    %5064 = vmatpush.bf16.msra.mxu0 %v5024
    %5065 = vmatpush.bf16.msra.mxu0 %v5022
    %5066 = vmatpush.bf16.msra.mxu0 %v5020
    %5067 = vmatpush.bf16.msra.mxu0 %v5018
    %5068 = vmatpush.bf16.msra.mxu0 %v5016
    %5069 = vmatpush.bf16.msra.mxu0 %v5014
    %5070 = vmatpush.bf16.msra.mxu0 %v5012
    %5071 = vmatmul.bf16.gmra.mxu0 %v4921
    %v5072 = vpop.f32.mrf.mxu0
    %v5073 = vadd.f32 0.0, %v5072
    %v5074 = vpop.f32.mrf.mxu0
    %5075 = vdwg.mxu0
    %5076 = vmatpush.bf16.msra.mxu0 0
    %5077 = vmatpush.bf16.msra.mxu0 0
    %5078 = vmatpush.bf16.msra.mxu0 0
    %5079 = vmatpush.bf16.msra.mxu0 0
    %5080 = vmatpush.bf16.msra.mxu0 0
    %5081 = vmatpush.bf16.msra.mxu0 %v5058
    %5082 = vmatpush.bf16.msra.mxu0 %v5030
    %5083 = vmatpush.bf16.msra.mxu0 %v5028
    %5084 = vmatmul.bf16.gmra.mxu0 %v5055
    %v5085 = vpop.f32.mrf.mxu0
    %v5086 = vadd.f32 %v5073, %v5085
    %v5087 = vpop.f32.mrf.mxu0
    %5088 = vdwg.mxu0
    %5089 = vmatpush.bf16.msra.mxu0 %v5027
    %5090 = vmatpush.bf16.msra.mxu0 %v5025
    %5091 = vmatpush.bf16.msra.mxu0 %v5023
    %5092 = vmatpush.bf16.msra.mxu0 %v5021
    %5093 = vmatpush.bf16.msra.mxu0 %v5019
    %5094 = vmatpush.bf16.msra.mxu0 %v5017
    %5095 = vmatpush.bf16.msra.mxu0 %v5015
    %5096 = vmatpush.bf16.msra.mxu0 %v5013
    %5097 = vmatmul.bf16.gmra.mxu0 %v4921
    %v5098 = vpop.f32.mrf.mxu0
    %v5099 = vadd.f32 0.0, %v5098
    %v5100 = vpop.f32.mrf.mxu0
    %5101 = vdwg.mxu0
    %5102 = vmatpush.bf16.msra.mxu0 0
    %5103 = vmatpush.bf16.msra.mxu0 0
    %5104 = vmatpush.bf16.msra.mxu0 0
    %5105 = vmatpush.bf16.msra.mxu0 0
    %5106 = vmatpush.bf16.msra.mxu0 0
    %5107 = vmatpush.bf16.msra.mxu0 %v5061
    %5108 = vmatpush.bf16.msra.mxu0 %v5031
    %5109 = vmatpush.bf16.msra.mxu0 %v5029
    %5110 = vmatmul.bf16.gmra.mxu0 %v5055
    %v5111 = vpop.f32.mrf.mxu0
    %v5112 = vadd.f32 %v5099, %v5111
    %v5113 = vpop.f32.mrf.mxu0
    %5114 = vdwg.mxu0
    %v5115 = vadd.f32 %v4909, %v5086
    %v5116 = vadd.f32 %v4910, %v5112
    %v5117 = vrot.slane %v577, 4
    %v5118 = vrot.slane %v578, 4
    %v5121 = vrot.slane %v1001, 3
    %v5122 = vrot.slane %v1002, 3
    %v5125 = vsel %vm150, %v5117, %v5121
    %v5126 = vsel %vm150, %v5118, %v5122
    %v5127 = vpack.c.bf16 %v5125, %v5125
    %v5128 = vpack.c.bf16 %v5126, %v5126
    %s5129 = scalar_lea.vmem [#allocation2], 3520
    %v5130 = vld [vmem:[%s5129] sm:$0xff]
    %v5131 = vld [vmem:[%s5129 + $0x8] sm:$0xff]
    %v5132 = vld [vmem:[%s5129 + $0x10] sm:$0xff]
    %v5133 = vld [vmem:[%s5129 + $0x18] sm:$0xff]
    %v5134 = vld [vmem:[%s5129 + $0x20] sm:$0xff]
    %v5135 = vld [vmem:[%s5129 + $0x28] sm:$0xff]
    %v5136 = vld [vmem:[%s5129 + $0x30] sm:$0xff]
    %v5137 = vld [vmem:[%s5129 + $0x38] sm:$0xff]
    %v5138 = vld [vmem:[%s5129 + $0x40] sm:$0xff]
    %v5139 = vld [vmem:[%s5129 + $0x48] sm:$0xff]
    %v5140 = vld [vmem:[%s5129 + $0x50] sm:$0xff]
    %v5141 = vld [vmem:[%s5129 + $0x58] sm:$0xff]
    %v5142 = vld [vmem:[%s5129 + $0x60] sm:$0xff]
    %v5143 = vld [vmem:[%s5129 + $0x68] sm:$0xff]
    %v5144 = vld [vmem:[%s5129 + $0x70] sm:$0xff]
    %v5145 = vld [vmem:[%s5129 + $0x78] sm:$0xff]
    %v5146 = vld [vmem:[%s5129 + $0x80] sm:$0xff]
    %v5147 = vld [vmem:[%s5129 + $0x88] sm:$0xff]
    %v5148 = vld [vmem:[%s5129 + $0x90] sm:$0xff]
    %v5149 = vld [vmem:[%s5129 + $0x98] sm:$0xff]
    %v5150 = vld [vmem:[%s5129 + $0xa0] sm:$0xff]
    %v5151 = vld [vmem:[%s5129 + $0xa8] sm:$0x11]
    %v5174 = vunpack.c.l.b16 %v5130
    %v5175 = vunpack.c.h.b16 %v5130
    %v5176 = vunpack.c.l.b16 %v5131
    %v5177 = vunpack.c.h.b16 %v5131
    %v5178 = vunpack.c.l.b16 %v5132
    %v5179 = vunpack.c.h.b16 %v5132
    %v5180 = vunpack.c.l.b16 %v5133
    %v5181 = vunpack.c.h.b16 %v5133
    %v5182 = vunpack.c.l.b16 %v5134
    %v5183 = vunpack.c.h.b16 %v5134
    %v5184 = vunpack.c.l.b16 %v5135
    %v5185 = vunpack.c.h.b16 %v5135
    %v5186 = vunpack.c.l.b16 %v5136
    %v5187 = vunpack.c.h.b16 %v5136
    %v5188 = vunpack.c.l.b16 %v5137
    %v5189 = vunpack.c.h.b16 %v5137
    %v5190 = vunpack.c.l.b16 %v5138
    %v5191 = vunpack.c.h.b16 %v5138
    %v5192 = vunpack.c.l.b16 %v5139
    %v5193 = vunpack.c.h.b16 %v5139
    %v5194 = vunpack.c.l.b16 %v5140
    %v5195 = vunpack.c.h.b16 %v5140
    %v5196 = vunpack.c.l.b16 %v5141
    %v5197 = vunpack.c.h.b16 %v5141
    %v5198 = vunpack.c.l.b16 %v5142
    %v5199 = vunpack.c.h.b16 %v5142
    %v5200 = vunpack.c.l.b16 %v5143
    %v5201 = vunpack.c.h.b16 %v5143
    %v5202 = vunpack.c.l.b16 %v5144
    %v5203 = vunpack.c.h.b16 %v5144
    %v5204 = vunpack.c.l.b16 %v5145
    %v5205 = vunpack.c.h.b16 %v5145
    %v5206 = vunpack.c.l.b16 %v5146
    %v5207 = vunpack.c.h.b16 %v5146
    %v5208 = vunpack.c.l.b16 %v5147
    %v5209 = vunpack.c.h.b16 %v5147
    %v5210 = vunpack.c.l.b16 %v5148
    %v5211 = vunpack.c.h.b16 %v5148
    %v5212 = vunpack.c.l.b16 %v5149
    %v5213 = vunpack.c.h.b16 %v5149
    %v5214 = vunpack.c.l.b16 %v5150
    %v5215 = vunpack.c.h.b16 %v5150
    %v5216 = vunpack.c.l.b16 %v5151
    %v5217 = vunpack.c.h.b16 %v5151
    %v5218 = vpack.c.b16 %v5176, %v5174
    %v5219 = vpack.c.b16 %v5177, %v5175
    %v5220 = vpack.c.b16 %v5180, %v5178
    %v5221 = vpack.c.b16 %v5181, %v5179
    %v5222 = vpack.c.b16 %v5184, %v5182
    %v5223 = vpack.c.b16 %v5185, %v5183
    %v5224 = vpack.c.b16 %v5188, %v5186
    %v5225 = vpack.c.b16 %v5189, %v5187
    %v5226 = vpack.c.b16 %v5192, %v5190
    %v5227 = vpack.c.b16 %v5193, %v5191
    %v5228 = vpack.c.b16 %v5196, %v5194
    %v5229 = vpack.c.b16 %v5197, %v5195
    %v5230 = vpack.c.b16 %v5200, %v5198
    %v5231 = vpack.c.b16 %v5201, %v5199
    %v5232 = vpack.c.b16 %v5204, %v5202
    %v5233 = vpack.c.b16 %v5205, %v5203
    %v5234 = vpack.c.b16 %v5208, %v5206
    %v5235 = vpack.c.b16 %v5209, %v5207
    %v5236 = vpack.c.b16 %v5212, %v5210
    %v5237 = vpack.c.b16 %v5213, %v5211
    %v5238 = vpack.c.b16 %v5216, %v5214
    %v5239 = vpack.c.b16 %v5217, %v5215
    %v5261 = vsel %vm459, %v5128, 0
    %v5264 = vand.u32 %v5238, %v1189
    %v5267 = vand.u32 %v5239, %v1189
    %5269 = vmatpush.bf16.msra.mxu0 %v5232
    %5270 = vmatpush.bf16.msra.mxu0 %v5230
    %5271 = vmatpush.bf16.msra.mxu0 %v5228
    %5272 = vmatpush.bf16.msra.mxu0 %v5226
    %5273 = vmatpush.bf16.msra.mxu0 %v5224
    %5274 = vmatpush.bf16.msra.mxu0 %v5222
    %5275 = vmatpush.bf16.msra.mxu0 %v5220
    %5276 = vmatpush.bf16.msra.mxu0 %v5218
    %5277 = vmatmul.bf16.gmra.mxu0 %v5127
    %v5278 = vpop.f32.mrf.mxu0
    %v5279 = vadd.f32 0.0, %v5278
    %v5280 = vpop.f32.mrf.mxu0
    %5281 = vdwg.mxu0
    %5282 = vmatpush.bf16.msra.mxu0 0
    %5283 = vmatpush.bf16.msra.mxu0 0
    %5284 = vmatpush.bf16.msra.mxu0 0
    %5285 = vmatpush.bf16.msra.mxu0 0
    %5286 = vmatpush.bf16.msra.mxu0 0
    %5287 = vmatpush.bf16.msra.mxu0 %v5264
    %5288 = vmatpush.bf16.msra.mxu0 %v5236
    %5289 = vmatpush.bf16.msra.mxu0 %v5234
    %5290 = vmatmul.bf16.gmra.mxu0 %v5261
    %v5291 = vpop.f32.mrf.mxu0
    %v5292 = vadd.f32 %v5279, %v5291
    %v5293 = vpop.f32.mrf.mxu0
    %5294 = vdwg.mxu0
    %5295 = vmatpush.bf16.msra.mxu0 %v5233
    %5296 = vmatpush.bf16.msra.mxu0 %v5231
    %5297 = vmatpush.bf16.msra.mxu0 %v5229
    %5298 = vmatpush.bf16.msra.mxu0 %v5227
    %5299 = vmatpush.bf16.msra.mxu0 %v5225
    %5300 = vmatpush.bf16.msra.mxu0 %v5223
    %5301 = vmatpush.bf16.msra.mxu0 %v5221
    %5302 = vmatpush.bf16.msra.mxu0 %v5219
    %5303 = vmatmul.bf16.gmra.mxu0 %v5127
    %v5304 = vpop.f32.mrf.mxu0
    %v5305 = vadd.f32 0.0, %v5304
    %v5306 = vpop.f32.mrf.mxu0
    %5307 = vdwg.mxu0
    %5308 = vmatpush.bf16.msra.mxu0 0
    %5309 = vmatpush.bf16.msra.mxu0 0
    %5310 = vmatpush.bf16.msra.mxu0 0
    %5311 = vmatpush.bf16.msra.mxu0 0
    %5312 = vmatpush.bf16.msra.mxu0 0
    %5313 = vmatpush.bf16.msra.mxu0 %v5267
    %5314 = vmatpush.bf16.msra.mxu0 %v5237
    %5315 = vmatpush.bf16.msra.mxu0 %v5235
    %5316 = vmatmul.bf16.gmra.mxu0 %v5261
    %v5317 = vpop.f32.mrf.mxu0
    %v5318 = vadd.f32 %v5305, %v5317
    %v5319 = vpop.f32.mrf.mxu0
    %5320 = vdwg.mxu0
    %v5321 = vadd.f32 %v5115, %v5292
    %v5322 = vadd.f32 %v5116, %v5318
    %v5323 = vrot.slane %v577, 5
    %v5324 = vrot.slane %v578, 5
    %v5327 = vrot.slane %v1001, 4
    %v5328 = vrot.slane %v1002, 4
    %v5331 = vsel %vm150, %v5323, %v5327
    %v5332 = vsel %vm150, %v5324, %v5328
    %v5333 = vpack.c.bf16 %v5331, %v5331
    %v5334 = vpack.c.bf16 %v5332, %v5332
    %s5335 = scalar_lea.vmem [#allocation2], 3696
    %v5336 = vld [vmem:[%s5335] sm:$0xff]
    %v5337 = vld [vmem:[%s5335 + $0x8] sm:$0xff]
    %v5338 = vld [vmem:[%s5335 + $0x10] sm:$0xff]
    %v5339 = vld [vmem:[%s5335 + $0x18] sm:$0xff]
    %v5340 = vld [vmem:[%s5335 + $0x20] sm:$0xff]
    %v5341 = vld [vmem:[%s5335 + $0x28] sm:$0xff]
    %v5342 = vld [vmem:[%s5335 + $0x30] sm:$0xff]
    %v5343 = vld [vmem:[%s5335 + $0x38] sm:$0xff]
    %v5344 = vld [vmem:[%s5335 + $0x40] sm:$0xff]
    %v5345 = vld [vmem:[%s5335 + $0x48] sm:$0xff]
    %v5346 = vld [vmem:[%s5335 + $0x50] sm:$0xff]
    %v5347 = vld [vmem:[%s5335 + $0x58] sm:$0xff]
    %v5348 = vld [vmem:[%s5335 + $0x60] sm:$0xff]
    %v5349 = vld [vmem:[%s5335 + $0x68] sm:$0xff]
    %v5350 = vld [vmem:[%s5335 + $0x70] sm:$0xff]
    %v5351 = vld [vmem:[%s5335 + $0x78] sm:$0xff]
    %v5352 = vld [vmem:[%s5335 + $0x80] sm:$0xff]
    %v5353 = vld [vmem:[%s5335 + $0x88] sm:$0xff]
    %v5354 = vld [vmem:[%s5335 + $0x90] sm:$0xff]
    %v5355 = vld [vmem:[%s5335 + $0x98] sm:$0xff]
    %v5356 = vld [vmem:[%s5335 + $0xa0] sm:$0xff]
    %v5357 = vld [vmem:[%s5335 + $0xa8] sm:$0x11]
    %v5380 = vunpack.c.l.b16 %v5336
    %v5381 = vunpack.c.h.b16 %v5336
    %v5382 = vunpack.c.l.b16 %v5337
    %v5383 = vunpack.c.h.b16 %v5337
    %v5384 = vunpack.c.l.b16 %v5338
    %v5385 = vunpack.c.h.b16 %v5338
    %v5386 = vunpack.c.l.b16 %v5339
    %v5387 = vunpack.c.h.b16 %v5339
    %v5388 = vunpack.c.l.b16 %v5340
    %v5389 = vunpack.c.h.b16 %v5340
    %v5390 = vunpack.c.l.b16 %v5341
    %v5391 = vunpack.c.h.b16 %v5341
    %v5392 = vunpack.c.l.b16 %v5342
    %v5393 = vunpack.c.h.b16 %v5342
    %v5394 = vunpack.c.l.b16 %v5343
    %v5395 = vunpack.c.h.b16 %v5343
    %v5396 = vunpack.c.l.b16 %v5344
    %v5397 = vunpack.c.h.b16 %v5344
    %v5398 = vunpack.c.l.b16 %v5345
    %v5399 = vunpack.c.h.b16 %v5345
    %v5400 = vunpack.c.l.b16 %v5346
    %v5401 = vunpack.c.h.b16 %v5346
    %v5402 = vunpack.c.l.b16 %v5347
    %v5403 = vunpack.c.h.b16 %v5347
    %v5404 = vunpack.c.l.b16 %v5348
    %v5405 = vunpack.c.h.b16 %v5348
    %v5406 = vunpack.c.l.b16 %v5349
    %v5407 = vunpack.c.h.b16 %v5349
    %v5408 = vunpack.c.l.b16 %v5350
    %v5409 = vunpack.c.h.b16 %v5350
    %v5410 = vunpack.c.l.b16 %v5351
    %v5411 = vunpack.c.h.b16 %v5351
    %v5412 = vunpack.c.l.b16 %v5352
    %v5413 = vunpack.c.h.b16 %v5352
    %v5414 = vunpack.c.l.b16 %v5353
    %v5415 = vunpack.c.h.b16 %v5353
    %v5416 = vunpack.c.l.b16 %v5354
    %v5417 = vunpack.c.h.b16 %v5354
    %v5418 = vunpack.c.l.b16 %v5355
    %v5419 = vunpack.c.h.b16 %v5355
    %v5420 = vunpack.c.l.b16 %v5356
    %v5421 = vunpack.c.h.b16 %v5356
    %v5422 = vunpack.c.l.b16 %v5357
    %v5423 = vunpack.c.h.b16 %v5357
    %v5424 = vpack.c.b16 %v5382, %v5380
    %v5425 = vpack.c.b16 %v5383, %v5381
    %v5426 = vpack.c.b16 %v5386, %v5384
    %v5427 = vpack.c.b16 %v5387, %v5385
    %v5428 = vpack.c.b16 %v5390, %v5388
    %v5429 = vpack.c.b16 %v5391, %v5389
    %v5430 = vpack.c.b16 %v5394, %v5392
    %v5431 = vpack.c.b16 %v5395, %v5393
    %v5432 = vpack.c.b16 %v5398, %v5396
    %v5433 = vpack.c.b16 %v5399, %v5397
    %v5434 = vpack.c.b16 %v5402, %v5400
    %v5435 = vpack.c.b16 %v5403, %v5401
    %v5436 = vpack.c.b16 %v5406, %v5404
    %v5437 = vpack.c.b16 %v5407, %v5405
    %v5438 = vpack.c.b16 %v5410, %v5408
    %v5439 = vpack.c.b16 %v5411, %v5409
    %v5440 = vpack.c.b16 %v5414, %v5412
    %v5441 = vpack.c.b16 %v5415, %v5413
    %v5442 = vpack.c.b16 %v5418, %v5416
    %v5443 = vpack.c.b16 %v5419, %v5417
    %v5444 = vpack.c.b16 %v5422, %v5420
    %v5445 = vpack.c.b16 %v5423, %v5421
    %v5467 = vsel %vm459, %v5334, 0
    %v5470 = vand.u32 %v5444, %v1189
    %v5473 = vand.u32 %v5445, %v1189
    %5475 = vmatpush.bf16.msra.mxu0 %v5438
    %5476 = vmatpush.bf16.msra.mxu0 %v5436
    %5477 = vmatpush.bf16.msra.mxu0 %v5434
    %5478 = vmatpush.bf16.msra.mxu0 %v5432
    %5479 = vmatpush.bf16.msra.mxu0 %v5430
    %5480 = vmatpush.bf16.msra.mxu0 %v5428
    %5481 = vmatpush.bf16.msra.mxu0 %v5426
    %5482 = vmatpush.bf16.msra.mxu0 %v5424
    %5483 = vmatmul.bf16.gmra.mxu0 %v5333
    %v5484 = vpop.f32.mrf.mxu0
    %v5485 = vadd.f32 0.0, %v5484
    %v5486 = vpop.f32.mrf.mxu0
    %5487 = vdwg.mxu0
    %5488 = vmatpush.bf16.msra.mxu0 0
    %5489 = vmatpush.bf16.msra.mxu0 0
    %5490 = vmatpush.bf16.msra.mxu0 0
    %5491 = vmatpush.bf16.msra.mxu0 0
    %5492 = vmatpush.bf16.msra.mxu0 0
    %5493 = vmatpush.bf16.msra.mxu0 %v5470
    %5494 = vmatpush.bf16.msra.mxu0 %v5442
    %5495 = vmatpush.bf16.msra.mxu0 %v5440
    %5496 = vmatmul.bf16.gmra.mxu0 %v5467
    %v5497 = vpop.f32.mrf.mxu0
    %v5498 = vadd.f32 %v5485, %v5497
    %v5499 = vpop.f32.mrf.mxu0
    %5500 = vdwg.mxu0
    %5501 = vmatpush.bf16.msra.mxu0 %v5439
    %5502 = vmatpush.bf16.msra.mxu0 %v5437
    %5503 = vmatpush.bf16.msra.mxu0 %v5435
    %5504 = vmatpush.bf16.msra.mxu0 %v5433
    %5505 = vmatpush.bf16.msra.mxu0 %v5431
    %5506 = vmatpush.bf16.msra.mxu0 %v5429
    %5507 = vmatpush.bf16.msra.mxu0 %v5427
    %5508 = vmatpush.bf16.msra.mxu0 %v5425
    %5509 = vmatmul.bf16.gmra.mxu0 %v5333
    %v5510 = vpop.f32.mrf.mxu0
    %v5511 = vadd.f32 0.0, %v5510
    %v5512 = vpop.f32.mrf.mxu0
    %5513 = vdwg.mxu0
    %5514 = vmatpush.bf16.msra.mxu0 0
    %5515 = vmatpush.bf16.msra.mxu0 0
    %5516 = vmatpush.bf16.msra.mxu0 0
    %5517 = vmatpush.bf16.msra.mxu0 0
    %5518 = vmatpush.bf16.msra.mxu0 0
    %5519 = vmatpush.bf16.msra.mxu0 %v5473
    %5520 = vmatpush.bf16.msra.mxu0 %v5443
    %5521 = vmatpush.bf16.msra.mxu0 %v5441
    %5522 = vmatmul.bf16.gmra.mxu0 %v5467
    %v5523 = vpop.f32.mrf.mxu0
    %v5524 = vadd.f32 %v5511, %v5523
    %v5525 = vpop.f32.mrf.mxu0
    %5526 = vdwg.mxu0
    %v5527 = vadd.f32 %v5321, %v5498
    %v5528 = vadd.f32 %v5322, %v5524
    %v5529 = vrot.slane %v577, 6
    %v5530 = vrot.slane %v578, 6
    %v5533 = vrot.slane %v1001, 5
    %v5534 = vrot.slane %v1002, 5
    %v5537 = vsel %vm150, %v5529, %v5533
    %v5538 = vsel %vm150, %v5530, %v5534
    %v5539 = vpack.c.bf16 %v5537, %v5537
    %v5540 = vpack.c.bf16 %v5538, %v5538
    %s5541 = scalar_lea.vmem [#allocation2], 3872
    %v5542 = vld [vmem:[%s5541] sm:$0xff]
    %v5543 = vld [vmem:[%s5541 + $0x8] sm:$0xff]
    %v5544 = vld [vmem:[%s5541 + $0x10] sm:$0xff]
    %v5545 = vld [vmem:[%s5541 + $0x18] sm:$0xff]
    %v5546 = vld [vmem:[%s5541 + $0x20] sm:$0xff]
    %v5547 = vld [vmem:[%s5541 + $0x28] sm:$0xff]
    %v5548 = vld [vmem:[%s5541 + $0x30] sm:$0xff]
    %v5549 = vld [vmem:[%s5541 + $0x38] sm:$0xff]
    %v5550 = vld [vmem:[%s5541 + $0x40] sm:$0xff]
    %v5551 = vld [vmem:[%s5541 + $0x48] sm:$0xff]
    %v5552 = vld [vmem:[%s5541 + $0x50] sm:$0xff]
    %v5553 = vld [vmem:[%s5541 + $0x58] sm:$0xff]
    %v5554 = vld [vmem:[%s5541 + $0x60] sm:$0xff]
    %v5555 = vld [vmem:[%s5541 + $0x68] sm:$0xff]
    %v5556 = vld [vmem:[%s5541 + $0x70] sm:$0xff]
    %v5557 = vld [vmem:[%s5541 + $0x78] sm:$0xff]
    %v5558 = vld [vmem:[%s5541 + $0x80] sm:$0xff]
    %v5559 = vld [vmem:[%s5541 + $0x88] sm:$0xff]
    %v5560 = vld [vmem:[%s5541 + $0x90] sm:$0xff]
    %v5561 = vld [vmem:[%s5541 + $0x98] sm:$0xff]
    %v5562 = vld [vmem:[%s5541 + $0xa0] sm:$0xff]
    %v5563 = vld [vmem:[%s5541 + $0xa8] sm:$0x11]
    %v5586 = vunpack.c.l.b16 %v5542
    %v5587 = vunpack.c.h.b16 %v5542
    %v5588 = vunpack.c.l.b16 %v5543
    %v5589 = vunpack.c.h.b16 %v5543
    %v5590 = vunpack.c.l.b16 %v5544
    %v5591 = vunpack.c.h.b16 %v5544
    %v5592 = vunpack.c.l.b16 %v5545
    %v5593 = vunpack.c.h.b16 %v5545
    %v5594 = vunpack.c.l.b16 %v5546
    %v5595 = vunpack.c.h.b16 %v5546
    %v5596 = vunpack.c.l.b16 %v5547
    %v5597 = vunpack.c.h.b16 %v5547
    %v5598 = vunpack.c.l.b16 %v5548
    %v5599 = vunpack.c.h.b16 %v5548
    %v5600 = vunpack.c.l.b16 %v5549
    %v5601 = vunpack.c.h.b16 %v5549
    %v5602 = vunpack.c.l.b16 %v5550
    %v5603 = vunpack.c.h.b16 %v5550
    %v5604 = vunpack.c.l.b16 %v5551
    %v5605 = vunpack.c.h.b16 %v5551
    %v5606 = vunpack.c.l.b16 %v5552
    %v5607 = vunpack.c.h.b16 %v5552
    %v5608 = vunpack.c.l.b16 %v5553
    %v5609 = vunpack.c.h.b16 %v5553
    %v5610 = vunpack.c.l.b16 %v5554
    %v5611 = vunpack.c.h.b16 %v5554
    %v5612 = vunpack.c.l.b16 %v5555
    %v5613 = vunpack.c.h.b16 %v5555
    %v5614 = vunpack.c.l.b16 %v5556
    %v5615 = vunpack.c.h.b16 %v5556
    %v5616 = vunpack.c.l.b16 %v5557
    %v5617 = vunpack.c.h.b16 %v5557
    %v5618 = vunpack.c.l.b16 %v5558
    %v5619 = vunpack.c.h.b16 %v5558
    %v5620 = vunpack.c.l.b16 %v5559
    %v5621 = vunpack.c.h.b16 %v5559
    %v5622 = vunpack.c.l.b16 %v5560
    %v5623 = vunpack.c.h.b16 %v5560
    %v5624 = vunpack.c.l.b16 %v5561
    %v5625 = vunpack.c.h.b16 %v5561
    %v5626 = vunpack.c.l.b16 %v5562
    %v5627 = vunpack.c.h.b16 %v5562
    %v5628 = vunpack.c.l.b16 %v5563
    %v5629 = vunpack.c.h.b16 %v5563
    %v5630 = vpack.c.b16 %v5588, %v5586
    %v5631 = vpack.c.b16 %v5589, %v5587
    %v5632 = vpack.c.b16 %v5592, %v5590
    %v5633 = vpack.c.b16 %v5593, %v5591
    %v5634 = vpack.c.b16 %v5596, %v5594
    %v5635 = vpack.c.b16 %v5597, %v5595
    %v5636 = vpack.c.b16 %v5600, %v5598
    %v5637 = vpack.c.b16 %v5601, %v5599
    %v5638 = vpack.c.b16 %v5604, %v5602
    %v5639 = vpack.c.b16 %v5605, %v5603
    %v5640 = vpack.c.b16 %v5608, %v5606
    %v5641 = vpack.c.b16 %v5609, %v5607
    %v5642 = vpack.c.b16 %v5612, %v5610
    %v5643 = vpack.c.b16 %v5613, %v5611
    %v5644 = vpack.c.b16 %v5616, %v5614
    %v5645 = vpack.c.b16 %v5617, %v5615
    %v5646 = vpack.c.b16 %v5620, %v5618
    %v5647 = vpack.c.b16 %v5621, %v5619
    %v5648 = vpack.c.b16 %v5624, %v5622
    %v5649 = vpack.c.b16 %v5625, %v5623
    %v5650 = vpack.c.b16 %v5628, %v5626
    %v5651 = vpack.c.b16 %v5629, %v5627
    %v5673 = vsel %vm459, %v5540, 0
    %v5676 = vand.u32 %v5650, %v1189
    %v5679 = vand.u32 %v5651, %v1189
    %5681 = vmatpush.bf16.msra.mxu0 %v5644
    %5682 = vmatpush.bf16.msra.mxu0 %v5642
    %5683 = vmatpush.bf16.msra.mxu0 %v5640
    %5684 = vmatpush.bf16.msra.mxu0 %v5638
    %5685 = vmatpush.bf16.msra.mxu0 %v5636
    %5686 = vmatpush.bf16.msra.mxu0 %v5634
    %5687 = vmatpush.bf16.msra.mxu0 %v5632
    %5688 = vmatpush.bf16.msra.mxu0 %v5630
    %5689 = vmatmul.bf16.gmra.mxu0 %v5539
    %v5690 = vpop.f32.mrf.mxu0
    %v5691 = vadd.f32 0.0, %v5690
    %v5692 = vpop.f32.mrf.mxu0
    %5693 = vdwg.mxu0
    %5694 = vmatpush.bf16.msra.mxu0 0
    %5695 = vmatpush.bf16.msra.mxu0 0
    %5696 = vmatpush.bf16.msra.mxu0 0
    %5697 = vmatpush.bf16.msra.mxu0 0
    %5698 = vmatpush.bf16.msra.mxu0 0
    %5699 = vmatpush.bf16.msra.mxu0 %v5676
    %5700 = vmatpush.bf16.msra.mxu0 %v5648
    %5701 = vmatpush.bf16.msra.mxu0 %v5646
    %5702 = vmatmul.bf16.gmra.mxu0 %v5673
    %v5703 = vpop.f32.mrf.mxu0
    %v5704 = vadd.f32 %v5691, %v5703
    %v5705 = vpop.f32.mrf.mxu0
    %5706 = vdwg.mxu0
    %5707 = vmatpush.bf16.msra.mxu0 %v5645
    %5708 = vmatpush.bf16.msra.mxu0 %v5643
    %5709 = vmatpush.bf16.msra.mxu0 %v5641
    %5710 = vmatpush.bf16.msra.mxu0 %v5639
    %5711 = vmatpush.bf16.msra.mxu0 %v5637
    %5712 = vmatpush.bf16.msra.mxu0 %v5635
    %5713 = vmatpush.bf16.msra.mxu0 %v5633
    %5714 = vmatpush.bf16.msra.mxu0 %v5631
    %5715 = vmatmul.bf16.gmra.mxu0 %v5539
    %v5716 = vpop.f32.mrf.mxu0
    %v5717 = vadd.f32 0.0, %v5716
    %v5718 = vpop.f32.mrf.mxu0
    %5719 = vdwg.mxu0
    %5720 = vmatpush.bf16.msra.mxu0 0
    %5721 = vmatpush.bf16.msra.mxu0 0
    %5722 = vmatpush.bf16.msra.mxu0 0
    %5723 = vmatpush.bf16.msra.mxu0 0
    %5724 = vmatpush.bf16.msra.mxu0 0
    %5725 = vmatpush.bf16.msra.mxu0 %v5679
    %5726 = vmatpush.bf16.msra.mxu0 %v5649
    %5727 = vmatpush.bf16.msra.mxu0 %v5647
    %5728 = vmatmul.bf16.gmra.mxu0 %v5673
    %v5729 = vpop.f32.mrf.mxu0
    %v5730 = vadd.f32 %v5717, %v5729
    %v5731 = vpop.f32.mrf.mxu0
    %5732 = vdwg.mxu0
    %v5733 = vadd.f32 %v5527, %v5704
    %v5734 = vadd.f32 %v5528, %v5730
    %v5735 = vrot.slane %v577, 7
    %v5736 = vrot.slane %v578, 7
    %v5739 = vrot.slane %v1001, 6
    %v5740 = vrot.slane %v1002, 6
    %v5743 = vsel %vm150, %v5735, %v5739
    %v5744 = vsel %vm150, %v5736, %v5740
    %v5745 = vpack.c.bf16 %v5743, %v5743
    %v5746 = vpack.c.bf16 %v5744, %v5744
    %s5747 = scalar_lea.vmem [#allocation2], 4048
    %v5748 = vld [vmem:[%s5747] sm:$0xff]
    %v5749 = vld [vmem:[%s5747 + $0x8] sm:$0xff]
    %v5750 = vld [vmem:[%s5747 + $0x10] sm:$0xff]
    %v5751 = vld [vmem:[%s5747 + $0x18] sm:$0xff]
    %v5752 = vld [vmem:[%s5747 + $0x20] sm:$0xff]
    %v5753 = vld [vmem:[%s5747 + $0x28] sm:$0xff]
    %v5754 = vld [vmem:[%s5747 + $0x30] sm:$0xff]
    %v5755 = vld [vmem:[%s5747 + $0x38] sm:$0xff]
    %v5756 = vld [vmem:[%s5747 + $0x40] sm:$0xff]
    %v5757 = vld [vmem:[%s5747 + $0x48] sm:$0xff]
    %v5758 = vld [vmem:[%s5747 + $0x50] sm:$0xff]
    %v5759 = vld [vmem:[%s5747 + $0x58] sm:$0xff]
    %v5760 = vld [vmem:[%s5747 + $0x60] sm:$0xff]
    %v5761 = vld [vmem:[%s5747 + $0x68] sm:$0xff]
    %v5762 = vld [vmem:[%s5747 + $0x70] sm:$0xff]
    %v5763 = vld [vmem:[%s5747 + $0x78] sm:$0xff]
    %v5764 = vld [vmem:[%s5747 + $0x80] sm:$0xff]
    %v5765 = vld [vmem:[%s5747 + $0x88] sm:$0xff]
    %v5766 = vld [vmem:[%s5747 + $0x90] sm:$0xff]
    %v5767 = vld [vmem:[%s5747 + $0x98] sm:$0xff]
    %v5768 = vld [vmem:[%s5747 + $0xa0] sm:$0xff]
    %v5769 = vld [vmem:[%s5747 + $0xa8] sm:$0x11]
    %v5792 = vunpack.c.l.b16 %v5748
    %v5793 = vunpack.c.h.b16 %v5748
    %v5794 = vunpack.c.l.b16 %v5749
    %v5795 = vunpack.c.h.b16 %v5749
    %v5796 = vunpack.c.l.b16 %v5750
    %v5797 = vunpack.c.h.b16 %v5750
    %v5798 = vunpack.c.l.b16 %v5751
    %v5799 = vunpack.c.h.b16 %v5751
    %v5800 = vunpack.c.l.b16 %v5752
    %v5801 = vunpack.c.h.b16 %v5752
    %v5802 = vunpack.c.l.b16 %v5753
    %v5803 = vunpack.c.h.b16 %v5753
    %v5804 = vunpack.c.l.b16 %v5754
    %v5805 = vunpack.c.h.b16 %v5754
    %v5806 = vunpack.c.l.b16 %v5755
    %v5807 = vunpack.c.h.b16 %v5755
    %v5808 = vunpack.c.l.b16 %v5756
    %v5809 = vunpack.c.h.b16 %v5756
    %v5810 = vunpack.c.l.b16 %v5757
    %v5811 = vunpack.c.h.b16 %v5757
    %v5812 = vunpack.c.l.b16 %v5758
    %v5813 = vunpack.c.h.b16 %v5758
    %v5814 = vunpack.c.l.b16 %v5759
    %v5815 = vunpack.c.h.b16 %v5759
    %v5816 = vunpack.c.l.b16 %v5760
    %v5817 = vunpack.c.h.b16 %v5760
    %v5818 = vunpack.c.l.b16 %v5761
    %v5819 = vunpack.c.h.b16 %v5761
    %v5820 = vunpack.c.l.b16 %v5762
    %v5821 = vunpack.c.h.b16 %v5762
    %v5822 = vunpack.c.l.b16 %v5763
    %v5823 = vunpack.c.h.b16 %v5763
    %v5824 = vunpack.c.l.b16 %v5764
    %v5825 = vunpack.c.h.b16 %v5764
    %v5826 = vunpack.c.l.b16 %v5765
    %v5827 = vunpack.c.h.b16 %v5765
    %v5828 = vunpack.c.l.b16 %v5766
    %v5829 = vunpack.c.h.b16 %v5766
    %v5830 = vunpack.c.l.b16 %v5767
    %v5831 = vunpack.c.h.b16 %v5767
    %v5832 = vunpack.c.l.b16 %v5768
    %v5833 = vunpack.c.h.b16 %v5768
    %v5834 = vunpack.c.l.b16 %v5769
    %v5835 = vunpack.c.h.b16 %v5769
    %v5836 = vpack.c.b16 %v5794, %v5792
    %v5837 = vpack.c.b16 %v5795, %v5793
    %v5838 = vpack.c.b16 %v5798, %v5796
    %v5839 = vpack.c.b16 %v5799, %v5797
    %v5840 = vpack.c.b16 %v5802, %v5800
    %v5841 = vpack.c.b16 %v5803, %v5801
    %v5842 = vpack.c.b16 %v5806, %v5804
    %v5843 = vpack.c.b16 %v5807, %v5805
    %v5844 = vpack.c.b16 %v5810, %v5808
    %v5845 = vpack.c.b16 %v5811, %v5809
    %v5846 = vpack.c.b16 %v5814, %v5812
    %v5847 = vpack.c.b16 %v5815, %v5813
    %v5848 = vpack.c.b16 %v5818, %v5816
    %v5849 = vpack.c.b16 %v5819, %v5817
    %v5850 = vpack.c.b16 %v5822, %v5820
    %v5851 = vpack.c.b16 %v5823, %v5821
    %v5852 = vpack.c.b16 %v5826, %v5824
    %v5853 = vpack.c.b16 %v5827, %v5825
    %v5854 = vpack.c.b16 %v5830, %v5828
    %v5855 = vpack.c.b16 %v5831, %v5829
    %v5856 = vpack.c.b16 %v5834, %v5832
    %v5857 = vpack.c.b16 %v5835, %v5833
    %v5879 = vsel %vm459, %v5746, 0
    %v5882 = vand.u32 %v5856, %v1189
    %v5885 = vand.u32 %v5857, %v1189
    %5887 = vmatpush.bf16.msra.mxu0 %v5850
    %5888 = vmatpush.bf16.msra.mxu0 %v5848
    %5889 = vmatpush.bf16.msra.mxu0 %v5846
    %5890 = vmatpush.bf16.msra.mxu0 %v5844
    %5891 = vmatpush.bf16.msra.mxu0 %v5842
    %5892 = vmatpush.bf16.msra.mxu0 %v5840
    %5893 = vmatpush.bf16.msra.mxu0 %v5838
    %5894 = vmatpush.bf16.msra.mxu0 %v5836
    %5895 = vmatmul.bf16.gmra.mxu0 %v5745
    %v5896 = vpop.f32.mrf.mxu0
    %v5897 = vadd.f32 0.0, %v5896
    %v5898 = vpop.f32.mrf.mxu0
    %5899 = vdwg.mxu0
    %5900 = vmatpush.bf16.msra.mxu0 0
    %5901 = vmatpush.bf16.msra.mxu0 0
    %5902 = vmatpush.bf16.msra.mxu0 0
    %5903 = vmatpush.bf16.msra.mxu0 0
    %5904 = vmatpush.bf16.msra.mxu0 0
    %5905 = vmatpush.bf16.msra.mxu0 %v5882
    %5906 = vmatpush.bf16.msra.mxu0 %v5854
    %5907 = vmatpush.bf16.msra.mxu0 %v5852
    %5908 = vmatmul.bf16.gmra.mxu0 %v5879
    %v5909 = vpop.f32.mrf.mxu0
    %v5910 = vadd.f32 %v5897, %v5909
    %v5911 = vpop.f32.mrf.mxu0
    %5912 = vdwg.mxu0
    %5913 = vmatpush.bf16.msra.mxu0 %v5851
    %5914 = vmatpush.bf16.msra.mxu0 %v5849
    %5915 = vmatpush.bf16.msra.mxu0 %v5847
    %5916 = vmatpush.bf16.msra.mxu0 %v5845
    %5917 = vmatpush.bf16.msra.mxu0 %v5843
    %5918 = vmatpush.bf16.msra.mxu0 %v5841
    %5919 = vmatpush.bf16.msra.mxu0 %v5839
    %5920 = vmatpush.bf16.msra.mxu0 %v5837
    %5921 = vmatmul.bf16.gmra.mxu0 %v5745
    %v5922 = vpop.f32.mrf.mxu0
    %v5923 = vadd.f32 0.0, %v5922
    %v5924 = vpop.f32.mrf.mxu0
    %5925 = vdwg.mxu0
    %5926 = vmatpush.bf16.msra.mxu0 0
    %5927 = vmatpush.bf16.msra.mxu0 0
    %5928 = vmatpush.bf16.msra.mxu0 0
    %5929 = vmatpush.bf16.msra.mxu0 0
    %5930 = vmatpush.bf16.msra.mxu0 0
    %5931 = vmatpush.bf16.msra.mxu0 %v5885
    %5932 = vmatpush.bf16.msra.mxu0 %v5855
    %5933 = vmatpush.bf16.msra.mxu0 %v5853
    %5934 = vmatmul.bf16.gmra.mxu0 %v5879
    %v5935 = vpop.f32.mrf.mxu0
    %v5936 = vadd.f32 %v5923, %v5935
    %v5937 = vpop.f32.mrf.mxu0
    %5938 = vdwg.mxu0
    %v5939 = vadd.f32 %v5733, %v5910
    %v5940 = vadd.f32 %v5734, %v5936
    %v5943 = vrot.slane %v1003, 7
    %v5944 = vrot.slane %v1004, 7
    %v5947 = vsel %vm150, %v579, %v5943
    %v5948 = vsel %vm150, %v580, %v5944
    %v5949 = vpack.c.bf16 %v5947, %v5947
    %v5950 = vpack.c.bf16 %v5948, %v5948
    %s5951 = scalar_lea.vmem [#allocation2], 4224
    %v5952 = vld [vmem:[%s5951] sm:$0xff]
    %v5953 = vld [vmem:[%s5951 + $0x8] sm:$0xff]
    %v5954 = vld [vmem:[%s5951 + $0x10] sm:$0xff]
    %v5955 = vld [vmem:[%s5951 + $0x18] sm:$0xff]
    %v5956 = vld [vmem:[%s5951 + $0x20] sm:$0xff]
    %v5957 = vld [vmem:[%s5951 + $0x28] sm:$0xff]
    %v5958 = vld [vmem:[%s5951 + $0x30] sm:$0xff]
    %v5959 = vld [vmem:[%s5951 + $0x38] sm:$0xff]
    %v5960 = vld [vmem:[%s5951 + $0x40] sm:$0xff]
    %v5961 = vld [vmem:[%s5951 + $0x48] sm:$0xff]
    %v5962 = vld [vmem:[%s5951 + $0x50] sm:$0xff]
    %v5963 = vld [vmem:[%s5951 + $0x58] sm:$0xff]
    %v5964 = vld [vmem:[%s5951 + $0x60] sm:$0xff]
    %v5965 = vld [vmem:[%s5951 + $0x68] sm:$0xff]
    %v5966 = vld [vmem:[%s5951 + $0x70] sm:$0xff]
    %v5967 = vld [vmem:[%s5951 + $0x78] sm:$0xff]
    %v5968 = vld [vmem:[%s5951 + $0x80] sm:$0xff]
    %v5969 = vld [vmem:[%s5951 + $0x88] sm:$0xff]
    %v5970 = vld [vmem:[%s5951 + $0x90] sm:$0xff]
    %v5971 = vld [vmem:[%s5951 + $0x98] sm:$0xff]
    %v5972 = vld [vmem:[%s5951 + $0xa0] sm:$0xff]
    %v5973 = vld [vmem:[%s5951 + $0xa8] sm:$0x11]
    %v5996 = vunpack.c.l.b16 %v5952
    %v5997 = vunpack.c.h.b16 %v5952
    %v5998 = vunpack.c.l.b16 %v5953
    %v5999 = vunpack.c.h.b16 %v5953
    %v6000 = vunpack.c.l.b16 %v5954
    %v6001 = vunpack.c.h.b16 %v5954
    %v6002 = vunpack.c.l.b16 %v5955
    %v6003 = vunpack.c.h.b16 %v5955
    %v6004 = vunpack.c.l.b16 %v5956
    %v6005 = vunpack.c.h.b16 %v5956
    %v6006 = vunpack.c.l.b16 %v5957
    %v6007 = vunpack.c.h.b16 %v5957
    %v6008 = vunpack.c.l.b16 %v5958
    %v6009 = vunpack.c.h.b16 %v5958
    %v6010 = vunpack.c.l.b16 %v5959
    %v6011 = vunpack.c.h.b16 %v5959
    %v6012 = vunpack.c.l.b16 %v5960
    %v6013 = vunpack.c.h.b16 %v5960
    %v6014 = vunpack.c.l.b16 %v5961
    %v6015 = vunpack.c.h.b16 %v5961
    %v6016 = vunpack.c.l.b16 %v5962
    %v6017 = vunpack.c.h.b16 %v5962
    %v6018 = vunpack.c.l.b16 %v5963
    %v6019 = vunpack.c.h.b16 %v5963
    %v6020 = vunpack.c.l.b16 %v5964
    %v6021 = vunpack.c.h.b16 %v5964
    %v6022 = vunpack.c.l.b16 %v5965
    %v6023 = vunpack.c.h.b16 %v5965
    %v6024 = vunpack.c.l.b16 %v5966
    %v6025 = vunpack.c.h.b16 %v5966
    %v6026 = vunpack.c.l.b16 %v5967
    %v6027 = vunpack.c.h.b16 %v5967
    %v6028 = vunpack.c.l.b16 %v5968
    %v6029 = vunpack.c.h.b16 %v5968
    %v6030 = vunpack.c.l.b16 %v5969
    %v6031 = vunpack.c.h.b16 %v5969
    %v6032 = vunpack.c.l.b16 %v5970
    %v6033 = vunpack.c.h.b16 %v5970
    %v6034 = vunpack.c.l.b16 %v5971
    %v6035 = vunpack.c.h.b16 %v5971
    %v6036 = vunpack.c.l.b16 %v5972
    %v6037 = vunpack.c.h.b16 %v5972
    %v6038 = vunpack.c.l.b16 %v5973
    %v6039 = vunpack.c.h.b16 %v5973
    %v6040 = vpack.c.b16 %v5998, %v5996
    %v6041 = vpack.c.b16 %v5999, %v5997
    %v6042 = vpack.c.b16 %v6002, %v6000
    %v6043 = vpack.c.b16 %v6003, %v6001
    %v6044 = vpack.c.b16 %v6006, %v6004
    %v6045 = vpack.c.b16 %v6007, %v6005
    %v6046 = vpack.c.b16 %v6010, %v6008
    %v6047 = vpack.c.b16 %v6011, %v6009
    %v6048 = vpack.c.b16 %v6014, %v6012
    %v6049 = vpack.c.b16 %v6015, %v6013
    %v6050 = vpack.c.b16 %v6018, %v6016
    %v6051 = vpack.c.b16 %v6019, %v6017
    %v6052 = vpack.c.b16 %v6022, %v6020
    %v6053 = vpack.c.b16 %v6023, %v6021
    %v6054 = vpack.c.b16 %v6026, %v6024
    %v6055 = vpack.c.b16 %v6027, %v6025
    %v6056 = vpack.c.b16 %v6030, %v6028
    %v6057 = vpack.c.b16 %v6031, %v6029
    %v6058 = vpack.c.b16 %v6034, %v6032
    %v6059 = vpack.c.b16 %v6035, %v6033
    %v6060 = vpack.c.b16 %v6038, %v6036
    %v6061 = vpack.c.b16 %v6039, %v6037
    %v6083 = vsel %vm459, %v5950, 0
    %v6086 = vand.u32 %v6060, %v1189
    %v6089 = vand.u32 %v6061, %v1189
    %6091 = vmatpush.bf16.msra.mxu0 %v6054
    %6092 = vmatpush.bf16.msra.mxu0 %v6052
    %6093 = vmatpush.bf16.msra.mxu0 %v6050
    %6094 = vmatpush.bf16.msra.mxu0 %v6048
    %6095 = vmatpush.bf16.msra.mxu0 %v6046
    %6096 = vmatpush.bf16.msra.mxu0 %v6044
    %6097 = vmatpush.bf16.msra.mxu0 %v6042
    %6098 = vmatpush.bf16.msra.mxu0 %v6040
    %6099 = vmatmul.bf16.gmra.mxu0 %v5949
    %v6100 = vpop.f32.mrf.mxu0
    %v6101 = vadd.f32 0.0, %v6100
    %v6102 = vpop.f32.mrf.mxu0
    %6103 = vdwg.mxu0
    %6104 = vmatpush.bf16.msra.mxu0 0
    %6105 = vmatpush.bf16.msra.mxu0 0
    %6106 = vmatpush.bf16.msra.mxu0 0
    %6107 = vmatpush.bf16.msra.mxu0 0
    %6108 = vmatpush.bf16.msra.mxu0 0
    %6109 = vmatpush.bf16.msra.mxu0 %v6086
    %6110 = vmatpush.bf16.msra.mxu0 %v6058
    %6111 = vmatpush.bf16.msra.mxu0 %v6056
    %6112 = vmatmul.bf16.gmra.mxu0 %v6083
    %v6113 = vpop.f32.mrf.mxu0
    %v6114 = vadd.f32 %v6101, %v6113
    %v6115 = vpop.f32.mrf.mxu0
    %6116 = vdwg.mxu0
    %6117 = vmatpush.bf16.msra.mxu0 %v6055
    %6118 = vmatpush.bf16.msra.mxu0 %v6053
    %6119 = vmatpush.bf16.msra.mxu0 %v6051
    %6120 = vmatpush.bf16.msra.mxu0 %v6049
    %6121 = vmatpush.bf16.msra.mxu0 %v6047
    %6122 = vmatpush.bf16.msra.mxu0 %v6045
    %6123 = vmatpush.bf16.msra.mxu0 %v6043
    %6124 = vmatpush.bf16.msra.mxu0 %v6041
    %6125 = vmatmul.bf16.gmra.mxu0 %v5949
    %v6126 = vpop.f32.mrf.mxu0
    %v6127 = vadd.f32 0.0, %v6126
    %v6128 = vpop.f32.mrf.mxu0
    %6129 = vdwg.mxu0
    %6130 = vmatpush.bf16.msra.mxu0 0
    %6131 = vmatpush.bf16.msra.mxu0 0
    %6132 = vmatpush.bf16.msra.mxu0 0
    %6133 = vmatpush.bf16.msra.mxu0 0
    %6134 = vmatpush.bf16.msra.mxu0 0
    %6135 = vmatpush.bf16.msra.mxu0 %v6089
    %6136 = vmatpush.bf16.msra.mxu0 %v6059
    %6137 = vmatpush.bf16.msra.mxu0 %v6057
    %6138 = vmatmul.bf16.gmra.mxu0 %v6083
    %v6139 = vpop.f32.mrf.mxu0
    %v6140 = vadd.f32 %v6127, %v6139
    %v6141 = vpop.f32.mrf.mxu0
    %6142 = vdwg.mxu0
    %v6143 = vadd.f32 %v5939, %v6114
    %v6144 = vadd.f32 %v5940, %v6140
    %v6147 = vrot.slane %v579, 1
    %v6148 = vrot.slane %v580, 1
    %v6151 = vsel %vm150, %v6147, %v1003
    %v6152 = vsel %vm150, %v6148, %v1004
    %v6153 = vpack.c.bf16 %v6151, %v6151
    %v6154 = vpack.c.bf16 %v6152, %v6152
    %s6155 = scalar_lea.vmem [#allocation2], 4400
    %v6156 = vld [vmem:[%s6155] sm:$0xff]
    %v6157 = vld [vmem:[%s6155 + $0x8] sm:$0xff]
    %v6158 = vld [vmem:[%s6155 + $0x10] sm:$0xff]
    %v6159 = vld [vmem:[%s6155 + $0x18] sm:$0xff]
    %v6160 = vld [vmem:[%s6155 + $0x20] sm:$0xff]
    %v6161 = vld [vmem:[%s6155 + $0x28] sm:$0xff]
    %v6162 = vld [vmem:[%s6155 + $0x30] sm:$0xff]
    %v6163 = vld [vmem:[%s6155 + $0x38] sm:$0xff]
    %v6164 = vld [vmem:[%s6155 + $0x40] sm:$0xff]
    %v6165 = vld [vmem:[%s6155 + $0x48] sm:$0xff]
    %v6166 = vld [vmem:[%s6155 + $0x50] sm:$0xff]
    %v6167 = vld [vmem:[%s6155 + $0x58] sm:$0xff]
    %v6168 = vld [vmem:[%s6155 + $0x60] sm:$0xff]
    %v6169 = vld [vmem:[%s6155 + $0x68] sm:$0xff]
    %v6170 = vld [vmem:[%s6155 + $0x70] sm:$0xff]
    %v6171 = vld [vmem:[%s6155 + $0x78] sm:$0xff]
    %v6172 = vld [vmem:[%s6155 + $0x80] sm:$0xff]
    %v6173 = vld [vmem:[%s6155 + $0x88] sm:$0xff]
    %v6174 = vld [vmem:[%s6155 + $0x90] sm:$0xff]
    %v6175 = vld [vmem:[%s6155 + $0x98] sm:$0xff]
    %v6176 = vld [vmem:[%s6155 + $0xa0] sm:$0xff]
    %v6177 = vld [vmem:[%s6155 + $0xa8] sm:$0x11]
    %v6200 = vunpack.c.l.b16 %v6156
    %v6201 = vunpack.c.h.b16 %v6156
    %v6202 = vunpack.c.l.b16 %v6157
    %v6203 = vunpack.c.h.b16 %v6157
    %v6204 = vunpack.c.l.b16 %v6158
    %v6205 = vunpack.c.h.b16 %v6158
    %v6206 = vunpack.c.l.b16 %v6159
    %v6207 = vunpack.c.h.b16 %v6159
    %v6208 = vunpack.c.l.b16 %v6160
    %v6209 = vunpack.c.h.b16 %v6160
    %v6210 = vunpack.c.l.b16 %v6161
    %v6211 = vunpack.c.h.b16 %v6161
    %v6212 = vunpack.c.l.b16 %v6162
    %v6213 = vunpack.c.h.b16 %v6162
    %v6214 = vunpack.c.l.b16 %v6163
    %v6215 = vunpack.c.h.b16 %v6163
    %v6216 = vunpack.c.l.b16 %v6164
    %v6217 = vunpack.c.h.b16 %v6164
    %v6218 = vunpack.c.l.b16 %v6165
    %v6219 = vunpack.c.h.b16 %v6165
    %v6220 = vunpack.c.l.b16 %v6166
    %v6221 = vunpack.c.h.b16 %v6166
    %v6222 = vunpack.c.l.b16 %v6167
    %v6223 = vunpack.c.h.b16 %v6167
    %v6224 = vunpack.c.l.b16 %v6168
    %v6225 = vunpack.c.h.b16 %v6168
    %v6226 = vunpack.c.l.b16 %v6169
    %v6227 = vunpack.c.h.b16 %v6169
    %v6228 = vunpack.c.l.b16 %v6170
    %v6229 = vunpack.c.h.b16 %v6170
    %v6230 = vunpack.c.l.b16 %v6171
    %v6231 = vunpack.c.h.b16 %v6171
    %v6232 = vunpack.c.l.b16 %v6172
    %v6233 = vunpack.c.h.b16 %v6172
    %v6234 = vunpack.c.l.b16 %v6173
    %v6235 = vunpack.c.h.b16 %v6173
    %v6236 = vunpack.c.l.b16 %v6174
    %v6237 = vunpack.c.h.b16 %v6174
    %v6238 = vunpack.c.l.b16 %v6175
    %v6239 = vunpack.c.h.b16 %v6175
    %v6240 = vunpack.c.l.b16 %v6176
    %v6241 = vunpack.c.h.b16 %v6176
    %v6242 = vunpack.c.l.b16 %v6177
    %v6243 = vunpack.c.h.b16 %v6177
    %v6244 = vpack.c.b16 %v6202, %v6200
    %v6245 = vpack.c.b16 %v6203, %v6201
    %v6246 = vpack.c.b16 %v6206, %v6204
    %v6247 = vpack.c.b16 %v6207, %v6205
    %v6248 = vpack.c.b16 %v6210, %v6208
    %v6249 = vpack.c.b16 %v6211, %v6209
    %v6250 = vpack.c.b16 %v6214, %v6212
    %v6251 = vpack.c.b16 %v6215, %v6213
    %v6252 = vpack.c.b16 %v6218, %v6216
    %v6253 = vpack.c.b16 %v6219, %v6217
    %v6254 = vpack.c.b16 %v6222, %v6220
    %v6255 = vpack.c.b16 %v6223, %v6221
    %v6256 = vpack.c.b16 %v6226, %v6224
    %v6257 = vpack.c.b16 %v6227, %v6225
    %v6258 = vpack.c.b16 %v6230, %v6228
    %v6259 = vpack.c.b16 %v6231, %v6229
    %v6260 = vpack.c.b16 %v6234, %v6232
    %v6261 = vpack.c.b16 %v6235, %v6233
    %v6262 = vpack.c.b16 %v6238, %v6236
    %v6263 = vpack.c.b16 %v6239, %v6237
    %v6264 = vpack.c.b16 %v6242, %v6240
    %v6265 = vpack.c.b16 %v6243, %v6241
    %v6287 = vsel %vm459, %v6154, 0
    %v6290 = vand.u32 %v6264, %v1189
    %v6293 = vand.u32 %v6265, %v1189
    %6295 = vmatpush.bf16.msra.mxu0 %v6258
    %6296 = vmatpush.bf16.msra.mxu0 %v6256
    %6297 = vmatpush.bf16.msra.mxu0 %v6254
    %6298 = vmatpush.bf16.msra.mxu0 %v6252
    %6299 = vmatpush.bf16.msra.mxu0 %v6250
    %6300 = vmatpush.bf16.msra.mxu0 %v6248
    %6301 = vmatpush.bf16.msra.mxu0 %v6246
    %6302 = vmatpush.bf16.msra.mxu0 %v6244
    %6303 = vmatmul.bf16.gmra.mxu0 %v6153
    %v6304 = vpop.f32.mrf.mxu0
    %v6305 = vadd.f32 0.0, %v6304
    %v6306 = vpop.f32.mrf.mxu0
    %6307 = vdwg.mxu0
    %6308 = vmatpush.bf16.msra.mxu0 0
    %6309 = vmatpush.bf16.msra.mxu0 0
    %6310 = vmatpush.bf16.msra.mxu0 0
    %6311 = vmatpush.bf16.msra.mxu0 0
    %6312 = vmatpush.bf16.msra.mxu0 0
    %6313 = vmatpush.bf16.msra.mxu0 %v6290
    %6314 = vmatpush.bf16.msra.mxu0 %v6262
    %6315 = vmatpush.bf16.msra.mxu0 %v6260
    %6316 = vmatmul.bf16.gmra.mxu0 %v6287
    %v6317 = vpop.f32.mrf.mxu0
    %v6318 = vadd.f32 %v6305, %v6317
    %v6319 = vpop.f32.mrf.mxu0
    %6320 = vdwg.mxu0
    %6321 = vmatpush.bf16.msra.mxu0 %v6259
    %6322 = vmatpush.bf16.msra.mxu0 %v6257
    %6323 = vmatpush.bf16.msra.mxu0 %v6255
    %6324 = vmatpush.bf16.msra.mxu0 %v6253
    %6325 = vmatpush.bf16.msra.mxu0 %v6251
    %6326 = vmatpush.bf16.msra.mxu0 %v6249
    %6327 = vmatpush.bf16.msra.mxu0 %v6247
    %6328 = vmatpush.bf16.msra.mxu0 %v6245
    %6329 = vmatmul.bf16.gmra.mxu0 %v6153
    %v6330 = vpop.f32.mrf.mxu0
    %v6331 = vadd.f32 0.0, %v6330
    %v6332 = vpop.f32.mrf.mxu0
    %6333 = vdwg.mxu0
    %6334 = vmatpush.bf16.msra.mxu0 0
    %6335 = vmatpush.bf16.msra.mxu0 0
    %6336 = vmatpush.bf16.msra.mxu0 0
    %6337 = vmatpush.bf16.msra.mxu0 0
    %6338 = vmatpush.bf16.msra.mxu0 0
    %6339 = vmatpush.bf16.msra.mxu0 %v6293
    %6340 = vmatpush.bf16.msra.mxu0 %v6263
    %6341 = vmatpush.bf16.msra.mxu0 %v6261
    %6342 = vmatmul.bf16.gmra.mxu0 %v6287
    %v6343 = vpop.f32.mrf.mxu0
    %v6344 = vadd.f32 %v6331, %v6343
    %v6345 = vpop.f32.mrf.mxu0
    %6346 = vdwg.mxu0
    %v6347 = vadd.f32 %v6143, %v6318
    %v6348 = vadd.f32 %v6144, %v6344
    %v6349 = vrot.slane %v579, 2
    %v6350 = vrot.slane %v580, 2
    %v6353 = vrot.slane %v1003, 1
    %v6354 = vrot.slane %v1004, 1
    %v6357 = vsel %vm150, %v6349, %v6353
    %v6358 = vsel %vm150, %v6350, %v6354
    %v6359 = vpack.c.bf16 %v6357, %v6357
    %v6360 = vpack.c.bf16 %v6358, %v6358
    %s6361 = scalar_lea.vmem [#allocation2], 4576
    %v6362 = vld [vmem:[%s6361] sm:$0xff]
    %v6363 = vld [vmem:[%s6361 + $0x8] sm:$0xff]
    %v6364 = vld [vmem:[%s6361 + $0x10] sm:$0xff]
    %v6365 = vld [vmem:[%s6361 + $0x18] sm:$0xff]
    %v6366 = vld [vmem:[%s6361 + $0x20] sm:$0xff]
    %v6367 = vld [vmem:[%s6361 + $0x28] sm:$0xff]
    %v6368 = vld [vmem:[%s6361 + $0x30] sm:$0xff]
    %v6369 = vld [vmem:[%s6361 + $0x38] sm:$0xff]
    %v6370 = vld [vmem:[%s6361 + $0x40] sm:$0xff]
    %v6371 = vld [vmem:[%s6361 + $0x48] sm:$0xff]
    %v6372 = vld [vmem:[%s6361 + $0x50] sm:$0xff]
    %v6373 = vld [vmem:[%s6361 + $0x58] sm:$0xff]
    %v6374 = vld [vmem:[%s6361 + $0x60] sm:$0xff]
    %v6375 = vld [vmem:[%s6361 + $0x68] sm:$0xff]
    %v6376 = vld [vmem:[%s6361 + $0x70] sm:$0xff]
    %v6377 = vld [vmem:[%s6361 + $0x78] sm:$0xff]
    %v6378 = vld [vmem:[%s6361 + $0x80] sm:$0xff]
    %v6379 = vld [vmem:[%s6361 + $0x88] sm:$0xff]
    %v6380 = vld [vmem:[%s6361 + $0x90] sm:$0xff]
    %v6381 = vld [vmem:[%s6361 + $0x98] sm:$0xff]
    %v6382 = vld [vmem:[%s6361 + $0xa0] sm:$0xff]
    %v6383 = vld [vmem:[%s6361 + $0xa8] sm:$0x11]
    %v6406 = vunpack.c.l.b16 %v6362
    %v6407 = vunpack.c.h.b16 %v6362
    %v6408 = vunpack.c.l.b16 %v6363
    %v6409 = vunpack.c.h.b16 %v6363
    %v6410 = vunpack.c.l.b16 %v6364
    %v6411 = vunpack.c.h.b16 %v6364
    %v6412 = vunpack.c.l.b16 %v6365
    %v6413 = vunpack.c.h.b16 %v6365
    %v6414 = vunpack.c.l.b16 %v6366
    %v6415 = vunpack.c.h.b16 %v6366
    %v6416 = vunpack.c.l.b16 %v6367
    %v6417 = vunpack.c.h.b16 %v6367
    %v6418 = vunpack.c.l.b16 %v6368
    %v6419 = vunpack.c.h.b16 %v6368
    %v6420 = vunpack.c.l.b16 %v6369
    %v6421 = vunpack.c.h.b16 %v6369
    %v6422 = vunpack.c.l.b16 %v6370
    %v6423 = vunpack.c.h.b16 %v6370
    %v6424 = vunpack.c.l.b16 %v6371
    %v6425 = vunpack.c.h.b16 %v6371
    %v6426 = vunpack.c.l.b16 %v6372
    %v6427 = vunpack.c.h.b16 %v6372
    %v6428 = vunpack.c.l.b16 %v6373
    %v6429 = vunpack.c.h.b16 %v6373
    %v6430 = vunpack.c.l.b16 %v6374
    %v6431 = vunpack.c.h.b16 %v6374
    %v6432 = vunpack.c.l.b16 %v6375
    %v6433 = vunpack.c.h.b16 %v6375
    %v6434 = vunpack.c.l.b16 %v6376
    %v6435 = vunpack.c.h.b16 %v6376
    %v6436 = vunpack.c.l.b16 %v6377
    %v6437 = vunpack.c.h.b16 %v6377
    %v6438 = vunpack.c.l.b16 %v6378
    %v6439 = vunpack.c.h.b16 %v6378
    %v6440 = vunpack.c.l.b16 %v6379
    %v6441 = vunpack.c.h.b16 %v6379
    %v6442 = vunpack.c.l.b16 %v6380
    %v6443 = vunpack.c.h.b16 %v6380
    %v6444 = vunpack.c.l.b16 %v6381
    %v6445 = vunpack.c.h.b16 %v6381
    %v6446 = vunpack.c.l.b16 %v6382
    %v6447 = vunpack.c.h.b16 %v6382
    %v6448 = vunpack.c.l.b16 %v6383
    %v6449 = vunpack.c.h.b16 %v6383
    %v6450 = vpack.c.b16 %v6408, %v6406
    %v6451 = vpack.c.b16 %v6409, %v6407
    %v6452 = vpack.c.b16 %v6412, %v6410
    %v6453 = vpack.c.b16 %v6413, %v6411
    %v6454 = vpack.c.b16 %v6416, %v6414
    %v6455 = vpack.c.b16 %v6417, %v6415
    %v6456 = vpack.c.b16 %v6420, %v6418
    %v6457 = vpack.c.b16 %v6421, %v6419
    %v6458 = vpack.c.b16 %v6424, %v6422
    %v6459 = vpack.c.b16 %v6425, %v6423
    %v6460 = vpack.c.b16 %v6428, %v6426
    %v6461 = vpack.c.b16 %v6429, %v6427
    %v6462 = vpack.c.b16 %v6432, %v6430
    %v6463 = vpack.c.b16 %v6433, %v6431
    %v6464 = vpack.c.b16 %v6436, %v6434
    %v6465 = vpack.c.b16 %v6437, %v6435
    %v6466 = vpack.c.b16 %v6440, %v6438
    %v6467 = vpack.c.b16 %v6441, %v6439
    %v6468 = vpack.c.b16 %v6444, %v6442
    %v6469 = vpack.c.b16 %v6445, %v6443
    %v6470 = vpack.c.b16 %v6448, %v6446
    %v6471 = vpack.c.b16 %v6449, %v6447
    %v6493 = vsel %vm459, %v6360, 0
    %v6496 = vand.u32 %v6470, %v1189
    %v6499 = vand.u32 %v6471, %v1189
    %6501 = vmatpush.bf16.msra.mxu0 %v6464
    %6502 = vmatpush.bf16.msra.mxu0 %v6462
    %6503 = vmatpush.bf16.msra.mxu0 %v6460
    %6504 = vmatpush.bf16.msra.mxu0 %v6458
    %6505 = vmatpush.bf16.msra.mxu0 %v6456
    %6506 = vmatpush.bf16.msra.mxu0 %v6454
    %6507 = vmatpush.bf16.msra.mxu0 %v6452
    %6508 = vmatpush.bf16.msra.mxu0 %v6450
    %6509 = vmatmul.bf16.gmra.mxu0 %v6359
    %v6510 = vpop.f32.mrf.mxu0
    %v6511 = vadd.f32 0.0, %v6510
    %v6512 = vpop.f32.mrf.mxu0
    %6513 = vdwg.mxu0
    %6514 = vmatpush.bf16.msra.mxu0 0
    %6515 = vmatpush.bf16.msra.mxu0 0
    %6516 = vmatpush.bf16.msra.mxu0 0
    %6517 = vmatpush.bf16.msra.mxu0 0
    %6518 = vmatpush.bf16.msra.mxu0 0
    %6519 = vmatpush.bf16.msra.mxu0 %v6496
    %6520 = vmatpush.bf16.msra.mxu0 %v6468
    %6521 = vmatpush.bf16.msra.mxu0 %v6466
    %6522 = vmatmul.bf16.gmra.mxu0 %v6493
    %v6523 = vpop.f32.mrf.mxu0
    %v6524 = vadd.f32 %v6511, %v6523
    %v6525 = vpop.f32.mrf.mxu0
    %6526 = vdwg.mxu0
    %6527 = vmatpush.bf16.msra.mxu0 %v6465
    %6528 = vmatpush.bf16.msra.mxu0 %v6463
    %6529 = vmatpush.bf16.msra.mxu0 %v6461
    %6530 = vmatpush.bf16.msra.mxu0 %v6459
    %6531 = vmatpush.bf16.msra.mxu0 %v6457
    %6532 = vmatpush.bf16.msra.mxu0 %v6455
    %6533 = vmatpush.bf16.msra.mxu0 %v6453
    %6534 = vmatpush.bf16.msra.mxu0 %v6451
    %6535 = vmatmul.bf16.gmra.mxu0 %v6359
    %v6536 = vpop.f32.mrf.mxu0
    %v6537 = vadd.f32 0.0, %v6536
    %v6538 = vpop.f32.mrf.mxu0
    %6539 = vdwg.mxu0
    %6540 = vmatpush.bf16.msra.mxu0 0
    %6541 = vmatpush.bf16.msra.mxu0 0
    %6542 = vmatpush.bf16.msra.mxu0 0
    %6543 = vmatpush.bf16.msra.mxu0 0
    %6544 = vmatpush.bf16.msra.mxu0 0
    %6545 = vmatpush.bf16.msra.mxu0 %v6499
    %6546 = vmatpush.bf16.msra.mxu0 %v6469
    %6547 = vmatpush.bf16.msra.mxu0 %v6467
    %6548 = vmatmul.bf16.gmra.mxu0 %v6493
    %v6549 = vpop.f32.mrf.mxu0
    %v6550 = vadd.f32 %v6537, %v6549
    %v6551 = vpop.f32.mrf.mxu0
    %6552 = vdwg.mxu0
    %v6553 = vadd.f32 %v6347, %v6524
    %v6554 = vadd.f32 %v6348, %v6550
    %v6555 = vrot.slane %v579, 3
    %v6556 = vrot.slane %v580, 3
    %v6559 = vrot.slane %v1003, 2
    %v6560 = vrot.slane %v1004, 2
    %v6563 = vsel %vm150, %v6555, %v6559
    %v6564 = vsel %vm150, %v6556, %v6560
    %v6565 = vpack.c.bf16 %v6563, %v6563
    %v6566 = vpack.c.bf16 %v6564, %v6564
    %s6567 = scalar_lea.vmem [#allocation2], 4752
    %v6568 = vld [vmem:[%s6567] sm:$0xff]
    %v6569 = vld [vmem:[%s6567 + $0x8] sm:$0xff]
    %v6570 = vld [vmem:[%s6567 + $0x10] sm:$0xff]
    %v6571 = vld [vmem:[%s6567 + $0x18] sm:$0xff]
    %v6572 = vld [vmem:[%s6567 + $0x20] sm:$0xff]
    %v6573 = vld [vmem:[%s6567 + $0x28] sm:$0xff]
    %v6574 = vld [vmem:[%s6567 + $0x30] sm:$0xff]
    %v6575 = vld [vmem:[%s6567 + $0x38] sm:$0xff]
    %v6576 = vld [vmem:[%s6567 + $0x40] sm:$0xff]
    %v6577 = vld [vmem:[%s6567 + $0x48] sm:$0xff]
    %v6578 = vld [vmem:[%s6567 + $0x50] sm:$0xff]
    %v6579 = vld [vmem:[%s6567 + $0x58] sm:$0xff]
    %v6580 = vld [vmem:[%s6567 + $0x60] sm:$0xff]
    %v6581 = vld [vmem:[%s6567 + $0x68] sm:$0xff]
    %v6582 = vld [vmem:[%s6567 + $0x70] sm:$0xff]
    %v6583 = vld [vmem:[%s6567 + $0x78] sm:$0xff]
    %v6584 = vld [vmem:[%s6567 + $0x80] sm:$0xff]
    %v6585 = vld [vmem:[%s6567 + $0x88] sm:$0xff]
    %v6586 = vld [vmem:[%s6567 + $0x90] sm:$0xff]
    %v6587 = vld [vmem:[%s6567 + $0x98] sm:$0xff]
    %v6588 = vld [vmem:[%s6567 + $0xa0] sm:$0xff]
    %v6589 = vld [vmem:[%s6567 + $0xa8] sm:$0x11]
    %v6612 = vunpack.c.l.b16 %v6568
    %v6613 = vunpack.c.h.b16 %v6568
    %v6614 = vunpack.c.l.b16 %v6569
    %v6615 = vunpack.c.h.b16 %v6569
    %v6616 = vunpack.c.l.b16 %v6570
    %v6617 = vunpack.c.h.b16 %v6570
    %v6618 = vunpack.c.l.b16 %v6571
    %v6619 = vunpack.c.h.b16 %v6571
    %v6620 = vunpack.c.l.b16 %v6572
    %v6621 = vunpack.c.h.b16 %v6572
    %v6622 = vunpack.c.l.b16 %v6573
    %v6623 = vunpack.c.h.b16 %v6573
    %v6624 = vunpack.c.l.b16 %v6574
    %v6625 = vunpack.c.h.b16 %v6574
    %v6626 = vunpack.c.l.b16 %v6575
    %v6627 = vunpack.c.h.b16 %v6575
    %v6628 = vunpack.c.l.b16 %v6576
    %v6629 = vunpack.c.h.b16 %v6576
    %v6630 = vunpack.c.l.b16 %v6577
    %v6631 = vunpack.c.h.b16 %v6577
    %v6632 = vunpack.c.l.b16 %v6578
    %v6633 = vunpack.c.h.b16 %v6578
    %v6634 = vunpack.c.l.b16 %v6579
    %v6635 = vunpack.c.h.b16 %v6579
    %v6636 = vunpack.c.l.b16 %v6580
    %v6637 = vunpack.c.h.b16 %v6580
    %v6638 = vunpack.c.l.b16 %v6581
    %v6639 = vunpack.c.h.b16 %v6581
    %v6640 = vunpack.c.l.b16 %v6582
    %v6641 = vunpack.c.h.b16 %v6582
    %v6642 = vunpack.c.l.b16 %v6583
    %v6643 = vunpack.c.h.b16 %v6583
    %v6644 = vunpack.c.l.b16 %v6584
    %v6645 = vunpack.c.h.b16 %v6584
    %v6646 = vunpack.c.l.b16 %v6585
    %v6647 = vunpack.c.h.b16 %v6585
    %v6648 = vunpack.c.l.b16 %v6586
    %v6649 = vunpack.c.h.b16 %v6586
    %v6650 = vunpack.c.l.b16 %v6587
    %v6651 = vunpack.c.h.b16 %v6587
    %v6652 = vunpack.c.l.b16 %v6588
    %v6653 = vunpack.c.h.b16 %v6588
    %v6654 = vunpack.c.l.b16 %v6589
    %v6655 = vunpack.c.h.b16 %v6589
    %v6656 = vpack.c.b16 %v6614, %v6612
    %v6657 = vpack.c.b16 %v6615, %v6613
    %v6658 = vpack.c.b16 %v6618, %v6616
    %v6659 = vpack.c.b16 %v6619, %v6617
    %v6660 = vpack.c.b16 %v6622, %v6620
    %v6661 = vpack.c.b16 %v6623, %v6621
    %v6662 = vpack.c.b16 %v6626, %v6624
    %v6663 = vpack.c.b16 %v6627, %v6625
    %v6664 = vpack.c.b16 %v6630, %v6628
    %v6665 = vpack.c.b16 %v6631, %v6629
    %v6666 = vpack.c.b16 %v6634, %v6632
    %v6667 = vpack.c.b16 %v6635, %v6633
    %v6668 = vpack.c.b16 %v6638, %v6636
    %v6669 = vpack.c.b16 %v6639, %v6637
    %v6670 = vpack.c.b16 %v6642, %v6640
    %v6671 = vpack.c.b16 %v6643, %v6641
    %v6672 = vpack.c.b16 %v6646, %v6644
    %v6673 = vpack.c.b16 %v6647, %v6645
    %v6674 = vpack.c.b16 %v6650, %v6648
    %v6675 = vpack.c.b16 %v6651, %v6649
    %v6676 = vpack.c.b16 %v6654, %v6652
    %v6677 = vpack.c.b16 %v6655, %v6653
    %v6699 = vsel %vm459, %v6566, 0
    %v6702 = vand.u32 %v6676, %v1189
    %v6705 = vand.u32 %v6677, %v1189
    %6707 = vmatpush.bf16.msra.mxu0 %v6670
    %6708 = vmatpush.bf16.msra.mxu0 %v6668
    %6709 = vmatpush.bf16.msra.mxu0 %v6666
    %6710 = vmatpush.bf16.msra.mxu0 %v6664
    %6711 = vmatpush.bf16.msra.mxu0 %v6662
    %6712 = vmatpush.bf16.msra.mxu0 %v6660
    %6713 = vmatpush.bf16.msra.mxu0 %v6658
    %6714 = vmatpush.bf16.msra.mxu0 %v6656
    %6715 = vmatmul.bf16.gmra.mxu0 %v6565
    %v6716 = vpop.f32.mrf.mxu0
    %v6717 = vadd.f32 0.0, %v6716
    %v6718 = vpop.f32.mrf.mxu0
    %6719 = vdwg.mxu0
    %6720 = vmatpush.bf16.msra.mxu0 0
    %6721 = vmatpush.bf16.msra.mxu0 0
    %6722 = vmatpush.bf16.msra.mxu0 0
    %6723 = vmatpush.bf16.msra.mxu0 0
    %6724 = vmatpush.bf16.msra.mxu0 0
    %6725 = vmatpush.bf16.msra.mxu0 %v6702
    %6726 = vmatpush.bf16.msra.mxu0 %v6674
    %6727 = vmatpush.bf16.msra.mxu0 %v6672
    %6728 = vmatmul.bf16.gmra.mxu0 %v6699
    %v6729 = vpop.f32.mrf.mxu0
    %v6730 = vadd.f32 %v6717, %v6729
    %v6731 = vpop.f32.mrf.mxu0
    %6732 = vdwg.mxu0
    %6733 = vmatpush.bf16.msra.mxu0 %v6671
    %6734 = vmatpush.bf16.msra.mxu0 %v6669
    %6735 = vmatpush.bf16.msra.mxu0 %v6667
    %6736 = vmatpush.bf16.msra.mxu0 %v6665
    %6737 = vmatpush.bf16.msra.mxu0 %v6663
    %6738 = vmatpush.bf16.msra.mxu0 %v6661
    %6739 = vmatpush.bf16.msra.mxu0 %v6659
    %6740 = vmatpush.bf16.msra.mxu0 %v6657
    %6741 = vmatmul.bf16.gmra.mxu0 %v6565
    %v6742 = vpop.f32.mrf.mxu0
    %v6743 = vadd.f32 0.0, %v6742
    %v6744 = vpop.f32.mrf.mxu0
    %6745 = vdwg.mxu0
    %6746 = vmatpush.bf16.msra.mxu0 0
    %6747 = vmatpush.bf16.msra.mxu0 0
    %6748 = vmatpush.bf16.msra.mxu0 0
    %6749 = vmatpush.bf16.msra.mxu0 0
    %6750 = vmatpush.bf16.msra.mxu0 0
    %6751 = vmatpush.bf16.msra.mxu0 %v6705
    %6752 = vmatpush.bf16.msra.mxu0 %v6675
    %6753 = vmatpush.bf16.msra.mxu0 %v6673
    %6754 = vmatmul.bf16.gmra.mxu0 %v6699
    %v6755 = vpop.f32.mrf.mxu0
    %v6756 = vadd.f32 %v6743, %v6755
    %v6757 = vpop.f32.mrf.mxu0
    %6758 = vdwg.mxu0
    %v6759 = vadd.f32 %v6553, %v6730
    %v6760 = vadd.f32 %v6554, %v6756
    %v6761 = vrot.slane %v579, 4
    %v6762 = vrot.slane %v580, 4
    %v6765 = vrot.slane %v1003, 3
    %v6766 = vrot.slane %v1004, 3
    %v6769 = vsel %vm150, %v6761, %v6765
    %v6770 = vsel %vm150, %v6762, %v6766
    %v6771 = vpack.c.bf16 %v6769, %v6769
    %v6772 = vpack.c.bf16 %v6770, %v6770
    %s6773 = scalar_lea.vmem [#allocation2], 4928
    %v6774 = vld [vmem:[%s6773] sm:$0xff]
    %v6775 = vld [vmem:[%s6773 + $0x8] sm:$0xff]
    %v6776 = vld [vmem:[%s6773 + $0x10] sm:$0xff]
    %v6777 = vld [vmem:[%s6773 + $0x18] sm:$0xff]
    %v6778 = vld [vmem:[%s6773 + $0x20] sm:$0xff]
    %v6779 = vld [vmem:[%s6773 + $0x28] sm:$0xff]
    %v6780 = vld [vmem:[%s6773 + $0x30] sm:$0xff]
    %v6781 = vld [vmem:[%s6773 + $0x38] sm:$0xff]
    %v6782 = vld [vmem:[%s6773 + $0x40] sm:$0xff]
    %v6783 = vld [vmem:[%s6773 + $0x48] sm:$0xff]
    %v6784 = vld [vmem:[%s6773 + $0x50] sm:$0xff]
    %v6785 = vld [vmem:[%s6773 + $0x58] sm:$0xff]
    %v6786 = vld [vmem:[%s6773 + $0x60] sm:$0xff]
    %v6787 = vld [vmem:[%s6773 + $0x68] sm:$0xff]
    %v6788 = vld [vmem:[%s6773 + $0x70] sm:$0xff]
    %v6789 = vld [vmem:[%s6773 + $0x78] sm:$0xff]
    %v6790 = vld [vmem:[%s6773 + $0x80] sm:$0xff]
    %v6791 = vld [vmem:[%s6773 + $0x88] sm:$0xff]
    %v6792 = vld [vmem:[%s6773 + $0x90] sm:$0xff]
    %v6793 = vld [vmem:[%s6773 + $0x98] sm:$0xff]
    %v6794 = vld [vmem:[%s6773 + $0xa0] sm:$0xff]
    %v6795 = vld [vmem:[%s6773 + $0xa8] sm:$0x11]
    %v6818 = vunpack.c.l.b16 %v6774
    %v6819 = vunpack.c.h.b16 %v6774
    %v6820 = vunpack.c.l.b16 %v6775
    %v6821 = vunpack.c.h.b16 %v6775
    %v6822 = vunpack.c.l.b16 %v6776
    %v6823 = vunpack.c.h.b16 %v6776
    %v6824 = vunpack.c.l.b16 %v6777
    %v6825 = vunpack.c.h.b16 %v6777
    %v6826 = vunpack.c.l.b16 %v6778
    %v6827 = vunpack.c.h.b16 %v6778
    %v6828 = vunpack.c.l.b16 %v6779
    %v6829 = vunpack.c.h.b16 %v6779
    %v6830 = vunpack.c.l.b16 %v6780
    %v6831 = vunpack.c.h.b16 %v6780
    %v6832 = vunpack.c.l.b16 %v6781
    %v6833 = vunpack.c.h.b16 %v6781
    %v6834 = vunpack.c.l.b16 %v6782
    %v6835 = vunpack.c.h.b16 %v6782
    %v6836 = vunpack.c.l.b16 %v6783
    %v6837 = vunpack.c.h.b16 %v6783
    %v6838 = vunpack.c.l.b16 %v6784
    %v6839 = vunpack.c.h.b16 %v6784
    %v6840 = vunpack.c.l.b16 %v6785
    %v6841 = vunpack.c.h.b16 %v6785
    %v6842 = vunpack.c.l.b16 %v6786
    %v6843 = vunpack.c.h.b16 %v6786
    %v6844 = vunpack.c.l.b16 %v6787
    %v6845 = vunpack.c.h.b16 %v6787
    %v6846 = vunpack.c.l.b16 %v6788
    %v6847 = vunpack.c.h.b16 %v6788
    %v6848 = vunpack.c.l.b16 %v6789
    %v6849 = vunpack.c.h.b16 %v6789
    %v6850 = vunpack.c.l.b16 %v6790
    %v6851 = vunpack.c.h.b16 %v6790
    %v6852 = vunpack.c.l.b16 %v6791
    %v6853 = vunpack.c.h.b16 %v6791
    %v6854 = vunpack.c.l.b16 %v6792
    %v6855 = vunpack.c.h.b16 %v6792
    %v6856 = vunpack.c.l.b16 %v6793
    %v6857 = vunpack.c.h.b16 %v6793
    %v6858 = vunpack.c.l.b16 %v6794
    %v6859 = vunpack.c.h.b16 %v6794
    %v6860 = vunpack.c.l.b16 %v6795
    %v6861 = vunpack.c.h.b16 %v6795
    %v6862 = vpack.c.b16 %v6820, %v6818
    %v6863 = vpack.c.b16 %v6821, %v6819
    %v6864 = vpack.c.b16 %v6824, %v6822
    %v6865 = vpack.c.b16 %v6825, %v6823
    %v6866 = vpack.c.b16 %v6828, %v6826
    %v6867 = vpack.c.b16 %v6829, %v6827
    %v6868 = vpack.c.b16 %v6832, %v6830
    %v6869 = vpack.c.b16 %v6833, %v6831
    %v6870 = vpack.c.b16 %v6836, %v6834
    %v6871 = vpack.c.b16 %v6837, %v6835
    %v6872 = vpack.c.b16 %v6840, %v6838
    %v6873 = vpack.c.b16 %v6841, %v6839
    %v6874 = vpack.c.b16 %v6844, %v6842
    %v6875 = vpack.c.b16 %v6845, %v6843
    %v6876 = vpack.c.b16 %v6848, %v6846
    %v6877 = vpack.c.b16 %v6849, %v6847
    %v6878 = vpack.c.b16 %v6852, %v6850
    %v6879 = vpack.c.b16 %v6853, %v6851
    %v6880 = vpack.c.b16 %v6856, %v6854
    %v6881 = vpack.c.b16 %v6857, %v6855
    %v6882 = vpack.c.b16 %v6860, %v6858
    %v6883 = vpack.c.b16 %v6861, %v6859
    %v6905 = vsel %vm459, %v6772, 0
    %v6908 = vand.u32 %v6882, %v1189
    %v6911 = vand.u32 %v6883, %v1189
    %6913 = vmatpush.bf16.msra.mxu0 %v6876
    %6914 = vmatpush.bf16.msra.mxu0 %v6874
    %6915 = vmatpush.bf16.msra.mxu0 %v6872
    %6916 = vmatpush.bf16.msra.mxu0 %v6870
    %6917 = vmatpush.bf16.msra.mxu0 %v6868
    %6918 = vmatpush.bf16.msra.mxu0 %v6866
    %6919 = vmatpush.bf16.msra.mxu0 %v6864
    %6920 = vmatpush.bf16.msra.mxu0 %v6862
    %6921 = vmatmul.bf16.gmra.mxu0 %v6771
    %v6922 = vpop.f32.mrf.mxu0
    %v6923 = vadd.f32 0.0, %v6922
    %v6924 = vpop.f32.mrf.mxu0
    %6925 = vdwg.mxu0
    %6926 = vmatpush.bf16.msra.mxu0 0
    %6927 = vmatpush.bf16.msra.mxu0 0
    %6928 = vmatpush.bf16.msra.mxu0 0
    %6929 = vmatpush.bf16.msra.mxu0 0
    %6930 = vmatpush.bf16.msra.mxu0 0
    %6931 = vmatpush.bf16.msra.mxu0 %v6908
    %6932 = vmatpush.bf16.msra.mxu0 %v6880
    %6933 = vmatpush.bf16.msra.mxu0 %v6878
    %6934 = vmatmul.bf16.gmra.mxu0 %v6905
    %v6935 = vpop.f32.mrf.mxu0
    %v6936 = vadd.f32 %v6923, %v6935
    %v6937 = vpop.f32.mrf.mxu0
    %6938 = vdwg.mxu0
    %6939 = vmatpush.bf16.msra.mxu0 %v6877
    %6940 = vmatpush.bf16.msra.mxu0 %v6875
    %6941 = vmatpush.bf16.msra.mxu0 %v6873
    %6942 = vmatpush.bf16.msra.mxu0 %v6871
    %6943 = vmatpush.bf16.msra.mxu0 %v6869
    %6944 = vmatpush.bf16.msra.mxu0 %v6867
    %6945 = vmatpush.bf16.msra.mxu0 %v6865
    %6946 = vmatpush.bf16.msra.mxu0 %v6863
    %6947 = vmatmul.bf16.gmra.mxu0 %v6771
    %v6948 = vpop.f32.mrf.mxu0
    %v6949 = vadd.f32 0.0, %v6948
    %v6950 = vpop.f32.mrf.mxu0
    %6951 = vdwg.mxu0
    %6952 = vmatpush.bf16.msra.mxu0 0
    %6953 = vmatpush.bf16.msra.mxu0 0
    %6954 = vmatpush.bf16.msra.mxu0 0
    %6955 = vmatpush.bf16.msra.mxu0 0
    %6956 = vmatpush.bf16.msra.mxu0 0
    %6957 = vmatpush.bf16.msra.mxu0 %v6911
    %6958 = vmatpush.bf16.msra.mxu0 %v6881
    %6959 = vmatpush.bf16.msra.mxu0 %v6879
    %6960 = vmatmul.bf16.gmra.mxu0 %v6905
    %v6961 = vpop.f32.mrf.mxu0
    %v6962 = vadd.f32 %v6949, %v6961
    %v6963 = vpop.f32.mrf.mxu0
    %6964 = vdwg.mxu0
    %v6965 = vadd.f32 %v6759, %v6936
    %v6966 = vadd.f32 %v6760, %v6962
    %v6967 = vrot.slane %v579, 5
    %v6968 = vrot.slane %v580, 5
    %v6971 = vrot.slane %v1003, 4
    %v6972 = vrot.slane %v1004, 4
    %v6975 = vsel %vm150, %v6967, %v6971
    %v6976 = vsel %vm150, %v6968, %v6972
    %v6977 = vpack.c.bf16 %v6975, %v6975
    %v6978 = vpack.c.bf16 %v6976, %v6976
    %s6979 = scalar_lea.vmem [#allocation2], 5104
    %v6980 = vld [vmem:[%s6979] sm:$0xff]
    %v6981 = vld [vmem:[%s6979 + $0x8] sm:$0xff]
    %v6982 = vld [vmem:[%s6979 + $0x10] sm:$0xff]
    %v6983 = vld [vmem:[%s6979 + $0x18] sm:$0xff]
    %v6984 = vld [vmem:[%s6979 + $0x20] sm:$0xff]
    %v6985 = vld [vmem:[%s6979 + $0x28] sm:$0xff]
    %v6986 = vld [vmem:[%s6979 + $0x30] sm:$0xff]
    %v6987 = vld [vmem:[%s6979 + $0x38] sm:$0xff]
    %v6988 = vld [vmem:[%s6979 + $0x40] sm:$0xff]
    %v6989 = vld [vmem:[%s6979 + $0x48] sm:$0xff]
    %v6990 = vld [vmem:[%s6979 + $0x50] sm:$0xff]
    %v6991 = vld [vmem:[%s6979 + $0x58] sm:$0xff]
    %v6992 = vld [vmem:[%s6979 + $0x60] sm:$0xff]
    %v6993 = vld [vmem:[%s6979 + $0x68] sm:$0xff]
    %v6994 = vld [vmem:[%s6979 + $0x70] sm:$0xff]
    %v6995 = vld [vmem:[%s6979 + $0x78] sm:$0xff]
    %v6996 = vld [vmem:[%s6979 + $0x80] sm:$0xff]
    %v6997 = vld [vmem:[%s6979 + $0x88] sm:$0xff]
    %v6998 = vld [vmem:[%s6979 + $0x90] sm:$0xff]
    %v6999 = vld [vmem:[%s6979 + $0x98] sm:$0xff]
    %v7000 = vld [vmem:[%s6979 + $0xa0] sm:$0xff]
    %v7001 = vld [vmem:[%s6979 + $0xa8] sm:$0x11]
    %v7024 = vunpack.c.l.b16 %v6980
    %v7025 = vunpack.c.h.b16 %v6980
    %v7026 = vunpack.c.l.b16 %v6981
    %v7027 = vunpack.c.h.b16 %v6981
    %v7028 = vunpack.c.l.b16 %v6982
    %v7029 = vunpack.c.h.b16 %v6982
    %v7030 = vunpack.c.l.b16 %v6983
    %v7031 = vunpack.c.h.b16 %v6983
    %v7032 = vunpack.c.l.b16 %v6984
    %v7033 = vunpack.c.h.b16 %v6984
    %v7034 = vunpack.c.l.b16 %v6985
    %v7035 = vunpack.c.h.b16 %v6985
    %v7036 = vunpack.c.l.b16 %v6986
    %v7037 = vunpack.c.h.b16 %v6986
    %v7038 = vunpack.c.l.b16 %v6987
    %v7039 = vunpack.c.h.b16 %v6987
    %v7040 = vunpack.c.l.b16 %v6988
    %v7041 = vunpack.c.h.b16 %v6988
    %v7042 = vunpack.c.l.b16 %v6989
    %v7043 = vunpack.c.h.b16 %v6989
    %v7044 = vunpack.c.l.b16 %v6990
    %v7045 = vunpack.c.h.b16 %v6990
    %v7046 = vunpack.c.l.b16 %v6991
    %v7047 = vunpack.c.h.b16 %v6991
    %v7048 = vunpack.c.l.b16 %v6992
    %v7049 = vunpack.c.h.b16 %v6992
    %v7050 = vunpack.c.l.b16 %v6993
    %v7051 = vunpack.c.h.b16 %v6993
    %v7052 = vunpack.c.l.b16 %v6994
    %v7053 = vunpack.c.h.b16 %v6994
    %v7054 = vunpack.c.l.b16 %v6995
    %v7055 = vunpack.c.h.b16 %v6995
    %v7056 = vunpack.c.l.b16 %v6996
    %v7057 = vunpack.c.h.b16 %v6996
    %v7058 = vunpack.c.l.b16 %v6997
    %v7059 = vunpack.c.h.b16 %v6997
    %v7060 = vunpack.c.l.b16 %v6998
    %v7061 = vunpack.c.h.b16 %v6998
    %v7062 = vunpack.c.l.b16 %v6999
    %v7063 = vunpack.c.h.b16 %v6999
    %v7064 = vunpack.c.l.b16 %v7000
    %v7065 = vunpack.c.h.b16 %v7000
    %v7066 = vunpack.c.l.b16 %v7001
    %v7067 = vunpack.c.h.b16 %v7001
    %v7068 = vpack.c.b16 %v7026, %v7024
    %v7069 = vpack.c.b16 %v7027, %v7025
    %v7070 = vpack.c.b16 %v7030, %v7028
    %v7071 = vpack.c.b16 %v7031, %v7029
    %v7072 = vpack.c.b16 %v7034, %v7032
    %v7073 = vpack.c.b16 %v7035, %v7033
    %v7074 = vpack.c.b16 %v7038, %v7036
    %v7075 = vpack.c.b16 %v7039, %v7037
    %v7076 = vpack.c.b16 %v7042, %v7040
    %v7077 = vpack.c.b16 %v7043, %v7041
    %v7078 = vpack.c.b16 %v7046, %v7044
    %v7079 = vpack.c.b16 %v7047, %v7045
    %v7080 = vpack.c.b16 %v7050, %v7048
    %v7081 = vpack.c.b16 %v7051, %v7049
    %v7082 = vpack.c.b16 %v7054, %v7052
    %v7083 = vpack.c.b16 %v7055, %v7053
    %v7084 = vpack.c.b16 %v7058, %v7056
    %v7085 = vpack.c.b16 %v7059, %v7057
    %v7086 = vpack.c.b16 %v7062, %v7060
    %v7087 = vpack.c.b16 %v7063, %v7061
    %v7088 = vpack.c.b16 %v7066, %v7064
    %v7089 = vpack.c.b16 %v7067, %v7065
    %v7111 = vsel %vm459, %v6978, 0
    %v7114 = vand.u32 %v7088, %v1189
    %v7117 = vand.u32 %v7089, %v1189
    %7119 = vmatpush.bf16.msra.mxu0 %v7082
    %7120 = vmatpush.bf16.msra.mxu0 %v7080
    %7121 = vmatpush.bf16.msra.mxu0 %v7078
    %7122 = vmatpush.bf16.msra.mxu0 %v7076
    %7123 = vmatpush.bf16.msra.mxu0 %v7074
    %7124 = vmatpush.bf16.msra.mxu0 %v7072
    %7125 = vmatpush.bf16.msra.mxu0 %v7070
    %7126 = vmatpush.bf16.msra.mxu0 %v7068
    %7127 = vmatmul.bf16.gmra.mxu0 %v6977
    %v7128 = vpop.f32.mrf.mxu0
    %v7129 = vadd.f32 0.0, %v7128
    %v7130 = vpop.f32.mrf.mxu0
    %7131 = vdwg.mxu0
    %7132 = vmatpush.bf16.msra.mxu0 0
    %7133 = vmatpush.bf16.msra.mxu0 0
    %7134 = vmatpush.bf16.msra.mxu0 0
    %7135 = vmatpush.bf16.msra.mxu0 0
    %7136 = vmatpush.bf16.msra.mxu0 0
    %7137 = vmatpush.bf16.msra.mxu0 %v7114
    %7138 = vmatpush.bf16.msra.mxu0 %v7086
    %7139 = vmatpush.bf16.msra.mxu0 %v7084
    %7140 = vmatmul.bf16.gmra.mxu0 %v7111
    %v7141 = vpop.f32.mrf.mxu0
    %v7142 = vadd.f32 %v7129, %v7141
    %v7143 = vpop.f32.mrf.mxu0
    %7144 = vdwg.mxu0
    %7145 = vmatpush.bf16.msra.mxu0 %v7083
    %7146 = vmatpush.bf16.msra.mxu0 %v7081
    %7147 = vmatpush.bf16.msra.mxu0 %v7079
    %7148 = vmatpush.bf16.msra.mxu0 %v7077
    %7149 = vmatpush.bf16.msra.mxu0 %v7075
    %7150 = vmatpush.bf16.msra.mxu0 %v7073
    %7151 = vmatpush.bf16.msra.mxu0 %v7071
    %7152 = vmatpush.bf16.msra.mxu0 %v7069
    %7153 = vmatmul.bf16.gmra.mxu0 %v6977
    %v7154 = vpop.f32.mrf.mxu0
    %v7155 = vadd.f32 0.0, %v7154
    %v7156 = vpop.f32.mrf.mxu0
    %7157 = vdwg.mxu0
    %7158 = vmatpush.bf16.msra.mxu0 0
    %7159 = vmatpush.bf16.msra.mxu0 0
    %7160 = vmatpush.bf16.msra.mxu0 0
    %7161 = vmatpush.bf16.msra.mxu0 0
    %7162 = vmatpush.bf16.msra.mxu0 0
    %7163 = vmatpush.bf16.msra.mxu0 %v7117
    %7164 = vmatpush.bf16.msra.mxu0 %v7087
    %7165 = vmatpush.bf16.msra.mxu0 %v7085
    %7166 = vmatmul.bf16.gmra.mxu0 %v7111
    %v7167 = vpop.f32.mrf.mxu0
    %v7168 = vadd.f32 %v7155, %v7167
    %v7169 = vpop.f32.mrf.mxu0
    %7170 = vdwg.mxu0
    %v7171 = vadd.f32 %v6965, %v7142
    %v7172 = vadd.f32 %v6966, %v7168
    %v7173 = vld [vmem:[#allocation9] sm:$0x3]
    %v7175 = vperm.slane %v7173, 0
    %v7176 = vperm.slane %v7173, 1
    %v7179 = vadd.f32 %v7171, %v7175
    %v7180 = vadd.f32 %v7172, %v7176
    %vm7181 = vcmask 1041408
    %v7182 = vsel %vm7181, %v7179, inf
    %vm7183 = vcmask 173056
    %v7184 = vsel %vm7183, %v7180, inf
    %v7185 = vmin.f32 %v7182, %v7184
    %7186 = vmin.xlane.f32.xlu0 %v7185
    %v7187 = vpop.xlane.xlu0 %7186
    %v7188 = vsel %vm7181, %v7179, -inf
    %v7189 = vsel %vm7183, %v7180, -inf
    %v7190 = vmax.f32 %v7188, %v7189
    %7191 = vmax.xlane.f32.xlu0 %v7190
    %v7192 = vpop.xlane.xlu0 %7191
    loop: start=0, step=1, limit=13
    $region64: #{_lambda_.1} parent=1 // loop_pre_header
      _
    $region65: #{_lambda_.1} parent=1 // loop_header
      %s7194 = sphi 0, %s7198
      %p7195 = scmp.ge.s32.totalorder %s7194, 13
      %v7199 = vphi %v7187, %v7215
      %v7200 = vphi %v7192, %v7216
    $region66: #{_lambda_.1} parent=1 // loop_header_branch
      %7197 = sbr.rel (%p7195) target = $region70
    $region67: #{_lambda_.1} parent=1 // loop_body
      %v7201 = vadd.f32 %v7199, %v7200
      %v7202 = vmul.f32 %v7201, 0.5
      %vm7203 = vcmp.ge.f32.partialorder %v7179, %v7202
      %vm7204 = vcmp.ge.f32.partialorder %v7180, %v7202
      %v7205 = vsel %vm7203, 1, 0
      %v7206 = vsel %vm7204, 1, 0
      %v7207 = vcvt.s32.f32 %v7205
      %v7208 = vcvt.s32.f32 %v7206
      %v7209 = vsel %vm7181, %v7207, 0.0
      %v7210 = vsel %vm7183, %v7208, 0.0
      %v7211 = vadd.f32 %v7209, %v7210
      %7212 = vadd.xlane.f32.xlu0 %v7211
      %v7213 = vpop.xlane.xlu0 %7212
      %vm7214 = vcmp.ge.f32.partialorder %v7213, 50.0
      %v7215 = vsel %vm7214, %v7202, %v7199
      %v7216 = vsel %vm7214, %v7200, %v7202
    $region68: #{_lambda_.1} parent=1 // loop_footer
      %s7198 = sadd.s32 1, %s7194
    $region69: #{_lambda_.1} parent=1 // loop_footer_branch
      %7193 = sbr.rel target = $region65
    $region70: #{_lambda_.1} parent=1 // loop_exit
      _
    %vm7217 = vcmp.ge.f32.partialorder %v7179, %v7199
    %vm7218 = vcmp.ge.f32.partialorder %v7180, %v7199
    %v7219 = vsel %vm7217, %v7179, 0.0
    %v7220 = vsel %vm7218, %v7180, 0.0
    %v7221 = vld [vmem:[#allocation10] sm:$0xff]
    %v7222 = vld [vmem:[#allocation10 + $0x8] sm:$0xff]
    %v7223 = vld [vmem:[#allocation10 + $0x10] sm:$0xff]
    %v7224 = vld [vmem:[#allocation10 + $0x18] sm:$0xff]
    %v7225 = vld [vmem:[#allocation10 + $0x20] sm:$0xff]
    %v7226 = vld [vmem:[#allocation10 + $0x28] sm:$0xff]
    %v7227 = vld [vmem:[#allocation10 + $0x30] sm:$0xff]
    %v7228 = vld [vmem:[#allocation10 + $0x38] sm:$0xff]
    %v7229 = vld [vmem:[#allocation10 + $0x40] sm:$0xff]
    %v7230 = vld [vmem:[#allocation10 + $0x48] sm:$0xff]
    %v7231 = vld [vmem:[#allocation10 + $0x50] sm:$0xff]
    %v7232 = vld [vmem:[#allocation10 + $0x58] sm:$0xff]
    %v7233 = vld [vmem:[#allocation10 + $0x60] sm:$0xff]
    %v7234 = vld [vmem:[#allocation10 + $0x68] sm:$0xff]
    %v7235 = vld [vmem:[#allocation10 + $0x70] sm:$0xff]
    %v7236 = vld [vmem:[#allocation10 + $0x78] sm:$0xff]
    %v7237 = vld [vmem:[#allocation10 + $0x80] sm:$0xff]
    %v7238 = vld [vmem:[#allocation10 + $0x88] sm:$0xff]
    %v7239 = vld [vmem:[#allocation10 + $0x90] sm:$0x3f]
    %v7240 = vld [vmem:[#allocation12] sm:$0x1]
    %v7242 = vperm.slane %v7240, 0
    %vm7244 = vcmask 179200
    %v7246 = vsel %vm7244, %v7220, 0
    %v7249 = vsel %vm465, %v7239, 0
    %7251 = vmatpush.msra.mxu0 %v7236
    %7252 = vmatpush.msra.mxu0 %v7235
    %7253 = vmatpush.msra.mxu0 %v7234
    %7254 = vmatpush.msra.mxu0 %v7233
    %7255 = vmatpush.msra.mxu0 %v7232
    %7256 = vmatpush.msra.mxu0 %v7231
    %7257 = vmatpush.msra.mxu0 %v7230
    %7258 = vmatpush.msra.mxu0 %v7229
    %7259 = vmatpush.msra.mxu0 %v7228
    %7260 = vmatpush.msra.mxu0 %v7227
    %7261 = vmatpush.msra.mxu0 %v7226
    %7262 = vmatpush.msra.mxu0 %v7225
    %7263 = vmatpush.msra.mxu0 %v7224
    %7264 = vmatpush.msra.mxu0 %v7223
    %7265 = vmatpush.msra.mxu0 %v7222
    %7266 = vmatpush.msra.mxu0 %v7221
    %7267 = vmatmul.f32.gmra.mxu0 %v7219
    %v7268 = vpop.f32.mrf.mxu0
    %v7269 = vadd.f32 %v7242, %v7268
    %7270 = vdwg.mxu0
    %7271 = vmatpush.msra.mxu0 0.0
    %7272 = vmatpush.msra.mxu0 0.0
    %7273 = vmatpush.msra.mxu0 0.0
    %7274 = vmatpush.msra.mxu0 0.0
    %7275 = vmatpush.msra.mxu0 0.0
    %7276 = vmatpush.msra.mxu0 0.0
    %7277 = vmatpush.msra.mxu0 0.0
    %7278 = vmatpush.msra.mxu0 0.0
    %7279 = vmatpush.msra.mxu0 0.0
    %7280 = vmatpush.msra.mxu0 0.0
    %7281 = vmatpush.msra.mxu0 0.0
    %7282 = vmatpush.msra.mxu0 0.0
    %7283 = vmatpush.msra.mxu0 0.0
    %7284 = vmatpush.msra.mxu0 %v7249
    %7285 = vmatpush.msra.mxu0 %v7238
    %7286 = vmatpush.msra.mxu0 %v7237
    %7287 = vmatmul.f32.gmra.mxu0 %v7246
    %v7288 = vpop.f32.mrf.mxu0
    %v7289 = vadd.f32 %v7269, %v7288
    %7290 = vdwg.mxu0
    %vm7291 = vcmask 74752
    %7292 = vst.msk [vmem:[#allocation13] sm:$0x3] %vm7291, %v7289
    // Predicated region
    $region71: #{_lambda_.1} parent=1 // pred_check
      _
    $region72: #{_lambda_.1} parent=1 // pred_check_branch
      %7294 = sbr.rel (0) target = $region74
    $region73: #{_lambda_.1} parent=1 // pred_region
      %7296 = vsyncadd [#allocation6], 0
      %s7298 = sshll.u32 [#allocation13], 4
      %s7299 = int_to_ptr.vmem [resolvable:$true] %s7298
      %s7300 = sshll.u32 %s7, 4
      %s7301 = int_to_ptr.hbm [resolvable:$true] %s7300
      %7303 = dma.vmem_to_hbm [thread:$0]  %s7299, 32, %s7301, [#allocation6]
    $region74: #{_lambda_.1} parent=1 // pred_fallthru
      _
    // Predicated region
    $region75: #{_lambda_.1} parent=1 // pred_check
      _
    $region76: #{_lambda_.1} parent=1 // pred_check_branch
      %7305 = sbr.rel (0) target = $region78
    $region77: #{_lambda_.1} parent=1 // pred_region
      %7307 = dma.done [#allocation6], 32
    $region78: #{_lambda_.1} parent=1 // pred_fallthru
      _
    %7308 = vsyncpa [#allocation5], 1
    %7309 = vsyncpa [#allocation8], 1
    %7310 = vsyncpa [#allocation11], 1
    %7311 = vsyncpa [#allocation6], 1
  %7312 = vsyncmov [#allocation3]
  %s7313 = vpop.sfrf %7312
  %p7314 = scmp.eq.s32.totalorder %s7313, 0
  %p7315 = pneg %p7314
  %7317 = shalt.err (%p7315)

</llo_original>
